<compile_context>
chip_gen: v6e
topology: v6e:2x2x1
jax: 0.10.0
libtpu: 0.0.40
codegen_flags: <defaults>
</compile_context>

<pallas_src>
import functools

import jax
import jax.numpy as jnp
from jax.experimental import pallas as pl
from jax.experimental.pallas import tpu as pltpu


# ----------------------------- Pallas kernels -----------------------------

def _conv_bn_relu_kernel(w_ref, p_ref, gamma_ref, beta_ref, o_ref):
    """out_T = relu(batchnorm(W_T @ patches_T)), channels-as-rows layout.

    The matmul result (cout, M) never leaves VMEM before the BN/ReLU epilogue.
    BN uses training-mode batch statistics over the M = N*Ho*Wo axis, computed
    in one pass (sum and sum-of-squares -> biased variance, eps=1e-5).  The conv
    bias is intentionally omitted: BatchNorm subtracts the per-channel mean, so
    a bias preceding it cancels exactly.
    """
    y = jnp.dot(w_ref[...], p_ref[...], preferred_element_type=jnp.float32)
    inv_m = 1.0 / y.shape[1]
    mean = jnp.sum(y, axis=1, keepdims=True) * inv_m
    mean_sq = jnp.sum(y * y, axis=1, keepdims=True) * inv_m
    var = jnp.maximum(mean_sq - mean * mean, 0.0)          # biased variance
    y = (y - mean) * jax.lax.rsqrt(var + 1e-5)
    y = y * gamma_ref[...] + beta_ref[...]
    o_ref[...] = jnp.maximum(y, 0.0)


def _conv_bias_relu_kernel(w_ref, p_ref, b_ref, o_ref):
    """out_T = relu(W_T @ patches_T + b)   (normalization=False path)."""
    y = jnp.dot(w_ref[...], p_ref[...], preferred_element_type=jnp.float32)
    o_ref[...] = jnp.maximum(y + b_ref[...], 0.0)


def _linear_softmax_kernel(x_ref, w_ref, b_ref, o_ref):
    logits = jnp.dot(x_ref[...], w_ref[...],
                     preferred_element_type=jnp.float32) + b_ref[...]
    m = jnp.max(logits, axis=-1, keepdims=True)
    e = jnp.exp(logits - m)
    o_ref[...] = e / jnp.sum(e, axis=-1, keepdims=True)


# --------------------------- pallas_call wrappers ---------------------------

def _single_block_call(kernel, out_shape, *operands):
    """One grid step, whole-array blocks (everything fits comfortably in VMEM)."""
    in_specs = [pl.BlockSpec(op.shape, lambda i: (0, 0)) for op in operands]
    return pl.pallas_call(
        kernel,
        out_shape=out_shape,
        grid_spec=pltpu.PrefetchScalarGridSpec(
            num_scalar_prefetch=0,
            grid=(1,),
            in_specs=in_specs,
            out_specs=pl.BlockSpec(out_shape.shape, lambda i: (0, 0))),
    )(*operands)


def conv_bn_relu_t(w_t, patches_t, gamma, beta):
    """Fused conv(as matmul) + BatchNorm + ReLU in channels-as-rows layout."""
    cout = w_t.shape[0]
    M = patches_t.shape[1]
    return _single_block_call(
        _conv_bn_relu_kernel,
        jax.ShapeDtypeStruct((cout, M), jnp.float32),
        w_t, patches_t, gamma.reshape(cout, 1), beta.reshape(cout, 1))


def conv_bias_relu_t(w_t, patches_t, bias):
    """Fused conv(as matmul) + bias + ReLU (used when normalization=False)."""
    cout = w_t.shape[0]
    M = patches_t.shape[1]
    return _single_block_call(
        _conv_bias_relu_kernel,
        jax.ShapeDtypeStruct((cout, M), jnp.float32),
        w_t, patches_t, bias)


def linear_softmax(x, w, b):
    M = x.shape[0]
    N = w.shape[1]
    return _single_block_call(
        _linear_softmax_kernel,
        jax.ShapeDtypeStruct((M, N), jnp.float32),
        x, w, b)


# ------------------------------- JAX glue ---------------------------------

def im2col_t(x_cnhw, kh, kw, stride, pad):
    """Transposed im2col: patches_T of shape (kh*kw*C, N*Ho*Wo).

    Feature (row) order is (kh, kw, cin), matching W.reshape(kh*kw*cin, cout).T.
    Column order is (n, ho, wo).
    """
    C, N, H, W = x_cnhw.shape
    xp = jnp.pad(x_cnhw, ((0, 0), (0, 0), (pad, pad), (pad, pad)))
    Ho = (H + 2 * pad - kh) // stride + 1
    Wo = (W + 2 * pad - kw) // stride + 1
    cols = []
    for i in range(kh):
        for j in range(kw):
            cols.append(xp[:, :, i:i + stride * Ho:stride,
                           j:j + stride * Wo:stride])
    patches = jnp.concatenate(cols, axis=0)              # (kh*kw*C, N, Ho, Wo)
    return patches.reshape(kh * kw * C, N * Ho * Wo), Ho, Wo


def init_params(key, in_channels, out_channels, num_conv_layers,
                normalization, num_classifications):
    params = {"convs": [], "bns": []}
    cin = in_channels
    for i in range(num_conv_layers, 0, -1):
        cout = 2 ** (i - 1) * out_channels
        key, k_w, k_b, k_g, k_bt = jax.random.split(key, 5)
        fan_in = 4 * 4 * cin
        w = jax.random.normal(k_w, (4, 4, cin, cout), jnp.float32) / jnp.sqrt(fan_in)
        b = jax.random.normal(k_b, (cout,), jnp.float32) * 0.01
        params["convs"].append((w, b))
        if normalization:
            gamma = 1.0 + 0.1 * jax.random.normal(k_g, (cout,), jnp.float32)
            beta = 0.1 * jax.random.normal(k_bt, (cout,), jnp.float32)
            params["bns"].append((gamma, beta))
        cin = cout
    lin_in = 2 ** (11 - num_conv_layers) * out_channels
    key, k_wl, k_bl = jax.random.split(key, 3)
    w_lin = jax.random.normal(k_wl, (lin_in, num_classifications),
                              jnp.float32) / jnp.sqrt(lin_in)
    b_lin = jax.random.normal(k_bl, (num_classifications,), jnp.float32) * 0.01
    params["linear"] = (w_lin, b_lin)
    return params


def prepare_params(params):
    """One-time repacking of weights into the layouts the kernels expect."""
    prepped = {"convs": [], "bns": params["bns"]}
    for (w, b) in params["convs"]:
        kh, kw, cin, cout = w.shape
        w_t = w.reshape(kh * kw * cin, cout).T            # (cout, K), K-order (i,j,c)
        prepped["convs"].append((w_t, b.reshape(cout, 1)))
    w_lin, b_lin = params["linear"]
    prepped["linear"] = (w_lin, b_lin.reshape(1, -1))
    return prepped


def cat_dog_cnn_forward(prepped, x_nchw, *, normalization=True):
    # NCHW (PyTorch convention) -> CNHW so every conv layer runs channel-major:
    # the conv matmul output is (cout, N*Ho*Wo), i.e. lane-dense stores.
    x = jnp.transpose(x_nchw, (1, 0, 2, 3)).astype(jnp.float32)
    N = x.shape[1]
    for li, (w_t, b) in enumerate(prepped["convs"]):
        cout = w_t.shape[0]
        # TODO(synk): build im2col patches inside the conv kernel (strided ref
        # loads from a VMEM-resident padded activation) so all conv layers can
        # collapse into a single pallas_call with no patch-matrix HBM round trip.
        patches_t, Ho, Wo = im2col_t(x, 4, 4, stride=2, pad=1)
        if normalization:
            gamma, beta = prepped["bns"][li]
            y = conv_bn_relu_t(w_t, patches_t, gamma, beta)   # fused matmul+BN+ReLU
        else:
            y = conv_bias_relu_t(w_t, patches_t, b)           # fused matmul+bias+ReLU
        x = y.reshape(cout, N, Ho, Wo)
    # nn.Flatten on NCHW flattens per-sample in (C, H, W) order; our activations
    # are already channel-major, so only a tiny (C,N,H,W)->(N,C,H,W) transpose
    # (8 KB) is needed before the fused linear+softmax kernel.
    feat = jnp.transpose(x, (1, 0, 2, 3)).reshape(N, -1)
    w_lin, b_lin = prepped["linear"]
    return linear_softmax(feat, w_lin, b_lin)


# --------------------------------- main ------------------------------------

if __name__ == "__main__":
    in_channels = 3
    out_channels = 4
    num_conv_layers = 3
    num_classifications = 2
    normalization = True
    batch = 2
    # spatial must be 128 so that the flattened conv output matches the
    # module's Linear in-features 2**(11 - num_conv_layers) * out_channels.
    spatial = 128

    key = jax.random.PRNGKey(0)
    key, pkey, xkey = jax.random.split(key, 3)
    params = init_params(pkey, in_channels, out_channels, num_conv_layers,
                         normalization, num_classifications)
    prepped = prepare_params(params)
    x = jax.random.normal(xkey, (batch, in_channels, spatial, spatial),
                          jnp.float32)

    fwd = jax.jit(functools.partial(cat_dog_cnn_forward,
                                    normalization=normalization))
    out = jax.block_until_ready(fwd(prepped, x))

    assert out.shape == (batch, num_classifications), out.shape
    assert bool(jnp.all(jnp.isfinite(out)))
    row_sums = jnp.sum(out, axis=1)
    assert bool(jnp.all(jnp.abs(row_sums - 1.0) < 1e-5)), row_sums
    print("KERNEL_OK")
</pallas_src>

<mosaic_0001>
module attributes {stable_mosaic.version = 11 : i64} {
  func.func @_conv_bn_relu_kernel(%arg0: i32, %arg1: memref<16x48xf32, #tpu.memory_space<vmem>>, %arg2: memref<48x8192xf32, #tpu.memory_space<vmem>>, %arg3: memref<16x1xf32, #tpu.memory_space<vmem>>, %arg4: memref<16x1xf32, #tpu.memory_space<vmem>>, %arg5: memref<16x8192xf32, #tpu.memory_space<vmem>>) attributes {dimension_semantics = [#tpu.dimension_semantics<arbitrary>], iteration_bounds = array<i64: 1>, scalar_prefetch = 0 : i64, scratch_operands = 0 : i64, tpu.core_type = #tpu.core_type<tc>, window_params = [{pipeline_mode = #tpu.pipeline_mode<synchronous>, transform_indices = @transform_0, window_bounds = array<i64: 16, 48>}, {pipeline_mode = #tpu.pipeline_mode<synchronous>, transform_indices = @transform_1, window_bounds = array<i64: 48, 8192>}, {pipeline_mode = #tpu.pipeline_mode<synchronous>, transform_indices = @transform_2, window_bounds = array<i64: 16, 1>}, {pipeline_mode = #tpu.pipeline_mode<synchronous>, transform_indices = @transform_3, window_bounds = array<i64: 16, 1>}, {pipeline_mode = #tpu.pipeline_mode<synchronous>, transform_indices = @transform_4, window_bounds = array<i64: 16, 8192>}]} {
    %c0 = arith.constant 0 : index
    %c0_0 = arith.constant 0 : index
    %0 = vector.load %arg1[%c0, %c0_0] : memref<16x48xf32, #tpu.memory_space<vmem>>, vector<16x48xf32>
    %c0_1 = arith.constant 0 : index
    %c0_2 = arith.constant 0 : index
    %1 = vector.load %arg2[%c0_1, %c0_2] : memref<48x8192xf32, #tpu.memory_space<vmem>>, vector<48x8192xf32>
    %cst = arith.constant dense<0.000000e+00> : vector<16x8192xf32>
    %2 = tpu.matmul %0, %1, %cst {dimension_numbers = #tpu.dot_dimension_numbers<[1], [0], [0], [1], [0, 0, 1, 1], [], []>} : vector<16x48xf32>, vector<48x8192xf32>, vector<16x8192xf32> -> vector<16x8192xf32>
    %cst_3 = arith.constant dense<0.000000e+00> : vector<16xf32>
    %3 = vector.multi_reduction <add>, %2, %cst_3 [1] : vector<16x8192xf32> to vector<16xf32>
    %4 = vector.shape_cast %3 : vector<16xf32> to vector<16x1xf32>
    %cst_4 = arith.constant 1.22070313E-4 : f32
    %5 = vector.broadcast %cst_4 : f32 to vector<16x1xf32>
    %6 = arith.mulf %4, %5 : vector<16x1xf32>
    %7 = arith.mulf %2, %2 : vector<16x8192xf32>
    %cst_5 = arith.constant dense<0.000000e+00> : vector<16xf32>
    %8 = vector.multi_reduction <add>, %7, %cst_5 [1] : vector<16x8192xf32> to vector<16xf32>
    %9 = vector.shape_cast %8 : vector<16xf32> to vector<16x1xf32>
    %cst_6 = arith.constant 1.22070313E-4 : f32
    %10 = vector.broadcast %cst_6 : f32 to vector<16x1xf32>
    %11 = arith.mulf %9, %10 : vector<16x1xf32>
    %12 = arith.mulf %6, %6 : vector<16x1xf32>
    %13 = arith.subf %11, %12 : vector<16x1xf32>
    %cst_7 = arith.constant 0.000000e+00 : f32
    %14 = vector.broadcast %cst_7 : f32 to vector<16x1xf32>
    %15 = arith.maximumf %13, %14 : vector<16x1xf32>
    %16 = vector.broadcast %6 : vector<16x1xf32> to vector<16x8192xf32>
    %17 = arith.subf %2, %16 : vector<16x8192xf32>
    %cst_8 = arith.constant 9.99999974E-6 : f32
    %18 = vector.broadcast %cst_8 : f32 to vector<16x1xf32>
    %19 = arith.addf %15, %18 : vector<16x1xf32>
    %20 = math.rsqrt %19 : vector<16x1xf32>
    %21 = vector.broadcast %20 : vector<16x1xf32> to vector<16x8192xf32>
    %22 = arith.mulf %17, %21 : vector<16x8192xf32>
    %c0_9 = arith.constant 0 : index
    %c0_10 = arith.constant 0 : index
    %23 = vector.load %arg3[%c0_9, %c0_10] : memref<16x1xf32, #tpu.memory_space<vmem>>, vector<16x1xf32>
    %24 = vector.broadcast %23 : vector<16x1xf32> to vector<16x8192xf32>
    %25 = arith.mulf %22, %24 : vector<16x8192xf32>
    %c0_11 = arith.constant 0 : index
    %c0_12 = arith.constant 0 : index
    %26 = vector.load %arg4[%c0_11, %c0_12] : memref<16x1xf32, #tpu.memory_space<vmem>>, vector<16x1xf32>
    %27 = vector.broadcast %26 : vector<16x1xf32> to vector<16x8192xf32>
    %28 = arith.addf %25, %27 : vector<16x8192xf32>
    %cst_13 = arith.constant 0.000000e+00 : f32
    %29 = vector.broadcast %cst_13 : f32 to vector<16x8192xf32>
    %30 = arith.maximumf %28, %29 : vector<16x8192xf32>
    %c0_14 = arith.constant 0 : index
    %c0_15 = arith.constant 0 : index
    %31 = vector.load %arg5[%c0_14, %c0_15] : memref<16x8192xf32, #tpu.memory_space<vmem>>, vector<16x8192xf32>
    tpu.vector_store %arg5[%c0_14, %c0_15], %30 {strides = array<i32>} : memref<16x8192xf32, #tpu.memory_space<vmem>>, vector<16x8192xf32>,
    return
  }
  func.func @transform_0(%arg0: i32) -> (i32, i32) {
    %c0_i32 = arith.constant 0 : i32
    %c0_i32_0 = arith.constant 0 : i32
    %c0_i32_1 = arith.constant 0 : i32
    return %c0_i32, %c0_i32_0 : i32, i32
  }
  func.func @transform_1(%arg0: i32) -> (i32, i32) {
    %c0_i32 = arith.constant 0 : i32
    %c0_i32_0 = arith.constant 0 : i32
    %c0_i32_1 = arith.constant 0 : i32
    return %c0_i32, %c0_i32_0 : i32, i32
  }
  func.func @transform_2(%arg0: i32) -> (i32, i32) {
    %c0_i32 = arith.constant 0 : i32
    %c0_i32_0 = arith.constant 0 : i32
    %c0_i32_1 = arith.constant 0 : i32
    return %c0_i32, %c0_i32_0 : i32, i32
  }
  func.func @transform_3(%arg0: i32) -> (i32, i32) {
    %c0_i32 = arith.constant 0 : i32
    %c0_i32_0 = arith.constant 0 : i32
    %c0_i32_1 = arith.constant 0 : i32
    return %c0_i32, %c0_i32_0 : i32, i32
  }
  func.func @transform_4(%arg0: i32) -> (i32, i32) {
    %c0_i32 = arith.constant 0 : i32
    %c0_i32_0 = arith.constant 0 : i32
    %c0_i32_1 = arith.constant 0 : i32
    return %c0_i32, %c0_i32_0 : i32, i32
  }
}

module attributes {stable_mosaic.version = 11 : i64} {
  func.func @_conv_bn_relu_kernel(%arg0: i32, %arg1: memref<8x256xf32, #tpu.memory_space<vmem>>, %arg2: memref<256x2048xf32, #tpu.memory_space<vmem>>, %arg3: memref<8x1xf32, #tpu.memory_space<vmem>>, %arg4: memref<8x1xf32, #tpu.memory_space<vmem>>, %arg5: memref<8x2048xf32, #tpu.memory_space<vmem>>) attributes {dimension_semantics = [#tpu.dimension_semantics<arbitrary>], iteration_bounds = array<i64: 1>, scalar_prefetch = 0 : i64, scratch_operands = 0 : i64, tpu.core_type = #tpu.core_type<tc>, window_params = [{pipeline_mode = #tpu.pipeline_mode<synchronous>, transform_indices = @transform_0, window_bounds = array<i64: 8, 256>}, {pipeline_mode = #tpu.pipeline_mode<synchronous>, transform_indices = @transform_1, window_bounds = array<i64: 256, 2048>}, {pipeline_mode = #tpu.pipeline_mode<synchronous>, transform_indices = @transform_2, window_bounds = array<i64: 8, 1>}, {pipeline_mode = #tpu.pipeline_mode<synchronous>, transform_indices = @transform_3, window_bounds = array<i64: 8, 1>}, {pipeline_mode = #tpu.pipeline_mode<synchronous>, transform_indices = @transform_4, window_bounds = array<i64: 8, 2048>}]} {
    %c0 = arith.constant 0 : index
    %c0_0 = arith.constant 0 : index
    %0 = vector.load %arg1[%c0, %c0_0] : memref<8x256xf32, #tpu.memory_space<vmem>>, vector<8x256xf32>
    %c0_1 = arith.constant 0 : index
    %c0_2 = arith.constant 0 : index
    %1 = vector.load %arg2[%c0_1, %c0_2] : memref<256x2048xf32, #tpu.memory_space<vmem>>, vector<256x2048xf32>
    %cst = arith.constant dense<0.000000e+00> : vector<8x2048xf32>
    %2 = tpu.matmul %0, %1, %cst {dimension_numbers = #tpu.dot_dimension_numbers<[1], [0], [0], [1], [0, 0, 1, 1], [], []>} : vector<8x256xf32>, vector<256x2048xf32>, vector<8x2048xf32> -> vector<8x2048xf32>
    %cst_3 = arith.constant dense<0.000000e+00> : vector<8xf32>
    %3 = vector.multi_reduction <add>, %2, %cst_3 [1] : vector<8x2048xf32> to vector<8xf32>
    %4 = vector.shape_cast %3 : vector<8xf32> to vector<8x1xf32>
    %cst_4 = arith.constant 4.8828125E-4 : f32
    %5 = vector.broadcast %cst_4 : f32 to vector<8x1xf32>
    %6 = arith.mulf %4, %5 : vector<8x1xf32>
    %7 = arith.mulf %2, %2 : vector<8x2048xf32>
    %cst_5 = arith.constant dense<0.000000e+00> : vector<8xf32>
    %8 = vector.multi_reduction <add>, %7, %cst_5 [1] : vector<8x2048xf32> to vector<8xf32>
    %9 = vector.shape_cast %8 : vector<8xf32> to vector<8x1xf32>
    %cst_6 = arith.constant 4.8828125E-4 : f32
    %10 = vector.broadcast %cst_6 : f32 to vector<8x1xf32>
    %11 = arith.mulf %9, %10 : vector<8x1xf32>
    %12 = arith.mulf %6, %6 : vector<8x1xf32>
    %13 = arith.subf %11, %12 : vector<8x1xf32>
    %cst_7 = arith.constant 0.000000e+00 : f32
    %14 = vector.broadcast %cst_7 : f32 to vector<8x1xf32>
    %15 = arith.maximumf %13, %14 : vector<8x1xf32>
    %16 = vector.broadcast %6 : vector<8x1xf32> to vector<8x2048xf32>
    %17 = arith.subf %2, %16 : vector<8x2048xf32>
    %cst_8 = arith.constant 9.99999974E-6 : f32
    %18 = vector.broadcast %cst_8 : f32 to vector<8x1xf32>
    %19 = arith.addf %15, %18 : vector<8x1xf32>
    %20 = math.rsqrt %19 : vector<8x1xf32>
    %21 = vector.broadcast %20 : vector<8x1xf32> to vector<8x2048xf32>
    %22 = arith.mulf %17, %21 : vector<8x2048xf32>
    %c0_9 = arith.constant 0 : index
    %c0_10 = arith.constant 0 : index
    %23 = vector.load %arg3[%c0_9, %c0_10] : memref<8x1xf32, #tpu.memory_space<vmem>>, vector<8x1xf32>
    %24 = vector.broadcast %23 : vector<8x1xf32> to vector<8x2048xf32>
    %25 = arith.mulf %22, %24 : vector<8x2048xf32>
    %c0_11 = arith.constant 0 : index
    %c0_12 = arith.constant 0 : index
    %26 = vector.load %arg4[%c0_11, %c0_12] : memref<8x1xf32, #tpu.memory_space<vmem>>, vector<8x1xf32>
    %27 = vector.broadcast %26 : vector<8x1xf32> to vector<8x2048xf32>
    %28 = arith.addf %25, %27 : vector<8x2048xf32>
    %cst_13 = arith.constant 0.000000e+00 : f32
    %29 = vector.broadcast %cst_13 : f32 to vector<8x2048xf32>
    %30 = arith.maximumf %28, %29 : vector<8x2048xf32>
    %c0_14 = arith.constant 0 : index
    %c0_15 = arith.constant 0 : index
    %31 = vector.load %arg5[%c0_14, %c0_15] : memref<8x2048xf32, #tpu.memory_space<vmem>>, vector<8x2048xf32>
    tpu.vector_store %arg5[%c0_14, %c0_15], %30 {strides = array<i32>} : memref<8x2048xf32, #tpu.memory_space<vmem>>, vector<8x2048xf32>,
    return
  }
  func.func @transform_0(%arg0: i32) -> (i32, i32) {
    %c0_i32 = arith.constant 0 : i32
    %c0_i32_0 = arith.constant 0 : i32
    %c0_i32_1 = arith.constant 0 : i32
    return %c0_i32, %c0_i32_0 : i32, i32
  }
  func.func @transform_1(%arg0: i32) -> (i32, i32) {
    %c0_i32 = arith.constant 0 : i32
    %c0_i32_0 = arith.constant 0 : i32
    %c0_i32_1 = arith.constant 0 : i32
    return %c0_i32, %c0_i32_0 : i32, i32
  }
  func.func @transform_2(%arg0: i32) -> (i32, i32) {
    %c0_i32 = arith.constant 0 : i32
    %c0_i32_0 = arith.constant 0 : i32
    %c0_i32_1 = arith.constant 0 : i32
    return %c0_i32, %c0_i32_0 : i32, i32
  }
  func.func @transform_3(%arg0: i32) -> (i32, i32) {
    %c0_i32 = arith.constant 0 : i32
    %c0_i32_0 = arith.constant 0 : i32
    %c0_i32_1 = arith.constant 0 : i32
    return %c0_i32, %c0_i32_0 : i32, i32
  }
  func.func @transform_4(%arg0: i32) -> (i32, i32) {
    %c0_i32 = arith.constant 0 : i32
    %c0_i32_0 = arith.constant 0 : i32
    %c0_i32_1 = arith.constant 0 : i32
    return %c0_i32, %c0_i32_0 : i32, i32
  }
}

module attributes {stable_mosaic.version = 11 : i64} {
  func.func @_conv_bn_relu_kernel(%arg0: i32, %arg1: memref<4x128xf32, #tpu.memory_space<vmem>>, %arg2: memref<128x512xf32, #tpu.memory_space<vmem>>, %arg3: memref<4x1xf32, #tpu.memory_space<vmem>>, %arg4: memref<4x1xf32, #tpu.memory_space<vmem>>, %arg5: memref<4x512xf32, #tpu.memory_space<vmem>>) attributes {dimension_semantics = [#tpu.dimension_semantics<arbitrary>], iteration_bounds = array<i64: 1>, scalar_prefetch = 0 : i64, scratch_operands = 0 : i64, tpu.core_type = #tpu.core_type<tc>, window_params = [{pipeline_mode = #tpu.pipeline_mode<synchronous>, transform_indices = @transform_0, window_bounds = array<i64: 4, 128>}, {pipeline_mode = #tpu.pipeline_mode<synchronous>, transform_indices = @transform_1, window_bounds = array<i64: 128, 512>}, {pipeline_mode = #tpu.pipeline_mode<synchronous>, transform_indices = @transform_2, window_bounds = array<i64: 4, 1>}, {pipeline_mode = #tpu.pipeline_mode<synchronous>, transform_indices = @transform_3, window_bounds = array<i64: 4, 1>}, {pipeline_mode = #tpu.pipeline_mode<synchronous>, transform_indices = @transform_4, window_bounds = array<i64: 4, 512>}]} {
    %c0 = arith.constant 0 : index
    %c0_0 = arith.constant 0 : index
    %0 = vector.load %arg1[%c0, %c0_0] : memref<4x128xf32, #tpu.memory_space<vmem>>, vector<4x128xf32>
    %c0_1 = arith.constant 0 : index
    %c0_2 = arith.constant 0 : index
    %1 = vector.load %arg2[%c0_1, %c0_2] : memref<128x512xf32, #tpu.memory_space<vmem>>, vector<128x512xf32>
    %cst = arith.constant dense<0.000000e+00> : vector<4x512xf32>
    %2 = tpu.matmul %0, %1, %cst {dimension_numbers = #tpu.dot_dimension_numbers<[1], [0], [0], [1], [0, 0, 1, 1], [], []>} : vector<4x128xf32>, vector<128x512xf32>, vector<4x512xf32> -> vector<4x512xf32>
    %cst_3 = arith.constant dense<0.000000e+00> : vector<4xf32>
    %3 = vector.multi_reduction <add>, %2, %cst_3 [1] : vector<4x512xf32> to vector<4xf32>
    %4 = vector.shape_cast %3 : vector<4xf32> to vector<4x1xf32>
    %cst_4 = arith.constant 0.001953125 : f32
    %5 = vector.broadcast %cst_4 : f32 to vector<4x1xf32>
    %6 = arith.mulf %4, %5 : vector<4x1xf32>
    %7 = arith.mulf %2, %2 : vector<4x512xf32>
    %cst_5 = arith.constant dense<0.000000e+00> : vector<4xf32>
    %8 = vector.multi_reduction <add>, %7, %cst_5 [1] : vector<4x512xf32> to vector<4xf32>
    %9 = vector.shape_cast %8 : vector<4xf32> to vector<4x1xf32>
    %cst_6 = arith.constant 0.001953125 : f32
    %10 = vector.broadcast %cst_6 : f32 to vector<4x1xf32>
    %11 = arith.mulf %9, %10 : vector<4x1xf32>
    %12 = arith.mulf %6, %6 : vector<4x1xf32>
    %13 = arith.subf %11, %12 : vector<4x1xf32>
    %cst_7 = arith.constant 0.000000e+00 : f32
    %14 = vector.broadcast %cst_7 : f32 to vector<4x1xf32>
    %15 = arith.maximumf %13, %14 : vector<4x1xf32>
    %16 = vector.broadcast %6 : vector<4x1xf32> to vector<4x512xf32>
    %17 = arith.subf %2, %16 : vector<4x512xf32>
    %cst_8 = arith.constant 9.99999974E-6 : f32
    %18 = vector.broadcast %cst_8 : f32 to vector<4x1xf32>
    %19 = arith.addf %15, %18 : vector<4x1xf32>
    %20 = math.rsqrt %19 : vector<4x1xf32>
    %21 = vector.broadcast %20 : vector<4x1xf32> to vector<4x512xf32>
    %22 = arith.mulf %17, %21 : vector<4x512xf32>
    %c0_9 = arith.constant 0 : index
    %c0_10 = arith.constant 0 : index
    %23 = vector.load %arg3[%c0_9, %c0_10] : memref<4x1xf32, #tpu.memory_space<vmem>>, vector<4x1xf32>
    %24 = vector.broadcast %23 : vector<4x1xf32> to vector<4x512xf32>
    %25 = arith.mulf %22, %24 : vector<4x512xf32>
    %c0_11 = arith.constant 0 : index
    %c0_12 = arith.constant 0 : index
    %26 = vector.load %arg4[%c0_11, %c0_12] : memref<4x1xf32, #tpu.memory_space<vmem>>, vector<4x1xf32>
    %27 = vector.broadcast %26 : vector<4x1xf32> to vector<4x512xf32>
    %28 = arith.addf %25, %27 : vector<4x512xf32>
    %cst_13 = arith.constant 0.000000e+00 : f32
    %29 = vector.broadcast %cst_13 : f32 to vector<4x512xf32>
    %30 = arith.maximumf %28, %29 : vector<4x512xf32>
    %c0_14 = arith.constant 0 : index
    %c0_15 = arith.constant 0 : index
    %31 = vector.load %arg5[%c0_14, %c0_15] : memref<4x512xf32, #tpu.memory_space<vmem>>, vector<4x512xf32>
    tpu.vector_store %arg5[%c0_14, %c0_15], %30 {strides = array<i32>} : memref<4x512xf32, #tpu.memory_space<vmem>>, vector<4x512xf32>,
    return
  }
  func.func @transform_0(%arg0: i32) -> (i32, i32) {
    %c0_i32 = arith.constant 0 : i32
    %c0_i32_0 = arith.constant 0 : i32
    %c0_i32_1 = arith.constant 0 : i32
    return %c0_i32, %c0_i32_0 : i32, i32
  }
  func.func @transform_1(%arg0: i32) -> (i32, i32) {
    %c0_i32 = arith.constant 0 : i32
    %c0_i32_0 = arith.constant 0 : i32
    %c0_i32_1 = arith.constant 0 : i32
    return %c0_i32, %c0_i32_0 : i32, i32
  }
  func.func @transform_2(%arg0: i32) -> (i32, i32) {
    %c0_i32 = arith.constant 0 : i32
    %c0_i32_0 = arith.constant 0 : i32
    %c0_i32_1 = arith.constant 0 : i32
    return %c0_i32, %c0_i32_0 : i32, i32
  }
  func.func @transform_3(%arg0: i32) -> (i32, i32) {
    %c0_i32 = arith.constant 0 : i32
    %c0_i32_0 = arith.constant 0 : i32
    %c0_i32_1 = arith.constant 0 : i32
    return %c0_i32, %c0_i32_0 : i32, i32
  }
  func.func @transform_4(%arg0: i32) -> (i32, i32) {
    %c0_i32 = arith.constant 0 : i32
    %c0_i32_0 = arith.constant 0 : i32
    %c0_i32_1 = arith.constant 0 : i32
    return %c0_i32, %c0_i32_0 : i32, i32
  }
}

module attributes {stable_mosaic.version = 11 : i64} {
  func.func @_linear_softmax_kernel(%arg0: i32, %arg1: memref<2x1024xf32, #tpu.memory_space<vmem>>, %arg2: memref<1024x2xf32, #tpu.memory_space<vmem>>, %arg3: memref<1x2xf32, #tpu.memory_space<vmem>>, %arg4: memref<2x2xf32, #tpu.memory_space<vmem>>) attributes {dimension_semantics = [#tpu.dimension_semantics<arbitrary>], iteration_bounds = array<i64: 1>, scalar_prefetch = 0 : i64, scratch_operands = 0 : i64, tpu.core_type = #tpu.core_type<tc>, window_params = [{pipeline_mode = #tpu.pipeline_mode<synchronous>, transform_indices = @transform_0, window_bounds = array<i64: 2, 1024>}, {pipeline_mode = #tpu.pipeline_mode<synchronous>, transform_indices = @transform_1, window_bounds = array<i64: 1024, 2>}, {pipeline_mode = #tpu.pipeline_mode<synchronous>, transform_indices = @transform_2, window_bounds = array<i64: 1, 2>}, {pipeline_mode = #tpu.pipeline_mode<synchronous>, transform_indices = @transform_3, window_bounds = array<i64: 2, 2>}]} {
    %c0 = arith.constant 0 : index
    %c0_0 = arith.constant 0 : index
    %0 = vector.load %arg1[%c0, %c0_0] : memref<2x1024xf32, #tpu.memory_space<vmem>>, vector<2x1024xf32>
    %c0_1 = arith.constant 0 : index
    %c0_2 = arith.constant 0 : index
    %1 = vector.load %arg2[%c0_1, %c0_2] : memref<1024x2xf32, #tpu.memory_space<vmem>>, vector<1024x2xf32>
    %cst = arith.constant dense<0.000000e+00> : vector<2x2xf32>
    %2 = tpu.matmul %0, %1, %cst {dimension_numbers = #tpu.dot_dimension_numbers<[1], [0], [0], [1], [0, 0, 1, 1], [], []>} : vector<2x1024xf32>, vector<1024x2xf32>, vector<2x2xf32> -> vector<2x2xf32>
    %c0_3 = arith.constant 0 : index
    %c0_4 = arith.constant 0 : index
    %3 = vector.load %arg3[%c0_3, %c0_4] : memref<1x2xf32, #tpu.memory_space<vmem>>, vector<1x2xf32>
    %4 = vector.broadcast %3 : vector<1x2xf32> to vector<2x2xf32>
    %5 = arith.addf %2, %4 : vector<2x2xf32>
    %cst_5 = arith.constant dense<0xFF800000> : vector<2xf32>
    %6 = vector.multi_reduction <maximumf>, %5, %cst_5 [1] : vector<2x2xf32> to vector<2xf32>
    %7 = vector.shape_cast %6 : vector<2xf32> to vector<2x1xf32>
    %8 = vector.broadcast %7 : vector<2x1xf32> to vector<2x2xf32>
    %9 = arith.subf %5, %8 : vector<2x2xf32>
    %10 = math.exp %9 : vector<2x2xf32>
    %cst_6 = arith.constant dense<0.000000e+00> : vector<2xf32>
    %11 = vector.multi_reduction <add>, %10, %cst_6 [1] : vector<2x2xf32> to vector<2xf32>
    %12 = vector.shape_cast %11 : vector<2xf32> to vector<2x1xf32>
    %13 = vector.broadcast %12 : vector<2x1xf32> to vector<2x2xf32>
    %14 = arith.divf %10, %13 : vector<2x2xf32>
    %c0_7 = arith.constant 0 : index
    %c0_8 = arith.constant 0 : index
    %15 = vector.load %arg4[%c0_7, %c0_8] : memref<2x2xf32, #tpu.memory_space<vmem>>, vector<2x2xf32>
    tpu.vector_store %arg4[%c0_7, %c0_8], %14 {strides = array<i32>} : memref<2x2xf32, #tpu.memory_space<vmem>>, vector<2x2xf32>,
    return
  }
  func.func @transform_0(%arg0: i32) -> (i32, i32) {
    %c0_i32 = arith.constant 0 : i32
    %c0_i32_0 = arith.constant 0 : i32
    %c0_i32_1 = arith.constant 0 : i32
    return %c0_i32, %c0_i32_0 : i32, i32
  }
  func.func @transform_1(%arg0: i32) -> (i32, i32) {
    %c0_i32 = arith.constant 0 : i32
    %c0_i32_0 = arith.constant 0 : i32
    %c0_i32_1 = arith.constant 0 : i32
    return %c0_i32, %c0_i32_0 : i32, i32
  }
  func.func @transform_2(%arg0: i32) -> (i32, i32) {
    %c0_i32 = arith.constant 0 : i32
    %c0_i32_0 = arith.constant 0 : i32
    %c0_i32_1 = arith.constant 0 : i32
    return %c0_i32, %c0_i32_0 : i32, i32
  }
  func.func @transform_3(%arg0: i32) -> (i32, i32) {
    %c0_i32 = arith.constant 0 : i32
    %c0_i32_0 = arith.constant 0 : i32
    %c0_i32_1 = arith.constant 0 : i32
    return %c0_i32, %c0_i32_0 : i32, i32
  }
}

</mosaic_0001>

<llo_original>
// kernel: cat_dog_cnn_forward.4
$region0: #{cat_dog_cnn_forward.4}
  #allocation0 [shape = 'u32[]', space=smem, size = 0x4, offset = 0x4, fixed_abs, tag = 'smem constant byte address 0x4 - core index']
  #allocation1 [shape = 'u32[144,128]{1,0:T(1,128)}', space=vmem, size = 0x12000, scoped, tag = 'internal scratch']
  %s0 = inlined_call_operand.vmem [shape: f32[16,48], index: 0, kind: input, shape index: {}]
  %s1 = inlined_call_operand.vmem [shape: f32[48,8192], index: 1, kind: input, shape index: {}]
  %s2 = inlined_call_operand.vmem [shape: f32[16,1], index: 2, kind: input, shape index: {}]
  %s3 = inlined_call_operand.vmem [shape: f32[16,1], index: 3, kind: input, shape index: {}]
  %s4 = inlined_call_operand.vmem [shape: f32[16,8192], index: 4, kind: output, shape index: {}]
  %s5 = sld [smem:[#allocation0]]
  $region26: #{cat_dog_cnn_forward.4} parent=0
    _
  %s7 = ssub.s32 1, %s5
  %s8 = scalar_select 0, %s7, %s5
  // Predicated region
  $region2: #{cat_dog_cnn_forward.4} parent=0 // pred_check
    _
  $region3: #{cat_dog_cnn_forward.4} parent=0 // pred_check_branch
    %10 = sbr.rel (0) target = $region5
  $region4: #{cat_dog_cnn_forward.4} parent=0 // pred_region
    _
  $region5: #{cat_dog_cnn_forward.4} parent=0 // pred_fallthru
    _
  // Predicated region
  $region6: #{cat_dog_cnn_forward.4} parent=0 // pred_check
    _
  $region7: #{cat_dog_cnn_forward.4} parent=0 // pred_check_branch
    %12 = sbr.rel (0) target = $region9
  $region8: #{cat_dog_cnn_forward.4} parent=0 // pred_region
    _
  $region9: #{cat_dog_cnn_forward.4} parent=0 // pred_fallthru
    _
  // Predicated region
  $region10: #{cat_dog_cnn_forward.4} parent=0 // pred_check
    _
  $region11: #{cat_dog_cnn_forward.4} parent=0 // pred_check_branch
    %14 = sbr.rel (0) target = $region13
  $region12: #{cat_dog_cnn_forward.4} parent=0 // pred_region
    _
  $region13: #{cat_dog_cnn_forward.4} parent=0 // pred_fallthru
    _
  // Predicated region
  $region14: #{cat_dog_cnn_forward.4} parent=0 // pred_check
    _
  $region15: #{cat_dog_cnn_forward.4} parent=0 // pred_check_branch
    %16 = sbr.rel (0) target = $region17
  $region16: #{cat_dog_cnn_forward.4} parent=0 // pred_region
    _
  $region17: #{cat_dog_cnn_forward.4} parent=0 // pred_fallthru
    _
  %v17 = vld [vmem:[%s0] sm:$0xff]
  %v18 = vld [vmem:[%s0 + $0x8] sm:$0xff]
  %v19 = vld [vmem:[%s1] sm:$0xff]
  %v20 = vld [vmem:[%s1 + $0x8] sm:$0xff]
  %v21 = vld [vmem:[%s1 + $0x10] sm:$0xff]
  %v22 = vld [vmem:[%s1 + $0x18] sm:$0xff]
  %v23 = vld [vmem:[%s1 + $0x20] sm:$0xff]
  %v24 = vld [vmem:[%s1 + $0x28] sm:$0xff]
  %v25 = vld [vmem:[%s1 + $0x30] sm:$0xff]
  %v26 = vld [vmem:[%s1 + $0x38] sm:$0xff]
  %v27 = vld [vmem:[%s1 + $0x40] sm:$0xff]
  %v28 = vld [vmem:[%s1 + $0x48] sm:$0xff]
  %v29 = vld [vmem:[%s1 + $0x50] sm:$0xff]
  %v30 = vld [vmem:[%s1 + $0x58] sm:$0xff]
  %v31 = vld [vmem:[%s1 + $0x60] sm:$0xff]
  %v32 = vld [vmem:[%s1 + $0x68] sm:$0xff]
  %v33 = vld [vmem:[%s1 + $0x70] sm:$0xff]
  %v34 = vld [vmem:[%s1 + $0x78] sm:$0xff]
  %v35 = vld [vmem:[%s1 + $0x80] sm:$0xff]
  %v36 = vld [vmem:[%s1 + $0x88] sm:$0xff]
  %v37 = vld [vmem:[%s1 + $0x90] sm:$0xff]
  %v38 = vld [vmem:[%s1 + $0x98] sm:$0xff]
  %v39 = vld [vmem:[%s1 + $0xa0] sm:$0xff]
  %v40 = vld [vmem:[%s1 + $0xa8] sm:$0xff]
  %v41 = vld [vmem:[%s1 + $0xb0] sm:$0xff]
  %v42 = vld [vmem:[%s1 + $0xb8] sm:$0xff]
  %v43 = vld [vmem:[%s1 + $0xc0] sm:$0xff]
  %v44 = vld [vmem:[%s1 + $0xc8] sm:$0xff]
  %v45 = vld [vmem:[%s1 + $0xd0] sm:$0xff]
  %v46 = vld [vmem:[%s1 + $0xd8] sm:$0xff]
  %v47 = vld [vmem:[%s1 + $0xe0] sm:$0xff]
  %v48 = vld [vmem:[%s1 + $0xe8] sm:$0xff]
  %v49 = vld [vmem:[%s1 + $0xf0] sm:$0xff]
  %v50 = vld [vmem:[%s1 + $0xf8] sm:$0xff]
  %v51 = vld [vmem:[%s1 + $0x100] sm:$0xff]
  %v52 = vld [vmem:[%s1 + $0x108] sm:$0xff]
  %v53 = vld [vmem:[%s1 + $0x110] sm:$0xff]
  %v54 = vld [vmem:[%s1 + $0x118] sm:$0xff]
  %v55 = vld [vmem:[%s1 + $0x120] sm:$0xff]
  %v56 = vld [vmem:[%s1 + $0x128] sm:$0xff]
  %v57 = vld [vmem:[%s1 + $0x130] sm:$0xff]
  %v58 = vld [vmem:[%s1 + $0x138] sm:$0xff]
  %v59 = vld [vmem:[%s1 + $0x140] sm:$0xff]
  %v60 = vld [vmem:[%s1 + $0x148] sm:$0xff]
  %v61 = vld [vmem:[%s1 + $0x150] sm:$0xff]
  %v62 = vld [vmem:[%s1 + $0x158] sm:$0xff]
  %v63 = vld [vmem:[%s1 + $0x160] sm:$0xff]
  %v64 = vld [vmem:[%s1 + $0x168] sm:$0xff]
  %v65 = vld [vmem:[%s1 + $0x170] sm:$0xff]
  %v66 = vld [vmem:[%s1 + $0x178] sm:$0xff]
  %v67 = vld [vmem:[%s1 + $0x180] sm:$0xff]
  %v68 = vld [vmem:[%s1 + $0x188] sm:$0xff]
  %v69 = vld [vmem:[%s1 + $0x190] sm:$0xff]
  %v70 = vld [vmem:[%s1 + $0x198] sm:$0xff]
  %v71 = vld [vmem:[%s1 + $0x1a0] sm:$0xff]
  %v72 = vld [vmem:[%s1 + $0x1a8] sm:$0xff]
  %v73 = vld [vmem:[%s1 + $0x1b0] sm:$0xff]
  %v74 = vld [vmem:[%s1 + $0x1b8] sm:$0xff]
  %v75 = vld [vmem:[%s1 + $0x1c0] sm:$0xff]
  %v76 = vld [vmem:[%s1 + $0x1c8] sm:$0xff]
  %v77 = vld [vmem:[%s1 + $0x1d0] sm:$0xff]
  %v78 = vld [vmem:[%s1 + $0x1d8] sm:$0xff]
  %v79 = vld [vmem:[%s1 + $0x1e0] sm:$0xff]
  %v80 = vld [vmem:[%s1 + $0x1e8] sm:$0xff]
  %v81 = vld [vmem:[%s1 + $0x1f0] sm:$0xff]
  %v82 = vld [vmem:[%s1 + $0x1f8] sm:$0xff]
  %v83 = vld [vmem:[%s1 + $0x200] sm:$0xff]
  %v84 = vld [vmem:[%s1 + $0x208] sm:$0xff]
  %v85 = vld [vmem:[%s1 + $0x210] sm:$0xff]
  %v86 = vld [vmem:[%s1 + $0x218] sm:$0xff]
  %v87 = vld [vmem:[%s1 + $0x220] sm:$0xff]
  %v88 = vld [vmem:[%s1 + $0x228] sm:$0xff]
  %v89 = vld [vmem:[%s1 + $0x230] sm:$0xff]
  %v90 = vld [vmem:[%s1 + $0x238] sm:$0xff]
  %v91 = vld [vmem:[%s1 + $0x240] sm:$0xff]
  %v92 = vld [vmem:[%s1 + $0x248] sm:$0xff]
  %v93 = vld [vmem:[%s1 + $0x250] sm:$0xff]
  %v94 = vld [vmem:[%s1 + $0x258] sm:$0xff]
  %v95 = vld [vmem:[%s1 + $0x260] sm:$0xff]
  %v96 = vld [vmem:[%s1 + $0x268] sm:$0xff]
  %v97 = vld [vmem:[%s1 + $0x270] sm:$0xff]
  %v98 = vld [vmem:[%s1 + $0x278] sm:$0xff]
  %v99 = vld [vmem:[%s1 + $0x280] sm:$0xff]
  %v100 = vld [vmem:[%s1 + $0x288] sm:$0xff]
  %v101 = vld [vmem:[%s1 + $0x290] sm:$0xff]
  %v102 = vld [vmem:[%s1 + $0x298] sm:$0xff]
  %v103 = vld [vmem:[%s1 + $0x2a0] sm:$0xff]
  %v104 = vld [vmem:[%s1 + $0x2a8] sm:$0xff]
  %v105 = vld [vmem:[%s1 + $0x2b0] sm:$0xff]
  %v106 = vld [vmem:[%s1 + $0x2b8] sm:$0xff]
  %v107 = vld [vmem:[%s1 + $0x2c0] sm:$0xff]
  %v108 = vld [vmem:[%s1 + $0x2c8] sm:$0xff]
  %v109 = vld [vmem:[%s1 + $0x2d0] sm:$0xff]
  %v110 = vld [vmem:[%s1 + $0x2d8] sm:$0xff]
  %v111 = vld [vmem:[%s1 + $0x2e0] sm:$0xff]
  %v112 = vld [vmem:[%s1 + $0x2e8] sm:$0xff]
  %v113 = vld [vmem:[%s1 + $0x2f0] sm:$0xff]
  %v114 = vld [vmem:[%s1 + $0x2f8] sm:$0xff]
  %v115 = vld [vmem:[%s1 + $0x300] sm:$0xff]
  %v116 = vld [vmem:[%s1 + $0x308] sm:$0xff]
  %v117 = vld [vmem:[%s1 + $0x310] sm:$0xff]
  %v118 = vld [vmem:[%s1 + $0x318] sm:$0xff]
  %v119 = vld [vmem:[%s1 + $0x320] sm:$0xff]
  %v120 = vld [vmem:[%s1 + $0x328] sm:$0xff]
  %v121 = vld [vmem:[%s1 + $0x330] sm:$0xff]
  %v122 = vld [vmem:[%s1 + $0x338] sm:$0xff]
  %v123 = vld [vmem:[%s1 + $0x340] sm:$0xff]
  %v124 = vld [vmem:[%s1 + $0x348] sm:$0xff]
  %v125 = vld [vmem:[%s1 + $0x350] sm:$0xff]
  %v126 = vld [vmem:[%s1 + $0x358] sm:$0xff]
  %v127 = vld [vmem:[%s1 + $0x360] sm:$0xff]
  %v128 = vld [vmem:[%s1 + $0x368] sm:$0xff]
  %v129 = vld [vmem:[%s1 + $0x370] sm:$0xff]
  %v130 = vld [vmem:[%s1 + $0x378] sm:$0xff]
  %v131 = vld [vmem:[%s1 + $0x380] sm:$0xff]
  %v132 = vld [vmem:[%s1 + $0x388] sm:$0xff]
  %v133 = vld [vmem:[%s1 + $0x390] sm:$0xff]
  %v134 = vld [vmem:[%s1 + $0x398] sm:$0xff]
  %v135 = vld [vmem:[%s1 + $0x3a0] sm:$0xff]
  %v136 = vld [vmem:[%s1 + $0x3a8] sm:$0xff]
  %v137 = vld [vmem:[%s1 + $0x3b0] sm:$0xff]
  %v138 = vld [vmem:[%s1 + $0x3b8] sm:$0xff]
  %v139 = vld [vmem:[%s1 + $0x3c0] sm:$0xff]
  %v140 = vld [vmem:[%s1 + $0x3c8] sm:$0xff]
  %v141 = vld [vmem:[%s1 + $0x3d0] sm:$0xff]
  %v142 = vld [vmem:[%s1 + $0x3d8] sm:$0xff]
  %v143 = vld [vmem:[%s1 + $0x3e0] sm:$0xff]
  %v144 = vld [vmem:[%s1 + $0x3e8] sm:$0xff]
  %v145 = vld [vmem:[%s1 + $0x3f0] sm:$0xff]
  %v146 = vld [vmem:[%s1 + $0x3f8] sm:$0xff]
  %v147 = vld [vmem:[%s1 + $0x400] sm:$0xff]
  %v148 = vld [vmem:[%s1 + $0x408] sm:$0xff]
  %v149 = vld [vmem:[%s1 + $0x410] sm:$0xff]
  %v150 = vld [vmem:[%s1 + $0x418] sm:$0xff]
  %v151 = vld [vmem:[%s1 + $0x420] sm:$0xff]
  %v152 = vld [vmem:[%s1 + $0x428] sm:$0xff]
  %v153 = vld [vmem:[%s1 + $0x430] sm:$0xff]
  %v154 = vld [vmem:[%s1 + $0x438] sm:$0xff]
  %v155 = vld [vmem:[%s1 + $0x440] sm:$0xff]
  %v156 = vld [vmem:[%s1 + $0x448] sm:$0xff]
  %v157 = vld [vmem:[%s1 + $0x450] sm:$0xff]
  %v158 = vld [vmem:[%s1 + $0x458] sm:$0xff]
  %v159 = vld [vmem:[%s1 + $0x460] sm:$0xff]
  %v160 = vld [vmem:[%s1 + $0x468] sm:$0xff]
  %v161 = vld [vmem:[%s1 + $0x470] sm:$0xff]
  %v162 = vld [vmem:[%s1 + $0x478] sm:$0xff]
  %v163 = vld [vmem:[%s1 + $0x480] sm:$0xff]
  %v164 = vld [vmem:[%s1 + $0x488] sm:$0xff]
  %v165 = vld [vmem:[%s1 + $0x490] sm:$0xff]
  %v166 = vld [vmem:[%s1 + $0x498] sm:$0xff]
  %v167 = vld [vmem:[%s1 + $0x4a0] sm:$0xff]
  %v168 = vld [vmem:[%s1 + $0x4a8] sm:$0xff]
  %v169 = vld [vmem:[%s1 + $0x4b0] sm:$0xff]
  %v170 = vld [vmem:[%s1 + $0x4b8] sm:$0xff]
  %v171 = vld [vmem:[%s1 + $0x4c0] sm:$0xff]
  %v172 = vld [vmem:[%s1 + $0x4c8] sm:$0xff]
  %v173 = vld [vmem:[%s1 + $0x4d0] sm:$0xff]
  %v174 = vld [vmem:[%s1 + $0x4d8] sm:$0xff]
  %v175 = vld [vmem:[%s1 + $0x4e0] sm:$0xff]
  %v176 = vld [vmem:[%s1 + $0x4e8] sm:$0xff]
  %v177 = vld [vmem:[%s1 + $0x4f0] sm:$0xff]
  %v178 = vld [vmem:[%s1 + $0x4f8] sm:$0xff]
  %v179 = vld [vmem:[%s1 + $0x500] sm:$0xff]
  %v180 = vld [vmem:[%s1 + $0x508] sm:$0xff]
  %v181 = vld [vmem:[%s1 + $0x510] sm:$0xff]
  %v182 = vld [vmem:[%s1 + $0x518] sm:$0xff]
  %v183 = vld [vmem:[%s1 + $0x520] sm:$0xff]
  %v184 = vld [vmem:[%s1 + $0x528] sm:$0xff]
  %v185 = vld [vmem:[%s1 + $0x530] sm:$0xff]
  %v186 = vld [vmem:[%s1 + $0x538] sm:$0xff]
  %v187 = vld [vmem:[%s1 + $0x540] sm:$0xff]
  %v188 = vld [vmem:[%s1 + $0x548] sm:$0xff]
  %v189 = vld [vmem:[%s1 + $0x550] sm:$0xff]
  %v190 = vld [vmem:[%s1 + $0x558] sm:$0xff]
  %v191 = vld [vmem:[%s1 + $0x560] sm:$0xff]
  %v192 = vld [vmem:[%s1 + $0x568] sm:$0xff]
  %v193 = vld [vmem:[%s1 + $0x570] sm:$0xff]
  %v194 = vld [vmem:[%s1 + $0x578] sm:$0xff]
  %v195 = vld [vmem:[%s1 + $0x580] sm:$0xff]
  %v196 = vld [vmem:[%s1 + $0x588] sm:$0xff]
  %v197 = vld [vmem:[%s1 + $0x590] sm:$0xff]
  %v198 = vld [vmem:[%s1 + $0x598] sm:$0xff]
  %v199 = vld [vmem:[%s1 + $0x5a0] sm:$0xff]
  %v200 = vld [vmem:[%s1 + $0x5a8] sm:$0xff]
  %v201 = vld [vmem:[%s1 + $0x5b0] sm:$0xff]
  %v202 = vld [vmem:[%s1 + $0x5b8] sm:$0xff]
  %v203 = vld [vmem:[%s1 + $0x5c0] sm:$0xff]
  %v204 = vld [vmem:[%s1 + $0x5c8] sm:$0xff]
  %v205 = vld [vmem:[%s1 + $0x5d0] sm:$0xff]
  %v206 = vld [vmem:[%s1 + $0x5d8] sm:$0xff]
  %v207 = vld [vmem:[%s1 + $0x5e0] sm:$0xff]
  %v208 = vld [vmem:[%s1 + $0x5e8] sm:$0xff]
  %v209 = vld [vmem:[%s1 + $0x5f0] sm:$0xff]
  %v210 = vld [vmem:[%s1 + $0x5f8] sm:$0xff]
  %v211 = vld [vmem:[%s1 + $0x600] sm:$0xff]
  %v212 = vld [vmem:[%s1 + $0x608] sm:$0xff]
  %v213 = vld [vmem:[%s1 + $0x610] sm:$0xff]
  %v214 = vld [vmem:[%s1 + $0x618] sm:$0xff]
  %v215 = vld [vmem:[%s1 + $0x620] sm:$0xff]
  %v216 = vld [vmem:[%s1 + $0x628] sm:$0xff]
  %v217 = vld [vmem:[%s1 + $0x630] sm:$0xff]
  %v218 = vld [vmem:[%s1 + $0x638] sm:$0xff]
  %v219 = vld [vmem:[%s1 + $0x640] sm:$0xff]
  %v220 = vld [vmem:[%s1 + $0x648] sm:$0xff]
  %v221 = vld [vmem:[%s1 + $0x650] sm:$0xff]
  %v222 = vld [vmem:[%s1 + $0x658] sm:$0xff]
  %v223 = vld [vmem:[%s1 + $0x660] sm:$0xff]
  %v224 = vld [vmem:[%s1 + $0x668] sm:$0xff]
  %v225 = vld [vmem:[%s1 + $0x670] sm:$0xff]
  %v226 = vld [vmem:[%s1 + $0x678] sm:$0xff]
  %v227 = vld [vmem:[%s1 + $0x680] sm:$0xff]
  %v228 = vld [vmem:[%s1 + $0x688] sm:$0xff]
  %v229 = vld [vmem:[%s1 + $0x690] sm:$0xff]
  %v230 = vld [vmem:[%s1 + $0x698] sm:$0xff]
  %v231 = vld [vmem:[%s1 + $0x6a0] sm:$0xff]
  %v232 = vld [vmem:[%s1 + $0x6a8] sm:$0xff]
  %v233 = vld [vmem:[%s1 + $0x6b0] sm:$0xff]
  %v234 = vld [vmem:[%s1 + $0x6b8] sm:$0xff]
  %v235 = vld [vmem:[%s1 + $0x6c0] sm:$0xff]
  %v236 = vld [vmem:[%s1 + $0x6c8] sm:$0xff]
  %v237 = vld [vmem:[%s1 + $0x6d0] sm:$0xff]
  %v238 = vld [vmem:[%s1 + $0x6d8] sm:$0xff]
  %v239 = vld [vmem:[%s1 + $0x6e0] sm:$0xff]
  %v240 = vld [vmem:[%s1 + $0x6e8] sm:$0xff]
  %v241 = vld [vmem:[%s1 + $0x6f0] sm:$0xff]
  %v242 = vld [vmem:[%s1 + $0x6f8] sm:$0xff]
  %v243 = vld [vmem:[%s1 + $0x700] sm:$0xff]
  %v244 = vld [vmem:[%s1 + $0x708] sm:$0xff]
  %v245 = vld [vmem:[%s1 + $0x710] sm:$0xff]
  %v246 = vld [vmem:[%s1 + $0x718] sm:$0xff]
  %v247 = vld [vmem:[%s1 + $0x720] sm:$0xff]
  %v248 = vld [vmem:[%s1 + $0x728] sm:$0xff]
  %v249 = vld [vmem:[%s1 + $0x730] sm:$0xff]
  %v250 = vld [vmem:[%s1 + $0x738] sm:$0xff]
  %v251 = vld [vmem:[%s1 + $0x740] sm:$0xff]
  %v252 = vld [vmem:[%s1 + $0x748] sm:$0xff]
  %v253 = vld [vmem:[%s1 + $0x750] sm:$0xff]
  %v254 = vld [vmem:[%s1 + $0x758] sm:$0xff]
  %v255 = vld [vmem:[%s1 + $0x760] sm:$0xff]
  %v256 = vld [vmem:[%s1 + $0x768] sm:$0xff]
  %v257 = vld [vmem:[%s1 + $0x770] sm:$0xff]
  %v258 = vld [vmem:[%s1 + $0x778] sm:$0xff]
  %v259 = vld [vmem:[%s1 + $0x780] sm:$0xff]
  %v260 = vld [vmem:[%s1 + $0x788] sm:$0xff]
  %v261 = vld [vmem:[%s1 + $0x790] sm:$0xff]
  %v262 = vld [vmem:[%s1 + $0x798] sm:$0xff]
  %v263 = vld [vmem:[%s1 + $0x7a0] sm:$0xff]
  %v264 = vld [vmem:[%s1 + $0x7a8] sm:$0xff]
  %v265 = vld [vmem:[%s1 + $0x7b0] sm:$0xff]
  %v266 = vld [vmem:[%s1 + $0x7b8] sm:$0xff]
  %v267 = vld [vmem:[%s1 + $0x7c0] sm:$0xff]
  %v268 = vld [vmem:[%s1 + $0x7c8] sm:$0xff]
  %v269 = vld [vmem:[%s1 + $0x7d0] sm:$0xff]
  %v270 = vld [vmem:[%s1 + $0x7d8] sm:$0xff]
  %v271 = vld [vmem:[%s1 + $0x7e0] sm:$0xff]
  %v272 = vld [vmem:[%s1 + $0x7e8] sm:$0xff]
  %v273 = vld [vmem:[%s1 + $0x7f0] sm:$0xff]
  %v274 = vld [vmem:[%s1 + $0x7f8] sm:$0xff]
  %v275 = vld [vmem:[%s1 + $0x800] sm:$0xff]
  %v276 = vld [vmem:[%s1 + $0x808] sm:$0xff]
  %v277 = vld [vmem:[%s1 + $0x810] sm:$0xff]
  %v278 = vld [vmem:[%s1 + $0x818] sm:$0xff]
  %v279 = vld [vmem:[%s1 + $0x820] sm:$0xff]
  %v280 = vld [vmem:[%s1 + $0x828] sm:$0xff]
  %v281 = vld [vmem:[%s1 + $0x830] sm:$0xff]
  %v282 = vld [vmem:[%s1 + $0x838] sm:$0xff]
  %v283 = vld [vmem:[%s1 + $0x840] sm:$0xff]
  %v284 = vld [vmem:[%s1 + $0x848] sm:$0xff]
  %v285 = vld [vmem:[%s1 + $0x850] sm:$0xff]
  %v286 = vld [vmem:[%s1 + $0x858] sm:$0xff]
  %v287 = vld [vmem:[%s1 + $0x860] sm:$0xff]
  %v288 = vld [vmem:[%s1 + $0x868] sm:$0xff]
  %v289 = vld [vmem:[%s1 + $0x870] sm:$0xff]
  %v290 = vld [vmem:[%s1 + $0x878] sm:$0xff]
  %v291 = vld [vmem:[%s1 + $0x880] sm:$0xff]
  %v292 = vld [vmem:[%s1 + $0x888] sm:$0xff]
  %v293 = vld [vmem:[%s1 + $0x890] sm:$0xff]
  %v294 = vld [vmem:[%s1 + $0x898] sm:$0xff]
  %v295 = vld [vmem:[%s1 + $0x8a0] sm:$0xff]
  %v296 = vld [vmem:[%s1 + $0x8a8] sm:$0xff]
  %v297 = vld [vmem:[%s1 + $0x8b0] sm:$0xff]
  %v298 = vld [vmem:[%s1 + $0x8b8] sm:$0xff]
  %v299 = vld [vmem:[%s1 + $0x8c0] sm:$0xff]
  %v300 = vld [vmem:[%s1 + $0x8c8] sm:$0xff]
  %v301 = vld [vmem:[%s1 + $0x8d0] sm:$0xff]
  %v302 = vld [vmem:[%s1 + $0x8d8] sm:$0xff]
  %v303 = vld [vmem:[%s1 + $0x8e0] sm:$0xff]
  %v304 = vld [vmem:[%s1 + $0x8e8] sm:$0xff]
  %v305 = vld [vmem:[%s1 + $0x8f0] sm:$0xff]
  %v306 = vld [vmem:[%s1 + $0x8f8] sm:$0xff]
  %v307 = vld [vmem:[%s1 + $0x900] sm:$0xff]
  %v308 = vld [vmem:[%s1 + $0x908] sm:$0xff]
  %v309 = vld [vmem:[%s1 + $0x910] sm:$0xff]
  %v310 = vld [vmem:[%s1 + $0x918] sm:$0xff]
  %v311 = vld [vmem:[%s1 + $0x920] sm:$0xff]
  %v312 = vld [vmem:[%s1 + $0x928] sm:$0xff]
  %v313 = vld [vmem:[%s1 + $0x930] sm:$0xff]
  %v314 = vld [vmem:[%s1 + $0x938] sm:$0xff]
  %v315 = vld [vmem:[%s1 + $0x940] sm:$0xff]
  %v316 = vld [vmem:[%s1 + $0x948] sm:$0xff]
  %v317 = vld [vmem:[%s1 + $0x950] sm:$0xff]
  %v318 = vld [vmem:[%s1 + $0x958] sm:$0xff]
  %v319 = vld [vmem:[%s1 + $0x960] sm:$0xff]
  %v320 = vld [vmem:[%s1 + $0x968] sm:$0xff]
  %v321 = vld [vmem:[%s1 + $0x970] sm:$0xff]
  %v322 = vld [vmem:[%s1 + $0x978] sm:$0xff]
  %v323 = vld [vmem:[%s1 + $0x980] sm:$0xff]
  %v324 = vld [vmem:[%s1 + $0x988] sm:$0xff]
  %v325 = vld [vmem:[%s1 + $0x990] sm:$0xff]
  %v326 = vld [vmem:[%s1 + $0x998] sm:$0xff]
  %v327 = vld [vmem:[%s1 + $0x9a0] sm:$0xff]
  %v328 = vld [vmem:[%s1 + $0x9a8] sm:$0xff]
  %v329 = vld [vmem:[%s1 + $0x9b0] sm:$0xff]
  %v330 = vld [vmem:[%s1 + $0x9b8] sm:$0xff]
  %v331 = vld [vmem:[%s1 + $0x9c0] sm:$0xff]
  %v332 = vld [vmem:[%s1 + $0x9c8] sm:$0xff]
  %v333 = vld [vmem:[%s1 + $0x9d0] sm:$0xff]
  %v334 = vld [vmem:[%s1 + $0x9d8] sm:$0xff]
  %v335 = vld [vmem:[%s1 + $0x9e0] sm:$0xff]
  %v336 = vld [vmem:[%s1 + $0x9e8] sm:$0xff]
  %v337 = vld [vmem:[%s1 + $0x9f0] sm:$0xff]
  %v338 = vld [vmem:[%s1 + $0x9f8] sm:$0xff]
  %v339 = vld [vmem:[%s1 + $0xa00] sm:$0xff]
  %v340 = vld [vmem:[%s1 + $0xa08] sm:$0xff]
  %v341 = vld [vmem:[%s1 + $0xa10] sm:$0xff]
  %v342 = vld [vmem:[%s1 + $0xa18] sm:$0xff]
  %v343 = vld [vmem:[%s1 + $0xa20] sm:$0xff]
  %v344 = vld [vmem:[%s1 + $0xa28] sm:$0xff]
  %v345 = vld [vmem:[%s1 + $0xa30] sm:$0xff]
  %v346 = vld [vmem:[%s1 + $0xa38] sm:$0xff]
  %v347 = vld [vmem:[%s1 + $0xa40] sm:$0xff]
  %v348 = vld [vmem:[%s1 + $0xa48] sm:$0xff]
  %v349 = vld [vmem:[%s1 + $0xa50] sm:$0xff]
  %v350 = vld [vmem:[%s1 + $0xa58] sm:$0xff]
  %v351 = vld [vmem:[%s1 + $0xa60] sm:$0xff]
  %v352 = vld [vmem:[%s1 + $0xa68] sm:$0xff]
  %v353 = vld [vmem:[%s1 + $0xa70] sm:$0xff]
  %v354 = vld [vmem:[%s1 + $0xa78] sm:$0xff]
  %v355 = vld [vmem:[%s1 + $0xa80] sm:$0xff]
  %v356 = vld [vmem:[%s1 + $0xa88] sm:$0xff]
  %v357 = vld [vmem:[%s1 + $0xa90] sm:$0xff]
  %v358 = vld [vmem:[%s1 + $0xa98] sm:$0xff]
  %v359 = vld [vmem:[%s1 + $0xaa0] sm:$0xff]
  %v360 = vld [vmem:[%s1 + $0xaa8] sm:$0xff]
  %v361 = vld [vmem:[%s1 + $0xab0] sm:$0xff]
  %v362 = vld [vmem:[%s1 + $0xab8] sm:$0xff]
  %v363 = vld [vmem:[%s1 + $0xac0] sm:$0xff]
  %v364 = vld [vmem:[%s1 + $0xac8] sm:$0xff]
  %v365 = vld [vmem:[%s1 + $0xad0] sm:$0xff]
  %v366 = vld [vmem:[%s1 + $0xad8] sm:$0xff]
  %v367 = vld [vmem:[%s1 + $0xae0] sm:$0xff]
  %v368 = vld [vmem:[%s1 + $0xae8] sm:$0xff]
  %v369 = vld [vmem:[%s1 + $0xaf0] sm:$0xff]
  %v370 = vld [vmem:[%s1 + $0xaf8] sm:$0xff]
  %v371 = vld [vmem:[%s1 + $0xb00] sm:$0xff]
  %v372 = vld [vmem:[%s1 + $0xb08] sm:$0xff]
  %v373 = vld [vmem:[%s1 + $0xb10] sm:$0xff]
  %v374 = vld [vmem:[%s1 + $0xb18] sm:$0xff]
  %v375 = vld [vmem:[%s1 + $0xb20] sm:$0xff]
  %v376 = vld [vmem:[%s1 + $0xb28] sm:$0xff]
  %v377 = vld [vmem:[%s1 + $0xb30] sm:$0xff]
  %v378 = vld [vmem:[%s1 + $0xb38] sm:$0xff]
  %v379 = vld [vmem:[%s1 + $0xb40] sm:$0xff]
  %v380 = vld [vmem:[%s1 + $0xb48] sm:$0xff]
  %v381 = vld [vmem:[%s1 + $0xb50] sm:$0xff]
  %v382 = vld [vmem:[%s1 + $0xb58] sm:$0xff]
  %v383 = vld [vmem:[%s1 + $0xb60] sm:$0xff]
  %v384 = vld [vmem:[%s1 + $0xb68] sm:$0xff]
  %v385 = vld [vmem:[%s1 + $0xb70] sm:$0xff]
  %v386 = vld [vmem:[%s1 + $0xb78] sm:$0xff]
  %v387 = vld [vmem:[%s1 + $0xb80] sm:$0xff]
  %v388 = vld [vmem:[%s1 + $0xb88] sm:$0xff]
  %v389 = vld [vmem:[%s1 + $0xb90] sm:$0xff]
  %v390 = vld [vmem:[%s1 + $0xb98] sm:$0xff]
  %v391 = vld [vmem:[%s1 + $0xba0] sm:$0xff]
  %v392 = vld [vmem:[%s1 + $0xba8] sm:$0xff]
  %v393 = vld [vmem:[%s1 + $0xbb0] sm:$0xff]
  %v394 = vld [vmem:[%s1 + $0xbb8] sm:$0xff]
  %v395 = vld [vmem:[%s1 + $0xbc0] sm:$0xff]
  %v396 = vld [vmem:[%s1 + $0xbc8] sm:$0xff]
  %v397 = vld [vmem:[%s1 + $0xbd0] sm:$0xff]
  %v398 = vld [vmem:[%s1 + $0xbd8] sm:$0xff]
  %v399 = vld [vmem:[%s1 + $0xbe0] sm:$0xff]
  %v400 = vld [vmem:[%s1 + $0xbe8] sm:$0xff]
  %v401 = vld [vmem:[%s1 + $0xbf0] sm:$0xff]
  %v402 = vld [vmem:[%s1 + $0xbf8] sm:$0xff]
  %vm403 = vcmask 392192
  %v405 = vsel %vm403, %v17, 0
  %v408 = vsel %vm403, %v18, 0
  %410 = vmatprep.subr.mxu0 0.0
  %411 = vmatpush1.msra.mxu0 0.0
  %412 = vmatprep.subr.mxu0 0.0
  %413 = vmatpush1.msra.mxu0 0.0
  %414 = vmatprep.subr.mxu0 0.0
  %415 = vmatpush1.msra.mxu0 0.0
  %416 = vmatprep.subr.mxu0 0.0
  %417 = vmatpush1.msra.mxu0 0.0
  %418 = vmatprep.subr.mxu0 0.0
  %419 = vmatpush1.msra.mxu0 0.0
  %420 = vmatprep.subr.mxu0 0.0
  %421 = vmatpush1.msra.mxu0 0.0
  %422 = vmatprep.subr.mxu0 0.0
  %423 = vmatpush1.msra.mxu0 0.0
  %424 = vmatprep.subr.mxu0 0.0
  %425 = vmatpush1.msra.mxu0 0.0
  %426 = vmatprep.subr.mxu0 0.0
  %427 = vmatpush1.msra.mxu0 0.0
  %428 = vmatprep.subr.mxu0 0.0
  %429 = vmatpush1.msra.mxu0 0.0
  %430 = vmatprep.subr.mxu0 %v340
  %431 = vmatpush1.msra.mxu0 %v339
  %432 = vmatprep.subr.mxu0 %v276
  %433 = vmatpush1.msra.mxu0 %v275
  %434 = vmatprep.subr.mxu0 %v212
  %435 = vmatpush1.msra.mxu0 %v211
  %436 = vmatprep.subr.mxu0 %v148
  %437 = vmatpush1.msra.mxu0 %v147
  %438 = vmatprep.subr.mxu0 %v84
  %439 = vmatpush1.msra.mxu0 %v83
  %440 = vmatprep.subr.mxu0 %v20
  %441 = vmatpush1.msra.mxu0 %v19
  %442 = vmatprep.subr.mxu0 0.0
  %443 = vmatpush2.msra.mxu0 0.0
  %444 = vmatprep.subr.mxu0 0.0
  %445 = vmatpush2.msra.mxu0 0.0
  %446 = vmatprep.subr.mxu0 0.0
  %447 = vmatpush2.msra.mxu0 0.0
  %448 = vmatprep.subr.mxu0 0.0
  %449 = vmatpush2.msra.mxu0 0.0
  %450 = vmatprep.subr.mxu0 0.0
  %451 = vmatpush2.msra.mxu0 0.0
  %452 = vmatprep.subr.mxu0 0.0
  %453 = vmatpush2.msra.mxu0 0.0
  %454 = vmatprep.subr.mxu0 0.0
  %455 = vmatpush2.msra.mxu0 0.0
  %456 = vmatprep.subr.mxu0 0.0
  %457 = vmatpush2.msra.mxu0 0.0
  %458 = vmatprep.subr.mxu0 0.0
  %459 = vmatpush2.msra.mxu0 0.0
  %460 = vmatprep.subr.mxu0 0.0
  %461 = vmatpush2.msra.mxu0 0.0
  %462 = vmatprep.subr.mxu0 0.0
  %463 = vmatpush2.msra.mxu0 0.0
  %464 = vmatprep.subr.mxu0 0.0
  %465 = vmatpush2.msra.mxu0 0.0
  %466 = vmatprep.subr.mxu0 0.0
  %467 = vmatpush2.msra.mxu0 0.0
  %468 = vmatprep.subr.mxu0 0.0
  %469 = vmatpush2.msra.mxu0 0.0
  %470 = vmatprep.subr.mxu0 0.0
  %471 = vmatpush2.msra.mxu0 0.0
  %472 = vmatprep.subr.mxu0 0.0
  %473 = vmatpush2.msra.mxu0 0.0
  %474 = vmatprep.mubr.f32.mxu0 0.0
  %475 = vmatmul.mubr.f32.gmra.mxu0 %v405
  %v476 = vpop.f32.mrf.mxu0
  %v477 = vadd.f32 0.0, %v476
  %v478 = vpop.f32.mrf.mxu0
  %v479 = vadd.f32 0.0, %v478
  %480 = vmatprep.mubr.f32.mxu0 0.0
  %481 = vmatmul.mubr.f32.gmra.mxu0 %v408
  %v482 = vpop.f32.mrf.mxu0
  %v483 = vadd.f32 0.0, %v482
  %v484 = vpop.f32.mrf.mxu0
  %v485 = vadd.f32 0.0, %v484
  %486 = vdwg.mxu0
  %487 = vmatprep.subr.mxu0 0.0
  %488 = vmatpush1.msra.mxu0 0.0
  %489 = vmatprep.subr.mxu0 0.0
  %490 = vmatpush1.msra.mxu0 0.0
  %491 = vmatprep.subr.mxu0 0.0
  %492 = vmatpush1.msra.mxu0 0.0
  %493 = vmatprep.subr.mxu0 0.0
  %494 = vmatpush1.msra.mxu0 0.0
  %495 = vmatprep.subr.mxu0 0.0
  %496 = vmatpush1.msra.mxu0 0.0
  %497 = vmatprep.subr.mxu0 0.0
  %498 = vmatpush1.msra.mxu0 0.0
  %499 = vmatprep.subr.mxu0 0.0
  %500 = vmatpush1.msra.mxu0 0.0
  %501 = vmatprep.subr.mxu0 0.0
  %502 = vmatpush1.msra.mxu0 0.0
  %503 = vmatprep.subr.mxu0 0.0
  %504 = vmatpush1.msra.mxu0 0.0
  %505 = vmatprep.subr.mxu0 0.0
  %506 = vmatpush1.msra.mxu0 0.0
  %507 = vmatprep.subr.mxu0 %v342
  %508 = vmatpush1.msra.mxu0 %v341
  %509 = vmatprep.subr.mxu0 %v278
  %510 = vmatpush1.msra.mxu0 %v277
  %511 = vmatprep.subr.mxu0 %v214
  %512 = vmatpush1.msra.mxu0 %v213
  %513 = vmatprep.subr.mxu0 %v150
  %514 = vmatpush1.msra.mxu0 %v149
  %515 = vmatprep.subr.mxu0 %v86
  %516 = vmatpush1.msra.mxu0 %v85
  %517 = vmatprep.subr.mxu0 %v22
  %518 = vmatpush1.msra.mxu0 %v21
  %519 = vmatprep.subr.mxu0 0.0
  %520 = vmatpush2.msra.mxu0 0.0
  %521 = vmatprep.subr.mxu0 0.0
  %522 = vmatpush2.msra.mxu0 0.0
  %523 = vmatprep.subr.mxu0 0.0
  %524 = vmatpush2.msra.mxu0 0.0
  %525 = vmatprep.subr.mxu0 0.0
  %526 = vmatpush2.msra.mxu0 0.0
  %527 = vmatprep.subr.mxu0 0.0
  %528 = vmatpush2.msra.mxu0 0.0
  %529 = vmatprep.subr.mxu0 0.0
  %530 = vmatpush2.msra.mxu0 0.0
  %531 = vmatprep.subr.mxu0 0.0
  %532 = vmatpush2.msra.mxu0 0.0
  %533 = vmatprep.subr.mxu0 0.0
  %534 = vmatpush2.msra.mxu0 0.0
  %535 = vmatprep.subr.mxu0 0.0
  %536 = vmatpush2.msra.mxu0 0.0
  %537 = vmatprep.subr.mxu0 0.0
  %538 = vmatpush2.msra.mxu0 0.0
  %539 = vmatprep.subr.mxu0 0.0
  %540 = vmatpush2.msra.mxu0 0.0
  %541 = vmatprep.subr.mxu0 0.0
  %542 = vmatpush2.msra.mxu0 0.0
  %543 = vmatprep.subr.mxu0 0.0
  %544 = vmatpush2.msra.mxu0 0.0
  %545 = vmatprep.subr.mxu0 0.0
  %546 = vmatpush2.msra.mxu0 0.0
  %547 = vmatprep.subr.mxu0 0.0
  %548 = vmatpush2.msra.mxu0 0.0
  %549 = vmatprep.subr.mxu0 0.0
  %550 = vmatpush2.msra.mxu0 0.0
  %551 = vmatprep.mubr.f32.mxu0 0.0
  %552 = vmatmul.mubr.f32.gmra.mxu0 %v405
  %v553 = vpop.f32.mrf.mxu0
  %v554 = vadd.f32 0.0, %v553
  %v555 = vpop.f32.mrf.mxu0
  %v556 = vadd.f32 0.0, %v555
  %557 = vmatprep.mubr.f32.mxu0 0.0
  %558 = vmatmul.mubr.f32.gmra.mxu0 %v408
  %v559 = vpop.f32.mrf.mxu0
  %v560 = vadd.f32 0.0, %v559
  %v561 = vpop.f32.mrf.mxu0
  %v562 = vadd.f32 0.0, %v561
  %563 = vdwg.mxu0
  %564 = vmatprep.subr.mxu0 0.0
  %565 = vmatpush1.msra.mxu0 0.0
  %566 = vmatprep.subr.mxu0 0.0
  %567 = vmatpush1.msra.mxu0 0.0
  %568 = vmatprep.subr.mxu0 0.0
  %569 = vmatpush1.msra.mxu0 0.0
  %570 = vmatprep.subr.mxu0 0.0
  %571 = vmatpush1.msra.mxu0 0.0
  %572 = vmatprep.subr.mxu0 0.0
  %573 = vmatpush1.msra.mxu0 0.0
  %574 = vmatprep.subr.mxu0 0.0
  %575 = vmatpush1.msra.mxu0 0.0
  %576 = vmatprep.subr.mxu0 0.0
  %577 = vmatpush1.msra.mxu0 0.0
  %578 = vmatprep.subr.mxu0 0.0
  %579 = vmatpush1.msra.mxu0 0.0
  %580 = vmatprep.subr.mxu0 0.0
  %581 = vmatpush1.msra.mxu0 0.0
  %582 = vmatprep.subr.mxu0 0.0
  %583 = vmatpush1.msra.mxu0 0.0
  %584 = vmatprep.subr.mxu0 %v344
  %585 = vmatpush1.msra.mxu0 %v343
  %586 = vmatprep.subr.mxu0 %v280
  %587 = vmatpush1.msra.mxu0 %v279
  %588 = vmatprep.subr.mxu0 %v216
  %589 = vmatpush1.msra.mxu0 %v215
  %590 = vmatprep.subr.mxu0 %v152
  %591 = vmatpush1.msra.mxu0 %v151
  %592 = vmatprep.subr.mxu0 %v88
  %593 = vmatpush1.msra.mxu0 %v87
  %594 = vmatprep.subr.mxu0 %v24
  %595 = vmatpush1.msra.mxu0 %v23
  %596 = vmatprep.subr.mxu0 0.0
  %597 = vmatpush2.msra.mxu0 0.0
  %598 = vmatprep.subr.mxu0 0.0
  %599 = vmatpush2.msra.mxu0 0.0
  %600 = vmatprep.subr.mxu0 0.0
  %601 = vmatpush2.msra.mxu0 0.0
  %602 = vmatprep.subr.mxu0 0.0
  %603 = vmatpush2.msra.mxu0 0.0
  %604 = vmatprep.subr.mxu0 0.0
  %605 = vmatpush2.msra.mxu0 0.0
  %606 = vmatprep.subr.mxu0 0.0
  %607 = vmatpush2.msra.mxu0 0.0
  %608 = vmatprep.subr.mxu0 0.0
  %609 = vmatpush2.msra.mxu0 0.0
  %610 = vmatprep.subr.mxu0 0.0
  %611 = vmatpush2.msra.mxu0 0.0
  %612 = vmatprep.subr.mxu0 0.0
  %613 = vmatpush2.msra.mxu0 0.0
  %614 = vmatprep.subr.mxu0 0.0
  %615 = vmatpush2.msra.mxu0 0.0
  %616 = vmatprep.subr.mxu0 0.0
  %617 = vmatpush2.msra.mxu0 0.0
  %618 = vmatprep.subr.mxu0 0.0
  %619 = vmatpush2.msra.mxu0 0.0
  %620 = vmatprep.subr.mxu0 0.0
  %621 = vmatpush2.msra.mxu0 0.0
  %622 = vmatprep.subr.mxu0 0.0
  %623 = vmatpush2.msra.mxu0 0.0
  %624 = vmatprep.subr.mxu0 0.0
  %625 = vmatpush2.msra.mxu0 0.0
  %626 = vmatprep.subr.mxu0 0.0
  %627 = vmatpush2.msra.mxu0 0.0
  %628 = vmatprep.mubr.f32.mxu0 0.0
  %629 = vmatmul.mubr.f32.gmra.mxu0 %v405
  %v630 = vpop.f32.mrf.mxu0
  %v631 = vadd.f32 0.0, %v630
  %v632 = vpop.f32.mrf.mxu0
  %v633 = vadd.f32 0.0, %v632
  %634 = vmatprep.mubr.f32.mxu0 0.0
  %635 = vmatmul.mubr.f32.gmra.mxu0 %v408
  %v636 = vpop.f32.mrf.mxu0
  %v637 = vadd.f32 0.0, %v636
  %v638 = vpop.f32.mrf.mxu0
  %v639 = vadd.f32 0.0, %v638
  %640 = vdwg.mxu0
  %641 = vmatprep.subr.mxu0 0.0
  %642 = vmatpush1.msra.mxu0 0.0
  %643 = vmatprep.subr.mxu0 0.0
  %644 = vmatpush1.msra.mxu0 0.0
  %645 = vmatprep.subr.mxu0 0.0
  %646 = vmatpush1.msra.mxu0 0.0
  %647 = vmatprep.subr.mxu0 0.0
  %648 = vmatpush1.msra.mxu0 0.0
  %649 = vmatprep.subr.mxu0 0.0
  %650 = vmatpush1.msra.mxu0 0.0
  %651 = vmatprep.subr.mxu0 0.0
  %652 = vmatpush1.msra.mxu0 0.0
  %653 = vmatprep.subr.mxu0 0.0
  %654 = vmatpush1.msra.mxu0 0.0
  %655 = vmatprep.subr.mxu0 0.0
  %656 = vmatpush1.msra.mxu0 0.0
  %657 = vmatprep.subr.mxu0 0.0
  %658 = vmatpush1.msra.mxu0 0.0
  %659 = vmatprep.subr.mxu0 0.0
  %660 = vmatpush1.msra.mxu0 0.0
  %661 = vmatprep.subr.mxu0 %v346
  %662 = vmatpush1.msra.mxu0 %v345
  %663 = vmatprep.subr.mxu0 %v282
  %664 = vmatpush1.msra.mxu0 %v281
  %665 = vmatprep.subr.mxu0 %v218
  %666 = vmatpush1.msra.mxu0 %v217
  %667 = vmatprep.subr.mxu0 %v154
  %668 = vmatpush1.msra.mxu0 %v153
  %669 = vmatprep.subr.mxu0 %v90
  %670 = vmatpush1.msra.mxu0 %v89
  %671 = vmatprep.subr.mxu0 %v26
  %672 = vmatpush1.msra.mxu0 %v25
  %673 = vmatprep.subr.mxu0 0.0
  %674 = vmatpush2.msra.mxu0 0.0
  %675 = vmatprep.subr.mxu0 0.0
  %676 = vmatpush2.msra.mxu0 0.0
  %677 = vmatprep.subr.mxu0 0.0
  %678 = vmatpush2.msra.mxu0 0.0
  %679 = vmatprep.subr.mxu0 0.0
  %680 = vmatpush2.msra.mxu0 0.0
  %681 = vmatprep.subr.mxu0 0.0
  %682 = vmatpush2.msra.mxu0 0.0
  %683 = vmatprep.subr.mxu0 0.0
  %684 = vmatpush2.msra.mxu0 0.0
  %685 = vmatprep.subr.mxu0 0.0
  %686 = vmatpush2.msra.mxu0 0.0
  %687 = vmatprep.subr.mxu0 0.0
  %688 = vmatpush2.msra.mxu0 0.0
  %689 = vmatprep.subr.mxu0 0.0
  %690 = vmatpush2.msra.mxu0 0.0
  %691 = vmatprep.subr.mxu0 0.0
  %692 = vmatpush2.msra.mxu0 0.0
  %693 = vmatprep.subr.mxu0 0.0
  %694 = vmatpush2.msra.mxu0 0.0
  %695 = vmatprep.subr.mxu0 0.0
  %696 = vmatpush2.msra.mxu0 0.0
  %697 = vmatprep.subr.mxu0 0.0
  %698 = vmatpush2.msra.mxu0 0.0
  %699 = vmatprep.subr.mxu0 0.0
  %700 = vmatpush2.msra.mxu0 0.0
  %701 = vmatprep.subr.mxu0 0.0
  %702 = vmatpush2.msra.mxu0 0.0
  %703 = vmatprep.subr.mxu0 0.0
  %704 = vmatpush2.msra.mxu0 0.0
  %705 = vmatprep.mubr.f32.mxu0 0.0
  %706 = vmatmul.mubr.f32.gmra.mxu0 %v405
  %v707 = vpop.f32.mrf.mxu0
  %v708 = vadd.f32 0.0, %v707
  %v709 = vpop.f32.mrf.mxu0
  %v710 = vadd.f32 0.0, %v709
  %711 = vmatprep.mubr.f32.mxu0 0.0
  %712 = vmatmul.mubr.f32.gmra.mxu0 %v408
  %v713 = vpop.f32.mrf.mxu0
  %v714 = vadd.f32 0.0, %v713
  %v715 = vpop.f32.mrf.mxu0
  %v716 = vadd.f32 0.0, %v715
  %717 = vdwg.mxu0
  %718 = vmatprep.subr.mxu0 0.0
  %719 = vmatpush1.msra.mxu0 0.0
  %720 = vmatprep.subr.mxu0 0.0
  %721 = vmatpush1.msra.mxu0 0.0
  %722 = vmatprep.subr.mxu0 0.0
  %723 = vmatpush1.msra.mxu0 0.0
  %724 = vmatprep.subr.mxu0 0.0
  %725 = vmatpush1.msra.mxu0 0.0
  %726 = vmatprep.subr.mxu0 0.0
  %727 = vmatpush1.msra.mxu0 0.0
  %728 = vmatprep.subr.mxu0 0.0
  %729 = vmatpush1.msra.mxu0 0.0
  %730 = vmatprep.subr.mxu0 0.0
  %731 = vmatpush1.msra.mxu0 0.0
  %732 = vmatprep.subr.mxu0 0.0
  %733 = vmatpush1.msra.mxu0 0.0
  %734 = vmatprep.subr.mxu0 0.0
  %735 = vmatpush1.msra.mxu0 0.0
  %736 = vmatprep.subr.mxu0 0.0
  %737 = vmatpush1.msra.mxu0 0.0
  %738 = vmatprep.subr.mxu0 %v348
  %739 = vmatpush1.msra.mxu0 %v347
  %740 = vmatprep.subr.mxu0 %v284
  %741 = vmatpush1.msra.mxu0 %v283
  %742 = vmatprep.subr.mxu0 %v220
  %743 = vmatpush1.msra.mxu0 %v219
  %744 = vmatprep.subr.mxu0 %v156
  %745 = vmatpush1.msra.mxu0 %v155
  %746 = vmatprep.subr.mxu0 %v92
  %747 = vmatpush1.msra.mxu0 %v91
  %748 = vmatprep.subr.mxu0 %v28
  %749 = vmatpush1.msra.mxu0 %v27
  %750 = vmatprep.subr.mxu0 0.0
  %751 = vmatpush2.msra.mxu0 0.0
  %752 = vmatprep.subr.mxu0 0.0
  %753 = vmatpush2.msra.mxu0 0.0
  %754 = vmatprep.subr.mxu0 0.0
  %755 = vmatpush2.msra.mxu0 0.0
  %756 = vmatprep.subr.mxu0 0.0
  %757 = vmatpush2.msra.mxu0 0.0
  %758 = vmatprep.subr.mxu0 0.0
  %759 = vmatpush2.msra.mxu0 0.0
  %760 = vmatprep.subr.mxu0 0.0
  %761 = vmatpush2.msra.mxu0 0.0
  %762 = vmatprep.subr.mxu0 0.0
  %763 = vmatpush2.msra.mxu0 0.0
  %764 = vmatprep.subr.mxu0 0.0
  %765 = vmatpush2.msra.mxu0 0.0
  %766 = vmatprep.subr.mxu0 0.0
  %767 = vmatpush2.msra.mxu0 0.0
  %768 = vmatprep.subr.mxu0 0.0
  %769 = vmatpush2.msra.mxu0 0.0
  %770 = vmatprep.subr.mxu0 0.0
  %771 = vmatpush2.msra.mxu0 0.0
  %772 = vmatprep.subr.mxu0 0.0
  %773 = vmatpush2.msra.mxu0 0.0
  %774 = vmatprep.subr.mxu0 0.0
  %775 = vmatpush2.msra.mxu0 0.0
  %776 = vmatprep.subr.mxu0 0.0
  %777 = vmatpush2.msra.mxu0 0.0
  %778 = vmatprep.subr.mxu0 0.0
  %779 = vmatpush2.msra.mxu0 0.0
  %780 = vmatprep.subr.mxu0 0.0
  %781 = vmatpush2.msra.mxu0 0.0
  %782 = vmatprep.mubr.f32.mxu0 0.0
  %783 = vmatmul.mubr.f32.gmra.mxu0 %v405
  %v784 = vpop.f32.mrf.mxu0
  %v785 = vadd.f32 0.0, %v784
  %v786 = vpop.f32.mrf.mxu0
  %v787 = vadd.f32 0.0, %v786
  %788 = vmatprep.mubr.f32.mxu0 0.0
  %789 = vmatmul.mubr.f32.gmra.mxu0 %v408
  %v790 = vpop.f32.mrf.mxu0
  %v791 = vadd.f32 0.0, %v790
  %v792 = vpop.f32.mrf.mxu0
  %v793 = vadd.f32 0.0, %v792
  %794 = vdwg.mxu0
  %795 = vmatprep.subr.mxu0 0.0
  %796 = vmatpush1.msra.mxu0 0.0
  %797 = vmatprep.subr.mxu0 0.0
  %798 = vmatpush1.msra.mxu0 0.0
  %799 = vmatprep.subr.mxu0 0.0
  %800 = vmatpush1.msra.mxu0 0.0
  %801 = vmatprep.subr.mxu0 0.0
  %802 = vmatpush1.msra.mxu0 0.0
  %803 = vmatprep.subr.mxu0 0.0
  %804 = vmatpush1.msra.mxu0 0.0
  %805 = vmatprep.subr.mxu0 0.0
  %806 = vmatpush1.msra.mxu0 0.0
  %807 = vmatprep.subr.mxu0 0.0
  %808 = vmatpush1.msra.mxu0 0.0
  %809 = vmatprep.subr.mxu0 0.0
  %810 = vmatpush1.msra.mxu0 0.0
  %811 = vmatprep.subr.mxu0 0.0
  %812 = vmatpush1.msra.mxu0 0.0
  %813 = vmatprep.subr.mxu0 0.0
  %814 = vmatpush1.msra.mxu0 0.0
  %815 = vmatprep.subr.mxu0 %v350
  %816 = vmatpush1.msra.mxu0 %v349
  %817 = vmatprep.subr.mxu0 %v286
  %818 = vmatpush1.msra.mxu0 %v285
  %819 = vmatprep.subr.mxu0 %v222
  %820 = vmatpush1.msra.mxu0 %v221
  %821 = vmatprep.subr.mxu0 %v158
  %822 = vmatpush1.msra.mxu0 %v157
  %823 = vmatprep.subr.mxu0 %v94
  %824 = vmatpush1.msra.mxu0 %v93
  %825 = vmatprep.subr.mxu0 %v30
  %826 = vmatpush1.msra.mxu0 %v29
  %827 = vmatprep.subr.mxu0 0.0
  %828 = vmatpush2.msra.mxu0 0.0
  %829 = vmatprep.subr.mxu0 0.0
  %830 = vmatpush2.msra.mxu0 0.0
  %831 = vmatprep.subr.mxu0 0.0
  %832 = vmatpush2.msra.mxu0 0.0
  %833 = vmatprep.subr.mxu0 0.0
  %834 = vmatpush2.msra.mxu0 0.0
  %835 = vmatprep.subr.mxu0 0.0
  %836 = vmatpush2.msra.mxu0 0.0
  %837 = vmatprep.subr.mxu0 0.0
  %838 = vmatpush2.msra.mxu0 0.0
  %839 = vmatprep.subr.mxu0 0.0
  %840 = vmatpush2.msra.mxu0 0.0
  %841 = vmatprep.subr.mxu0 0.0
  %842 = vmatpush2.msra.mxu0 0.0
  %843 = vmatprep.subr.mxu0 0.0
  %844 = vmatpush2.msra.mxu0 0.0
  %845 = vmatprep.subr.mxu0 0.0
  %846 = vmatpush2.msra.mxu0 0.0
  %847 = vmatprep.subr.mxu0 0.0
  %848 = vmatpush2.msra.mxu0 0.0
  %849 = vmatprep.subr.mxu0 0.0
  %850 = vmatpush2.msra.mxu0 0.0
  %851 = vmatprep.subr.mxu0 0.0
  %852 = vmatpush2.msra.mxu0 0.0
  %853 = vmatprep.subr.mxu0 0.0
  %854 = vmatpush2.msra.mxu0 0.0
  %855 = vmatprep.subr.mxu0 0.0
  %856 = vmatpush2.msra.mxu0 0.0
  %857 = vmatprep.subr.mxu0 0.0
  %858 = vmatpush2.msra.mxu0 0.0
  %859 = vmatprep.mubr.f32.mxu0 0.0
  %860 = vmatmul.mubr.f32.gmra.mxu0 %v405
  %v861 = vpop.f32.mrf.mxu0
  %v862 = vadd.f32 0.0, %v861
  %v863 = vpop.f32.mrf.mxu0
  %v864 = vadd.f32 0.0, %v863
  %865 = vmatprep.mubr.f32.mxu0 0.0
  %866 = vmatmul.mubr.f32.gmra.mxu0 %v408
  %v867 = vpop.f32.mrf.mxu0
  %v868 = vadd.f32 0.0, %v867
  %v869 = vpop.f32.mrf.mxu0
  %v870 = vadd.f32 0.0, %v869
  %871 = vdwg.mxu0
  %872 = vmatprep.subr.mxu0 0.0
  %873 = vmatpush1.msra.mxu0 0.0
  %874 = vmatprep.subr.mxu0 0.0
  %875 = vmatpush1.msra.mxu0 0.0
  %876 = vmatprep.subr.mxu0 0.0
  %877 = vmatpush1.msra.mxu0 0.0
  %878 = vmatprep.subr.mxu0 0.0
  %879 = vmatpush1.msra.mxu0 0.0
  %880 = vmatprep.subr.mxu0 0.0
  %881 = vmatpush1.msra.mxu0 0.0
  %882 = vmatprep.subr.mxu0 0.0
  %883 = vmatpush1.msra.mxu0 0.0
  %884 = vmatprep.subr.mxu0 0.0
  %885 = vmatpush1.msra.mxu0 0.0
  %886 = vmatprep.subr.mxu0 0.0
  %887 = vmatpush1.msra.mxu0 0.0
  %888 = vmatprep.subr.mxu0 0.0
  %889 = vmatpush1.msra.mxu0 0.0
  %890 = vmatprep.subr.mxu0 0.0
  %891 = vmatpush1.msra.mxu0 0.0
  %892 = vmatprep.subr.mxu0 %v352
  %893 = vmatpush1.msra.mxu0 %v351
  %894 = vmatprep.subr.mxu0 %v288
  %895 = vmatpush1.msra.mxu0 %v287
  %896 = vmatprep.subr.mxu0 %v224
  %897 = vmatpush1.msra.mxu0 %v223
  %898 = vmatprep.subr.mxu0 %v160
  %899 = vmatpush1.msra.mxu0 %v159
  %900 = vmatprep.subr.mxu0 %v96
  %901 = vmatpush1.msra.mxu0 %v95
  %902 = vmatprep.subr.mxu0 %v32
  %903 = vmatpush1.msra.mxu0 %v31
  %904 = vmatprep.subr.mxu0 0.0
  %905 = vmatpush2.msra.mxu0 0.0
  %906 = vmatprep.subr.mxu0 0.0
  %907 = vmatpush2.msra.mxu0 0.0
  %908 = vmatprep.subr.mxu0 0.0
  %909 = vmatpush2.msra.mxu0 0.0
  %910 = vmatprep.subr.mxu0 0.0
  %911 = vmatpush2.msra.mxu0 0.0
  %912 = vmatprep.subr.mxu0 0.0
  %913 = vmatpush2.msra.mxu0 0.0
  %914 = vmatprep.subr.mxu0 0.0
  %915 = vmatpush2.msra.mxu0 0.0
  %916 = vmatprep.subr.mxu0 0.0
  %917 = vmatpush2.msra.mxu0 0.0
  %918 = vmatprep.subr.mxu0 0.0
  %919 = vmatpush2.msra.mxu0 0.0
  %920 = vmatprep.subr.mxu0 0.0
  %921 = vmatpush2.msra.mxu0 0.0
  %922 = vmatprep.subr.mxu0 0.0
  %923 = vmatpush2.msra.mxu0 0.0
  %924 = vmatprep.subr.mxu0 0.0
  %925 = vmatpush2.msra.mxu0 0.0
  %926 = vmatprep.subr.mxu0 0.0
  %927 = vmatpush2.msra.mxu0 0.0
  %928 = vmatprep.subr.mxu0 0.0
  %929 = vmatpush2.msra.mxu0 0.0
  %930 = vmatprep.subr.mxu0 0.0
  %931 = vmatpush2.msra.mxu0 0.0
  %932 = vmatprep.subr.mxu0 0.0
  %933 = vmatpush2.msra.mxu0 0.0
  %934 = vmatprep.subr.mxu0 0.0
  %935 = vmatpush2.msra.mxu0 0.0
  %936 = vmatprep.mubr.f32.mxu0 0.0
  %937 = vmatmul.mubr.f32.gmra.mxu0 %v405
  %v938 = vpop.f32.mrf.mxu0
  %v939 = vadd.f32 0.0, %v938
  %v940 = vpop.f32.mrf.mxu0
  %v941 = vadd.f32 0.0, %v940
  %942 = vmatprep.mubr.f32.mxu0 0.0
  %943 = vmatmul.mubr.f32.gmra.mxu0 %v408
  %v944 = vpop.f32.mrf.mxu0
  %v945 = vadd.f32 0.0, %v944
  %v946 = vpop.f32.mrf.mxu0
  %v947 = vadd.f32 0.0, %v946
  %948 = vdwg.mxu0
  %949 = vmatprep.subr.mxu0 0.0
  %950 = vmatpush1.msra.mxu0 0.0
  %951 = vmatprep.subr.mxu0 0.0
  %952 = vmatpush1.msra.mxu0 0.0
  %953 = vmatprep.subr.mxu0 0.0
  %954 = vmatpush1.msra.mxu0 0.0
  %955 = vmatprep.subr.mxu0 0.0
  %956 = vmatpush1.msra.mxu0 0.0
  %957 = vmatprep.subr.mxu0 0.0
  %958 = vmatpush1.msra.mxu0 0.0
  %959 = vmatprep.subr.mxu0 0.0
  %960 = vmatpush1.msra.mxu0 0.0
  %961 = vmatprep.subr.mxu0 0.0
  %962 = vmatpush1.msra.mxu0 0.0
  %963 = vmatprep.subr.mxu0 0.0
  %964 = vmatpush1.msra.mxu0 0.0
  %965 = vmatprep.subr.mxu0 0.0
  %966 = vmatpush1.msra.mxu0 0.0
  %967 = vmatprep.subr.mxu0 0.0
  %968 = vmatpush1.msra.mxu0 0.0
  %969 = vmatprep.subr.mxu0 %v354
  %970 = vmatpush1.msra.mxu0 %v353
  %971 = vmatprep.subr.mxu0 %v290
  %972 = vmatpush1.msra.mxu0 %v289
  %973 = vmatprep.subr.mxu0 %v226
  %974 = vmatpush1.msra.mxu0 %v225
  %975 = vmatprep.subr.mxu0 %v162
  %976 = vmatpush1.msra.mxu0 %v161
  %977 = vmatprep.subr.mxu0 %v98
  %978 = vmatpush1.msra.mxu0 %v97
  %979 = vmatprep.subr.mxu0 %v34
  %980 = vmatpush1.msra.mxu0 %v33
  %981 = vmatprep.subr.mxu0 0.0
  %982 = vmatpush2.msra.mxu0 0.0
  %983 = vmatprep.subr.mxu0 0.0
  %984 = vmatpush2.msra.mxu0 0.0
  %985 = vmatprep.subr.mxu0 0.0
  %986 = vmatpush2.msra.mxu0 0.0
  %987 = vmatprep.subr.mxu0 0.0
  %988 = vmatpush2.msra.mxu0 0.0
  %989 = vmatprep.subr.mxu0 0.0
  %990 = vmatpush2.msra.mxu0 0.0
  %991 = vmatprep.subr.mxu0 0.0
  %992 = vmatpush2.msra.mxu0 0.0
  %993 = vmatprep.subr.mxu0 0.0
  %994 = vmatpush2.msra.mxu0 0.0
  %995 = vmatprep.subr.mxu0 0.0
  %996 = vmatpush2.msra.mxu0 0.0
  %997 = vmatprep.subr.mxu0 0.0
  %998 = vmatpush2.msra.mxu0 0.0
  %999 = vmatprep.subr.mxu0 0.0
  %1000 = vmatpush2.msra.mxu0 0.0
  %1001 = vmatprep.subr.mxu0 0.0
  %1002 = vmatpush2.msra.mxu0 0.0
  %1003 = vmatprep.subr.mxu0 0.0
  %1004 = vmatpush2.msra.mxu0 0.0
  %1005 = vmatprep.subr.mxu0 0.0
  %1006 = vmatpush2.msra.mxu0 0.0
  %1007 = vmatprep.subr.mxu0 0.0
  %1008 = vmatpush2.msra.mxu0 0.0
  %1009 = vmatprep.subr.mxu0 0.0
  %1010 = vmatpush2.msra.mxu0 0.0
  %1011 = vmatprep.subr.mxu0 0.0
  %1012 = vmatpush2.msra.mxu0 0.0
  %1013 = vmatprep.mubr.f32.mxu0 0.0
  %1014 = vmatmul.mubr.f32.gmra.mxu0 %v405
  %v1015 = vpop.f32.mrf.mxu0
  %v1016 = vadd.f32 0.0, %v1015
  %v1017 = vpop.f32.mrf.mxu0
  %v1018 = vadd.f32 0.0, %v1017
  %1019 = vmatprep.mubr.f32.mxu0 0.0
  %1020 = vmatmul.mubr.f32.gmra.mxu0 %v408
  %v1021 = vpop.f32.mrf.mxu0
  %v1022 = vadd.f32 0.0, %v1021
  %v1023 = vpop.f32.mrf.mxu0
  %v1024 = vadd.f32 0.0, %v1023
  %1025 = vdwg.mxu0
  %1026 = vmatprep.subr.mxu0 0.0
  %1027 = vmatpush1.msra.mxu0 0.0
  %1028 = vmatprep.subr.mxu0 0.0
  %1029 = vmatpush1.msra.mxu0 0.0
  %1030 = vmatprep.subr.mxu0 0.0
  %1031 = vmatpush1.msra.mxu0 0.0
  %1032 = vmatprep.subr.mxu0 0.0
  %1033 = vmatpush1.msra.mxu0 0.0
  %1034 = vmatprep.subr.mxu0 0.0
  %1035 = vmatpush1.msra.mxu0 0.0
  %1036 = vmatprep.subr.mxu0 0.0
  %1037 = vmatpush1.msra.mxu0 0.0
  %1038 = vmatprep.subr.mxu0 0.0
  %1039 = vmatpush1.msra.mxu0 0.0
  %1040 = vmatprep.subr.mxu0 0.0
  %1041 = vmatpush1.msra.mxu0 0.0
  %1042 = vmatprep.subr.mxu0 0.0
  %1043 = vmatpush1.msra.mxu0 0.0
  %1044 = vmatprep.subr.mxu0 0.0
  %1045 = vmatpush1.msra.mxu0 0.0
  %1046 = vmatprep.subr.mxu0 %v356
  %1047 = vmatpush1.msra.mxu0 %v355
  %1048 = vmatprep.subr.mxu0 %v292
  %1049 = vmatpush1.msra.mxu0 %v291
  %1050 = vmatprep.subr.mxu0 %v228
  %1051 = vmatpush1.msra.mxu0 %v227
  %1052 = vmatprep.subr.mxu0 %v164
  %1053 = vmatpush1.msra.mxu0 %v163
  %1054 = vmatprep.subr.mxu0 %v100
  %1055 = vmatpush1.msra.mxu0 %v99
  %1056 = vmatprep.subr.mxu0 %v36
  %1057 = vmatpush1.msra.mxu0 %v35
  %1058 = vmatprep.subr.mxu0 0.0
  %1059 = vmatpush2.msra.mxu0 0.0
  %1060 = vmatprep.subr.mxu0 0.0
  %1061 = vmatpush2.msra.mxu0 0.0
  %1062 = vmatprep.subr.mxu0 0.0
  %1063 = vmatpush2.msra.mxu0 0.0
  %1064 = vmatprep.subr.mxu0 0.0
  %1065 = vmatpush2.msra.mxu0 0.0
  %1066 = vmatprep.subr.mxu0 0.0
  %1067 = vmatpush2.msra.mxu0 0.0
  %1068 = vmatprep.subr.mxu0 0.0
  %1069 = vmatpush2.msra.mxu0 0.0
  %1070 = vmatprep.subr.mxu0 0.0
  %1071 = vmatpush2.msra.mxu0 0.0
  %1072 = vmatprep.subr.mxu0 0.0
  %1073 = vmatpush2.msra.mxu0 0.0
  %1074 = vmatprep.subr.mxu0 0.0
  %1075 = vmatpush2.msra.mxu0 0.0
  %1076 = vmatprep.subr.mxu0 0.0
  %1077 = vmatpush2.msra.mxu0 0.0
  %1078 = vmatprep.subr.mxu0 0.0
  %1079 = vmatpush2.msra.mxu0 0.0
  %1080 = vmatprep.subr.mxu0 0.0
  %1081 = vmatpush2.msra.mxu0 0.0
  %1082 = vmatprep.subr.mxu0 0.0
  %1083 = vmatpush2.msra.mxu0 0.0
  %1084 = vmatprep.subr.mxu0 0.0
  %1085 = vmatpush2.msra.mxu0 0.0
  %1086 = vmatprep.subr.mxu0 0.0
  %1087 = vmatpush2.msra.mxu0 0.0
  %1088 = vmatprep.subr.mxu0 0.0
  %1089 = vmatpush2.msra.mxu0 0.0
  %1090 = vmatprep.mubr.f32.mxu0 0.0
  %1091 = vmatmul.mubr.f32.gmra.mxu0 %v405
  %v1092 = vpop.f32.mrf.mxu0
  %v1093 = vadd.f32 0.0, %v1092
  %v1094 = vpop.f32.mrf.mxu0
  %v1095 = vadd.f32 0.0, %v1094
  %1096 = vmatprep.mubr.f32.mxu0 0.0
  %1097 = vmatmul.mubr.f32.gmra.mxu0 %v408
  %v1098 = vpop.f32.mrf.mxu0
  %v1099 = vadd.f32 0.0, %v1098
  %v1100 = vpop.f32.mrf.mxu0
  %v1101 = vadd.f32 0.0, %v1100
  %1102 = vdwg.mxu0
  %1103 = vmatprep.subr.mxu0 0.0
  %1104 = vmatpush1.msra.mxu0 0.0
  %1105 = vmatprep.subr.mxu0 0.0
  %1106 = vmatpush1.msra.mxu0 0.0
  %1107 = vmatprep.subr.mxu0 0.0
  %1108 = vmatpush1.msra.mxu0 0.0
  %1109 = vmatprep.subr.mxu0 0.0
  %1110 = vmatpush1.msra.mxu0 0.0
  %1111 = vmatprep.subr.mxu0 0.0
  %1112 = vmatpush1.msra.mxu0 0.0
  %1113 = vmatprep.subr.mxu0 0.0
  %1114 = vmatpush1.msra.mxu0 0.0
  %1115 = vmatprep.subr.mxu0 0.0
  %1116 = vmatpush1.msra.mxu0 0.0
  %1117 = vmatprep.subr.mxu0 0.0
  %1118 = vmatpush1.msra.mxu0 0.0
  %1119 = vmatprep.subr.mxu0 0.0
  %1120 = vmatpush1.msra.mxu0 0.0
  %1121 = vmatprep.subr.mxu0 0.0
  %1122 = vmatpush1.msra.mxu0 0.0
  %1123 = vmatprep.subr.mxu0 %v358
  %1124 = vmatpush1.msra.mxu0 %v357
  %1125 = vmatprep.subr.mxu0 %v294
  %1126 = vmatpush1.msra.mxu0 %v293
  %1127 = vmatprep.subr.mxu0 %v230
  %1128 = vmatpush1.msra.mxu0 %v229
  %1129 = vmatprep.subr.mxu0 %v166
  %1130 = vmatpush1.msra.mxu0 %v165
  %1131 = vmatprep.subr.mxu0 %v102
  %1132 = vmatpush1.msra.mxu0 %v101
  %1133 = vmatprep.subr.mxu0 %v38
  %1134 = vmatpush1.msra.mxu0 %v37
  %1135 = vmatprep.subr.mxu0 0.0
  %1136 = vmatpush2.msra.mxu0 0.0
  %1137 = vmatprep.subr.mxu0 0.0
  %1138 = vmatpush2.msra.mxu0 0.0
  %1139 = vmatprep.subr.mxu0 0.0
  %1140 = vmatpush2.msra.mxu0 0.0
  %1141 = vmatprep.subr.mxu0 0.0
  %1142 = vmatpush2.msra.mxu0 0.0
  %1143 = vmatprep.subr.mxu0 0.0
  %1144 = vmatpush2.msra.mxu0 0.0
  %1145 = vmatprep.subr.mxu0 0.0
  %1146 = vmatpush2.msra.mxu0 0.0
  %1147 = vmatprep.subr.mxu0 0.0
  %1148 = vmatpush2.msra.mxu0 0.0
  %1149 = vmatprep.subr.mxu0 0.0
  %1150 = vmatpush2.msra.mxu0 0.0
  %1151 = vmatprep.subr.mxu0 0.0
  %1152 = vmatpush2.msra.mxu0 0.0
  %1153 = vmatprep.subr.mxu0 0.0
  %1154 = vmatpush2.msra.mxu0 0.0
  %1155 = vmatprep.subr.mxu0 0.0
  %1156 = vmatpush2.msra.mxu0 0.0
  %1157 = vmatprep.subr.mxu0 0.0
  %1158 = vmatpush2.msra.mxu0 0.0
  %1159 = vmatprep.subr.mxu0 0.0
  %1160 = vmatpush2.msra.mxu0 0.0
  %1161 = vmatprep.subr.mxu0 0.0
  %1162 = vmatpush2.msra.mxu0 0.0
  %1163 = vmatprep.subr.mxu0 0.0
  %1164 = vmatpush2.msra.mxu0 0.0
  %1165 = vmatprep.subr.mxu0 0.0
  %1166 = vmatpush2.msra.mxu0 0.0
  %1167 = vmatprep.mubr.f32.mxu0 0.0
  %1168 = vmatmul.mubr.f32.gmra.mxu0 %v405
  %v1169 = vpop.f32.mrf.mxu0
  %v1170 = vadd.f32 0.0, %v1169
  %v1171 = vpop.f32.mrf.mxu0
  %v1172 = vadd.f32 0.0, %v1171
  %1173 = vmatprep.mubr.f32.mxu0 0.0
  %1174 = vmatmul.mubr.f32.gmra.mxu0 %v408
  %v1175 = vpop.f32.mrf.mxu0
  %v1176 = vadd.f32 0.0, %v1175
  %v1177 = vpop.f32.mrf.mxu0
  %v1178 = vadd.f32 0.0, %v1177
  %1179 = vdwg.mxu0
  %1180 = vmatprep.subr.mxu0 0.0
  %1181 = vmatpush1.msra.mxu0 0.0
  %1182 = vmatprep.subr.mxu0 0.0
  %1183 = vmatpush1.msra.mxu0 0.0
  %1184 = vmatprep.subr.mxu0 0.0
  %1185 = vmatpush1.msra.mxu0 0.0
  %1186 = vmatprep.subr.mxu0 0.0
  %1187 = vmatpush1.msra.mxu0 0.0
  %1188 = vmatprep.subr.mxu0 0.0
  %1189 = vmatpush1.msra.mxu0 0.0
  %1190 = vmatprep.subr.mxu0 0.0
  %1191 = vmatpush1.msra.mxu0 0.0
  %1192 = vmatprep.subr.mxu0 0.0
  %1193 = vmatpush1.msra.mxu0 0.0
  %1194 = vmatprep.subr.mxu0 0.0
  %1195 = vmatpush1.msra.mxu0 0.0
  %1196 = vmatprep.subr.mxu0 0.0
  %1197 = vmatpush1.msra.mxu0 0.0
  %1198 = vmatprep.subr.mxu0 0.0
  %1199 = vmatpush1.msra.mxu0 0.0
  %1200 = vmatprep.subr.mxu0 %v360
  %1201 = vmatpush1.msra.mxu0 %v359
  %1202 = vmatprep.subr.mxu0 %v296
  %1203 = vmatpush1.msra.mxu0 %v295
  %1204 = vmatprep.subr.mxu0 %v232
  %1205 = vmatpush1.msra.mxu0 %v231
  %1206 = vmatprep.subr.mxu0 %v168
  %1207 = vmatpush1.msra.mxu0 %v167
  %1208 = vmatprep.subr.mxu0 %v104
  %1209 = vmatpush1.msra.mxu0 %v103
  %1210 = vmatprep.subr.mxu0 %v40
  %1211 = vmatpush1.msra.mxu0 %v39
  %1212 = vmatprep.subr.mxu0 0.0
  %1213 = vmatpush2.msra.mxu0 0.0
  %1214 = vmatprep.subr.mxu0 0.0
  %1215 = vmatpush2.msra.mxu0 0.0
  %1216 = vmatprep.subr.mxu0 0.0
  %1217 = vmatpush2.msra.mxu0 0.0
  %1218 = vmatprep.subr.mxu0 0.0
  %1219 = vmatpush2.msra.mxu0 0.0
  %1220 = vmatprep.subr.mxu0 0.0
  %1221 = vmatpush2.msra.mxu0 0.0
  %1222 = vmatprep.subr.mxu0 0.0
  %1223 = vmatpush2.msra.mxu0 0.0
  %1224 = vmatprep.subr.mxu0 0.0
  %1225 = vmatpush2.msra.mxu0 0.0
  %1226 = vmatprep.subr.mxu0 0.0
  %1227 = vmatpush2.msra.mxu0 0.0
  %1228 = vmatprep.subr.mxu0 0.0
  %1229 = vmatpush2.msra.mxu0 0.0
  %1230 = vmatprep.subr.mxu0 0.0
  %1231 = vmatpush2.msra.mxu0 0.0
  %1232 = vmatprep.subr.mxu0 0.0
  %1233 = vmatpush2.msra.mxu0 0.0
  %1234 = vmatprep.subr.mxu0 0.0
  %1235 = vmatpush2.msra.mxu0 0.0
  %1236 = vmatprep.subr.mxu0 0.0
  %1237 = vmatpush2.msra.mxu0 0.0
  %1238 = vmatprep.subr.mxu0 0.0
  %1239 = vmatpush2.msra.mxu0 0.0
  %1240 = vmatprep.subr.mxu0 0.0
  %1241 = vmatpush2.msra.mxu0 0.0
  %1242 = vmatprep.subr.mxu0 0.0
  %1243 = vmatpush2.msra.mxu0 0.0
  %1244 = vmatprep.mubr.f32.mxu0 0.0
  %1245 = vmatmul.mubr.f32.gmra.mxu0 %v405
  %v1246 = vpop.f32.mrf.mxu0
  %v1247 = vadd.f32 0.0, %v1246
  %v1248 = vpop.f32.mrf.mxu0
  %v1249 = vadd.f32 0.0, %v1248
  %1250 = vmatprep.mubr.f32.mxu0 0.0
  %1251 = vmatmul.mubr.f32.gmra.mxu0 %v408
  %v1252 = vpop.f32.mrf.mxu0
  %v1253 = vadd.f32 0.0, %v1252
  %v1254 = vpop.f32.mrf.mxu0
  %v1255 = vadd.f32 0.0, %v1254
  %1256 = vdwg.mxu0
  %1257 = vmatprep.subr.mxu0 0.0
  %1258 = vmatpush1.msra.mxu0 0.0
  %1259 = vmatprep.subr.mxu0 0.0
  %1260 = vmatpush1.msra.mxu0 0.0
  %1261 = vmatprep.subr.mxu0 0.0
  %1262 = vmatpush1.msra.mxu0 0.0
  %1263 = vmatprep.subr.mxu0 0.0
  %1264 = vmatpush1.msra.mxu0 0.0
  %1265 = vmatprep.subr.mxu0 0.0
  %1266 = vmatpush1.msra.mxu0 0.0
  %1267 = vmatprep.subr.mxu0 0.0
  %1268 = vmatpush1.msra.mxu0 0.0
  %1269 = vmatprep.subr.mxu0 0.0
  %1270 = vmatpush1.msra.mxu0 0.0
  %1271 = vmatprep.subr.mxu0 0.0
  %1272 = vmatpush1.msra.mxu0 0.0
  %1273 = vmatprep.subr.mxu0 0.0
  %1274 = vmatpush1.msra.mxu0 0.0
  %1275 = vmatprep.subr.mxu0 0.0
  %1276 = vmatpush1.msra.mxu0 0.0
  %1277 = vmatprep.subr.mxu0 %v362
  %1278 = vmatpush1.msra.mxu0 %v361
  %1279 = vmatprep.subr.mxu0 %v298
  %1280 = vmatpush1.msra.mxu0 %v297
  %1281 = vmatprep.subr.mxu0 %v234
  %1282 = vmatpush1.msra.mxu0 %v233
  %1283 = vmatprep.subr.mxu0 %v170
  %1284 = vmatpush1.msra.mxu0 %v169
  %1285 = vmatprep.subr.mxu0 %v106
  %1286 = vmatpush1.msra.mxu0 %v105
  %1287 = vmatprep.subr.mxu0 %v42
  %1288 = vmatpush1.msra.mxu0 %v41
  %1289 = vmatprep.subr.mxu0 0.0
  %1290 = vmatpush2.msra.mxu0 0.0
  %1291 = vmatprep.subr.mxu0 0.0
  %1292 = vmatpush2.msra.mxu0 0.0
  %1293 = vmatprep.subr.mxu0 0.0
  %1294 = vmatpush2.msra.mxu0 0.0
  %1295 = vmatprep.subr.mxu0 0.0
  %1296 = vmatpush2.msra.mxu0 0.0
  %1297 = vmatprep.subr.mxu0 0.0
  %1298 = vmatpush2.msra.mxu0 0.0
  %1299 = vmatprep.subr.mxu0 0.0
  %1300 = vmatpush2.msra.mxu0 0.0
  %1301 = vmatprep.subr.mxu0 0.0
  %1302 = vmatpush2.msra.mxu0 0.0
  %1303 = vmatprep.subr.mxu0 0.0
  %1304 = vmatpush2.msra.mxu0 0.0
  %1305 = vmatprep.subr.mxu0 0.0
  %1306 = vmatpush2.msra.mxu0 0.0
  %1307 = vmatprep.subr.mxu0 0.0
  %1308 = vmatpush2.msra.mxu0 0.0
  %1309 = vmatprep.subr.mxu0 0.0
  %1310 = vmatpush2.msra.mxu0 0.0
  %1311 = vmatprep.subr.mxu0 0.0
  %1312 = vmatpush2.msra.mxu0 0.0
  %1313 = vmatprep.subr.mxu0 0.0
  %1314 = vmatpush2.msra.mxu0 0.0
  %1315 = vmatprep.subr.mxu0 0.0
  %1316 = vmatpush2.msra.mxu0 0.0
  %1317 = vmatprep.subr.mxu0 0.0
  %1318 = vmatpush2.msra.mxu0 0.0
  %1319 = vmatprep.subr.mxu0 0.0
  %1320 = vmatpush2.msra.mxu0 0.0
  %1321 = vmatprep.mubr.f32.mxu0 0.0
  %1322 = vmatmul.mubr.f32.gmra.mxu0 %v405
  %v1323 = vpop.f32.mrf.mxu0
  %v1324 = vadd.f32 0.0, %v1323
  %v1325 = vpop.f32.mrf.mxu0
  %v1326 = vadd.f32 0.0, %v1325
  %1327 = vmatprep.mubr.f32.mxu0 0.0
  %1328 = vmatmul.mubr.f32.gmra.mxu0 %v408
  %v1329 = vpop.f32.mrf.mxu0
  %v1330 = vadd.f32 0.0, %v1329
  %v1331 = vpop.f32.mrf.mxu0
  %v1332 = vadd.f32 0.0, %v1331
  %1333 = vdwg.mxu0
  %1334 = vmatprep.subr.mxu0 0.0
  %1335 = vmatpush1.msra.mxu0 0.0
  %1336 = vmatprep.subr.mxu0 0.0
  %1337 = vmatpush1.msra.mxu0 0.0
  %1338 = vmatprep.subr.mxu0 0.0
  %1339 = vmatpush1.msra.mxu0 0.0
  %1340 = vmatprep.subr.mxu0 0.0
  %1341 = vmatpush1.msra.mxu0 0.0
  %1342 = vmatprep.subr.mxu0 0.0
  %1343 = vmatpush1.msra.mxu0 0.0
  %1344 = vmatprep.subr.mxu0 0.0
  %1345 = vmatpush1.msra.mxu0 0.0
  %1346 = vmatprep.subr.mxu0 0.0
  %1347 = vmatpush1.msra.mxu0 0.0
  %1348 = vmatprep.subr.mxu0 0.0
  %1349 = vmatpush1.msra.mxu0 0.0
  %1350 = vmatprep.subr.mxu0 0.0
  %1351 = vmatpush1.msra.mxu0 0.0
  %1352 = vmatprep.subr.mxu0 0.0
  %1353 = vmatpush1.msra.mxu0 0.0
  %1354 = vmatprep.subr.mxu0 %v364
  %1355 = vmatpush1.msra.mxu0 %v363
  %1356 = vmatprep.subr.mxu0 %v300
  %1357 = vmatpush1.msra.mxu0 %v299
  %1358 = vmatprep.subr.mxu0 %v236
  %1359 = vmatpush1.msra.mxu0 %v235
  %1360 = vmatprep.subr.mxu0 %v172
  %1361 = vmatpush1.msra.mxu0 %v171
  %1362 = vmatprep.subr.mxu0 %v108
  %1363 = vmatpush1.msra.mxu0 %v107
  %1364 = vmatprep.subr.mxu0 %v44
  %1365 = vmatpush1.msra.mxu0 %v43
  %1366 = vmatprep.subr.mxu0 0.0
  %1367 = vmatpush2.msra.mxu0 0.0
  %1368 = vmatprep.subr.mxu0 0.0
  %1369 = vmatpush2.msra.mxu0 0.0
  %1370 = vmatprep.subr.mxu0 0.0
  %1371 = vmatpush2.msra.mxu0 0.0
  %1372 = vmatprep.subr.mxu0 0.0
  %1373 = vmatpush2.msra.mxu0 0.0
  %1374 = vmatprep.subr.mxu0 0.0
  %1375 = vmatpush2.msra.mxu0 0.0
  %1376 = vmatprep.subr.mxu0 0.0
  %1377 = vmatpush2.msra.mxu0 0.0
  %1378 = vmatprep.subr.mxu0 0.0
  %1379 = vmatpush2.msra.mxu0 0.0
  %1380 = vmatprep.subr.mxu0 0.0
  %1381 = vmatpush2.msra.mxu0 0.0
  %1382 = vmatprep.subr.mxu0 0.0
  %1383 = vmatpush2.msra.mxu0 0.0
  %1384 = vmatprep.subr.mxu0 0.0
  %1385 = vmatpush2.msra.mxu0 0.0
  %1386 = vmatprep.subr.mxu0 0.0
  %1387 = vmatpush2.msra.mxu0 0.0
  %1388 = vmatprep.subr.mxu0 0.0
  %1389 = vmatpush2.msra.mxu0 0.0
  %1390 = vmatprep.subr.mxu0 0.0
  %1391 = vmatpush2.msra.mxu0 0.0
  %1392 = vmatprep.subr.mxu0 0.0
  %1393 = vmatpush2.msra.mxu0 0.0
  %1394 = vmatprep.subr.mxu0 0.0
  %1395 = vmatpush2.msra.mxu0 0.0
  %1396 = vmatprep.subr.mxu0 0.0
  %1397 = vmatpush2.msra.mxu0 0.0
  %1398 = vmatprep.mubr.f32.mxu0 0.0
  %1399 = vmatmul.mubr.f32.gmra.mxu0 %v405
  %v1400 = vpop.f32.mrf.mxu0
  %v1401 = vadd.f32 0.0, %v1400
  %v1402 = vpop.f32.mrf.mxu0
  %v1403 = vadd.f32 0.0, %v1402
  %1404 = vmatprep.mubr.f32.mxu0 0.0
  %1405 = vmatmul.mubr.f32.gmra.mxu0 %v408
  %v1406 = vpop.f32.mrf.mxu0
  %v1407 = vadd.f32 0.0, %v1406
  %v1408 = vpop.f32.mrf.mxu0
  %v1409 = vadd.f32 0.0, %v1408
  %1410 = vdwg.mxu0
  %1411 = vmatprep.subr.mxu0 0.0
  %1412 = vmatpush1.msra.mxu0 0.0
  %1413 = vmatprep.subr.mxu0 0.0
  %1414 = vmatpush1.msra.mxu0 0.0
  %1415 = vmatprep.subr.mxu0 0.0
  %1416 = vmatpush1.msra.mxu0 0.0
  %1417 = vmatprep.subr.mxu0 0.0
  %1418 = vmatpush1.msra.mxu0 0.0
  %1419 = vmatprep.subr.mxu0 0.0
  %1420 = vmatpush1.msra.mxu0 0.0
  %1421 = vmatprep.subr.mxu0 0.0
  %1422 = vmatpush1.msra.mxu0 0.0
  %1423 = vmatprep.subr.mxu0 0.0
  %1424 = vmatpush1.msra.mxu0 0.0
  %1425 = vmatprep.subr.mxu0 0.0
  %1426 = vmatpush1.msra.mxu0 0.0
  %1427 = vmatprep.subr.mxu0 0.0
  %1428 = vmatpush1.msra.mxu0 0.0
  %1429 = vmatprep.subr.mxu0 0.0
  %1430 = vmatpush1.msra.mxu0 0.0
  %1431 = vmatprep.subr.mxu0 %v366
  %1432 = vmatpush1.msra.mxu0 %v365
  %1433 = vmatprep.subr.mxu0 %v302
  %1434 = vmatpush1.msra.mxu0 %v301
  %1435 = vmatprep.subr.mxu0 %v238
  %1436 = vmatpush1.msra.mxu0 %v237
  %1437 = vmatprep.subr.mxu0 %v174
  %1438 = vmatpush1.msra.mxu0 %v173
  %1439 = vmatprep.subr.mxu0 %v110
  %1440 = vmatpush1.msra.mxu0 %v109
  %1441 = vmatprep.subr.mxu0 %v46
  %1442 = vmatpush1.msra.mxu0 %v45
  %1443 = vmatprep.subr.mxu0 0.0
  %1444 = vmatpush2.msra.mxu0 0.0
  %1445 = vmatprep.subr.mxu0 0.0
  %1446 = vmatpush2.msra.mxu0 0.0
  %1447 = vmatprep.subr.mxu0 0.0
  %1448 = vmatpush2.msra.mxu0 0.0
  %1449 = vmatprep.subr.mxu0 0.0
  %1450 = vmatpush2.msra.mxu0 0.0
  %1451 = vmatprep.subr.mxu0 0.0
  %1452 = vmatpush2.msra.mxu0 0.0
  %1453 = vmatprep.subr.mxu0 0.0
  %1454 = vmatpush2.msra.mxu0 0.0
  %1455 = vmatprep.subr.mxu0 0.0
  %1456 = vmatpush2.msra.mxu0 0.0
  %1457 = vmatprep.subr.mxu0 0.0
  %1458 = vmatpush2.msra.mxu0 0.0
  %1459 = vmatprep.subr.mxu0 0.0
  %1460 = vmatpush2.msra.mxu0 0.0
  %1461 = vmatprep.subr.mxu0 0.0
  %1462 = vmatpush2.msra.mxu0 0.0
  %1463 = vmatprep.subr.mxu0 0.0
  %1464 = vmatpush2.msra.mxu0 0.0
  %1465 = vmatprep.subr.mxu0 0.0
  %1466 = vmatpush2.msra.mxu0 0.0
  %1467 = vmatprep.subr.mxu0 0.0
  %1468 = vmatpush2.msra.mxu0 0.0
  %1469 = vmatprep.subr.mxu0 0.0
  %1470 = vmatpush2.msra.mxu0 0.0
  %1471 = vmatprep.subr.mxu0 0.0
  %1472 = vmatpush2.msra.mxu0 0.0
  %1473 = vmatprep.subr.mxu0 0.0
  %1474 = vmatpush2.msra.mxu0 0.0
  %1475 = vmatprep.mubr.f32.mxu0 0.0
  %1476 = vmatmul.mubr.f32.gmra.mxu0 %v405
  %v1477 = vpop.f32.mrf.mxu0
  %v1478 = vadd.f32 0.0, %v1477
  %v1479 = vpop.f32.mrf.mxu0
  %v1480 = vadd.f32 0.0, %v1479
  %1481 = vmatprep.mubr.f32.mxu0 0.0
  %1482 = vmatmul.mubr.f32.gmra.mxu0 %v408
  %v1483 = vpop.f32.mrf.mxu0
  %v1484 = vadd.f32 0.0, %v1483
  %v1485 = vpop.f32.mrf.mxu0
  %v1486 = vadd.f32 0.0, %v1485
  %1487 = vdwg.mxu0
  %1488 = vmatprep.subr.mxu0 0.0
  %1489 = vmatpush1.msra.mxu0 0.0
  %1490 = vmatprep.subr.mxu0 0.0
  %1491 = vmatpush1.msra.mxu0 0.0
  %1492 = vmatprep.subr.mxu0 0.0
  %1493 = vmatpush1.msra.mxu0 0.0
  %1494 = vmatprep.subr.mxu0 0.0
  %1495 = vmatpush1.msra.mxu0 0.0
  %1496 = vmatprep.subr.mxu0 0.0
  %1497 = vmatpush1.msra.mxu0 0.0
  %1498 = vmatprep.subr.mxu0 0.0
  %1499 = vmatpush1.msra.mxu0 0.0
  %1500 = vmatprep.subr.mxu0 0.0
  %1501 = vmatpush1.msra.mxu0 0.0
  %1502 = vmatprep.subr.mxu0 0.0
  %1503 = vmatpush1.msra.mxu0 0.0
  %1504 = vmatprep.subr.mxu0 0.0
  %1505 = vmatpush1.msra.mxu0 0.0
  %1506 = vmatprep.subr.mxu0 0.0
  %1507 = vmatpush1.msra.mxu0 0.0
  %1508 = vmatprep.subr.mxu0 %v368
  %1509 = vmatpush1.msra.mxu0 %v367
  %1510 = vmatprep.subr.mxu0 %v304
  %1511 = vmatpush1.msra.mxu0 %v303
  %1512 = vmatprep.subr.mxu0 %v240
  %1513 = vmatpush1.msra.mxu0 %v239
  %1514 = vmatprep.subr.mxu0 %v176
  %1515 = vmatpush1.msra.mxu0 %v175
  %1516 = vmatprep.subr.mxu0 %v112
  %1517 = vmatpush1.msra.mxu0 %v111
  %1518 = vmatprep.subr.mxu0 %v48
  %1519 = vmatpush1.msra.mxu0 %v47
  %1520 = vmatprep.subr.mxu0 0.0
  %1521 = vmatpush2.msra.mxu0 0.0
  %1522 = vmatprep.subr.mxu0 0.0
  %1523 = vmatpush2.msra.mxu0 0.0
  %1524 = vmatprep.subr.mxu0 0.0
  %1525 = vmatpush2.msra.mxu0 0.0
  %1526 = vmatprep.subr.mxu0 0.0
  %1527 = vmatpush2.msra.mxu0 0.0
  %1528 = vmatprep.subr.mxu0 0.0
  %1529 = vmatpush2.msra.mxu0 0.0
  %1530 = vmatprep.subr.mxu0 0.0
  %1531 = vmatpush2.msra.mxu0 0.0
  %1532 = vmatprep.subr.mxu0 0.0
  %1533 = vmatpush2.msra.mxu0 0.0
  %1534 = vmatprep.subr.mxu0 0.0
  %1535 = vmatpush2.msra.mxu0 0.0
  %1536 = vmatprep.subr.mxu0 0.0
  %1537 = vmatpush2.msra.mxu0 0.0
  %1538 = vmatprep.subr.mxu0 0.0
  %1539 = vmatpush2.msra.mxu0 0.0
  %1540 = vmatprep.subr.mxu0 0.0
  %1541 = vmatpush2.msra.mxu0 0.0
  %1542 = vmatprep.subr.mxu0 0.0
  %1543 = vmatpush2.msra.mxu0 0.0
  %1544 = vmatprep.subr.mxu0 0.0
  %1545 = vmatpush2.msra.mxu0 0.0
  %1546 = vmatprep.subr.mxu0 0.0
  %1547 = vmatpush2.msra.mxu0 0.0
  %1548 = vmatprep.subr.mxu0 0.0
  %1549 = vmatpush2.msra.mxu0 0.0
  %1550 = vmatprep.subr.mxu0 0.0
  %1551 = vmatpush2.msra.mxu0 0.0
  %1552 = vmatprep.mubr.f32.mxu0 0.0
  %1553 = vmatmul.mubr.f32.gmra.mxu0 %v405
  %v1554 = vpop.f32.mrf.mxu0
  %v1555 = vadd.f32 0.0, %v1554
  %v1556 = vpop.f32.mrf.mxu0
  %v1557 = vadd.f32 0.0, %v1556
  %1558 = vmatprep.mubr.f32.mxu0 0.0
  %1559 = vmatmul.mubr.f32.gmra.mxu0 %v408
  %v1560 = vpop.f32.mrf.mxu0
  %v1561 = vadd.f32 0.0, %v1560
  %v1562 = vpop.f32.mrf.mxu0
  %v1563 = vadd.f32 0.0, %v1562
  %1564 = vdwg.mxu0
  %1565 = vmatprep.subr.mxu0 0.0
  %1566 = vmatpush1.msra.mxu0 0.0
  %1567 = vmatprep.subr.mxu0 0.0
  %1568 = vmatpush1.msra.mxu0 0.0
  %1569 = vmatprep.subr.mxu0 0.0
  %1570 = vmatpush1.msra.mxu0 0.0
  %1571 = vmatprep.subr.mxu0 0.0
  %1572 = vmatpush1.msra.mxu0 0.0
  %1573 = vmatprep.subr.mxu0 0.0
  %1574 = vmatpush1.msra.mxu0 0.0
  %1575 = vmatprep.subr.mxu0 0.0
  %1576 = vmatpush1.msra.mxu0 0.0
  %1577 = vmatprep.subr.mxu0 0.0
  %1578 = vmatpush1.msra.mxu0 0.0
  %1579 = vmatprep.subr.mxu0 0.0
  %1580 = vmatpush1.msra.mxu0 0.0
  %1581 = vmatprep.subr.mxu0 0.0
  %1582 = vmatpush1.msra.mxu0 0.0
  %1583 = vmatprep.subr.mxu0 0.0
  %1584 = vmatpush1.msra.mxu0 0.0
  %1585 = vmatprep.subr.mxu0 %v370
  %1586 = vmatpush1.msra.mxu0 %v369
  %1587 = vmatprep.subr.mxu0 %v306
  %1588 = vmatpush1.msra.mxu0 %v305
  %1589 = vmatprep.subr.mxu0 %v242
  %1590 = vmatpush1.msra.mxu0 %v241
  %1591 = vmatprep.subr.mxu0 %v178
  %1592 = vmatpush1.msra.mxu0 %v177
  %1593 = vmatprep.subr.mxu0 %v114
  %1594 = vmatpush1.msra.mxu0 %v113
  %1595 = vmatprep.subr.mxu0 %v50
  %1596 = vmatpush1.msra.mxu0 %v49
  %1597 = vmatprep.subr.mxu0 0.0
  %1598 = vmatpush2.msra.mxu0 0.0
  %1599 = vmatprep.subr.mxu0 0.0
  %1600 = vmatpush2.msra.mxu0 0.0
  %1601 = vmatprep.subr.mxu0 0.0
  %1602 = vmatpush2.msra.mxu0 0.0
  %1603 = vmatprep.subr.mxu0 0.0
  %1604 = vmatpush2.msra.mxu0 0.0
  %1605 = vmatprep.subr.mxu0 0.0
  %1606 = vmatpush2.msra.mxu0 0.0
  %1607 = vmatprep.subr.mxu0 0.0
  %1608 = vmatpush2.msra.mxu0 0.0
  %1609 = vmatprep.subr.mxu0 0.0
  %1610 = vmatpush2.msra.mxu0 0.0
  %1611 = vmatprep.subr.mxu0 0.0
  %1612 = vmatpush2.msra.mxu0 0.0
  %1613 = vmatprep.subr.mxu0 0.0
  %1614 = vmatpush2.msra.mxu0 0.0
  %1615 = vmatprep.subr.mxu0 0.0
  %1616 = vmatpush2.msra.mxu0 0.0
  %1617 = vmatprep.subr.mxu0 0.0
  %1618 = vmatpush2.msra.mxu0 0.0
  %1619 = vmatprep.subr.mxu0 0.0
  %1620 = vmatpush2.msra.mxu0 0.0
  %1621 = vmatprep.subr.mxu0 0.0
  %1622 = vmatpush2.msra.mxu0 0.0
  %1623 = vmatprep.subr.mxu0 0.0
  %1624 = vmatpush2.msra.mxu0 0.0
  %1625 = vmatprep.subr.mxu0 0.0
  %1626 = vmatpush2.msra.mxu0 0.0
  %1627 = vmatprep.subr.mxu0 0.0
  %1628 = vmatpush2.msra.mxu0 0.0
  %1629 = vmatprep.mubr.f32.mxu0 0.0
  %1630 = vmatmul.mubr.f32.gmra.mxu0 %v405
  %v1631 = vpop.f32.mrf.mxu0
  %v1632 = vadd.f32 0.0, %v1631
  %v1633 = vpop.f32.mrf.mxu0
  %v1634 = vadd.f32 0.0, %v1633
  %1635 = vmatprep.mubr.f32.mxu0 0.0
  %1636 = vmatmul.mubr.f32.gmra.mxu0 %v408
  %v1637 = vpop.f32.mrf.mxu0
  %v1638 = vadd.f32 0.0, %v1637
  %v1639 = vpop.f32.mrf.mxu0
  %v1640 = vadd.f32 0.0, %v1639
  %1641 = vdwg.mxu0
  %1642 = vmatprep.subr.mxu0 0.0
  %1643 = vmatpush1.msra.mxu0 0.0
  %1644 = vmatprep.subr.mxu0 0.0
  %1645 = vmatpush1.msra.mxu0 0.0
  %1646 = vmatprep.subr.mxu0 0.0
  %1647 = vmatpush1.msra.mxu0 0.0
  %1648 = vmatprep.subr.mxu0 0.0
  %1649 = vmatpush1.msra.mxu0 0.0
  %1650 = vmatprep.subr.mxu0 0.0
  %1651 = vmatpush1.msra.mxu0 0.0
  %1652 = vmatprep.subr.mxu0 0.0
  %1653 = vmatpush1.msra.mxu0 0.0
  %1654 = vmatprep.subr.mxu0 0.0
  %1655 = vmatpush1.msra.mxu0 0.0
  %1656 = vmatprep.subr.mxu0 0.0
  %1657 = vmatpush1.msra.mxu0 0.0
  %1658 = vmatprep.subr.mxu0 0.0
  %1659 = vmatpush1.msra.mxu0 0.0
  %1660 = vmatprep.subr.mxu0 0.0
  %1661 = vmatpush1.msra.mxu0 0.0
  %1662 = vmatprep.subr.mxu0 %v372
  %1663 = vmatpush1.msra.mxu0 %v371
  %1664 = vmatprep.subr.mxu0 %v308
  %1665 = vmatpush1.msra.mxu0 %v307
  %1666 = vmatprep.subr.mxu0 %v244
  %1667 = vmatpush1.msra.mxu0 %v243
  %1668 = vmatprep.subr.mxu0 %v180
  %1669 = vmatpush1.msra.mxu0 %v179
  %1670 = vmatprep.subr.mxu0 %v116
  %1671 = vmatpush1.msra.mxu0 %v115
  %1672 = vmatprep.subr.mxu0 %v52
  %1673 = vmatpush1.msra.mxu0 %v51
  %1674 = vmatprep.subr.mxu0 0.0
  %1675 = vmatpush2.msra.mxu0 0.0
  %1676 = vmatprep.subr.mxu0 0.0
  %1677 = vmatpush2.msra.mxu0 0.0
  %1678 = vmatprep.subr.mxu0 0.0
  %1679 = vmatpush2.msra.mxu0 0.0
  %1680 = vmatprep.subr.mxu0 0.0
  %1681 = vmatpush2.msra.mxu0 0.0
  %1682 = vmatprep.subr.mxu0 0.0
  %1683 = vmatpush2.msra.mxu0 0.0
  %1684 = vmatprep.subr.mxu0 0.0
  %1685 = vmatpush2.msra.mxu0 0.0
  %1686 = vmatprep.subr.mxu0 0.0
  %1687 = vmatpush2.msra.mxu0 0.0
  %1688 = vmatprep.subr.mxu0 0.0
  %1689 = vmatpush2.msra.mxu0 0.0
  %1690 = vmatprep.subr.mxu0 0.0
  %1691 = vmatpush2.msra.mxu0 0.0
  %1692 = vmatprep.subr.mxu0 0.0
  %1693 = vmatpush2.msra.mxu0 0.0
  %1694 = vmatprep.subr.mxu0 0.0
  %1695 = vmatpush2.msra.mxu0 0.0
  %1696 = vmatprep.subr.mxu0 0.0
  %1697 = vmatpush2.msra.mxu0 0.0
  %1698 = vmatprep.subr.mxu0 0.0
  %1699 = vmatpush2.msra.mxu0 0.0
  %1700 = vmatprep.subr.mxu0 0.0
  %1701 = vmatpush2.msra.mxu0 0.0
  %1702 = vmatprep.subr.mxu0 0.0
  %1703 = vmatpush2.msra.mxu0 0.0
  %1704 = vmatprep.subr.mxu0 0.0
  %1705 = vmatpush2.msra.mxu0 0.0
  %1706 = vmatprep.mubr.f32.mxu0 0.0
  %1707 = vmatmul.mubr.f32.gmra.mxu0 %v405
  %v1708 = vpop.f32.mrf.mxu0
  %v1709 = vadd.f32 0.0, %v1708
  %v1710 = vpop.f32.mrf.mxu0
  %v1711 = vadd.f32 0.0, %v1710
  %1712 = vmatprep.mubr.f32.mxu0 0.0
  %1713 = vmatmul.mubr.f32.gmra.mxu0 %v408
  %v1714 = vpop.f32.mrf.mxu0
  %v1715 = vadd.f32 0.0, %v1714
  %v1716 = vpop.f32.mrf.mxu0
  %v1717 = vadd.f32 0.0, %v1716
  %1718 = vdwg.mxu0
  %1719 = vmatprep.subr.mxu0 0.0
  %1720 = vmatpush1.msra.mxu0 0.0
  %1721 = vmatprep.subr.mxu0 0.0
  %1722 = vmatpush1.msra.mxu0 0.0
  %1723 = vmatprep.subr.mxu0 0.0
  %1724 = vmatpush1.msra.mxu0 0.0
  %1725 = vmatprep.subr.mxu0 0.0
  %1726 = vmatpush1.msra.mxu0 0.0
  %1727 = vmatprep.subr.mxu0 0.0
  %1728 = vmatpush1.msra.mxu0 0.0
  %1729 = vmatprep.subr.mxu0 0.0
  %1730 = vmatpush1.msra.mxu0 0.0
  %1731 = vmatprep.subr.mxu0 0.0
  %1732 = vmatpush1.msra.mxu0 0.0
  %1733 = vmatprep.subr.mxu0 0.0
  %1734 = vmatpush1.msra.mxu0 0.0
  %1735 = vmatprep.subr.mxu0 0.0
  %1736 = vmatpush1.msra.mxu0 0.0
  %1737 = vmatprep.subr.mxu0 0.0
  %1738 = vmatpush1.msra.mxu0 0.0
  %1739 = vmatprep.subr.mxu0 %v374
  %1740 = vmatpush1.msra.mxu0 %v373
  %1741 = vmatprep.subr.mxu0 %v310
  %1742 = vmatpush1.msra.mxu0 %v309
  %1743 = vmatprep.subr.mxu0 %v246
  %1744 = vmatpush1.msra.mxu0 %v245
  %1745 = vmatprep.subr.mxu0 %v182
  %1746 = vmatpush1.msra.mxu0 %v181
  %1747 = vmatprep.subr.mxu0 %v118
  %1748 = vmatpush1.msra.mxu0 %v117
  %1749 = vmatprep.subr.mxu0 %v54
  %1750 = vmatpush1.msra.mxu0 %v53
  %1751 = vmatprep.subr.mxu0 0.0
  %1752 = vmatpush2.msra.mxu0 0.0
  %1753 = vmatprep.subr.mxu0 0.0
  %1754 = vmatpush2.msra.mxu0 0.0
  %1755 = vmatprep.subr.mxu0 0.0
  %1756 = vmatpush2.msra.mxu0 0.0
  %1757 = vmatprep.subr.mxu0 0.0
  %1758 = vmatpush2.msra.mxu0 0.0
  %1759 = vmatprep.subr.mxu0 0.0
  %1760 = vmatpush2.msra.mxu0 0.0
  %1761 = vmatprep.subr.mxu0 0.0
  %1762 = vmatpush2.msra.mxu0 0.0
  %1763 = vmatprep.subr.mxu0 0.0
  %1764 = vmatpush2.msra.mxu0 0.0
  %1765 = vmatprep.subr.mxu0 0.0
  %1766 = vmatpush2.msra.mxu0 0.0
  %1767 = vmatprep.subr.mxu0 0.0
  %1768 = vmatpush2.msra.mxu0 0.0
  %1769 = vmatprep.subr.mxu0 0.0
  %1770 = vmatpush2.msra.mxu0 0.0
  %1771 = vmatprep.subr.mxu0 0.0
  %1772 = vmatpush2.msra.mxu0 0.0
  %1773 = vmatprep.subr.mxu0 0.0
  %1774 = vmatpush2.msra.mxu0 0.0
  %1775 = vmatprep.subr.mxu0 0.0
  %1776 = vmatpush2.msra.mxu0 0.0
  %1777 = vmatprep.subr.mxu0 0.0
  %1778 = vmatpush2.msra.mxu0 0.0
  %1779 = vmatprep.subr.mxu0 0.0
  %1780 = vmatpush2.msra.mxu0 0.0
  %1781 = vmatprep.subr.mxu0 0.0
  %1782 = vmatpush2.msra.mxu0 0.0
  %1783 = vmatprep.mubr.f32.mxu0 0.0
  %1784 = vmatmul.mubr.f32.gmra.mxu0 %v405
  %v1785 = vpop.f32.mrf.mxu0
  %v1786 = vadd.f32 0.0, %v1785
  %v1787 = vpop.f32.mrf.mxu0
  %v1788 = vadd.f32 0.0, %v1787
  %1789 = vmatprep.mubr.f32.mxu0 0.0
  %1790 = vmatmul.mubr.f32.gmra.mxu0 %v408
  %v1791 = vpop.f32.mrf.mxu0
  %v1792 = vadd.f32 0.0, %v1791
  %v1793 = vpop.f32.mrf.mxu0
  %v1794 = vadd.f32 0.0, %v1793
  %1795 = vdwg.mxu0
  %1796 = vmatprep.subr.mxu0 0.0
  %1797 = vmatpush1.msra.mxu0 0.0
  %1798 = vmatprep.subr.mxu0 0.0
  %1799 = vmatpush1.msra.mxu0 0.0
  %1800 = vmatprep.subr.mxu0 0.0
  %1801 = vmatpush1.msra.mxu0 0.0
  %1802 = vmatprep.subr.mxu0 0.0
  %1803 = vmatpush1.msra.mxu0 0.0
  %1804 = vmatprep.subr.mxu0 0.0
  %1805 = vmatpush1.msra.mxu0 0.0
  %1806 = vmatprep.subr.mxu0 0.0
  %1807 = vmatpush1.msra.mxu0 0.0
  %1808 = vmatprep.subr.mxu0 0.0
  %1809 = vmatpush1.msra.mxu0 0.0
  %1810 = vmatprep.subr.mxu0 0.0
  %1811 = vmatpush1.msra.mxu0 0.0
  %1812 = vmatprep.subr.mxu0 0.0
  %1813 = vmatpush1.msra.mxu0 0.0
  %1814 = vmatprep.subr.mxu0 0.0
  %1815 = vmatpush1.msra.mxu0 0.0
  %1816 = vmatprep.subr.mxu0 %v376
  %1817 = vmatpush1.msra.mxu0 %v375
  %1818 = vmatprep.subr.mxu0 %v312
  %1819 = vmatpush1.msra.mxu0 %v311
  %1820 = vmatprep.subr.mxu0 %v248
  %1821 = vmatpush1.msra.mxu0 %v247
  %1822 = vmatprep.subr.mxu0 %v184
  %1823 = vmatpush1.msra.mxu0 %v183
  %1824 = vmatprep.subr.mxu0 %v120
  %1825 = vmatpush1.msra.mxu0 %v119
  %1826 = vmatprep.subr.mxu0 %v56
  %1827 = vmatpush1.msra.mxu0 %v55
  %1828 = vmatprep.subr.mxu0 0.0
  %1829 = vmatpush2.msra.mxu0 0.0
  %1830 = vmatprep.subr.mxu0 0.0
  %1831 = vmatpush2.msra.mxu0 0.0
  %1832 = vmatprep.subr.mxu0 0.0
  %1833 = vmatpush2.msra.mxu0 0.0
  %1834 = vmatprep.subr.mxu0 0.0
  %1835 = vmatpush2.msra.mxu0 0.0
  %1836 = vmatprep.subr.mxu0 0.0
  %1837 = vmatpush2.msra.mxu0 0.0
  %1838 = vmatprep.subr.mxu0 0.0
  %1839 = vmatpush2.msra.mxu0 0.0
  %1840 = vmatprep.subr.mxu0 0.0
  %1841 = vmatpush2.msra.mxu0 0.0
  %1842 = vmatprep.subr.mxu0 0.0
  %1843 = vmatpush2.msra.mxu0 0.0
  %1844 = vmatprep.subr.mxu0 0.0
  %1845 = vmatpush2.msra.mxu0 0.0
  %1846 = vmatprep.subr.mxu0 0.0
  %1847 = vmatpush2.msra.mxu0 0.0
  %1848 = vmatprep.subr.mxu0 0.0
  %1849 = vmatpush2.msra.mxu0 0.0
  %1850 = vmatprep.subr.mxu0 0.0
  %1851 = vmatpush2.msra.mxu0 0.0
  %1852 = vmatprep.subr.mxu0 0.0
  %1853 = vmatpush2.msra.mxu0 0.0
  %1854 = vmatprep.subr.mxu0 0.0
  %1855 = vmatpush2.msra.mxu0 0.0
  %1856 = vmatprep.subr.mxu0 0.0
  %1857 = vmatpush2.msra.mxu0 0.0
  %1858 = vmatprep.subr.mxu0 0.0
  %1859 = vmatpush2.msra.mxu0 0.0
  %1860 = vmatprep.mubr.f32.mxu0 0.0
  %1861 = vmatmul.mubr.f32.gmra.mxu0 %v405
  %v1862 = vpop.f32.mrf.mxu0
  %v1863 = vadd.f32 0.0, %v1862
  %v1864 = vpop.f32.mrf.mxu0
  %v1865 = vadd.f32 0.0, %v1864
  %1866 = vmatprep.mubr.f32.mxu0 0.0
  %1867 = vmatmul.mubr.f32.gmra.mxu0 %v408
  %v1868 = vpop.f32.mrf.mxu0
  %v1869 = vadd.f32 0.0, %v1868
  %v1870 = vpop.f32.mrf.mxu0
  %v1871 = vadd.f32 0.0, %v1870
  %1872 = vdwg.mxu0
  %1873 = vmatprep.subr.mxu0 0.0
  %1874 = vmatpush1.msra.mxu0 0.0
  %1875 = vmatprep.subr.mxu0 0.0
  %1876 = vmatpush1.msra.mxu0 0.0
  %1877 = vmatprep.subr.mxu0 0.0
  %1878 = vmatpush1.msra.mxu0 0.0
  %1879 = vmatprep.subr.mxu0 0.0
  %1880 = vmatpush1.msra.mxu0 0.0
  %1881 = vmatprep.subr.mxu0 0.0
  %1882 = vmatpush1.msra.mxu0 0.0
  %1883 = vmatprep.subr.mxu0 0.0
  %1884 = vmatpush1.msra.mxu0 0.0
  %1885 = vmatprep.subr.mxu0 0.0
  %1886 = vmatpush1.msra.mxu0 0.0
  %1887 = vmatprep.subr.mxu0 0.0
  %1888 = vmatpush1.msra.mxu0 0.0
  %1889 = vmatprep.subr.mxu0 0.0
  %1890 = vmatpush1.msra.mxu0 0.0
  %1891 = vmatprep.subr.mxu0 0.0
  %1892 = vmatpush1.msra.mxu0 0.0
  %1893 = vmatprep.subr.mxu0 %v378
  %1894 = vmatpush1.msra.mxu0 %v377
  %1895 = vmatprep.subr.mxu0 %v314
  %1896 = vmatpush1.msra.mxu0 %v313
  %1897 = vmatprep.subr.mxu0 %v250
  %1898 = vmatpush1.msra.mxu0 %v249
  %1899 = vmatprep.subr.mxu0 %v186
  %1900 = vmatpush1.msra.mxu0 %v185
  %1901 = vmatprep.subr.mxu0 %v122
  %1902 = vmatpush1.msra.mxu0 %v121
  %1903 = vmatprep.subr.mxu0 %v58
  %1904 = vmatpush1.msra.mxu0 %v57
  %1905 = vmatprep.subr.mxu0 0.0
  %1906 = vmatpush2.msra.mxu0 0.0
  %1907 = vmatprep.subr.mxu0 0.0
  %1908 = vmatpush2.msra.mxu0 0.0
  %1909 = vmatprep.subr.mxu0 0.0
  %1910 = vmatpush2.msra.mxu0 0.0
  %1911 = vmatprep.subr.mxu0 0.0
  %1912 = vmatpush2.msra.mxu0 0.0
  %1913 = vmatprep.subr.mxu0 0.0
  %1914 = vmatpush2.msra.mxu0 0.0
  %1915 = vmatprep.subr.mxu0 0.0
  %1916 = vmatpush2.msra.mxu0 0.0
  %1917 = vmatprep.subr.mxu0 0.0
  %1918 = vmatpush2.msra.mxu0 0.0
  %1919 = vmatprep.subr.mxu0 0.0
  %1920 = vmatpush2.msra.mxu0 0.0
  %1921 = vmatprep.subr.mxu0 0.0
  %1922 = vmatpush2.msra.mxu0 0.0
  %1923 = vmatprep.subr.mxu0 0.0
  %1924 = vmatpush2.msra.mxu0 0.0
  %1925 = vmatprep.subr.mxu0 0.0
  %1926 = vmatpush2.msra.mxu0 0.0
  %1927 = vmatprep.subr.mxu0 0.0
  %1928 = vmatpush2.msra.mxu0 0.0
  %1929 = vmatprep.subr.mxu0 0.0
  %1930 = vmatpush2.msra.mxu0 0.0
  %1931 = vmatprep.subr.mxu0 0.0
  %1932 = vmatpush2.msra.mxu0 0.0
  %1933 = vmatprep.subr.mxu0 0.0
  %1934 = vmatpush2.msra.mxu0 0.0
  %1935 = vmatprep.subr.mxu0 0.0
  %1936 = vmatpush2.msra.mxu0 0.0
  %1937 = vmatprep.mubr.f32.mxu0 0.0
  %1938 = vmatmul.mubr.f32.gmra.mxu0 %v405
  %v1939 = vpop.f32.mrf.mxu0
  %v1940 = vadd.f32 0.0, %v1939
  %v1941 = vpop.f32.mrf.mxu0
  %v1942 = vadd.f32 0.0, %v1941
  %1943 = vmatprep.mubr.f32.mxu0 0.0
  %1944 = vmatmul.mubr.f32.gmra.mxu0 %v408
  %v1945 = vpop.f32.mrf.mxu0
  %v1946 = vadd.f32 0.0, %v1945
  %v1947 = vpop.f32.mrf.mxu0
  %v1948 = vadd.f32 0.0, %v1947
  %1949 = vdwg.mxu0
  %1950 = vmatprep.subr.mxu0 0.0
  %1951 = vmatpush1.msra.mxu0 0.0
  %1952 = vmatprep.subr.mxu0 0.0
  %1953 = vmatpush1.msra.mxu0 0.0
  %1954 = vmatprep.subr.mxu0 0.0
  %1955 = vmatpush1.msra.mxu0 0.0
  %1956 = vmatprep.subr.mxu0 0.0
  %1957 = vmatpush1.msra.mxu0 0.0
  %1958 = vmatprep.subr.mxu0 0.0
  %1959 = vmatpush1.msra.mxu0 0.0
  %1960 = vmatprep.subr.mxu0 0.0
  %1961 = vmatpush1.msra.mxu0 0.0
  %1962 = vmatprep.subr.mxu0 0.0
  %1963 = vmatpush1.msra.mxu0 0.0
  %1964 = vmatprep.subr.mxu0 0.0
  %1965 = vmatpush1.msra.mxu0 0.0
  %1966 = vmatprep.subr.mxu0 0.0
  %1967 = vmatpush1.msra.mxu0 0.0
  %1968 = vmatprep.subr.mxu0 0.0
  %1969 = vmatpush1.msra.mxu0 0.0
  %1970 = vmatprep.subr.mxu0 %v380
  %1971 = vmatpush1.msra.mxu0 %v379
  %1972 = vmatprep.subr.mxu0 %v316
  %1973 = vmatpush1.msra.mxu0 %v315
  %1974 = vmatprep.subr.mxu0 %v252
  %1975 = vmatpush1.msra.mxu0 %v251
  %1976 = vmatprep.subr.mxu0 %v188
  %1977 = vmatpush1.msra.mxu0 %v187
  %1978 = vmatprep.subr.mxu0 %v124
  %1979 = vmatpush1.msra.mxu0 %v123
  %1980 = vmatprep.subr.mxu0 %v60
  %1981 = vmatpush1.msra.mxu0 %v59
  %1982 = vmatprep.subr.mxu0 0.0
  %1983 = vmatpush2.msra.mxu0 0.0
  %1984 = vmatprep.subr.mxu0 0.0
  %1985 = vmatpush2.msra.mxu0 0.0
  %1986 = vmatprep.subr.mxu0 0.0
  %1987 = vmatpush2.msra.mxu0 0.0
  %1988 = vmatprep.subr.mxu0 0.0
  %1989 = vmatpush2.msra.mxu0 0.0
  %1990 = vmatprep.subr.mxu0 0.0
  %1991 = vmatpush2.msra.mxu0 0.0
  %1992 = vmatprep.subr.mxu0 0.0
  %1993 = vmatpush2.msra.mxu0 0.0
  %1994 = vmatprep.subr.mxu0 0.0
  %1995 = vmatpush2.msra.mxu0 0.0
  %1996 = vmatprep.subr.mxu0 0.0
  %1997 = vmatpush2.msra.mxu0 0.0
  %1998 = vmatprep.subr.mxu0 0.0
  %1999 = vmatpush2.msra.mxu0 0.0
  %2000 = vmatprep.subr.mxu0 0.0
  %2001 = vmatpush2.msra.mxu0 0.0
  %2002 = vmatprep.subr.mxu0 0.0
  %2003 = vmatpush2.msra.mxu0 0.0
  %2004 = vmatprep.subr.mxu0 0.0
  %2005 = vmatpush2.msra.mxu0 0.0
  %2006 = vmatprep.subr.mxu0 0.0
  %2007 = vmatpush2.msra.mxu0 0.0
  %2008 = vmatprep.subr.mxu0 0.0
  %2009 = vmatpush2.msra.mxu0 0.0
  %2010 = vmatprep.subr.mxu0 0.0
  %2011 = vmatpush2.msra.mxu0 0.0
  %2012 = vmatprep.subr.mxu0 0.0
  %2013 = vmatpush2.msra.mxu0 0.0
  %2014 = vmatprep.mubr.f32.mxu0 0.0
  %2015 = vmatmul.mubr.f32.gmra.mxu0 %v405
  %v2016 = vpop.f32.mrf.mxu0
  %v2017 = vadd.f32 0.0, %v2016
  %v2018 = vpop.f32.mrf.mxu0
  %v2019 = vadd.f32 0.0, %v2018
  %2020 = vmatprep.mubr.f32.mxu0 0.0
  %2021 = vmatmul.mubr.f32.gmra.mxu0 %v408
  %v2022 = vpop.f32.mrf.mxu0
  %v2023 = vadd.f32 0.0, %v2022
  %v2024 = vpop.f32.mrf.mxu0
  %v2025 = vadd.f32 0.0, %v2024
  %2026 = vdwg.mxu0
  %2027 = vmatprep.subr.mxu0 0.0
  %2028 = vmatpush1.msra.mxu0 0.0
  %2029 = vmatprep.subr.mxu0 0.0
  %2030 = vmatpush1.msra.mxu0 0.0
  %2031 = vmatprep.subr.mxu0 0.0
  %2032 = vmatpush1.msra.mxu0 0.0
  %2033 = vmatprep.subr.mxu0 0.0
  %2034 = vmatpush1.msra.mxu0 0.0
  %2035 = vmatprep.subr.mxu0 0.0
  %2036 = vmatpush1.msra.mxu0 0.0
  %2037 = vmatprep.subr.mxu0 0.0
  %2038 = vmatpush1.msra.mxu0 0.0
  %2039 = vmatprep.subr.mxu0 0.0
  %2040 = vmatpush1.msra.mxu0 0.0
  %2041 = vmatprep.subr.mxu0 0.0
  %2042 = vmatpush1.msra.mxu0 0.0
  %2043 = vmatprep.subr.mxu0 0.0
  %2044 = vmatpush1.msra.mxu0 0.0
  %2045 = vmatprep.subr.mxu0 0.0
  %2046 = vmatpush1.msra.mxu0 0.0
  %2047 = vmatprep.subr.mxu0 %v382
  %2048 = vmatpush1.msra.mxu0 %v381
  %2049 = vmatprep.subr.mxu0 %v318
  %2050 = vmatpush1.msra.mxu0 %v317
  %2051 = vmatprep.subr.mxu0 %v254
  %2052 = vmatpush1.msra.mxu0 %v253
  %2053 = vmatprep.subr.mxu0 %v190
  %2054 = vmatpush1.msra.mxu0 %v189
  %2055 = vmatprep.subr.mxu0 %v126
  %2056 = vmatpush1.msra.mxu0 %v125
  %2057 = vmatprep.subr.mxu0 %v62
  %2058 = vmatpush1.msra.mxu0 %v61
  %2059 = vmatprep.subr.mxu0 0.0
  %2060 = vmatpush2.msra.mxu0 0.0
  %2061 = vmatprep.subr.mxu0 0.0
  %2062 = vmatpush2.msra.mxu0 0.0
  %2063 = vmatprep.subr.mxu0 0.0
  %2064 = vmatpush2.msra.mxu0 0.0
  %2065 = vmatprep.subr.mxu0 0.0
  %2066 = vmatpush2.msra.mxu0 0.0
  %2067 = vmatprep.subr.mxu0 0.0
  %2068 = vmatpush2.msra.mxu0 0.0
  %2069 = vmatprep.subr.mxu0 0.0
  %2070 = vmatpush2.msra.mxu0 0.0
  %2071 = vmatprep.subr.mxu0 0.0
  %2072 = vmatpush2.msra.mxu0 0.0
  %2073 = vmatprep.subr.mxu0 0.0
  %2074 = vmatpush2.msra.mxu0 0.0
  %2075 = vmatprep.subr.mxu0 0.0
  %2076 = vmatpush2.msra.mxu0 0.0
  %2077 = vmatprep.subr.mxu0 0.0
  %2078 = vmatpush2.msra.mxu0 0.0
  %2079 = vmatprep.subr.mxu0 0.0
  %2080 = vmatpush2.msra.mxu0 0.0
  %2081 = vmatprep.subr.mxu0 0.0
  %2082 = vmatpush2.msra.mxu0 0.0
  %2083 = vmatprep.subr.mxu0 0.0
  %2084 = vmatpush2.msra.mxu0 0.0
  %2085 = vmatprep.subr.mxu0 0.0
  %2086 = vmatpush2.msra.mxu0 0.0
  %2087 = vmatprep.subr.mxu0 0.0
  %2088 = vmatpush2.msra.mxu0 0.0
  %2089 = vmatprep.subr.mxu0 0.0
  %2090 = vmatpush2.msra.mxu0 0.0
  %2091 = vmatprep.mubr.f32.mxu0 0.0
  %2092 = vmatmul.mubr.f32.gmra.mxu0 %v405
  %v2093 = vpop.f32.mrf.mxu0
  %v2094 = vadd.f32 0.0, %v2093
  %v2095 = vpop.f32.mrf.mxu0
  %v2096 = vadd.f32 0.0, %v2095
  %2097 = vmatprep.mubr.f32.mxu0 0.0
  %2098 = vmatmul.mubr.f32.gmra.mxu0 %v408
  %v2099 = vpop.f32.mrf.mxu0
  %v2100 = vadd.f32 0.0, %v2099
  %v2101 = vpop.f32.mrf.mxu0
  %v2102 = vadd.f32 0.0, %v2101
  %2103 = vdwg.mxu0
  %2104 = vmatprep.subr.mxu0 0.0
  %2105 = vmatpush1.msra.mxu0 0.0
  %2106 = vmatprep.subr.mxu0 0.0
  %2107 = vmatpush1.msra.mxu0 0.0
  %2108 = vmatprep.subr.mxu0 0.0
  %2109 = vmatpush1.msra.mxu0 0.0
  %2110 = vmatprep.subr.mxu0 0.0
  %2111 = vmatpush1.msra.mxu0 0.0
  %2112 = vmatprep.subr.mxu0 0.0
  %2113 = vmatpush1.msra.mxu0 0.0
  %2114 = vmatprep.subr.mxu0 0.0
  %2115 = vmatpush1.msra.mxu0 0.0
  %2116 = vmatprep.subr.mxu0 0.0
  %2117 = vmatpush1.msra.mxu0 0.0
  %2118 = vmatprep.subr.mxu0 0.0
  %2119 = vmatpush1.msra.mxu0 0.0
  %2120 = vmatprep.subr.mxu0 0.0
  %2121 = vmatpush1.msra.mxu0 0.0
  %2122 = vmatprep.subr.mxu0 0.0
  %2123 = vmatpush1.msra.mxu0 0.0
  %2124 = vmatprep.subr.mxu0 %v384
  %2125 = vmatpush1.msra.mxu0 %v383
  %2126 = vmatprep.subr.mxu0 %v320
  %2127 = vmatpush1.msra.mxu0 %v319
  %2128 = vmatprep.subr.mxu0 %v256
  %2129 = vmatpush1.msra.mxu0 %v255
  %2130 = vmatprep.subr.mxu0 %v192
  %2131 = vmatpush1.msra.mxu0 %v191
  %2132 = vmatprep.subr.mxu0 %v128
  %2133 = vmatpush1.msra.mxu0 %v127
  %2134 = vmatprep.subr.mxu0 %v64
  %2135 = vmatpush1.msra.mxu0 %v63
  %2136 = vmatprep.subr.mxu0 0.0
  %2137 = vmatpush2.msra.mxu0 0.0
  %2138 = vmatprep.subr.mxu0 0.0
  %2139 = vmatpush2.msra.mxu0 0.0
  %2140 = vmatprep.subr.mxu0 0.0
  %2141 = vmatpush2.msra.mxu0 0.0
  %2142 = vmatprep.subr.mxu0 0.0
  %2143 = vmatpush2.msra.mxu0 0.0
  %2144 = vmatprep.subr.mxu0 0.0
  %2145 = vmatpush2.msra.mxu0 0.0
  %2146 = vmatprep.subr.mxu0 0.0
  %2147 = vmatpush2.msra.mxu0 0.0
  %2148 = vmatprep.subr.mxu0 0.0
  %2149 = vmatpush2.msra.mxu0 0.0
  %2150 = vmatprep.subr.mxu0 0.0
  %2151 = vmatpush2.msra.mxu0 0.0
  %2152 = vmatprep.subr.mxu0 0.0
  %2153 = vmatpush2.msra.mxu0 0.0
  %2154 = vmatprep.subr.mxu0 0.0
  %2155 = vmatpush2.msra.mxu0 0.0
  %2156 = vmatprep.subr.mxu0 0.0
  %2157 = vmatpush2.msra.mxu0 0.0
  %2158 = vmatprep.subr.mxu0 0.0
  %2159 = vmatpush2.msra.mxu0 0.0
  %2160 = vmatprep.subr.mxu0 0.0
  %2161 = vmatpush2.msra.mxu0 0.0
  %2162 = vmatprep.subr.mxu0 0.0
  %2163 = vmatpush2.msra.mxu0 0.0
  %2164 = vmatprep.subr.mxu0 0.0
  %2165 = vmatpush2.msra.mxu0 0.0
  %2166 = vmatprep.subr.mxu0 0.0
  %2167 = vmatpush2.msra.mxu0 0.0
  %2168 = vmatprep.mubr.f32.mxu0 0.0
  %2169 = vmatmul.mubr.f32.gmra.mxu0 %v405
  %v2170 = vpop.f32.mrf.mxu0
  %v2171 = vadd.f32 0.0, %v2170
  %v2172 = vpop.f32.mrf.mxu0
  %v2173 = vadd.f32 0.0, %v2172
  %2174 = vmatprep.mubr.f32.mxu0 0.0
  %2175 = vmatmul.mubr.f32.gmra.mxu0 %v408
  %v2176 = vpop.f32.mrf.mxu0
  %v2177 = vadd.f32 0.0, %v2176
  %v2178 = vpop.f32.mrf.mxu0
  %v2179 = vadd.f32 0.0, %v2178
  %2180 = vdwg.mxu0
  %2181 = vmatprep.subr.mxu0 0.0
  %2182 = vmatpush1.msra.mxu0 0.0
  %2183 = vmatprep.subr.mxu0 0.0
  %2184 = vmatpush1.msra.mxu0 0.0
  %2185 = vmatprep.subr.mxu0 0.0
  %2186 = vmatpush1.msra.mxu0 0.0
  %2187 = vmatprep.subr.mxu0 0.0
  %2188 = vmatpush1.msra.mxu0 0.0
  %2189 = vmatprep.subr.mxu0 0.0
  %2190 = vmatpush1.msra.mxu0 0.0
  %2191 = vmatprep.subr.mxu0 0.0
  %2192 = vmatpush1.msra.mxu0 0.0
  %2193 = vmatprep.subr.mxu0 0.0
  %2194 = vmatpush1.msra.mxu0 0.0
  %2195 = vmatprep.subr.mxu0 0.0
  %2196 = vmatpush1.msra.mxu0 0.0
  %2197 = vmatprep.subr.mxu0 0.0
  %2198 = vmatpush1.msra.mxu0 0.0
  %2199 = vmatprep.subr.mxu0 0.0
  %2200 = vmatpush1.msra.mxu0 0.0
  %2201 = vmatprep.subr.mxu0 %v386
  %2202 = vmatpush1.msra.mxu0 %v385
  %2203 = vmatprep.subr.mxu0 %v322
  %2204 = vmatpush1.msra.mxu0 %v321
  %2205 = vmatprep.subr.mxu0 %v258
  %2206 = vmatpush1.msra.mxu0 %v257
  %2207 = vmatprep.subr.mxu0 %v194
  %2208 = vmatpush1.msra.mxu0 %v193
  %2209 = vmatprep.subr.mxu0 %v130
  %2210 = vmatpush1.msra.mxu0 %v129
  %2211 = vmatprep.subr.mxu0 %v66
  %2212 = vmatpush1.msra.mxu0 %v65
  %2213 = vmatprep.subr.mxu0 0.0
  %2214 = vmatpush2.msra.mxu0 0.0
  %2215 = vmatprep.subr.mxu0 0.0
  %2216 = vmatpush2.msra.mxu0 0.0
  %2217 = vmatprep.subr.mxu0 0.0
  %2218 = vmatpush2.msra.mxu0 0.0
  %2219 = vmatprep.subr.mxu0 0.0
  %2220 = vmatpush2.msra.mxu0 0.0
  %2221 = vmatprep.subr.mxu0 0.0
  %2222 = vmatpush2.msra.mxu0 0.0
  %2223 = vmatprep.subr.mxu0 0.0
  %2224 = vmatpush2.msra.mxu0 0.0
  %2225 = vmatprep.subr.mxu0 0.0
  %2226 = vmatpush2.msra.mxu0 0.0
  %2227 = vmatprep.subr.mxu0 0.0
  %2228 = vmatpush2.msra.mxu0 0.0
  %2229 = vmatprep.subr.mxu0 0.0
  %2230 = vmatpush2.msra.mxu0 0.0
  %2231 = vmatprep.subr.mxu0 0.0
  %2232 = vmatpush2.msra.mxu0 0.0
  %2233 = vmatprep.subr.mxu0 0.0
  %2234 = vmatpush2.msra.mxu0 0.0
  %2235 = vmatprep.subr.mxu0 0.0
  %2236 = vmatpush2.msra.mxu0 0.0
  %2237 = vmatprep.subr.mxu0 0.0
  %2238 = vmatpush2.msra.mxu0 0.0
  %2239 = vmatprep.subr.mxu0 0.0
  %2240 = vmatpush2.msra.mxu0 0.0
  %2241 = vmatprep.subr.mxu0 0.0
  %2242 = vmatpush2.msra.mxu0 0.0
  %2243 = vmatprep.subr.mxu0 0.0
  %2244 = vmatpush2.msra.mxu0 0.0
  %2245 = vmatprep.mubr.f32.mxu0 0.0
  %2246 = vmatmul.mubr.f32.gmra.mxu0 %v405
  %v2247 = vpop.f32.mrf.mxu0
  %v2248 = vadd.f32 0.0, %v2247
  %v2249 = vpop.f32.mrf.mxu0
  %v2250 = vadd.f32 0.0, %v2249
  %2251 = vmatprep.mubr.f32.mxu0 0.0
  %2252 = vmatmul.mubr.f32.gmra.mxu0 %v408
  %v2253 = vpop.f32.mrf.mxu0
  %v2254 = vadd.f32 0.0, %v2253
  %v2255 = vpop.f32.mrf.mxu0
  %v2256 = vadd.f32 0.0, %v2255
  %2257 = vdwg.mxu0
  %2258 = vmatprep.subr.mxu0 0.0
  %2259 = vmatpush1.msra.mxu0 0.0
  %2260 = vmatprep.subr.mxu0 0.0
  %2261 = vmatpush1.msra.mxu0 0.0
  %2262 = vmatprep.subr.mxu0 0.0
  %2263 = vmatpush1.msra.mxu0 0.0
  %2264 = vmatprep.subr.mxu0 0.0
  %2265 = vmatpush1.msra.mxu0 0.0
  %2266 = vmatprep.subr.mxu0 0.0
  %2267 = vmatpush1.msra.mxu0 0.0
  %2268 = vmatprep.subr.mxu0 0.0
  %2269 = vmatpush1.msra.mxu0 0.0
  %2270 = vmatprep.subr.mxu0 0.0
  %2271 = vmatpush1.msra.mxu0 0.0
  %2272 = vmatprep.subr.mxu0 0.0
  %2273 = vmatpush1.msra.mxu0 0.0
  %2274 = vmatprep.subr.mxu0 0.0
  %2275 = vmatpush1.msra.mxu0 0.0
  %2276 = vmatprep.subr.mxu0 0.0
  %2277 = vmatpush1.msra.mxu0 0.0
  %2278 = vmatprep.subr.mxu0 %v388
  %2279 = vmatpush1.msra.mxu0 %v387
  %2280 = vmatprep.subr.mxu0 %v324
  %2281 = vmatpush1.msra.mxu0 %v323
  %2282 = vmatprep.subr.mxu0 %v260
  %2283 = vmatpush1.msra.mxu0 %v259
  %2284 = vmatprep.subr.mxu0 %v196
  %2285 = vmatpush1.msra.mxu0 %v195
  %2286 = vmatprep.subr.mxu0 %v132
  %2287 = vmatpush1.msra.mxu0 %v131
  %2288 = vmatprep.subr.mxu0 %v68
  %2289 = vmatpush1.msra.mxu0 %v67
  %2290 = vmatprep.subr.mxu0 0.0
  %2291 = vmatpush2.msra.mxu0 0.0
  %2292 = vmatprep.subr.mxu0 0.0
  %2293 = vmatpush2.msra.mxu0 0.0
  %2294 = vmatprep.subr.mxu0 0.0
  %2295 = vmatpush2.msra.mxu0 0.0
  %2296 = vmatprep.subr.mxu0 0.0
  %2297 = vmatpush2.msra.mxu0 0.0
  %2298 = vmatprep.subr.mxu0 0.0
  %2299 = vmatpush2.msra.mxu0 0.0
  %2300 = vmatprep.subr.mxu0 0.0
  %2301 = vmatpush2.msra.mxu0 0.0
  %2302 = vmatprep.subr.mxu0 0.0
  %2303 = vmatpush2.msra.mxu0 0.0
  %2304 = vmatprep.subr.mxu0 0.0
  %2305 = vmatpush2.msra.mxu0 0.0
  %2306 = vmatprep.subr.mxu0 0.0
  %2307 = vmatpush2.msra.mxu0 0.0
  %2308 = vmatprep.subr.mxu0 0.0
  %2309 = vmatpush2.msra.mxu0 0.0
  %2310 = vmatprep.subr.mxu0 0.0
  %2311 = vmatpush2.msra.mxu0 0.0
  %2312 = vmatprep.subr.mxu0 0.0
  %2313 = vmatpush2.msra.mxu0 0.0
  %2314 = vmatprep.subr.mxu0 0.0
  %2315 = vmatpush2.msra.mxu0 0.0
  %2316 = vmatprep.subr.mxu0 0.0
  %2317 = vmatpush2.msra.mxu0 0.0
  %2318 = vmatprep.subr.mxu0 0.0
  %2319 = vmatpush2.msra.mxu0 0.0
  %2320 = vmatprep.subr.mxu0 0.0
  %2321 = vmatpush2.msra.mxu0 0.0
  %2322 = vmatprep.mubr.f32.mxu0 0.0
  %2323 = vmatmul.mubr.f32.gmra.mxu0 %v405
  %v2324 = vpop.f32.mrf.mxu0
  %v2325 = vadd.f32 0.0, %v2324
  %v2326 = vpop.f32.mrf.mxu0
  %v2327 = vadd.f32 0.0, %v2326
  %2328 = vmatprep.mubr.f32.mxu0 0.0
  %2329 = vmatmul.mubr.f32.gmra.mxu0 %v408
  %v2330 = vpop.f32.mrf.mxu0
  %v2331 = vadd.f32 0.0, %v2330
  %v2332 = vpop.f32.mrf.mxu0
  %v2333 = vadd.f32 0.0, %v2332
  %2334 = vdwg.mxu0
  %2335 = vmatprep.subr.mxu0 0.0
  %2336 = vmatpush1.msra.mxu0 0.0
  %2337 = vmatprep.subr.mxu0 0.0
  %2338 = vmatpush1.msra.mxu0 0.0
  %2339 = vmatprep.subr.mxu0 0.0
  %2340 = vmatpush1.msra.mxu0 0.0
  %2341 = vmatprep.subr.mxu0 0.0
  %2342 = vmatpush1.msra.mxu0 0.0
  %2343 = vmatprep.subr.mxu0 0.0
  %2344 = vmatpush1.msra.mxu0 0.0
  %2345 = vmatprep.subr.mxu0 0.0
  %2346 = vmatpush1.msra.mxu0 0.0
  %2347 = vmatprep.subr.mxu0 0.0
  %2348 = vmatpush1.msra.mxu0 0.0
  %2349 = vmatprep.subr.mxu0 0.0
  %2350 = vmatpush1.msra.mxu0 0.0
  %2351 = vmatprep.subr.mxu0 0.0
  %2352 = vmatpush1.msra.mxu0 0.0
  %2353 = vmatprep.subr.mxu0 0.0
  %2354 = vmatpush1.msra.mxu0 0.0
  %2355 = vmatprep.subr.mxu0 %v390
  %2356 = vmatpush1.msra.mxu0 %v389
  %2357 = vmatprep.subr.mxu0 %v326
  %2358 = vmatpush1.msra.mxu0 %v325
  %2359 = vmatprep.subr.mxu0 %v262
  %2360 = vmatpush1.msra.mxu0 %v261
  %2361 = vmatprep.subr.mxu0 %v198
  %2362 = vmatpush1.msra.mxu0 %v197
  %2363 = vmatprep.subr.mxu0 %v134
  %2364 = vmatpush1.msra.mxu0 %v133
  %2365 = vmatprep.subr.mxu0 %v70
  %2366 = vmatpush1.msra.mxu0 %v69
  %2367 = vmatprep.subr.mxu0 0.0
  %2368 = vmatpush2.msra.mxu0 0.0
  %2369 = vmatprep.subr.mxu0 0.0
  %2370 = vmatpush2.msra.mxu0 0.0
  %2371 = vmatprep.subr.mxu0 0.0
  %2372 = vmatpush2.msra.mxu0 0.0
  %2373 = vmatprep.subr.mxu0 0.0
  %2374 = vmatpush2.msra.mxu0 0.0
  %2375 = vmatprep.subr.mxu0 0.0
  %2376 = vmatpush2.msra.mxu0 0.0
  %2377 = vmatprep.subr.mxu0 0.0
  %2378 = vmatpush2.msra.mxu0 0.0
  %2379 = vmatprep.subr.mxu0 0.0
  %2380 = vmatpush2.msra.mxu0 0.0
  %2381 = vmatprep.subr.mxu0 0.0
  %2382 = vmatpush2.msra.mxu0 0.0
  %2383 = vmatprep.subr.mxu0 0.0
  %2384 = vmatpush2.msra.mxu0 0.0
  %2385 = vmatprep.subr.mxu0 0.0
  %2386 = vmatpush2.msra.mxu0 0.0
  %2387 = vmatprep.subr.mxu0 0.0
  %2388 = vmatpush2.msra.mxu0 0.0
  %2389 = vmatprep.subr.mxu0 0.0
  %2390 = vmatpush2.msra.mxu0 0.0
  %2391 = vmatprep.subr.mxu0 0.0
  %2392 = vmatpush2.msra.mxu0 0.0
  %2393 = vmatprep.subr.mxu0 0.0
  %2394 = vmatpush2.msra.mxu0 0.0
  %2395 = vmatprep.subr.mxu0 0.0
  %2396 = vmatpush2.msra.mxu0 0.0
  %2397 = vmatprep.subr.mxu0 0.0
  %2398 = vmatpush2.msra.mxu0 0.0
  %2399 = vmatprep.mubr.f32.mxu0 0.0
  %2400 = vmatmul.mubr.f32.gmra.mxu0 %v405
  %v2401 = vpop.f32.mrf.mxu0
  %v2402 = vadd.f32 0.0, %v2401
  %v2403 = vpop.f32.mrf.mxu0
  %v2404 = vadd.f32 0.0, %v2403
  %2405 = vmatprep.mubr.f32.mxu0 0.0
  %2406 = vmatmul.mubr.f32.gmra.mxu0 %v408
  %v2407 = vpop.f32.mrf.mxu0
  %v2408 = vadd.f32 0.0, %v2407
  %v2409 = vpop.f32.mrf.mxu0
  %v2410 = vadd.f32 0.0, %v2409
  %2411 = vdwg.mxu0
  %2412 = vmatprep.subr.mxu0 0.0
  %2413 = vmatpush1.msra.mxu0 0.0
  %2414 = vmatprep.subr.mxu0 0.0
  %2415 = vmatpush1.msra.mxu0 0.0
  %2416 = vmatprep.subr.mxu0 0.0
  %2417 = vmatpush1.msra.mxu0 0.0
  %2418 = vmatprep.subr.mxu0 0.0
  %2419 = vmatpush1.msra.mxu0 0.0
  %2420 = vmatprep.subr.mxu0 0.0
  %2421 = vmatpush1.msra.mxu0 0.0
  %2422 = vmatprep.subr.mxu0 0.0
  %2423 = vmatpush1.msra.mxu0 0.0
  %2424 = vmatprep.subr.mxu0 0.0
  %2425 = vmatpush1.msra.mxu0 0.0
  %2426 = vmatprep.subr.mxu0 0.0
  %2427 = vmatpush1.msra.mxu0 0.0
  %2428 = vmatprep.subr.mxu0 0.0
  %2429 = vmatpush1.msra.mxu0 0.0
  %2430 = vmatprep.subr.mxu0 0.0
  %2431 = vmatpush1.msra.mxu0 0.0
  %2432 = vmatprep.subr.mxu0 %v392
  %2433 = vmatpush1.msra.mxu0 %v391
  %2434 = vmatprep.subr.mxu0 %v328
  %2435 = vmatpush1.msra.mxu0 %v327
  %2436 = vmatprep.subr.mxu0 %v264
  %2437 = vmatpush1.msra.mxu0 %v263
  %2438 = vmatprep.subr.mxu0 %v200
  %2439 = vmatpush1.msra.mxu0 %v199
  %2440 = vmatprep.subr.mxu0 %v136
  %2441 = vmatpush1.msra.mxu0 %v135
  %2442 = vmatprep.subr.mxu0 %v72
  %2443 = vmatpush1.msra.mxu0 %v71
  %2444 = vmatprep.subr.mxu0 0.0
  %2445 = vmatpush2.msra.mxu0 0.0
  %2446 = vmatprep.subr.mxu0 0.0
  %2447 = vmatpush2.msra.mxu0 0.0
  %2448 = vmatprep.subr.mxu0 0.0
  %2449 = vmatpush2.msra.mxu0 0.0
  %2450 = vmatprep.subr.mxu0 0.0
  %2451 = vmatpush2.msra.mxu0 0.0
  %2452 = vmatprep.subr.mxu0 0.0
  %2453 = vmatpush2.msra.mxu0 0.0
  %2454 = vmatprep.subr.mxu0 0.0
  %2455 = vmatpush2.msra.mxu0 0.0
  %2456 = vmatprep.subr.mxu0 0.0
  %2457 = vmatpush2.msra.mxu0 0.0
  %2458 = vmatprep.subr.mxu0 0.0
  %2459 = vmatpush2.msra.mxu0 0.0
  %2460 = vmatprep.subr.mxu0 0.0
  %2461 = vmatpush2.msra.mxu0 0.0
  %2462 = vmatprep.subr.mxu0 0.0
  %2463 = vmatpush2.msra.mxu0 0.0
  %2464 = vmatprep.subr.mxu0 0.0
  %2465 = vmatpush2.msra.mxu0 0.0
  %2466 = vmatprep.subr.mxu0 0.0
  %2467 = vmatpush2.msra.mxu0 0.0
  %2468 = vmatprep.subr.mxu0 0.0
  %2469 = vmatpush2.msra.mxu0 0.0
  %2470 = vmatprep.subr.mxu0 0.0
  %2471 = vmatpush2.msra.mxu0 0.0
  %2472 = vmatprep.subr.mxu0 0.0
  %2473 = vmatpush2.msra.mxu0 0.0
  %2474 = vmatprep.subr.mxu0 0.0
  %2475 = vmatpush2.msra.mxu0 0.0
  %2476 = vmatprep.mubr.f32.mxu0 0.0
  %2477 = vmatmul.mubr.f32.gmra.mxu0 %v405
  %v2478 = vpop.f32.mrf.mxu0
  %v2479 = vadd.f32 0.0, %v2478
  %v2480 = vpop.f32.mrf.mxu0
  %v2481 = vadd.f32 0.0, %v2480
  %2482 = vmatprep.mubr.f32.mxu0 0.0
  %2483 = vmatmul.mubr.f32.gmra.mxu0 %v408
  %v2484 = vpop.f32.mrf.mxu0
  %v2485 = vadd.f32 0.0, %v2484
  %v2486 = vpop.f32.mrf.mxu0
  %v2487 = vadd.f32 0.0, %v2486
  %2488 = vdwg.mxu0
  %2489 = vmatprep.subr.mxu0 0.0
  %2490 = vmatpush1.msra.mxu0 0.0
  %2491 = vmatprep.subr.mxu0 0.0
  %2492 = vmatpush1.msra.mxu0 0.0
  %2493 = vmatprep.subr.mxu0 0.0
  %2494 = vmatpush1.msra.mxu0 0.0
  %2495 = vmatprep.subr.mxu0 0.0
  %2496 = vmatpush1.msra.mxu0 0.0
  %2497 = vmatprep.subr.mxu0 0.0
  %2498 = vmatpush1.msra.mxu0 0.0
  %2499 = vmatprep.subr.mxu0 0.0
  %2500 = vmatpush1.msra.mxu0 0.0
  %2501 = vmatprep.subr.mxu0 0.0
  %2502 = vmatpush1.msra.mxu0 0.0
  %2503 = vmatprep.subr.mxu0 0.0
  %2504 = vmatpush1.msra.mxu0 0.0
  %2505 = vmatprep.subr.mxu0 0.0
  %2506 = vmatpush1.msra.mxu0 0.0
  %2507 = vmatprep.subr.mxu0 0.0
  %2508 = vmatpush1.msra.mxu0 0.0
  %2509 = vmatprep.subr.mxu0 %v394
  %2510 = vmatpush1.msra.mxu0 %v393
  %2511 = vmatprep.subr.mxu0 %v330
  %2512 = vmatpush1.msra.mxu0 %v329
  %2513 = vmatprep.subr.mxu0 %v266
  %2514 = vmatpush1.msra.mxu0 %v265
  %2515 = vmatprep.subr.mxu0 %v202
  %2516 = vmatpush1.msra.mxu0 %v201
  %2517 = vmatprep.subr.mxu0 %v138
  %2518 = vmatpush1.msra.mxu0 %v137
  %2519 = vmatprep.subr.mxu0 %v74
  %2520 = vmatpush1.msra.mxu0 %v73
  %2521 = vmatprep.subr.mxu0 0.0
  %2522 = vmatpush2.msra.mxu0 0.0
  %2523 = vmatprep.subr.mxu0 0.0
  %2524 = vmatpush2.msra.mxu0 0.0
  %2525 = vmatprep.subr.mxu0 0.0
  %2526 = vmatpush2.msra.mxu0 0.0
  %2527 = vmatprep.subr.mxu0 0.0
  %2528 = vmatpush2.msra.mxu0 0.0
  %2529 = vmatprep.subr.mxu0 0.0
  %2530 = vmatpush2.msra.mxu0 0.0
  %2531 = vmatprep.subr.mxu0 0.0
  %2532 = vmatpush2.msra.mxu0 0.0
  %2533 = vmatprep.subr.mxu0 0.0
  %2534 = vmatpush2.msra.mxu0 0.0
  %2535 = vmatprep.subr.mxu0 0.0
  %2536 = vmatpush2.msra.mxu0 0.0
  %2537 = vmatprep.subr.mxu0 0.0
  %2538 = vmatpush2.msra.mxu0 0.0
  %2539 = vmatprep.subr.mxu0 0.0
  %2540 = vmatpush2.msra.mxu0 0.0
  %2541 = vmatprep.subr.mxu0 0.0
  %2542 = vmatpush2.msra.mxu0 0.0
  %2543 = vmatprep.subr.mxu0 0.0
  %2544 = vmatpush2.msra.mxu0 0.0
  %2545 = vmatprep.subr.mxu0 0.0
  %2546 = vmatpush2.msra.mxu0 0.0
  %2547 = vmatprep.subr.mxu0 0.0
  %2548 = vmatpush2.msra.mxu0 0.0
  %2549 = vmatprep.subr.mxu0 0.0
  %2550 = vmatpush2.msra.mxu0 0.0
  %2551 = vmatprep.subr.mxu0 0.0
  %2552 = vmatpush2.msra.mxu0 0.0
  %2553 = vmatprep.mubr.f32.mxu0 0.0
  %2554 = vmatmul.mubr.f32.gmra.mxu0 %v405
  %v2555 = vpop.f32.mrf.mxu0
  %v2556 = vadd.f32 0.0, %v2555
  %v2557 = vpop.f32.mrf.mxu0
  %v2558 = vadd.f32 0.0, %v2557
  %2559 = vmatprep.mubr.f32.mxu0 0.0
  %2560 = vmatmul.mubr.f32.gmra.mxu0 %v408
  %v2561 = vpop.f32.mrf.mxu0
  %v2562 = vadd.f32 0.0, %v2561
  %v2563 = vpop.f32.mrf.mxu0
  %v2564 = vadd.f32 0.0, %v2563
  %2565 = vdwg.mxu0
  %2566 = vmatprep.subr.mxu0 0.0
  %2567 = vmatpush1.msra.mxu0 0.0
  %2568 = vmatprep.subr.mxu0 0.0
  %2569 = vmatpush1.msra.mxu0 0.0
  %2570 = vmatprep.subr.mxu0 0.0
  %2571 = vmatpush1.msra.mxu0 0.0
  %2572 = vmatprep.subr.mxu0 0.0
  %2573 = vmatpush1.msra.mxu0 0.0
  %2574 = vmatprep.subr.mxu0 0.0
  %2575 = vmatpush1.msra.mxu0 0.0
  %2576 = vmatprep.subr.mxu0 0.0
  %2577 = vmatpush1.msra.mxu0 0.0
  %2578 = vmatprep.subr.mxu0 0.0
  %2579 = vmatpush1.msra.mxu0 0.0
  %2580 = vmatprep.subr.mxu0 0.0
  %2581 = vmatpush1.msra.mxu0 0.0
  %2582 = vmatprep.subr.mxu0 0.0
  %2583 = vmatpush1.msra.mxu0 0.0
  %2584 = vmatprep.subr.mxu0 0.0
  %2585 = vmatpush1.msra.mxu0 0.0
  %2586 = vmatprep.subr.mxu0 %v396
  %2587 = vmatpush1.msra.mxu0 %v395
  %2588 = vmatprep.subr.mxu0 %v332
  %2589 = vmatpush1.msra.mxu0 %v331
  %2590 = vmatprep.subr.mxu0 %v268
  %2591 = vmatpush1.msra.mxu0 %v267
  %2592 = vmatprep.subr.mxu0 %v204
  %2593 = vmatpush1.msra.mxu0 %v203
  %2594 = vmatprep.subr.mxu0 %v140
  %2595 = vmatpush1.msra.mxu0 %v139
  %2596 = vmatprep.subr.mxu0 %v76
  %2597 = vmatpush1.msra.mxu0 %v75
  %2598 = vmatprep.subr.mxu0 0.0
  %2599 = vmatpush2.msra.mxu0 0.0
  %2600 = vmatprep.subr.mxu0 0.0
  %2601 = vmatpush2.msra.mxu0 0.0
  %2602 = vmatprep.subr.mxu0 0.0
  %2603 = vmatpush2.msra.mxu0 0.0
  %2604 = vmatprep.subr.mxu0 0.0
  %2605 = vmatpush2.msra.mxu0 0.0
  %2606 = vmatprep.subr.mxu0 0.0
  %2607 = vmatpush2.msra.mxu0 0.0
  %2608 = vmatprep.subr.mxu0 0.0
  %2609 = vmatpush2.msra.mxu0 0.0
  %2610 = vmatprep.subr.mxu0 0.0
  %2611 = vmatpush2.msra.mxu0 0.0
  %2612 = vmatprep.subr.mxu0 0.0
  %2613 = vmatpush2.msra.mxu0 0.0
  %2614 = vmatprep.subr.mxu0 0.0
  %2615 = vmatpush2.msra.mxu0 0.0
  %2616 = vmatprep.subr.mxu0 0.0
  %2617 = vmatpush2.msra.mxu0 0.0
  %2618 = vmatprep.subr.mxu0 0.0
  %2619 = vmatpush2.msra.mxu0 0.0
  %2620 = vmatprep.subr.mxu0 0.0
  %2621 = vmatpush2.msra.mxu0 0.0
  %2622 = vmatprep.subr.mxu0 0.0
  %2623 = vmatpush2.msra.mxu0 0.0
  %2624 = vmatprep.subr.mxu0 0.0
  %2625 = vmatpush2.msra.mxu0 0.0
  %2626 = vmatprep.subr.mxu0 0.0
  %2627 = vmatpush2.msra.mxu0 0.0
  %2628 = vmatprep.subr.mxu0 0.0
  %2629 = vmatpush2.msra.mxu0 0.0
  %2630 = vmatprep.mubr.f32.mxu0 0.0
  %2631 = vmatmul.mubr.f32.gmra.mxu0 %v405
  %v2632 = vpop.f32.mrf.mxu0
  %v2633 = vadd.f32 0.0, %v2632
  %v2634 = vpop.f32.mrf.mxu0
  %v2635 = vadd.f32 0.0, %v2634
  %2636 = vmatprep.mubr.f32.mxu0 0.0
  %2637 = vmatmul.mubr.f32.gmra.mxu0 %v408
  %v2638 = vpop.f32.mrf.mxu0
  %v2639 = vadd.f32 0.0, %v2638
  %v2640 = vpop.f32.mrf.mxu0
  %v2641 = vadd.f32 0.0, %v2640
  %2642 = vdwg.mxu0
  %2643 = vmatprep.subr.mxu0 0.0
  %2644 = vmatpush1.msra.mxu0 0.0
  %2645 = vmatprep.subr.mxu0 0.0
  %2646 = vmatpush1.msra.mxu0 0.0
  %2647 = vmatprep.subr.mxu0 0.0
  %2648 = vmatpush1.msra.mxu0 0.0
  %2649 = vmatprep.subr.mxu0 0.0
  %2650 = vmatpush1.msra.mxu0 0.0
  %2651 = vmatprep.subr.mxu0 0.0
  %2652 = vmatpush1.msra.mxu0 0.0
  %2653 = vmatprep.subr.mxu0 0.0
  %2654 = vmatpush1.msra.mxu0 0.0
  %2655 = vmatprep.subr.mxu0 0.0
  %2656 = vmatpush1.msra.mxu0 0.0
  %2657 = vmatprep.subr.mxu0 0.0
  %2658 = vmatpush1.msra.mxu0 0.0
  %2659 = vmatprep.subr.mxu0 0.0
  %2660 = vmatpush1.msra.mxu0 0.0
  %2661 = vmatprep.subr.mxu0 0.0
  %2662 = vmatpush1.msra.mxu0 0.0
  %2663 = vmatprep.subr.mxu0 %v398
  %2664 = vmatpush1.msra.mxu0 %v397
  %2665 = vmatprep.subr.mxu0 %v334
  %2666 = vmatpush1.msra.mxu0 %v333
  %2667 = vmatprep.subr.mxu0 %v270
  %2668 = vmatpush1.msra.mxu0 %v269
  %2669 = vmatprep.subr.mxu0 %v206
  %2670 = vmatpush1.msra.mxu0 %v205
  %2671 = vmatprep.subr.mxu0 %v142
  %2672 = vmatpush1.msra.mxu0 %v141
  %2673 = vmatprep.subr.mxu0 %v78
  %2674 = vmatpush1.msra.mxu0 %v77
  %2675 = vmatprep.subr.mxu0 0.0
  %2676 = vmatpush2.msra.mxu0 0.0
  %2677 = vmatprep.subr.mxu0 0.0
  %2678 = vmatpush2.msra.mxu0 0.0
  %2679 = vmatprep.subr.mxu0 0.0
  %2680 = vmatpush2.msra.mxu0 0.0
  %2681 = vmatprep.subr.mxu0 0.0
  %2682 = vmatpush2.msra.mxu0 0.0
  %2683 = vmatprep.subr.mxu0 0.0
  %2684 = vmatpush2.msra.mxu0 0.0
  %2685 = vmatprep.subr.mxu0 0.0
  %2686 = vmatpush2.msra.mxu0 0.0
  %2687 = vmatprep.subr.mxu0 0.0
  %2688 = vmatpush2.msra.mxu0 0.0
  %2689 = vmatprep.subr.mxu0 0.0
  %2690 = vmatpush2.msra.mxu0 0.0
  %2691 = vmatprep.subr.mxu0 0.0
  %2692 = vmatpush2.msra.mxu0 0.0
  %2693 = vmatprep.subr.mxu0 0.0
  %2694 = vmatpush2.msra.mxu0 0.0
  %2695 = vmatprep.subr.mxu0 0.0
  %2696 = vmatpush2.msra.mxu0 0.0
  %2697 = vmatprep.subr.mxu0 0.0
  %2698 = vmatpush2.msra.mxu0 0.0
  %2699 = vmatprep.subr.mxu0 0.0
  %2700 = vmatpush2.msra.mxu0 0.0
  %2701 = vmatprep.subr.mxu0 0.0
  %2702 = vmatpush2.msra.mxu0 0.0
  %2703 = vmatprep.subr.mxu0 0.0
  %2704 = vmatpush2.msra.mxu0 0.0
  %2705 = vmatprep.subr.mxu0 0.0
  %2706 = vmatpush2.msra.mxu0 0.0
  %2707 = vmatprep.mubr.f32.mxu0 0.0
  %2708 = vmatmul.mubr.f32.gmra.mxu0 %v405
  %v2709 = vpop.f32.mrf.mxu0
  %v2710 = vadd.f32 0.0, %v2709
  %v2711 = vpop.f32.mrf.mxu0
  %v2712 = vadd.f32 0.0, %v2711
  %2713 = vmatprep.mubr.f32.mxu0 0.0
  %2714 = vmatmul.mubr.f32.gmra.mxu0 %v408
  %v2715 = vpop.f32.mrf.mxu0
  %v2716 = vadd.f32 0.0, %v2715
  %v2717 = vpop.f32.mrf.mxu0
  %v2718 = vadd.f32 0.0, %v2717
  %2719 = vdwg.mxu0
  %2720 = vmatprep.subr.mxu0 0.0
  %2721 = vmatpush1.msra.mxu0 0.0
  %2722 = vmatprep.subr.mxu0 0.0
  %2723 = vmatpush1.msra.mxu0 0.0
  %2724 = vmatprep.subr.mxu0 0.0
  %2725 = vmatpush1.msra.mxu0 0.0
  %2726 = vmatprep.subr.mxu0 0.0
  %2727 = vmatpush1.msra.mxu0 0.0
  %2728 = vmatprep.subr.mxu0 0.0
  %2729 = vmatpush1.msra.mxu0 0.0
  %2730 = vmatprep.subr.mxu0 0.0
  %2731 = vmatpush1.msra.mxu0 0.0
  %2732 = vmatprep.subr.mxu0 0.0
  %2733 = vmatpush1.msra.mxu0 0.0
  %2734 = vmatprep.subr.mxu0 0.0
  %2735 = vmatpush1.msra.mxu0 0.0
  %2736 = vmatprep.subr.mxu0 0.0
  %2737 = vmatpush1.msra.mxu0 0.0
  %2738 = vmatprep.subr.mxu0 0.0
  %2739 = vmatpush1.msra.mxu0 0.0
  %2740 = vmatprep.subr.mxu0 %v400
  %2741 = vmatpush1.msra.mxu0 %v399
  %2742 = vmatprep.subr.mxu0 %v336
  %2743 = vmatpush1.msra.mxu0 %v335
  %2744 = vmatprep.subr.mxu0 %v272
  %2745 = vmatpush1.msra.mxu0 %v271
  %2746 = vmatprep.subr.mxu0 %v208
  %2747 = vmatpush1.msra.mxu0 %v207
  %2748 = vmatprep.subr.mxu0 %v144
  %2749 = vmatpush1.msra.mxu0 %v143
  %2750 = vmatprep.subr.mxu0 %v80
  %2751 = vmatpush1.msra.mxu0 %v79
  %2752 = vmatprep.subr.mxu0 0.0
  %2753 = vmatpush2.msra.mxu0 0.0
  %2754 = vmatprep.subr.mxu0 0.0
  %2755 = vmatpush2.msra.mxu0 0.0
  %2756 = vmatprep.subr.mxu0 0.0
  %2757 = vmatpush2.msra.mxu0 0.0
  %2758 = vmatprep.subr.mxu0 0.0
  %2759 = vmatpush2.msra.mxu0 0.0
  %2760 = vmatprep.subr.mxu0 0.0
  %2761 = vmatpush2.msra.mxu0 0.0
  %2762 = vmatprep.subr.mxu0 0.0
  %2763 = vmatpush2.msra.mxu0 0.0
  %2764 = vmatprep.subr.mxu0 0.0
  %2765 = vmatpush2.msra.mxu0 0.0
  %2766 = vmatprep.subr.mxu0 0.0
  %2767 = vmatpush2.msra.mxu0 0.0
  %2768 = vmatprep.subr.mxu0 0.0
  %2769 = vmatpush2.msra.mxu0 0.0
  %2770 = vmatprep.subr.mxu0 0.0
  %2771 = vmatpush2.msra.mxu0 0.0
  %2772 = vmatprep.subr.mxu0 0.0
  %2773 = vmatpush2.msra.mxu0 0.0
  %2774 = vmatprep.subr.mxu0 0.0
  %2775 = vmatpush2.msra.mxu0 0.0
  %2776 = vmatprep.subr.mxu0 0.0
  %2777 = vmatpush2.msra.mxu0 0.0
  %2778 = vmatprep.subr.mxu0 0.0
  %2779 = vmatpush2.msra.mxu0 0.0
  %2780 = vmatprep.subr.mxu0 0.0
  %2781 = vmatpush2.msra.mxu0 0.0
  %2782 = vmatprep.subr.mxu0 0.0
  %2783 = vmatpush2.msra.mxu0 0.0
  %2784 = vmatprep.mubr.f32.mxu0 0.0
  %2785 = vmatmul.mubr.f32.gmra.mxu0 %v405
  %v2786 = vpop.f32.mrf.mxu0
  %v2787 = vadd.f32 0.0, %v2786
  %v2788 = vpop.f32.mrf.mxu0
  %v2789 = vadd.f32 0.0, %v2788
  %2790 = vmatprep.mubr.f32.mxu0 0.0
  %2791 = vmatmul.mubr.f32.gmra.mxu0 %v408
  %v2792 = vpop.f32.mrf.mxu0
  %v2793 = vadd.f32 0.0, %v2792
  %v2794 = vpop.f32.mrf.mxu0
  %v2795 = vadd.f32 0.0, %v2794
  %2796 = vdwg.mxu0
  %2797 = vmatprep.subr.mxu0 0.0
  %2798 = vmatpush1.msra.mxu0 0.0
  %2799 = vmatprep.subr.mxu0 0.0
  %2800 = vmatpush1.msra.mxu0 0.0
  %2801 = vmatprep.subr.mxu0 0.0
  %2802 = vmatpush1.msra.mxu0 0.0
  %2803 = vmatprep.subr.mxu0 0.0
  %2804 = vmatpush1.msra.mxu0 0.0
  %2805 = vmatprep.subr.mxu0 0.0
  %2806 = vmatpush1.msra.mxu0 0.0
  %2807 = vmatprep.subr.mxu0 0.0
  %2808 = vmatpush1.msra.mxu0 0.0
  %2809 = vmatprep.subr.mxu0 0.0
  %2810 = vmatpush1.msra.mxu0 0.0
  %2811 = vmatprep.subr.mxu0 0.0
  %2812 = vmatpush1.msra.mxu0 0.0
  %2813 = vmatprep.subr.mxu0 0.0
  %2814 = vmatpush1.msra.mxu0 0.0
  %2815 = vmatprep.subr.mxu0 0.0
  %2816 = vmatpush1.msra.mxu0 0.0
  %2817 = vmatprep.subr.mxu0 %v402
  %2818 = vmatpush1.msra.mxu0 %v401
  %2819 = vmatprep.subr.mxu0 %v338
  %2820 = vmatpush1.msra.mxu0 %v337
  %2821 = vmatprep.subr.mxu0 %v274
  %2822 = vmatpush1.msra.mxu0 %v273
  %2823 = vmatprep.subr.mxu0 %v210
  %2824 = vmatpush1.msra.mxu0 %v209
  %2825 = vmatprep.subr.mxu0 %v146
  %2826 = vmatpush1.msra.mxu0 %v145
  %2827 = vmatprep.subr.mxu0 %v82
  %2828 = vmatpush1.msra.mxu0 %v81
  %2829 = vmatprep.subr.mxu0 0.0
  %2830 = vmatpush2.msra.mxu0 0.0
  %2831 = vmatprep.subr.mxu0 0.0
  %2832 = vmatpush2.msra.mxu0 0.0
  %2833 = vmatprep.subr.mxu0 0.0
  %2834 = vmatpush2.msra.mxu0 0.0
  %2835 = vmatprep.subr.mxu0 0.0
  %2836 = vmatpush2.msra.mxu0 0.0
  %2837 = vmatprep.subr.mxu0 0.0
  %2838 = vmatpush2.msra.mxu0 0.0
  %2839 = vmatprep.subr.mxu0 0.0
  %2840 = vmatpush2.msra.mxu0 0.0
  %2841 = vmatprep.subr.mxu0 0.0
  %2842 = vmatpush2.msra.mxu0 0.0
  %2843 = vmatprep.subr.mxu0 0.0
  %2844 = vmatpush2.msra.mxu0 0.0
  %2845 = vmatprep.subr.mxu0 0.0
  %2846 = vmatpush2.msra.mxu0 0.0
  %2847 = vmatprep.subr.mxu0 0.0
  %2848 = vmatpush2.msra.mxu0 0.0
  %2849 = vmatprep.subr.mxu0 0.0
  %2850 = vmatpush2.msra.mxu0 0.0
  %2851 = vmatprep.subr.mxu0 0.0
  %2852 = vmatpush2.msra.mxu0 0.0
  %2853 = vmatprep.subr.mxu0 0.0
  %2854 = vmatpush2.msra.mxu0 0.0
  %2855 = vmatprep.subr.mxu0 0.0
  %2856 = vmatpush2.msra.mxu0 0.0
  %2857 = vmatprep.subr.mxu0 0.0
  %2858 = vmatpush2.msra.mxu0 0.0
  %2859 = vmatprep.subr.mxu0 0.0
  %2860 = vmatpush2.msra.mxu0 0.0
  %2861 = vmatprep.mubr.f32.mxu0 0.0
  %2862 = vmatmul.mubr.f32.gmra.mxu0 %v405
  %v2863 = vpop.f32.mrf.mxu0
  %v2864 = vadd.f32 0.0, %v2863
  %v2865 = vpop.f32.mrf.mxu0
  %v2866 = vadd.f32 0.0, %v2865
  %2867 = vmatprep.mubr.f32.mxu0 0.0
  %2868 = vmatmul.mubr.f32.gmra.mxu0 %v408
  %v2869 = vpop.f32.mrf.mxu0
  %v2870 = vadd.f32 0.0, %v2869
  %v2871 = vpop.f32.mrf.mxu0
  %v2872 = vadd.f32 0.0, %v2871
  %2873 = vdwg.mxu0
  %v2874 = vadd.f32 %v477, %v479
  %v2875 = vadd.f32 %v2874, %v554
  %v2876 = vadd.f32 %v2875, %v556
  %v2877 = vadd.f32 %v2876, %v631
  %v2878 = vadd.f32 %v2877, %v633
  %v2879 = vadd.f32 %v2878, %v708
  %v2880 = vadd.f32 %v2879, %v710
  %v2881 = vadd.f32 %v2880, %v785
  %v2882 = vadd.f32 %v2881, %v787
  %v2883 = vadd.f32 %v2882, %v862
  %v2884 = vadd.f32 %v2883, %v864
  %v2885 = vadd.f32 %v2884, %v939
  %v2886 = vadd.f32 %v2885, %v941
  %v2887 = vadd.f32 %v2886, %v1016
  %v2888 = vadd.f32 %v2887, %v1018
  %v2889 = vadd.f32 %v2888, %v1093
  %v2890 = vadd.f32 %v2889, %v1095
  %v2891 = vadd.f32 %v2890, %v1170
  %v2892 = vadd.f32 %v2891, %v1172
  %v2893 = vadd.f32 %v2892, %v1247
  %v2894 = vadd.f32 %v2893, %v1249
  %v2895 = vadd.f32 %v2894, %v1324
  %v2896 = vadd.f32 %v2895, %v1326
  %v2897 = vadd.f32 %v2896, %v1401
  %v2898 = vadd.f32 %v2897, %v1403
  %v2899 = vadd.f32 %v2898, %v1478
  %v2900 = vadd.f32 %v2899, %v1480
  %v2901 = vadd.f32 %v2900, %v1555
  %v2902 = vadd.f32 %v2901, %v1557
  %v2903 = vadd.f32 %v2902, %v1632
  %v2904 = vadd.f32 %v2903, %v1634
  %v2905 = vadd.f32 %v2904, %v1709
  %v2906 = vadd.f32 %v2905, %v1711
  %v2907 = vadd.f32 %v2906, %v1786
  %v2908 = vadd.f32 %v2907, %v1788
  %v2909 = vadd.f32 %v2908, %v1863
  %v2910 = vadd.f32 %v2909, %v1865
  %v2911 = vadd.f32 %v2910, %v1940
  %v2912 = vadd.f32 %v2911, %v1942
  %v2913 = vadd.f32 %v2912, %v2017
  %v2914 = vadd.f32 %v2913, %v2019
  %v2915 = vadd.f32 %v2914, %v2094
  %v2916 = vadd.f32 %v2915, %v2096
  %v2917 = vadd.f32 %v2916, %v2171
  %v2918 = vadd.f32 %v2917, %v2173
  %v2919 = vadd.f32 %v2918, %v2248
  %v2920 = vadd.f32 %v2919, %v2250
  %v2921 = vadd.f32 %v2920, %v2325
  %v2922 = vadd.f32 %v2921, %v2327
  %v2923 = vadd.f32 %v2922, %v2402
  %v2924 = vadd.f32 %v2923, %v2404
  %v2925 = vadd.f32 %v2924, %v2479
  %v2926 = vadd.f32 %v2925, %v2481
  %v2927 = vadd.f32 %v2926, %v2556
  %v2928 = vadd.f32 %v2927, %v2558
  %v2929 = vadd.f32 %v2928, %v2633
  %v2930 = vadd.f32 %v2929, %v2635
  %v2931 = vadd.f32 %v2930, %v2710
  %v2932 = vadd.f32 %v2931, %v2712
  %v2933 = vadd.f32 %v2932, %v2787
  %v2934 = vadd.f32 %v2933, %v2789
  %v2935 = vadd.f32 %v2934, %v2864
  %v2936 = vadd.f32 %v2935, %v2866
  %2937 = vadd.xlane.f32.xlu0 %v2936
  %v2938 = vpop.xlane.xlu0 %2937
  %v2939 = vadd.f32 %v483, %v485
  %v2940 = vadd.f32 %v2939, %v560
  %v2941 = vadd.f32 %v2940, %v562
  %v2942 = vadd.f32 %v2941, %v637
  %v2943 = vadd.f32 %v2942, %v639
  %v2944 = vadd.f32 %v2943, %v714
  %v2945 = vadd.f32 %v2944, %v716
  %v2946 = vadd.f32 %v2945, %v791
  %v2947 = vadd.f32 %v2946, %v793
  %v2948 = vadd.f32 %v2947, %v868
  %v2949 = vadd.f32 %v2948, %v870
  %v2950 = vadd.f32 %v2949, %v945
  %v2951 = vadd.f32 %v2950, %v947
  %v2952 = vadd.f32 %v2951, %v1022
  %v2953 = vadd.f32 %v2952, %v1024
  %v2954 = vadd.f32 %v2953, %v1099
  %v2955 = vadd.f32 %v2954, %v1101
  %v2956 = vadd.f32 %v2955, %v1176
  %v2957 = vadd.f32 %v2956, %v1178
  %v2958 = vadd.f32 %v2957, %v1253
  %v2959 = vadd.f32 %v2958, %v1255
  %v2960 = vadd.f32 %v2959, %v1330
  %v2961 = vadd.f32 %v2960, %v1332
  %v2962 = vadd.f32 %v2961, %v1407
  %v2963 = vadd.f32 %v2962, %v1409
  %v2964 = vadd.f32 %v2963, %v1484
  %v2965 = vadd.f32 %v2964, %v1486
  %v2966 = vadd.f32 %v2965, %v1561
  %v2967 = vadd.f32 %v2966, %v1563
  %v2968 = vadd.f32 %v2967, %v1638
  %v2969 = vadd.f32 %v2968, %v1640
  %v2970 = vadd.f32 %v2969, %v1715
  %v2971 = vadd.f32 %v2970, %v1717
  %v2972 = vadd.f32 %v2971, %v1792
  %v2973 = vadd.f32 %v2972, %v1794
  %v2974 = vadd.f32 %v2973, %v1869
  %v2975 = vadd.f32 %v2974, %v1871
  %v2976 = vadd.f32 %v2975, %v1946
  %v2977 = vadd.f32 %v2976, %v1948
  %v2978 = vadd.f32 %v2977, %v2023
  %v2979 = vadd.f32 %v2978, %v2025
  %v2980 = vadd.f32 %v2979, %v2100
  %v2981 = vadd.f32 %v2980, %v2102
  %v2982 = vadd.f32 %v2981, %v2177
  %v2983 = vadd.f32 %v2982, %v2179
  %v2984 = vadd.f32 %v2983, %v2254
  %v2985 = vadd.f32 %v2984, %v2256
  %v2986 = vadd.f32 %v2985, %v2331
  %v2987 = vadd.f32 %v2986, %v2333
  %v2988 = vadd.f32 %v2987, %v2408
  %v2989 = vadd.f32 %v2988, %v2410
  %v2990 = vadd.f32 %v2989, %v2485
  %v2991 = vadd.f32 %v2990, %v2487
  %v2992 = vadd.f32 %v2991, %v2562
  %v2993 = vadd.f32 %v2992, %v2564
  %v2994 = vadd.f32 %v2993, %v2639
  %v2995 = vadd.f32 %v2994, %v2641
  %v2996 = vadd.f32 %v2995, %v2716
  %v2997 = vadd.f32 %v2996, %v2718
  %v2998 = vadd.f32 %v2997, %v2793
  %v2999 = vadd.f32 %v2998, %v2795
  %v3000 = vadd.f32 %v2999, %v2870
  %v3001 = vadd.f32 %v3000, %v2872
  %3002 = vadd.xlane.f32.xlu0 %v3001
  %v3003 = vpop.xlane.xlu0 %3002
  %v3004 = vmul.f32 %v2938, 0.00012207031
  %v3005 = vmul.f32 %v3003, 0.00012207031
  %v3006 = vmul.f32 %v477, %v477
  %v3007 = vmul.f32 %v479, %v479
  %v3008 = vmul.f32 %v554, %v554
  %v3009 = vmul.f32 %v556, %v556
  %v3010 = vmul.f32 %v631, %v631
  %v3011 = vmul.f32 %v633, %v633
  %v3012 = vmul.f32 %v708, %v708
  %v3013 = vmul.f32 %v710, %v710
  %v3014 = vmul.f32 %v785, %v785
  %v3015 = vmul.f32 %v787, %v787
  %v3016 = vmul.f32 %v862, %v862
  %v3017 = vmul.f32 %v864, %v864
  %v3018 = vmul.f32 %v939, %v939
  %v3019 = vmul.f32 %v941, %v941
  %v3020 = vmul.f32 %v1016, %v1016
  %v3021 = vmul.f32 %v1018, %v1018
  %v3022 = vmul.f32 %v1093, %v1093
  %v3023 = vmul.f32 %v1095, %v1095
  %v3024 = vmul.f32 %v1170, %v1170
  %v3025 = vmul.f32 %v1172, %v1172
  %v3026 = vmul.f32 %v1247, %v1247
  %v3027 = vmul.f32 %v1249, %v1249
  %v3028 = vmul.f32 %v1324, %v1324
  %v3029 = vmul.f32 %v1326, %v1326
  %v3030 = vmul.f32 %v1401, %v1401
  %v3031 = vmul.f32 %v1403, %v1403
  %v3032 = vmul.f32 %v1478, %v1478
  %v3033 = vmul.f32 %v1480, %v1480
  %v3034 = vmul.f32 %v1555, %v1555
  %v3035 = vmul.f32 %v1557, %v1557
  %v3036 = vmul.f32 %v1632, %v1632
  %v3037 = vmul.f32 %v1634, %v1634
  %v3038 = vmul.f32 %v1709, %v1709
  %v3039 = vmul.f32 %v1711, %v1711
  %v3040 = vmul.f32 %v1786, %v1786
  %v3041 = vmul.f32 %v1788, %v1788
  %v3042 = vmul.f32 %v1863, %v1863
  %v3043 = vmul.f32 %v1865, %v1865
  %v3044 = vmul.f32 %v1940, %v1940
  %v3045 = vmul.f32 %v1942, %v1942
  %v3046 = vmul.f32 %v2017, %v2017
  %v3047 = vmul.f32 %v2019, %v2019
  %v3048 = vmul.f32 %v2094, %v2094
  %v3049 = vmul.f32 %v2096, %v2096
  %v3050 = vmul.f32 %v2171, %v2171
  %v3051 = vmul.f32 %v2173, %v2173
  %v3052 = vmul.f32 %v2248, %v2248
  %v3053 = vmul.f32 %v2250, %v2250
  %v3054 = vmul.f32 %v2325, %v2325
  %v3055 = vmul.f32 %v2327, %v2327
  %v3056 = vmul.f32 %v2402, %v2402
  %v3057 = vmul.f32 %v2404, %v2404
  %v3058 = vmul.f32 %v2479, %v2479
  %v3059 = vmul.f32 %v2481, %v2481
  %v3060 = vmul.f32 %v2556, %v2556
  %v3061 = vmul.f32 %v2558, %v2558
  %v3062 = vmul.f32 %v2633, %v2633
  %v3063 = vmul.f32 %v2635, %v2635
  %v3064 = vmul.f32 %v2710, %v2710
  %v3065 = vmul.f32 %v2712, %v2712
  %v3066 = vmul.f32 %v2787, %v2787
  %v3067 = vmul.f32 %v2789, %v2789
  %v3068 = vmul.f32 %v2864, %v2864
  %v3069 = vmul.f32 %v2866, %v2866
  %v3070 = vmul.f32 %v483, %v483
  %v3071 = vmul.f32 %v485, %v485
  %v3072 = vmul.f32 %v560, %v560
  %v3073 = vmul.f32 %v562, %v562
  %v3074 = vmul.f32 %v637, %v637
  %v3075 = vmul.f32 %v639, %v639
  %v3076 = vmul.f32 %v714, %v714
  %v3077 = vmul.f32 %v716, %v716
  %v3078 = vmul.f32 %v791, %v791
  %v3079 = vmul.f32 %v793, %v793
  %v3080 = vmul.f32 %v868, %v868
  %v3081 = vmul.f32 %v870, %v870
  %v3082 = vmul.f32 %v945, %v945
  %v3083 = vmul.f32 %v947, %v947
  %v3084 = vmul.f32 %v1022, %v1022
  %v3085 = vmul.f32 %v1024, %v1024
  %v3086 = vmul.f32 %v1099, %v1099
  %v3087 = vmul.f32 %v1101, %v1101
  %v3088 = vmul.f32 %v1176, %v1176
  %v3089 = vmul.f32 %v1178, %v1178
  %v3090 = vmul.f32 %v1253, %v1253
  %v3091 = vmul.f32 %v1255, %v1255
  %v3092 = vmul.f32 %v1330, %v1330
  %v3093 = vmul.f32 %v1332, %v1332
  %v3094 = vmul.f32 %v1407, %v1407
  %v3095 = vmul.f32 %v1409, %v1409
  %v3096 = vmul.f32 %v1484, %v1484
  %v3097 = vmul.f32 %v1486, %v1486
  %v3098 = vmul.f32 %v1561, %v1561
  %v3099 = vmul.f32 %v1563, %v1563
  %v3100 = vmul.f32 %v1638, %v1638
  %v3101 = vmul.f32 %v1640, %v1640
  %v3102 = vmul.f32 %v1715, %v1715
  %v3103 = vmul.f32 %v1717, %v1717
  %v3104 = vmul.f32 %v1792, %v1792
  %v3105 = vmul.f32 %v1794, %v1794
  %v3106 = vmul.f32 %v1869, %v1869
  %v3107 = vmul.f32 %v1871, %v1871
  %v3108 = vmul.f32 %v1946, %v1946
  %v3109 = vmul.f32 %v1948, %v1948
  %v3110 = vmul.f32 %v2023, %v2023
  %v3111 = vmul.f32 %v2025, %v2025
  %v3112 = vmul.f32 %v2100, %v2100
  %v3113 = vmul.f32 %v2102, %v2102
  %v3114 = vmul.f32 %v2177, %v2177
  %v3115 = vmul.f32 %v2179, %v2179
  %v3116 = vmul.f32 %v2254, %v2254
  %v3117 = vmul.f32 %v2256, %v2256
  %v3118 = vmul.f32 %v2331, %v2331
  %v3119 = vmul.f32 %v2333, %v2333
  %v3120 = vmul.f32 %v2408, %v2408
  %v3121 = vmul.f32 %v2410, %v2410
  %v3122 = vmul.f32 %v2485, %v2485
  %v3123 = vmul.f32 %v2487, %v2487
  %v3124 = vmul.f32 %v2562, %v2562
  %v3125 = vmul.f32 %v2564, %v2564
  %v3126 = vmul.f32 %v2639, %v2639
  %v3127 = vmul.f32 %v2641, %v2641
  %v3128 = vmul.f32 %v2716, %v2716
  %v3129 = vmul.f32 %v2718, %v2718
  %v3130 = vmul.f32 %v2793, %v2793
  %v3131 = vmul.f32 %v2795, %v2795
  %v3132 = vmul.f32 %v2870, %v2870
  %v3133 = vmul.f32 %v2872, %v2872
  %v3134 = vadd.f32 %v3006, %v3007
  %v3135 = vadd.f32 %v3134, %v3008
  %v3136 = vadd.f32 %v3135, %v3009
  %v3137 = vadd.f32 %v3136, %v3010
  %v3138 = vadd.f32 %v3137, %v3011
  %v3139 = vadd.f32 %v3138, %v3012
  %v3140 = vadd.f32 %v3139, %v3013
  %v3141 = vadd.f32 %v3140, %v3014
  %v3142 = vadd.f32 %v3141, %v3015
  %v3143 = vadd.f32 %v3142, %v3016
  %v3144 = vadd.f32 %v3143, %v3017
  %v3145 = vadd.f32 %v3144, %v3018
  %v3146 = vadd.f32 %v3145, %v3019
  %v3147 = vadd.f32 %v3146, %v3020
  %v3148 = vadd.f32 %v3147, %v3021
  %v3149 = vadd.f32 %v3148, %v3022
  %v3150 = vadd.f32 %v3149, %v3023
  %v3151 = vadd.f32 %v3150, %v3024
  %v3152 = vadd.f32 %v3151, %v3025
  %v3153 = vadd.f32 %v3152, %v3026
  %v3154 = vadd.f32 %v3153, %v3027
  %v3155 = vadd.f32 %v3154, %v3028
  %v3156 = vadd.f32 %v3155, %v3029
  %v3157 = vadd.f32 %v3156, %v3030
  %v3158 = vadd.f32 %v3157, %v3031
  %v3159 = vadd.f32 %v3158, %v3032
  %v3160 = vadd.f32 %v3159, %v3033
  %v3161 = vadd.f32 %v3160, %v3034
  %v3162 = vadd.f32 %v3161, %v3035
  %v3163 = vadd.f32 %v3162, %v3036
  %v3164 = vadd.f32 %v3163, %v3037
  %v3165 = vadd.f32 %v3164, %v3038
  %v3166 = vadd.f32 %v3165, %v3039
  %v3167 = vadd.f32 %v3166, %v3040
  %v3168 = vadd.f32 %v3167, %v3041
  %v3169 = vadd.f32 %v3168, %v3042
  %v3170 = vadd.f32 %v3169, %v3043
  %v3171 = vadd.f32 %v3170, %v3044
  %v3172 = vadd.f32 %v3171, %v3045
  %v3173 = vadd.f32 %v3172, %v3046
  %v3174 = vadd.f32 %v3173, %v3047
  %v3175 = vadd.f32 %v3174, %v3048
  %v3176 = vadd.f32 %v3175, %v3049
  %v3177 = vadd.f32 %v3176, %v3050
  %v3178 = vadd.f32 %v3177, %v3051
  %v3179 = vadd.f32 %v3178, %v3052
  %v3180 = vadd.f32 %v3179, %v3053
  %v3181 = vadd.f32 %v3180, %v3054
  %v3182 = vadd.f32 %v3181, %v3055
  %v3183 = vadd.f32 %v3182, %v3056
  %v3184 = vadd.f32 %v3183, %v3057
  %v3185 = vadd.f32 %v3184, %v3058
  %v3186 = vadd.f32 %v3185, %v3059
  %v3187 = vadd.f32 %v3186, %v3060
  %v3188 = vadd.f32 %v3187, %v3061
  %v3189 = vadd.f32 %v3188, %v3062
  %v3190 = vadd.f32 %v3189, %v3063
  %v3191 = vadd.f32 %v3190, %v3064
  %v3192 = vadd.f32 %v3191, %v3065
  %v3193 = vadd.f32 %v3192, %v3066
  %v3194 = vadd.f32 %v3193, %v3067
  %v3195 = vadd.f32 %v3194, %v3068
  %v3196 = vadd.f32 %v3195, %v3069
  %3197 = vadd.xlane.f32.xlu0 %v3196
  %v3198 = vpop.xlane.xlu0 %3197
  %v3199 = vadd.f32 %v3070, %v3071
  %v3200 = vadd.f32 %v3199, %v3072
  %v3201 = vadd.f32 %v3200, %v3073
  %v3202 = vadd.f32 %v3201, %v3074
  %v3203 = vadd.f32 %v3202, %v3075
  %v3204 = vadd.f32 %v3203, %v3076
  %v3205 = vadd.f32 %v3204, %v3077
  %v3206 = vadd.f32 %v3205, %v3078
  %v3207 = vadd.f32 %v3206, %v3079
  %v3208 = vadd.f32 %v3207, %v3080
  %v3209 = vadd.f32 %v3208, %v3081
  %v3210 = vadd.f32 %v3209, %v3082
  %v3211 = vadd.f32 %v3210, %v3083
  %v3212 = vadd.f32 %v3211, %v3084
  %v3213 = vadd.f32 %v3212, %v3085
  %v3214 = vadd.f32 %v3213, %v3086
  %v3215 = vadd.f32 %v3214, %v3087
  %v3216 = vadd.f32 %v3215, %v3088
  %v3217 = vadd.f32 %v3216, %v3089
  %v3218 = vadd.f32 %v3217, %v3090
  %v3219 = vadd.f32 %v3218, %v3091
  %v3220 = vadd.f32 %v3219, %v3092
  %v3221 = vadd.f32 %v3220, %v3093
  %v3222 = vadd.f32 %v3221, %v3094
  %v3223 = vadd.f32 %v3222, %v3095
  %v3224 = vadd.f32 %v3223, %v3096
  %v3225 = vadd.f32 %v3224, %v3097
  %v3226 = vadd.f32 %v3225, %v3098
  %v3227 = vadd.f32 %v3226, %v3099
  %v3228 = vadd.f32 %v3227, %v3100
  %v3229 = vadd.f32 %v3228, %v3101
  %v3230 = vadd.f32 %v3229, %v3102
  %v3231 = vadd.f32 %v3230, %v3103
  %v3232 = vadd.f32 %v3231, %v3104
  %v3233 = vadd.f32 %v3232, %v3105
  %v3234 = vadd.f32 %v3233, %v3106
  %v3235 = vadd.f32 %v3234, %v3107
  %v3236 = vadd.f32 %v3235, %v3108
  %v3237 = vadd.f32 %v3236, %v3109
  %v3238 = vadd.f32 %v3237, %v3110
  %v3239 = vadd.f32 %v3238, %v3111
  %v3240 = vadd.f32 %v3239, %v3112
  %v3241 = vadd.f32 %v3240, %v3113
  %v3242 = vadd.f32 %v3241, %v3114
  %v3243 = vadd.f32 %v3242, %v3115
  %v3244 = vadd.f32 %v3243, %v3116
  %v3245 = vadd.f32 %v3244, %v3117
  %v3246 = vadd.f32 %v3245, %v3118
  %v3247 = vadd.f32 %v3246, %v3119
  %v3248 = vadd.f32 %v3247, %v3120
  %v3249 = vadd.f32 %v3248, %v3121
  %v3250 = vadd.f32 %v3249, %v3122
  %v3251 = vadd.f32 %v3250, %v3123
  %v3252 = vadd.f32 %v3251, %v3124
  %v3253 = vadd.f32 %v3252, %v3125
  %v3254 = vadd.f32 %v3253, %v3126
  %v3255 = vadd.f32 %v3254, %v3127
  %v3256 = vadd.f32 %v3255, %v3128
  %v3257 = vadd.f32 %v3256, %v3129
  %v3258 = vadd.f32 %v3257, %v3130
  %v3259 = vadd.f32 %v3258, %v3131
  %v3260 = vadd.f32 %v3259, %v3132
  %v3261 = vadd.f32 %v3260, %v3133
  %3262 = vadd.xlane.f32.xlu0 %v3261
  %v3263 = vpop.xlane.xlu0 %3262
  %v3264 = vmul.f32 %v3198, 0.00012207031
  %v3265 = vmul.f32 %v3263, 0.00012207031
  %v3266 = vmul.f32 %v3004, %v3004
  %v3267 = vmul.f32 %v3005, %v3005
  %v3268 = vsub.f32 %v3264, %v3266
  %v3269 = vsub.f32 %v3265, %v3267
  %v3270 = vmax.f32 %v3268, 0.0
  %v3271 = vmax.f32 %v3269, 0.0
  %v3272 = vsub.f32 %v477, %v3004
  %v3273 = vsub.f32 %v479, %v3004
  %v3274 = vsub.f32 %v554, %v3004
  %v3275 = vsub.f32 %v556, %v3004
  %v3276 = vsub.f32 %v631, %v3004
  %v3277 = vsub.f32 %v633, %v3004
  %v3278 = vsub.f32 %v708, %v3004
  %v3279 = vsub.f32 %v710, %v3004
  %v3280 = vsub.f32 %v785, %v3004
  %v3281 = vsub.f32 %v787, %v3004
  %v3282 = vsub.f32 %v862, %v3004
  %v3283 = vsub.f32 %v864, %v3004
  %v3284 = vsub.f32 %v939, %v3004
  %v3285 = vsub.f32 %v941, %v3004
  %v3286 = vsub.f32 %v1016, %v3004
  %v3287 = vsub.f32 %v1018, %v3004
  %v3288 = vsub.f32 %v1093, %v3004
  %v3289 = vsub.f32 %v1095, %v3004
  %v3290 = vsub.f32 %v1170, %v3004
  %v3291 = vsub.f32 %v1172, %v3004
  %v3292 = vsub.f32 %v1247, %v3004
  %v3293 = vsub.f32 %v1249, %v3004
  %v3294 = vsub.f32 %v1324, %v3004
  %v3295 = vsub.f32 %v1326, %v3004
  %v3296 = vsub.f32 %v1401, %v3004
  %v3297 = vsub.f32 %v1403, %v3004
  %v3298 = vsub.f32 %v1478, %v3004
  %v3299 = vsub.f32 %v1480, %v3004
  %v3300 = vsub.f32 %v1555, %v3004
  %v3301 = vsub.f32 %v1557, %v3004
  %v3302 = vsub.f32 %v1632, %v3004
  %v3303 = vsub.f32 %v1634, %v3004
  %v3304 = vsub.f32 %v1709, %v3004
  %v3305 = vsub.f32 %v1711, %v3004
  %v3306 = vsub.f32 %v1786, %v3004
  %v3307 = vsub.f32 %v1788, %v3004
  %v3308 = vsub.f32 %v1863, %v3004
  %v3309 = vsub.f32 %v1865, %v3004
  %v3310 = vsub.f32 %v1940, %v3004
  %v3311 = vsub.f32 %v1942, %v3004
  %v3312 = vsub.f32 %v2017, %v3004
  %v3313 = vsub.f32 %v2019, %v3004
  %v3314 = vsub.f32 %v2094, %v3004
  %v3315 = vsub.f32 %v2096, %v3004
  %v3316 = vsub.f32 %v2171, %v3004
  %v3317 = vsub.f32 %v2173, %v3004
  %v3318 = vsub.f32 %v2248, %v3004
  %v3319 = vsub.f32 %v2250, %v3004
  %v3320 = vsub.f32 %v2325, %v3004
  %v3321 = vsub.f32 %v2327, %v3004
  %v3322 = vsub.f32 %v2402, %v3004
  %v3323 = vsub.f32 %v2404, %v3004
  %v3324 = vsub.f32 %v2479, %v3004
  %v3325 = vsub.f32 %v2481, %v3004
  %v3326 = vsub.f32 %v2556, %v3004
  %v3327 = vsub.f32 %v2558, %v3004
  %v3328 = vsub.f32 %v2633, %v3004
  %v3329 = vsub.f32 %v2635, %v3004
  %v3330 = vsub.f32 %v2710, %v3004
  %v3331 = vsub.f32 %v2712, %v3004
  %v3332 = vsub.f32 %v2787, %v3004
  %v3333 = vsub.f32 %v2789, %v3004
  %v3334 = vsub.f32 %v2864, %v3004
  %v3335 = vsub.f32 %v2866, %v3004
  %v3336 = vsub.f32 %v483, %v3005
  %v3337 = vsub.f32 %v485, %v3005
  %v3338 = vsub.f32 %v560, %v3005
  %v3339 = vsub.f32 %v562, %v3005
  %v3340 = vsub.f32 %v637, %v3005
  %v3341 = vsub.f32 %v639, %v3005
  %v3342 = vsub.f32 %v714, %v3005
  %v3343 = vsub.f32 %v716, %v3005
  %v3344 = vsub.f32 %v791, %v3005
  %v3345 = vsub.f32 %v793, %v3005
  %v3346 = vsub.f32 %v868, %v3005
  %v3347 = vsub.f32 %v870, %v3005
  %v3348 = vsub.f32 %v945, %v3005
  %v3349 = vsub.f32 %v947, %v3005
  %v3350 = vsub.f32 %v1022, %v3005
  %v3351 = vsub.f32 %v1024, %v3005
  %v3352 = vsub.f32 %v1099, %v3005
  %v3353 = vsub.f32 %v1101, %v3005
  %v3354 = vsub.f32 %v1176, %v3005
  %v3355 = vsub.f32 %v1178, %v3005
  %v3356 = vsub.f32 %v1253, %v3005
  %v3357 = vsub.f32 %v1255, %v3005
  %v3358 = vsub.f32 %v1330, %v3005
  %v3359 = vsub.f32 %v1332, %v3005
  %v3360 = vsub.f32 %v1407, %v3005
  %v3361 = vsub.f32 %v1409, %v3005
  %v3362 = vsub.f32 %v1484, %v3005
  %v3363 = vsub.f32 %v1486, %v3005
  %v3364 = vsub.f32 %v1561, %v3005
  %v3365 = vsub.f32 %v1563, %v3005
  %v3366 = vsub.f32 %v1638, %v3005
  %v3367 = vsub.f32 %v1640, %v3005
  %v3368 = vsub.f32 %v1715, %v3005
  %v3369 = vsub.f32 %v1717, %v3005
  %v3370 = vsub.f32 %v1792, %v3005
  %v3371 = vsub.f32 %v1794, %v3005
  %v3372 = vsub.f32 %v1869, %v3005
  %v3373 = vsub.f32 %v1871, %v3005
  %v3374 = vsub.f32 %v1946, %v3005
  %v3375 = vsub.f32 %v1948, %v3005
  %v3376 = vsub.f32 %v2023, %v3005
  %v3377 = vsub.f32 %v2025, %v3005
  %v3378 = vsub.f32 %v2100, %v3005
  %v3379 = vsub.f32 %v2102, %v3005
  %v3380 = vsub.f32 %v2177, %v3005
  %v3381 = vsub.f32 %v2179, %v3005
  %v3382 = vsub.f32 %v2254, %v3005
  %v3383 = vsub.f32 %v2256, %v3005
  %v3384 = vsub.f32 %v2331, %v3005
  %v3385 = vsub.f32 %v2333, %v3005
  %v3386 = vsub.f32 %v2408, %v3005
  %v3387 = vsub.f32 %v2410, %v3005
  %v3388 = vsub.f32 %v2485, %v3005
  %v3389 = vsub.f32 %v2487, %v3005
  %v3390 = vsub.f32 %v2562, %v3005
  %v3391 = vsub.f32 %v2564, %v3005
  %v3392 = vsub.f32 %v2639, %v3005
  %v3393 = vsub.f32 %v2641, %v3005
  %v3394 = vsub.f32 %v2716, %v3005
  %v3395 = vsub.f32 %v2718, %v3005
  %v3396 = vsub.f32 %v2793, %v3005
  %v3397 = vsub.f32 %v2795, %v3005
  %v3398 = vsub.f32 %v2870, %v3005
  %v3399 = vsub.f32 %v2872, %v3005
  %v3400 = vadd.f32 %v3270, 1e-05
  %v3401 = vadd.f32 %v3271, 1e-05
  %v3402 = vrsqrt.pop %v3400
  %v3403 = vrsqrt.pop %v3401
  %v3404 = vmul.f32 %v3272, %v3402
  %v3405 = vmul.f32 %v3273, %v3402
  %v3406 = vmul.f32 %v3274, %v3402
  %v3407 = vmul.f32 %v3275, %v3402
  %v3408 = vmul.f32 %v3276, %v3402
  %v3409 = vmul.f32 %v3277, %v3402
  %v3410 = vmul.f32 %v3278, %v3402
  %v3411 = vmul.f32 %v3279, %v3402
  %v3412 = vmul.f32 %v3280, %v3402
  %v3413 = vmul.f32 %v3281, %v3402
  %v3414 = vmul.f32 %v3282, %v3402
  %v3415 = vmul.f32 %v3283, %v3402
  %v3416 = vmul.f32 %v3284, %v3402
  %v3417 = vmul.f32 %v3285, %v3402
  %v3418 = vmul.f32 %v3286, %v3402
  %v3419 = vmul.f32 %v3287, %v3402
  %v3420 = vmul.f32 %v3288, %v3402
  %v3421 = vmul.f32 %v3289, %v3402
  %v3422 = vmul.f32 %v3290, %v3402
  %v3423 = vmul.f32 %v3291, %v3402
  %v3424 = vmul.f32 %v3292, %v3402
  %v3425 = vmul.f32 %v3293, %v3402
  %v3426 = vmul.f32 %v3294, %v3402
  %v3427 = vmul.f32 %v3295, %v3402
  %v3428 = vmul.f32 %v3296, %v3402
  %v3429 = vmul.f32 %v3297, %v3402
  %v3430 = vmul.f32 %v3298, %v3402
  %v3431 = vmul.f32 %v3299, %v3402
  %v3432 = vmul.f32 %v3300, %v3402
  %v3433 = vmul.f32 %v3301, %v3402
  %v3434 = vmul.f32 %v3302, %v3402
  %v3435 = vmul.f32 %v3303, %v3402
  %v3436 = vmul.f32 %v3304, %v3402
  %v3437 = vmul.f32 %v3305, %v3402
  %v3438 = vmul.f32 %v3306, %v3402
  %v3439 = vmul.f32 %v3307, %v3402
  %v3440 = vmul.f32 %v3308, %v3402
  %v3441 = vmul.f32 %v3309, %v3402
  %v3442 = vmul.f32 %v3310, %v3402
  %v3443 = vmul.f32 %v3311, %v3402
  %v3444 = vmul.f32 %v3312, %v3402
  %v3445 = vmul.f32 %v3313, %v3402
  %v3446 = vmul.f32 %v3314, %v3402
  %v3447 = vmul.f32 %v3315, %v3402
  %v3448 = vmul.f32 %v3316, %v3402
  %v3449 = vmul.f32 %v3317, %v3402
  %v3450 = vmul.f32 %v3318, %v3402
  %v3451 = vmul.f32 %v3319, %v3402
  %v3452 = vmul.f32 %v3320, %v3402
  %v3453 = vmul.f32 %v3321, %v3402
  %v3454 = vmul.f32 %v3322, %v3402
  %v3455 = vmul.f32 %v3323, %v3402
  %v3456 = vmul.f32 %v3324, %v3402
  %v3457 = vmul.f32 %v3325, %v3402
  %v3458 = vmul.f32 %v3326, %v3402
  %v3459 = vmul.f32 %v3327, %v3402
  %v3460 = vmul.f32 %v3328, %v3402
  %v3461 = vmul.f32 %v3329, %v3402
  %v3462 = vmul.f32 %v3330, %v3402
  %v3463 = vmul.f32 %v3331, %v3402
  %v3464 = vmul.f32 %v3332, %v3402
  %v3465 = vmul.f32 %v3333, %v3402
  %v3466 = vmul.f32 %v3334, %v3402
  %v3467 = vmul.f32 %v3335, %v3402
  %v3468 = vmul.f32 %v3336, %v3403
  %v3469 = vmul.f32 %v3337, %v3403
  %v3470 = vmul.f32 %v3338, %v3403
  %v3471 = vmul.f32 %v3339, %v3403
  %v3472 = vmul.f32 %v3340, %v3403
  %v3473 = vmul.f32 %v3341, %v3403
  %v3474 = vmul.f32 %v3342, %v3403
  %v3475 = vmul.f32 %v3343, %v3403
  %v3476 = vmul.f32 %v3344, %v3403
  %v3477 = vmul.f32 %v3345, %v3403
  %v3478 = vmul.f32 %v3346, %v3403
  %v3479 = vmul.f32 %v3347, %v3403
  %v3480 = vmul.f32 %v3348, %v3403
  %v3481 = vmul.f32 %v3349, %v3403
  %v3482 = vmul.f32 %v3350, %v3403
  %v3483 = vmul.f32 %v3351, %v3403
  %v3484 = vmul.f32 %v3352, %v3403
  %v3485 = vmul.f32 %v3353, %v3403
  %v3486 = vmul.f32 %v3354, %v3403
  %v3487 = vmul.f32 %v3355, %v3403
  %v3488 = vmul.f32 %v3356, %v3403
  %v3489 = vmul.f32 %v3357, %v3403
  %v3490 = vmul.f32 %v3358, %v3403
  %v3491 = vmul.f32 %v3359, %v3403
  %v3492 = vmul.f32 %v3360, %v3403
  %v3493 = vmul.f32 %v3361, %v3403
  %v3494 = vmul.f32 %v3362, %v3403
  %v3495 = vmul.f32 %v3363, %v3403
  %v3496 = vmul.f32 %v3364, %v3403
  %v3497 = vmul.f32 %v3365, %v3403
  %v3498 = vmul.f32 %v3366, %v3403
  %v3499 = vmul.f32 %v3367, %v3403
  %v3500 = vmul.f32 %v3368, %v3403
  %v3501 = vmul.f32 %v3369, %v3403
  %v3502 = vmul.f32 %v3370, %v3403
  %v3503 = vmul.f32 %v3371, %v3403
  %v3504 = vmul.f32 %v3372, %v3403
  %v3505 = vmul.f32 %v3373, %v3403
  %v3506 = vmul.f32 %v3374, %v3403
  %v3507 = vmul.f32 %v3375, %v3403
  %v3508 = vmul.f32 %v3376, %v3403
  %v3509 = vmul.f32 %v3377, %v3403
  %v3510 = vmul.f32 %v3378, %v3403
  %v3511 = vmul.f32 %v3379, %v3403
  %v3512 = vmul.f32 %v3380, %v3403
  %v3513 = vmul.f32 %v3381, %v3403
  %v3514 = vmul.f32 %v3382, %v3403
  %v3515 = vmul.f32 %v3383, %v3403
  %v3516 = vmul.f32 %v3384, %v3403
  %v3517 = vmul.f32 %v3385, %v3403
  %v3518 = vmul.f32 %v3386, %v3403
  %v3519 = vmul.f32 %v3387, %v3403
  %v3520 = vmul.f32 %v3388, %v3403
  %v3521 = vmul.f32 %v3389, %v3403
  %v3522 = vmul.f32 %v3390, %v3403
  %v3523 = vmul.f32 %v3391, %v3403
  %v3524 = vmul.f32 %v3392, %v3403
  %v3525 = vmul.f32 %v3393, %v3403
  %v3526 = vmul.f32 %v3394, %v3403
  %v3527 = vmul.f32 %v3395, %v3403
  %v3528 = vmul.f32 %v3396, %v3403
  %v3529 = vmul.f32 %v3397, %v3403
  %v3530 = vmul.f32 %v3398, %v3403
  %v3531 = vmul.f32 %v3399, %v3403
  %v3532 = vld [vmem:[%s2] sm:$0xff]
  %v3533 = vld [vmem:[%s2 + $0x8] sm:$0xff]
  %3535 = vset.pattern.permute.xlu0 0
  %3536 = vperm.xlu0 %3535, %v3532
  %v3537 = vpop.permute.xlu0 %3536
  %3540 = vset.pattern.permute.xlu0 0
  %3541 = vperm.xlu0 %3540, %v3533
  %v3542 = vpop.permute.xlu0 %3541
  %v3544 = vmul.f32 %v3404, %v3537
  %v3545 = vmul.f32 %v3405, %v3537
  %v3546 = vmul.f32 %v3406, %v3537
  %v3547 = vmul.f32 %v3407, %v3537
  %v3548 = vmul.f32 %v3408, %v3537
  %v3549 = vmul.f32 %v3409, %v3537
  %v3550 = vmul.f32 %v3410, %v3537
  %v3551 = vmul.f32 %v3411, %v3537
  %v3552 = vmul.f32 %v3412, %v3537
  %v3553 = vmul.f32 %v3413, %v3537
  %v3554 = vmul.f32 %v3414, %v3537
  %v3555 = vmul.f32 %v3415, %v3537
  %v3556 = vmul.f32 %v3416, %v3537
  %v3557 = vmul.f32 %v3417, %v3537
  %v3558 = vmul.f32 %v3418, %v3537
  %v3559 = vmul.f32 %v3419, %v3537
  %v3560 = vmul.f32 %v3420, %v3537
  %v3561 = vmul.f32 %v3421, %v3537
  %v3562 = vmul.f32 %v3422, %v3537
  %v3563 = vmul.f32 %v3423, %v3537
  %v3564 = vmul.f32 %v3424, %v3537
  %v3565 = vmul.f32 %v3425, %v3537
  %v3566 = vmul.f32 %v3426, %v3537
  %v3567 = vmul.f32 %v3427, %v3537
  %v3568 = vmul.f32 %v3428, %v3537
  %v3569 = vmul.f32 %v3429, %v3537
  %v3570 = vmul.f32 %v3430, %v3537
  %v3571 = vmul.f32 %v3431, %v3537
  %v3572 = vmul.f32 %v3432, %v3537
  %v3573 = vmul.f32 %v3433, %v3537
  %v3574 = vmul.f32 %v3434, %v3537
  %v3575 = vmul.f32 %v3435, %v3537
  %v3576 = vmul.f32 %v3436, %v3537
  %v3577 = vmul.f32 %v3437, %v3537
  %v3578 = vmul.f32 %v3438, %v3537
  %v3579 = vmul.f32 %v3439, %v3537
  %v3580 = vmul.f32 %v3440, %v3537
  %v3581 = vmul.f32 %v3441, %v3537
  %v3582 = vmul.f32 %v3442, %v3537
  %v3583 = vmul.f32 %v3443, %v3537
  %v3584 = vmul.f32 %v3444, %v3537
  %v3585 = vmul.f32 %v3445, %v3537
  %v3586 = vmul.f32 %v3446, %v3537
  %v3587 = vmul.f32 %v3447, %v3537
  %v3588 = vmul.f32 %v3448, %v3537
  %v3589 = vmul.f32 %v3449, %v3537
  %v3590 = vmul.f32 %v3450, %v3537
  %v3591 = vmul.f32 %v3451, %v3537
  %v3592 = vmul.f32 %v3452, %v3537
  %v3593 = vmul.f32 %v3453, %v3537
  %v3594 = vmul.f32 %v3454, %v3537
  %v3595 = vmul.f32 %v3455, %v3537
  %v3596 = vmul.f32 %v3456, %v3537
  %v3597 = vmul.f32 %v3457, %v3537
  %v3598 = vmul.f32 %v3458, %v3537
  %v3599 = vmul.f32 %v3459, %v3537
  %v3600 = vmul.f32 %v3460, %v3537
  %v3601 = vmul.f32 %v3461, %v3537
  %v3602 = vmul.f32 %v3462, %v3537
  %v3603 = vmul.f32 %v3463, %v3537
  %v3604 = vmul.f32 %v3464, %v3537
  %v3605 = vmul.f32 %v3465, %v3537
  %v3606 = vmul.f32 %v3466, %v3537
  %v3607 = vmul.f32 %v3467, %v3537
  %v3608 = vmul.f32 %v3468, %v3542
  %v3609 = vmul.f32 %v3469, %v3542
  %v3610 = vmul.f32 %v3470, %v3542
  %v3611 = vmul.f32 %v3471, %v3542
  %v3612 = vmul.f32 %v3472, %v3542
  %v3613 = vmul.f32 %v3473, %v3542
  %v3614 = vmul.f32 %v3474, %v3542
  %v3615 = vmul.f32 %v3475, %v3542
  %v3616 = vmul.f32 %v3476, %v3542
  %v3617 = vmul.f32 %v3477, %v3542
  %v3618 = vmul.f32 %v3478, %v3542
  %v3619 = vmul.f32 %v3479, %v3542
  %v3620 = vmul.f32 %v3480, %v3542
  %v3621 = vmul.f32 %v3481, %v3542
  %v3622 = vmul.f32 %v3482, %v3542
  %v3623 = vmul.f32 %v3483, %v3542
  %v3624 = vmul.f32 %v3484, %v3542
  %v3625 = vmul.f32 %v3485, %v3542
  %v3626 = vmul.f32 %v3486, %v3542
  %v3627 = vmul.f32 %v3487, %v3542
  %v3628 = vmul.f32 %v3488, %v3542
  %v3629 = vmul.f32 %v3489, %v3542
  %v3630 = vmul.f32 %v3490, %v3542
  %v3631 = vmul.f32 %v3491, %v3542
  %v3632 = vmul.f32 %v3492, %v3542
  %v3633 = vmul.f32 %v3493, %v3542
  %v3634 = vmul.f32 %v3494, %v3542
  %v3635 = vmul.f32 %v3495, %v3542
  %v3636 = vmul.f32 %v3496, %v3542
  %v3637 = vmul.f32 %v3497, %v3542
  %v3638 = vmul.f32 %v3498, %v3542
  %v3639 = vmul.f32 %v3499, %v3542
  %v3640 = vmul.f32 %v3500, %v3542
  %v3641 = vmul.f32 %v3501, %v3542
  %v3642 = vmul.f32 %v3502, %v3542
  %v3643 = vmul.f32 %v3503, %v3542
  %v3644 = vmul.f32 %v3504, %v3542
  %v3645 = vmul.f32 %v3505, %v3542
  %v3646 = vmul.f32 %v3506, %v3542
  %v3647 = vmul.f32 %v3507, %v3542
  %v3648 = vmul.f32 %v3508, %v3542
  %v3649 = vmul.f32 %v3509, %v3542
  %v3650 = vmul.f32 %v3510, %v3542
  %v3651 = vmul.f32 %v3511, %v3542
  %v3652 = vmul.f32 %v3512, %v3542
  %v3653 = vmul.f32 %v3513, %v3542
  %v3654 = vmul.f32 %v3514, %v3542
  %v3655 = vmul.f32 %v3515, %v3542
  %v3656 = vmul.f32 %v3516, %v3542
  %v3657 = vmul.f32 %v3517, %v3542
  %v3658 = vmul.f32 %v3518, %v3542
  %v3659 = vmul.f32 %v3519, %v3542
  %v3660 = vmul.f32 %v3520, %v3542
  %v3661 = vmul.f32 %v3521, %v3542
  %v3662 = vmul.f32 %v3522, %v3542
  %v3663 = vmul.f32 %v3523, %v3542
  %v3664 = vmul.f32 %v3524, %v3542
  %v3665 = vmul.f32 %v3525, %v3542
  %v3666 = vmul.f32 %v3526, %v3542
  %v3667 = vmul.f32 %v3527, %v3542
  %v3668 = vmul.f32 %v3528, %v3542
  %v3669 = vmul.f32 %v3529, %v3542
  %v3670 = vmul.f32 %v3530, %v3542
  %v3671 = vmul.f32 %v3531, %v3542
  %v3672 = vld [vmem:[%s3] sm:$0xff]
  %v3673 = vld [vmem:[%s3 + $0x8] sm:$0xff]
  %3675 = vset.pattern.permute.xlu0 0
  %3676 = vperm.xlu0 %3675, %v3672
  %v3677 = vpop.permute.xlu0 %3676
  %3680 = vset.pattern.permute.xlu0 0
  %3681 = vperm.xlu0 %3680, %v3673
  %v3682 = vpop.permute.xlu0 %3681
  %v3684 = vadd.f32 %v3544, %v3677
  %v3685 = vadd.f32 %v3545, %v3677
  %v3686 = vadd.f32 %v3546, %v3677
  %v3687 = vadd.f32 %v3547, %v3677
  %v3688 = vadd.f32 %v3548, %v3677
  %v3689 = vadd.f32 %v3549, %v3677
  %v3690 = vadd.f32 %v3550, %v3677
  %v3691 = vadd.f32 %v3551, %v3677
  %v3692 = vadd.f32 %v3552, %v3677
  %v3693 = vadd.f32 %v3553, %v3677
  %v3694 = vadd.f32 %v3554, %v3677
  %v3695 = vadd.f32 %v3555, %v3677
  %v3696 = vadd.f32 %v3556, %v3677
  %v3697 = vadd.f32 %v3557, %v3677
  %v3698 = vadd.f32 %v3558, %v3677
  %v3699 = vadd.f32 %v3559, %v3677
  %v3700 = vadd.f32 %v3560, %v3677
  %v3701 = vadd.f32 %v3561, %v3677
  %v3702 = vadd.f32 %v3562, %v3677
  %v3703 = vadd.f32 %v3563, %v3677
  %v3704 = vadd.f32 %v3564, %v3677
  %v3705 = vadd.f32 %v3565, %v3677
  %v3706 = vadd.f32 %v3566, %v3677
  %v3707 = vadd.f32 %v3567, %v3677
  %v3708 = vadd.f32 %v3568, %v3677
  %v3709 = vadd.f32 %v3569, %v3677
  %v3710 = vadd.f32 %v3570, %v3677
  %v3711 = vadd.f32 %v3571, %v3677
  %v3712 = vadd.f32 %v3572, %v3677
  %v3713 = vadd.f32 %v3573, %v3677
  %v3714 = vadd.f32 %v3574, %v3677
  %v3715 = vadd.f32 %v3575, %v3677
  %v3716 = vadd.f32 %v3576, %v3677
  %v3717 = vadd.f32 %v3577, %v3677
  %v3718 = vadd.f32 %v3578, %v3677
  %v3719 = vadd.f32 %v3579, %v3677
  %v3720 = vadd.f32 %v3580, %v3677
  %v3721 = vadd.f32 %v3581, %v3677
  %v3722 = vadd.f32 %v3582, %v3677
  %v3723 = vadd.f32 %v3583, %v3677
  %v3724 = vadd.f32 %v3584, %v3677
  %v3725 = vadd.f32 %v3585, %v3677
  %v3726 = vadd.f32 %v3586, %v3677
  %v3727 = vadd.f32 %v3587, %v3677
  %v3728 = vadd.f32 %v3588, %v3677
  %v3729 = vadd.f32 %v3589, %v3677
  %v3730 = vadd.f32 %v3590, %v3677
  %v3731 = vadd.f32 %v3591, %v3677
  %v3732 = vadd.f32 %v3592, %v3677
  %v3733 = vadd.f32 %v3593, %v3677
  %v3734 = vadd.f32 %v3594, %v3677
  %v3735 = vadd.f32 %v3595, %v3677
  %v3736 = vadd.f32 %v3596, %v3677
  %v3737 = vadd.f32 %v3597, %v3677
  %v3738 = vadd.f32 %v3598, %v3677
  %v3739 = vadd.f32 %v3599, %v3677
  %v3740 = vadd.f32 %v3600, %v3677
  %v3741 = vadd.f32 %v3601, %v3677
  %v3742 = vadd.f32 %v3602, %v3677
  %v3743 = vadd.f32 %v3603, %v3677
  %v3744 = vadd.f32 %v3604, %v3677
  %v3745 = vadd.f32 %v3605, %v3677
  %v3746 = vadd.f32 %v3606, %v3677
  %v3747 = vadd.f32 %v3607, %v3677
  %v3748 = vadd.f32 %v3608, %v3682
  %v3749 = vadd.f32 %v3609, %v3682
  %v3750 = vadd.f32 %v3610, %v3682
  %v3751 = vadd.f32 %v3611, %v3682
  %v3752 = vadd.f32 %v3612, %v3682
  %v3753 = vadd.f32 %v3613, %v3682
  %v3754 = vadd.f32 %v3614, %v3682
  %v3755 = vadd.f32 %v3615, %v3682
  %v3756 = vadd.f32 %v3616, %v3682
  %v3757 = vadd.f32 %v3617, %v3682
  %v3758 = vadd.f32 %v3618, %v3682
  %v3759 = vadd.f32 %v3619, %v3682
  %v3760 = vadd.f32 %v3620, %v3682
  %v3761 = vadd.f32 %v3621, %v3682
  %v3762 = vadd.f32 %v3622, %v3682
  %v3763 = vadd.f32 %v3623, %v3682
  %v3764 = vadd.f32 %v3624, %v3682
  %v3765 = vadd.f32 %v3625, %v3682
  %v3766 = vadd.f32 %v3626, %v3682
  %v3767 = vadd.f32 %v3627, %v3682
  %v3768 = vadd.f32 %v3628, %v3682
  %v3769 = vadd.f32 %v3629, %v3682
  %v3770 = vadd.f32 %v3630, %v3682
  %v3771 = vadd.f32 %v3631, %v3682
  %v3772 = vadd.f32 %v3632, %v3682
  %v3773 = vadd.f32 %v3633, %v3682
  %v3774 = vadd.f32 %v3634, %v3682
  %v3775 = vadd.f32 %v3635, %v3682
  %v3776 = vadd.f32 %v3636, %v3682
  %v3777 = vadd.f32 %v3637, %v3682
  %v3778 = vadd.f32 %v3638, %v3682
  %v3779 = vadd.f32 %v3639, %v3682
  %v3780 = vadd.f32 %v3640, %v3682
  %v3781 = vadd.f32 %v3641, %v3682
  %v3782 = vadd.f32 %v3642, %v3682
  %v3783 = vadd.f32 %v3643, %v3682
  %v3784 = vadd.f32 %v3644, %v3682
  %v3785 = vadd.f32 %v3645, %v3682
  %v3786 = vadd.f32 %v3646, %v3682
  %v3787 = vadd.f32 %v3647, %v3682
  %v3788 = vadd.f32 %v3648, %v3682
  %v3789 = vadd.f32 %v3649, %v3682
  %v3790 = vadd.f32 %v3650, %v3682
  %v3791 = vadd.f32 %v3651, %v3682
  %v3792 = vadd.f32 %v3652, %v3682
  %v3793 = vadd.f32 %v3653, %v3682
  %v3794 = vadd.f32 %v3654, %v3682
  %v3795 = vadd.f32 %v3655, %v3682
  %v3796 = vadd.f32 %v3656, %v3682
  %v3797 = vadd.f32 %v3657, %v3682
  %v3798 = vadd.f32 %v3658, %v3682
  %v3799 = vadd.f32 %v3659, %v3682
  %v3800 = vadd.f32 %v3660, %v3682
  %v3801 = vadd.f32 %v3661, %v3682
  %v3802 = vadd.f32 %v3662, %v3682
  %v3803 = vadd.f32 %v3663, %v3682
  %v3804 = vadd.f32 %v3664, %v3682
  %v3805 = vadd.f32 %v3665, %v3682
  %v3806 = vadd.f32 %v3666, %v3682
  %v3807 = vadd.f32 %v3667, %v3682
  %v3808 = vadd.f32 %v3668, %v3682
  %v3809 = vadd.f32 %v3669, %v3682
  %v3810 = vadd.f32 %v3670, %v3682
  %v3811 = vadd.f32 %v3671, %v3682
  %v3812 = vmax.f32 %v3684, 0.0
  %v3813 = vmax.f32 %v3685, 0.0
  %v3814 = vmax.f32 %v3686, 0.0
  %v3815 = vmax.f32 %v3687, 0.0
  %v3816 = vmax.f32 %v3688, 0.0
  %v3817 = vmax.f32 %v3689, 0.0
  %v3818 = vmax.f32 %v3690, 0.0
  %v3819 = vmax.f32 %v3691, 0.0
  %v3820 = vmax.f32 %v3692, 0.0
  %v3821 = vmax.f32 %v3693, 0.0
  %v3822 = vmax.f32 %v3694, 0.0
  %v3823 = vmax.f32 %v3695, 0.0
  %v3824 = vmax.f32 %v3696, 0.0
  %v3825 = vmax.f32 %v3697, 0.0
  %v3826 = vmax.f32 %v3698, 0.0
  %v3827 = vmax.f32 %v3699, 0.0
  %v3828 = vmax.f32 %v3700, 0.0
  %v3829 = vmax.f32 %v3701, 0.0
  %v3830 = vmax.f32 %v3702, 0.0
  %v3831 = vmax.f32 %v3703, 0.0
  %v3832 = vmax.f32 %v3704, 0.0
  %v3833 = vmax.f32 %v3705, 0.0
  %v3834 = vmax.f32 %v3706, 0.0
  %v3835 = vmax.f32 %v3707, 0.0
  %v3836 = vmax.f32 %v3708, 0.0
  %v3837 = vmax.f32 %v3709, 0.0
  %v3838 = vmax.f32 %v3710, 0.0
  %v3839 = vmax.f32 %v3711, 0.0
  %v3840 = vmax.f32 %v3712, 0.0
  %v3841 = vmax.f32 %v3713, 0.0
  %v3842 = vmax.f32 %v3714, 0.0
  %v3843 = vmax.f32 %v3715, 0.0
  %v3844 = vmax.f32 %v3716, 0.0
  %v3845 = vmax.f32 %v3717, 0.0
  %v3846 = vmax.f32 %v3718, 0.0
  %v3847 = vmax.f32 %v3719, 0.0
  %v3848 = vmax.f32 %v3720, 0.0
  %v3849 = vmax.f32 %v3721, 0.0
  %v3850 = vmax.f32 %v3722, 0.0
  %v3851 = vmax.f32 %v3723, 0.0
  %v3852 = vmax.f32 %v3724, 0.0
  %v3853 = vmax.f32 %v3725, 0.0
  %v3854 = vmax.f32 %v3726, 0.0
  %v3855 = vmax.f32 %v3727, 0.0
  %v3856 = vmax.f32 %v3728, 0.0
  %v3857 = vmax.f32 %v3729, 0.0
  %v3858 = vmax.f32 %v3730, 0.0
  %v3859 = vmax.f32 %v3731, 0.0
  %v3860 = vmax.f32 %v3732, 0.0
  %v3861 = vmax.f32 %v3733, 0.0
  %v3862 = vmax.f32 %v3734, 0.0
  %v3863 = vmax.f32 %v3735, 0.0
  %v3864 = vmax.f32 %v3736, 0.0
  %v3865 = vmax.f32 %v3737, 0.0
  %v3866 = vmax.f32 %v3738, 0.0
  %v3867 = vmax.f32 %v3739, 0.0
  %v3868 = vmax.f32 %v3740, 0.0
  %v3869 = vmax.f32 %v3741, 0.0
  %v3870 = vmax.f32 %v3742, 0.0
  %v3871 = vmax.f32 %v3743, 0.0
  %v3872 = vmax.f32 %v3744, 0.0
  %v3873 = vmax.f32 %v3745, 0.0
  %v3874 = vmax.f32 %v3746, 0.0
  %v3875 = vmax.f32 %v3747, 0.0
  %v3876 = vmax.f32 %v3748, 0.0
  %v3877 = vmax.f32 %v3749, 0.0
  %v3878 = vmax.f32 %v3750, 0.0
  %v3879 = vmax.f32 %v3751, 0.0
  %v3880 = vmax.f32 %v3752, 0.0
  %v3881 = vmax.f32 %v3753, 0.0
  %v3882 = vmax.f32 %v3754, 0.0
  %v3883 = vmax.f32 %v3755, 0.0
  %v3884 = vmax.f32 %v3756, 0.0
  %v3885 = vmax.f32 %v3757, 0.0
  %v3886 = vmax.f32 %v3758, 0.0
  %v3887 = vmax.f32 %v3759, 0.0
  %v3888 = vmax.f32 %v3760, 0.0
  %v3889 = vmax.f32 %v3761, 0.0
  %v3890 = vmax.f32 %v3762, 0.0
  %v3891 = vmax.f32 %v3763, 0.0
  %v3892 = vmax.f32 %v3764, 0.0
  %v3893 = vmax.f32 %v3765, 0.0
  %v3894 = vmax.f32 %v3766, 0.0
  %v3895 = vmax.f32 %v3767, 0.0
  %v3896 = vmax.f32 %v3768, 0.0
  %v3897 = vmax.f32 %v3769, 0.0
  %v3898 = vmax.f32 %v3770, 0.0
  %v3899 = vmax.f32 %v3771, 0.0
  %v3900 = vmax.f32 %v3772, 0.0
  %v3901 = vmax.f32 %v3773, 0.0
  %v3902 = vmax.f32 %v3774, 0.0
  %v3903 = vmax.f32 %v3775, 0.0
  %v3904 = vmax.f32 %v3776, 0.0
  %v3905 = vmax.f32 %v3777, 0.0
  %v3906 = vmax.f32 %v3778, 0.0
  %v3907 = vmax.f32 %v3779, 0.0
  %v3908 = vmax.f32 %v3780, 0.0
  %v3909 = vmax.f32 %v3781, 0.0
  %v3910 = vmax.f32 %v3782, 0.0
  %v3911 = vmax.f32 %v3783, 0.0
  %v3912 = vmax.f32 %v3784, 0.0
  %v3913 = vmax.f32 %v3785, 0.0
  %v3914 = vmax.f32 %v3786, 0.0
  %v3915 = vmax.f32 %v3787, 0.0
  %v3916 = vmax.f32 %v3788, 0.0
  %v3917 = vmax.f32 %v3789, 0.0
  %v3918 = vmax.f32 %v3790, 0.0
  %v3919 = vmax.f32 %v3791, 0.0
  %v3920 = vmax.f32 %v3792, 0.0
  %v3921 = vmax.f32 %v3793, 0.0
  %v3922 = vmax.f32 %v3794, 0.0
  %v3923 = vmax.f32 %v3795, 0.0
  %v3924 = vmax.f32 %v3796, 0.0
  %v3925 = vmax.f32 %v3797, 0.0
  %v3926 = vmax.f32 %v3798, 0.0
  %v3927 = vmax.f32 %v3799, 0.0
  %v3928 = vmax.f32 %v3800, 0.0
  %v3929 = vmax.f32 %v3801, 0.0
  %v3930 = vmax.f32 %v3802, 0.0
  %v3931 = vmax.f32 %v3803, 0.0
  %v3932 = vmax.f32 %v3804, 0.0
  %v3933 = vmax.f32 %v3805, 0.0
  %v3934 = vmax.f32 %v3806, 0.0
  %v3935 = vmax.f32 %v3807, 0.0
  %v3936 = vmax.f32 %v3808, 0.0
  %v3937 = vmax.f32 %v3809, 0.0
  %v3938 = vmax.f32 %v3810, 0.0
  %v3939 = vmax.f32 %v3811, 0.0
  %3940 = vst [vmem:[%s4] sm:$0xff] %v3812
  %3941 = vst [vmem:[%s4 + $0x8] sm:$0xff] %v3813
  %3942 = vst [vmem:[%s4 + $0x10] sm:$0xff] %v3814
  %3943 = vst [vmem:[%s4 + $0x18] sm:$0xff] %v3815
  %3944 = vst [vmem:[%s4 + $0x20] sm:$0xff] %v3816
  %3945 = vst [vmem:[%s4 + $0x28] sm:$0xff] %v3817
  %3946 = vst [vmem:[%s4 + $0x30] sm:$0xff] %v3818
  %3947 = vst [vmem:[%s4 + $0x38] sm:$0xff] %v3819
  %3948 = vst [vmem:[%s4 + $0x40] sm:$0xff] %v3820
  %3949 = vst [vmem:[%s4 + $0x48] sm:$0xff] %v3821
  %3950 = vst [vmem:[%s4 + $0x50] sm:$0xff] %v3822
  %3951 = vst [vmem:[%s4 + $0x58] sm:$0xff] %v3823
  %3952 = vst [vmem:[%s4 + $0x60] sm:$0xff] %v3824
  %3953 = vst [vmem:[%s4 + $0x68] sm:$0xff] %v3825
  %3954 = vst [vmem:[%s4 + $0x70] sm:$0xff] %v3826
  %3955 = vst [vmem:[%s4 + $0x78] sm:$0xff] %v3827
  %3956 = vst [vmem:[%s4 + $0x80] sm:$0xff] %v3828
  %3957 = vst [vmem:[%s4 + $0x88] sm:$0xff] %v3829
  %3958 = vst [vmem:[%s4 + $0x90] sm:$0xff] %v3830
  %3959 = vst [vmem:[%s4 + $0x98] sm:$0xff] %v3831
  %3960 = vst [vmem:[%s4 + $0xa0] sm:$0xff] %v3832
  %3961 = vst [vmem:[%s4 + $0xa8] sm:$0xff] %v3833
  %3962 = vst [vmem:[%s4 + $0xb0] sm:$0xff] %v3834
  %3963 = vst [vmem:[%s4 + $0xb8] sm:$0xff] %v3835
  %3964 = vst [vmem:[%s4 + $0xc0] sm:$0xff] %v3836
  %3965 = vst [vmem:[%s4 + $0xc8] sm:$0xff] %v3837
  %3966 = vst [vmem:[%s4 + $0xd0] sm:$0xff] %v3838
  %3967 = vst [vmem:[%s4 + $0xd8] sm:$0xff] %v3839
  %3968 = vst [vmem:[%s4 + $0xe0] sm:$0xff] %v3840
  %3969 = vst [vmem:[%s4 + $0xe8] sm:$0xff] %v3841
  %3970 = vst [vmem:[%s4 + $0xf0] sm:$0xff] %v3842
  %3971 = vst [vmem:[%s4 + $0xf8] sm:$0xff] %v3843
  %3972 = vst [vmem:[%s4 + $0x100] sm:$0xff] %v3844
  %3973 = vst [vmem:[%s4 + $0x108] sm:$0xff] %v3845
  %3974 = vst [vmem:[%s4 + $0x110] sm:$0xff] %v3846
  %3975 = vst [vmem:[%s4 + $0x118] sm:$0xff] %v3847
  %3976 = vst [vmem:[%s4 + $0x120] sm:$0xff] %v3848
  %3977 = vst [vmem:[%s4 + $0x128] sm:$0xff] %v3849
  %3978 = vst [vmem:[%s4 + $0x130] sm:$0xff] %v3850
  %3979 = vst [vmem:[%s4 + $0x138] sm:$0xff] %v3851
  %3980 = vst [vmem:[%s4 + $0x140] sm:$0xff] %v3852
  %3981 = vst [vmem:[%s4 + $0x148] sm:$0xff] %v3853
  %3982 = vst [vmem:[%s4 + $0x150] sm:$0xff] %v3854
  %3983 = vst [vmem:[%s4 + $0x158] sm:$0xff] %v3855
  %3984 = vst [vmem:[%s4 + $0x160] sm:$0xff] %v3856
  %3985 = vst [vmem:[%s4 + $0x168] sm:$0xff] %v3857
  %3986 = vst [vmem:[%s4 + $0x170] sm:$0xff] %v3858
  %3987 = vst [vmem:[%s4 + $0x178] sm:$0xff] %v3859
  %3988 = vst [vmem:[%s4 + $0x180] sm:$0xff] %v3860
  %3989 = vst [vmem:[%s4 + $0x188] sm:$0xff] %v3861
  %3990 = vst [vmem:[%s4 + $0x190] sm:$0xff] %v3862
  %3991 = vst [vmem:[%s4 + $0x198] sm:$0xff] %v3863
  %3992 = vst [vmem:[%s4 + $0x1a0] sm:$0xff] %v3864
  %3993 = vst [vmem:[%s4 + $0x1a8] sm:$0xff] %v3865
  %3994 = vst [vmem:[%s4 + $0x1b0] sm:$0xff] %v3866
  %3995 = vst [vmem:[%s4 + $0x1b8] sm:$0xff] %v3867
  %3996 = vst [vmem:[%s4 + $0x1c0] sm:$0xff] %v3868
  %3997 = vst [vmem:[%s4 + $0x1c8] sm:$0xff] %v3869
  %3998 = vst [vmem:[%s4 + $0x1d0] sm:$0xff] %v3870
  %3999 = vst [vmem:[%s4 + $0x1d8] sm:$0xff] %v3871
  %4000 = vst [vmem:[%s4 + $0x1e0] sm:$0xff] %v3872
  %4001 = vst [vmem:[%s4 + $0x1e8] sm:$0xff] %v3873
  %4002 = vst [vmem:[%s4 + $0x1f0] sm:$0xff] %v3874
  %4003 = vst [vmem:[%s4 + $0x1f8] sm:$0xff] %v3875
  %4004 = vst [vmem:[%s4 + $0x200] sm:$0xff] %v3876
  %4005 = vst [vmem:[%s4 + $0x208] sm:$0xff] %v3877
  %4006 = vst [vmem:[%s4 + $0x210] sm:$0xff] %v3878
  %4007 = vst [vmem:[%s4 + $0x218] sm:$0xff] %v3879
  %4008 = vst [vmem:[%s4 + $0x220] sm:$0xff] %v3880
  %4009 = vst [vmem:[%s4 + $0x228] sm:$0xff] %v3881
  %4010 = vst [vmem:[%s4 + $0x230] sm:$0xff] %v3882
  %4011 = vst [vmem:[%s4 + $0x238] sm:$0xff] %v3883
  %4012 = vst [vmem:[%s4 + $0x240] sm:$0xff] %v3884
  %4013 = vst [vmem:[%s4 + $0x248] sm:$0xff] %v3885
  %4014 = vst [vmem:[%s4 + $0x250] sm:$0xff] %v3886
  %4015 = vst [vmem:[%s4 + $0x258] sm:$0xff] %v3887
  %4016 = vst [vmem:[%s4 + $0x260] sm:$0xff] %v3888
  %4017 = vst [vmem:[%s4 + $0x268] sm:$0xff] %v3889
  %4018 = vst [vmem:[%s4 + $0x270] sm:$0xff] %v3890
  %4019 = vst [vmem:[%s4 + $0x278] sm:$0xff] %v3891
  %4020 = vst [vmem:[%s4 + $0x280] sm:$0xff] %v3892
  %4021 = vst [vmem:[%s4 + $0x288] sm:$0xff] %v3893
  %4022 = vst [vmem:[%s4 + $0x290] sm:$0xff] %v3894
  %4023 = vst [vmem:[%s4 + $0x298] sm:$0xff] %v3895
  %4024 = vst [vmem:[%s4 + $0x2a0] sm:$0xff] %v3896
  %4025 = vst [vmem:[%s4 + $0x2a8] sm:$0xff] %v3897
  %4026 = vst [vmem:[%s4 + $0x2b0] sm:$0xff] %v3898
  %4027 = vst [vmem:[%s4 + $0x2b8] sm:$0xff] %v3899
  %4028 = vst [vmem:[%s4 + $0x2c0] sm:$0xff] %v3900
  %4029 = vst [vmem:[%s4 + $0x2c8] sm:$0xff] %v3901
  %4030 = vst [vmem:[%s4 + $0x2d0] sm:$0xff] %v3902
  %4031 = vst [vmem:[%s4 + $0x2d8] sm:$0xff] %v3903
  %4032 = vst [vmem:[%s4 + $0x2e0] sm:$0xff] %v3904
  %4033 = vst [vmem:[%s4 + $0x2e8] sm:$0xff] %v3905
  %4034 = vst [vmem:[%s4 + $0x2f0] sm:$0xff] %v3906
  %4035 = vst [vmem:[%s4 + $0x2f8] sm:$0xff] %v3907
  %4036 = vst [vmem:[%s4 + $0x300] sm:$0xff] %v3908
  %4037 = vst [vmem:[%s4 + $0x308] sm:$0xff] %v3909
  %4038 = vst [vmem:[%s4 + $0x310] sm:$0xff] %v3910
  %4039 = vst [vmem:[%s4 + $0x318] sm:$0xff] %v3911
  %4040 = vst [vmem:[%s4 + $0x320] sm:$0xff] %v3912
  %4041 = vst [vmem:[%s4 + $0x328] sm:$0xff] %v3913
  %4042 = vst [vmem:[%s4 + $0x330] sm:$0xff] %v3914
  %4043 = vst [vmem:[%s4 + $0x338] sm:$0xff] %v3915
  %4044 = vst [vmem:[%s4 + $0x340] sm:$0xff] %v3916
  %4045 = vst [vmem:[%s4 + $0x348] sm:$0xff] %v3917
  %4046 = vst [vmem:[%s4 + $0x350] sm:$0xff] %v3918
  %4047 = vst [vmem:[%s4 + $0x358] sm:$0xff] %v3919
  %4048 = vst [vmem:[%s4 + $0x360] sm:$0xff] %v3920
  %4049 = vst [vmem:[%s4 + $0x368] sm:$0xff] %v3921
  %4050 = vst [vmem:[%s4 + $0x370] sm:$0xff] %v3922
  %4051 = vst [vmem:[%s4 + $0x378] sm:$0xff] %v3923
  %4052 = vst [vmem:[%s4 + $0x380] sm:$0xff] %v3924
  %4053 = vst [vmem:[%s4 + $0x388] sm:$0xff] %v3925
  %4054 = vst [vmem:[%s4 + $0x390] sm:$0xff] %v3926
  %4055 = vst [vmem:[%s4 + $0x398] sm:$0xff] %v3927
  %4056 = vst [vmem:[%s4 + $0x3a0] sm:$0xff] %v3928
  %4057 = vst [vmem:[%s4 + $0x3a8] sm:$0xff] %v3929
  %4058 = vst [vmem:[%s4 + $0x3b0] sm:$0xff] %v3930
  %4059 = vst [vmem:[%s4 + $0x3b8] sm:$0xff] %v3931
  %4060 = vst [vmem:[%s4 + $0x3c0] sm:$0xff] %v3932
  %4061 = vst [vmem:[%s4 + $0x3c8] sm:$0xff] %v3933
  %4062 = vst [vmem:[%s4 + $0x3d0] sm:$0xff] %v3934
  %4063 = vst [vmem:[%s4 + $0x3d8] sm:$0xff] %v3935
  %4064 = vst [vmem:[%s4 + $0x3e0] sm:$0xff] %v3936
  %4065 = vst [vmem:[%s4 + $0x3e8] sm:$0xff] %v3937
  %4066 = vst [vmem:[%s4 + $0x3f0] sm:$0xff] %v3938
  %4067 = vst [vmem:[%s4 + $0x3f8] sm:$0xff] %v3939
  // Predicated region
  $region18: #{cat_dog_cnn_forward.4} parent=0 // pred_check
    _
  $region19: #{cat_dog_cnn_forward.4} parent=0 // pred_check_branch
    %4069 = sbr.rel (0) target = $region21
  $region20: #{cat_dog_cnn_forward.4} parent=0 // pred_region
    _
  $region21: #{cat_dog_cnn_forward.4} parent=0 // pred_fallthru
    _
  // Predicated region
  $region22: #{cat_dog_cnn_forward.4} parent=0 // pred_check
    _
  $region23: #{cat_dog_cnn_forward.4} parent=0 // pred_check_branch
    %4071 = sbr.rel (0) target = $region25
  $region24: #{cat_dog_cnn_forward.4} parent=0 // pred_region
    _
  $region25: #{cat_dog_cnn_forward.4} parent=0 // pred_fallthru
    _

// kernel: cat_dog_cnn_forward.5
$region0: #{cat_dog_cnn_forward.5}
  #allocation0 [shape = 'u32[]', space=smem, size = 0x4, offset = 0x4, fixed_abs, tag = 'smem constant byte address 0x4 - core index']
  #allocation1 [shape = 'u32[144,128]{1,0:T(1,128)}', space=vmem, size = 0x12000, scoped, tag = 'internal scratch']
  %s0 = inlined_call_operand.vmem [shape: f32[8,256], index: 0, kind: input, shape index: {}]
  %s1 = inlined_call_operand.vmem [shape: f32[256,2048], index: 1, kind: input, shape index: {}]
  %s2 = inlined_call_operand.vmem [shape: f32[8,1], index: 2, kind: input, shape index: {}]
  %s3 = inlined_call_operand.vmem [shape: f32[8,1], index: 3, kind: input, shape index: {}]
  %s4 = inlined_call_operand.vmem [shape: f32[8,2048], index: 4, kind: output, shape index: {}]
  %s5 = sld [smem:[#allocation0]]
  $region26: #{cat_dog_cnn_forward.5} parent=0
    _
  %s7 = ssub.s32 1, %s5
  %s8 = scalar_select 0, %s7, %s5
  // Predicated region
  $region2: #{cat_dog_cnn_forward.5} parent=0 // pred_check
    _
  $region3: #{cat_dog_cnn_forward.5} parent=0 // pred_check_branch
    %10 = sbr.rel (0) target = $region5
  $region4: #{cat_dog_cnn_forward.5} parent=0 // pred_region
    _
  $region5: #{cat_dog_cnn_forward.5} parent=0 // pred_fallthru
    _
  // Predicated region
  $region6: #{cat_dog_cnn_forward.5} parent=0 // pred_check
    _
  $region7: #{cat_dog_cnn_forward.5} parent=0 // pred_check_branch
    %12 = sbr.rel (0) target = $region9
  $region8: #{cat_dog_cnn_forward.5} parent=0 // pred_region
    _
  $region9: #{cat_dog_cnn_forward.5} parent=0 // pred_fallthru
    _
  // Predicated region
  $region10: #{cat_dog_cnn_forward.5} parent=0 // pred_check
    _
  $region11: #{cat_dog_cnn_forward.5} parent=0 // pred_check_branch
    %14 = sbr.rel (0) target = $region13
  $region12: #{cat_dog_cnn_forward.5} parent=0 // pred_region
    _
  $region13: #{cat_dog_cnn_forward.5} parent=0 // pred_fallthru
    _
  // Predicated region
  $region14: #{cat_dog_cnn_forward.5} parent=0 // pred_check
    _
  $region15: #{cat_dog_cnn_forward.5} parent=0 // pred_check_branch
    %16 = sbr.rel (0) target = $region17
  $region16: #{cat_dog_cnn_forward.5} parent=0 // pred_region
    _
  $region17: #{cat_dog_cnn_forward.5} parent=0 // pred_fallthru
    _
  %v17 = vld [vmem:[%s0] sm:$0xff]
  %v18 = vld [vmem:[%s0 + $0x8] sm:$0xff]
  %v19 = vld [vmem:[%s1] sm:$0xff]
  %v20 = vld [vmem:[%s1 + $0x8] sm:$0xff]
  %v21 = vld [vmem:[%s1 + $0x10] sm:$0xff]
  %v22 = vld [vmem:[%s1 + $0x18] sm:$0xff]
  %v23 = vld [vmem:[%s1 + $0x20] sm:$0xff]
  %v24 = vld [vmem:[%s1 + $0x28] sm:$0xff]
  %v25 = vld [vmem:[%s1 + $0x30] sm:$0xff]
  %v26 = vld [vmem:[%s1 + $0x38] sm:$0xff]
  %v27 = vld [vmem:[%s1 + $0x40] sm:$0xff]
  %v28 = vld [vmem:[%s1 + $0x48] sm:$0xff]
  %v29 = vld [vmem:[%s1 + $0x50] sm:$0xff]
  %v30 = vld [vmem:[%s1 + $0x58] sm:$0xff]
  %v31 = vld [vmem:[%s1 + $0x60] sm:$0xff]
  %v32 = vld [vmem:[%s1 + $0x68] sm:$0xff]
  %v33 = vld [vmem:[%s1 + $0x70] sm:$0xff]
  %v34 = vld [vmem:[%s1 + $0x78] sm:$0xff]
  %v35 = vld [vmem:[%s1 + $0x80] sm:$0xff]
  %v36 = vld [vmem:[%s1 + $0x88] sm:$0xff]
  %v37 = vld [vmem:[%s1 + $0x90] sm:$0xff]
  %v38 = vld [vmem:[%s1 + $0x98] sm:$0xff]
  %v39 = vld [vmem:[%s1 + $0xa0] sm:$0xff]
  %v40 = vld [vmem:[%s1 + $0xa8] sm:$0xff]
  %v41 = vld [vmem:[%s1 + $0xb0] sm:$0xff]
  %v42 = vld [vmem:[%s1 + $0xb8] sm:$0xff]
  %v43 = vld [vmem:[%s1 + $0xc0] sm:$0xff]
  %v44 = vld [vmem:[%s1 + $0xc8] sm:$0xff]
  %v45 = vld [vmem:[%s1 + $0xd0] sm:$0xff]
  %v46 = vld [vmem:[%s1 + $0xd8] sm:$0xff]
  %v47 = vld [vmem:[%s1 + $0xe0] sm:$0xff]
  %v48 = vld [vmem:[%s1 + $0xe8] sm:$0xff]
  %v49 = vld [vmem:[%s1 + $0xf0] sm:$0xff]
  %v50 = vld [vmem:[%s1 + $0xf8] sm:$0xff]
  %v51 = vld [vmem:[%s1 + $0x100] sm:$0xff]
  %v52 = vld [vmem:[%s1 + $0x108] sm:$0xff]
  %v53 = vld [vmem:[%s1 + $0x110] sm:$0xff]
  %v54 = vld [vmem:[%s1 + $0x118] sm:$0xff]
  %v55 = vld [vmem:[%s1 + $0x120] sm:$0xff]
  %v56 = vld [vmem:[%s1 + $0x128] sm:$0xff]
  %v57 = vld [vmem:[%s1 + $0x130] sm:$0xff]
  %v58 = vld [vmem:[%s1 + $0x138] sm:$0xff]
  %v59 = vld [vmem:[%s1 + $0x140] sm:$0xff]
  %v60 = vld [vmem:[%s1 + $0x148] sm:$0xff]
  %v61 = vld [vmem:[%s1 + $0x150] sm:$0xff]
  %v62 = vld [vmem:[%s1 + $0x158] sm:$0xff]
  %v63 = vld [vmem:[%s1 + $0x160] sm:$0xff]
  %v64 = vld [vmem:[%s1 + $0x168] sm:$0xff]
  %v65 = vld [vmem:[%s1 + $0x170] sm:$0xff]
  %v66 = vld [vmem:[%s1 + $0x178] sm:$0xff]
  %v67 = vld [vmem:[%s1 + $0x180] sm:$0xff]
  %v68 = vld [vmem:[%s1 + $0x188] sm:$0xff]
  %v69 = vld [vmem:[%s1 + $0x190] sm:$0xff]
  %v70 = vld [vmem:[%s1 + $0x198] sm:$0xff]
  %v71 = vld [vmem:[%s1 + $0x1a0] sm:$0xff]
  %v72 = vld [vmem:[%s1 + $0x1a8] sm:$0xff]
  %v73 = vld [vmem:[%s1 + $0x1b0] sm:$0xff]
  %v74 = vld [vmem:[%s1 + $0x1b8] sm:$0xff]
  %v75 = vld [vmem:[%s1 + $0x1c0] sm:$0xff]
  %v76 = vld [vmem:[%s1 + $0x1c8] sm:$0xff]
  %v77 = vld [vmem:[%s1 + $0x1d0] sm:$0xff]
  %v78 = vld [vmem:[%s1 + $0x1d8] sm:$0xff]
  %v79 = vld [vmem:[%s1 + $0x1e0] sm:$0xff]
  %v80 = vld [vmem:[%s1 + $0x1e8] sm:$0xff]
  %v81 = vld [vmem:[%s1 + $0x1f0] sm:$0xff]
  %v82 = vld [vmem:[%s1 + $0x1f8] sm:$0xff]
  %v83 = vld [vmem:[%s1 + $0x200] sm:$0xff]
  %v84 = vld [vmem:[%s1 + $0x208] sm:$0xff]
  %v85 = vld [vmem:[%s1 + $0x210] sm:$0xff]
  %v86 = vld [vmem:[%s1 + $0x218] sm:$0xff]
  %v87 = vld [vmem:[%s1 + $0x220] sm:$0xff]
  %v88 = vld [vmem:[%s1 + $0x228] sm:$0xff]
  %v89 = vld [vmem:[%s1 + $0x230] sm:$0xff]
  %v90 = vld [vmem:[%s1 + $0x238] sm:$0xff]
  %v91 = vld [vmem:[%s1 + $0x240] sm:$0xff]
  %v92 = vld [vmem:[%s1 + $0x248] sm:$0xff]
  %v93 = vld [vmem:[%s1 + $0x250] sm:$0xff]
  %v94 = vld [vmem:[%s1 + $0x258] sm:$0xff]
  %v95 = vld [vmem:[%s1 + $0x260] sm:$0xff]
  %v96 = vld [vmem:[%s1 + $0x268] sm:$0xff]
  %v97 = vld [vmem:[%s1 + $0x270] sm:$0xff]
  %v98 = vld [vmem:[%s1 + $0x278] sm:$0xff]
  %v99 = vld [vmem:[%s1 + $0x280] sm:$0xff]
  %v100 = vld [vmem:[%s1 + $0x288] sm:$0xff]
  %v101 = vld [vmem:[%s1 + $0x290] sm:$0xff]
  %v102 = vld [vmem:[%s1 + $0x298] sm:$0xff]
  %v103 = vld [vmem:[%s1 + $0x2a0] sm:$0xff]
  %v104 = vld [vmem:[%s1 + $0x2a8] sm:$0xff]
  %v105 = vld [vmem:[%s1 + $0x2b0] sm:$0xff]
  %v106 = vld [vmem:[%s1 + $0x2b8] sm:$0xff]
  %v107 = vld [vmem:[%s1 + $0x2c0] sm:$0xff]
  %v108 = vld [vmem:[%s1 + $0x2c8] sm:$0xff]
  %v109 = vld [vmem:[%s1 + $0x2d0] sm:$0xff]
  %v110 = vld [vmem:[%s1 + $0x2d8] sm:$0xff]
  %v111 = vld [vmem:[%s1 + $0x2e0] sm:$0xff]
  %v112 = vld [vmem:[%s1 + $0x2e8] sm:$0xff]
  %v113 = vld [vmem:[%s1 + $0x2f0] sm:$0xff]
  %v114 = vld [vmem:[%s1 + $0x2f8] sm:$0xff]
  %v115 = vld [vmem:[%s1 + $0x300] sm:$0xff]
  %v116 = vld [vmem:[%s1 + $0x308] sm:$0xff]
  %v117 = vld [vmem:[%s1 + $0x310] sm:$0xff]
  %v118 = vld [vmem:[%s1 + $0x318] sm:$0xff]
  %v119 = vld [vmem:[%s1 + $0x320] sm:$0xff]
  %v120 = vld [vmem:[%s1 + $0x328] sm:$0xff]
  %v121 = vld [vmem:[%s1 + $0x330] sm:$0xff]
  %v122 = vld [vmem:[%s1 + $0x338] sm:$0xff]
  %v123 = vld [vmem:[%s1 + $0x340] sm:$0xff]
  %v124 = vld [vmem:[%s1 + $0x348] sm:$0xff]
  %v125 = vld [vmem:[%s1 + $0x350] sm:$0xff]
  %v126 = vld [vmem:[%s1 + $0x358] sm:$0xff]
  %v127 = vld [vmem:[%s1 + $0x360] sm:$0xff]
  %v128 = vld [vmem:[%s1 + $0x368] sm:$0xff]
  %v129 = vld [vmem:[%s1 + $0x370] sm:$0xff]
  %v130 = vld [vmem:[%s1 + $0x378] sm:$0xff]
  %v131 = vld [vmem:[%s1 + $0x380] sm:$0xff]
  %v132 = vld [vmem:[%s1 + $0x388] sm:$0xff]
  %v133 = vld [vmem:[%s1 + $0x390] sm:$0xff]
  %v134 = vld [vmem:[%s1 + $0x398] sm:$0xff]
  %v135 = vld [vmem:[%s1 + $0x3a0] sm:$0xff]
  %v136 = vld [vmem:[%s1 + $0x3a8] sm:$0xff]
  %v137 = vld [vmem:[%s1 + $0x3b0] sm:$0xff]
  %v138 = vld [vmem:[%s1 + $0x3b8] sm:$0xff]
  %v139 = vld [vmem:[%s1 + $0x3c0] sm:$0xff]
  %v140 = vld [vmem:[%s1 + $0x3c8] sm:$0xff]
  %v141 = vld [vmem:[%s1 + $0x3d0] sm:$0xff]
  %v142 = vld [vmem:[%s1 + $0x3d8] sm:$0xff]
  %v143 = vld [vmem:[%s1 + $0x3e0] sm:$0xff]
  %v144 = vld [vmem:[%s1 + $0x3e8] sm:$0xff]
  %v145 = vld [vmem:[%s1 + $0x3f0] sm:$0xff]
  %v146 = vld [vmem:[%s1 + $0x3f8] sm:$0xff]
  %v147 = vld [vmem:[%s1 + $0x400] sm:$0xff]
  %v148 = vld [vmem:[%s1 + $0x408] sm:$0xff]
  %v149 = vld [vmem:[%s1 + $0x410] sm:$0xff]
  %v150 = vld [vmem:[%s1 + $0x418] sm:$0xff]
  %v151 = vld [vmem:[%s1 + $0x420] sm:$0xff]
  %v152 = vld [vmem:[%s1 + $0x428] sm:$0xff]
  %v153 = vld [vmem:[%s1 + $0x430] sm:$0xff]
  %v154 = vld [vmem:[%s1 + $0x438] sm:$0xff]
  %v155 = vld [vmem:[%s1 + $0x440] sm:$0xff]
  %v156 = vld [vmem:[%s1 + $0x448] sm:$0xff]
  %v157 = vld [vmem:[%s1 + $0x450] sm:$0xff]
  %v158 = vld [vmem:[%s1 + $0x458] sm:$0xff]
  %v159 = vld [vmem:[%s1 + $0x460] sm:$0xff]
  %v160 = vld [vmem:[%s1 + $0x468] sm:$0xff]
  %v161 = vld [vmem:[%s1 + $0x470] sm:$0xff]
  %v162 = vld [vmem:[%s1 + $0x478] sm:$0xff]
  %v163 = vld [vmem:[%s1 + $0x480] sm:$0xff]
  %v164 = vld [vmem:[%s1 + $0x488] sm:$0xff]
  %v165 = vld [vmem:[%s1 + $0x490] sm:$0xff]
  %v166 = vld [vmem:[%s1 + $0x498] sm:$0xff]
  %v167 = vld [vmem:[%s1 + $0x4a0] sm:$0xff]
  %v168 = vld [vmem:[%s1 + $0x4a8] sm:$0xff]
  %v169 = vld [vmem:[%s1 + $0x4b0] sm:$0xff]
  %v170 = vld [vmem:[%s1 + $0x4b8] sm:$0xff]
  %v171 = vld [vmem:[%s1 + $0x4c0] sm:$0xff]
  %v172 = vld [vmem:[%s1 + $0x4c8] sm:$0xff]
  %v173 = vld [vmem:[%s1 + $0x4d0] sm:$0xff]
  %v174 = vld [vmem:[%s1 + $0x4d8] sm:$0xff]
  %v175 = vld [vmem:[%s1 + $0x4e0] sm:$0xff]
  %v176 = vld [vmem:[%s1 + $0x4e8] sm:$0xff]
  %v177 = vld [vmem:[%s1 + $0x4f0] sm:$0xff]
  %v178 = vld [vmem:[%s1 + $0x4f8] sm:$0xff]
  %v179 = vld [vmem:[%s1 + $0x500] sm:$0xff]
  %v180 = vld [vmem:[%s1 + $0x508] sm:$0xff]
  %v181 = vld [vmem:[%s1 + $0x510] sm:$0xff]
  %v182 = vld [vmem:[%s1 + $0x518] sm:$0xff]
  %v183 = vld [vmem:[%s1 + $0x520] sm:$0xff]
  %v184 = vld [vmem:[%s1 + $0x528] sm:$0xff]
  %v185 = vld [vmem:[%s1 + $0x530] sm:$0xff]
  %v186 = vld [vmem:[%s1 + $0x538] sm:$0xff]
  %v187 = vld [vmem:[%s1 + $0x540] sm:$0xff]
  %v188 = vld [vmem:[%s1 + $0x548] sm:$0xff]
  %v189 = vld [vmem:[%s1 + $0x550] sm:$0xff]
  %v190 = vld [vmem:[%s1 + $0x558] sm:$0xff]
  %v191 = vld [vmem:[%s1 + $0x560] sm:$0xff]
  %v192 = vld [vmem:[%s1 + $0x568] sm:$0xff]
  %v193 = vld [vmem:[%s1 + $0x570] sm:$0xff]
  %v194 = vld [vmem:[%s1 + $0x578] sm:$0xff]
  %v195 = vld [vmem:[%s1 + $0x580] sm:$0xff]
  %v196 = vld [vmem:[%s1 + $0x588] sm:$0xff]
  %v197 = vld [vmem:[%s1 + $0x590] sm:$0xff]
  %v198 = vld [vmem:[%s1 + $0x598] sm:$0xff]
  %v199 = vld [vmem:[%s1 + $0x5a0] sm:$0xff]
  %v200 = vld [vmem:[%s1 + $0x5a8] sm:$0xff]
  %v201 = vld [vmem:[%s1 + $0x5b0] sm:$0xff]
  %v202 = vld [vmem:[%s1 + $0x5b8] sm:$0xff]
  %v203 = vld [vmem:[%s1 + $0x5c0] sm:$0xff]
  %v204 = vld [vmem:[%s1 + $0x5c8] sm:$0xff]
  %v205 = vld [vmem:[%s1 + $0x5d0] sm:$0xff]
  %v206 = vld [vmem:[%s1 + $0x5d8] sm:$0xff]
  %v207 = vld [vmem:[%s1 + $0x5e0] sm:$0xff]
  %v208 = vld [vmem:[%s1 + $0x5e8] sm:$0xff]
  %v209 = vld [vmem:[%s1 + $0x5f0] sm:$0xff]
  %v210 = vld [vmem:[%s1 + $0x5f8] sm:$0xff]
  %v211 = vld [vmem:[%s1 + $0x600] sm:$0xff]
  %v212 = vld [vmem:[%s1 + $0x608] sm:$0xff]
  %v213 = vld [vmem:[%s1 + $0x610] sm:$0xff]
  %v214 = vld [vmem:[%s1 + $0x618] sm:$0xff]
  %v215 = vld [vmem:[%s1 + $0x620] sm:$0xff]
  %v216 = vld [vmem:[%s1 + $0x628] sm:$0xff]
  %v217 = vld [vmem:[%s1 + $0x630] sm:$0xff]
  %v218 = vld [vmem:[%s1 + $0x638] sm:$0xff]
  %v219 = vld [vmem:[%s1 + $0x640] sm:$0xff]
  %v220 = vld [vmem:[%s1 + $0x648] sm:$0xff]
  %v221 = vld [vmem:[%s1 + $0x650] sm:$0xff]
  %v222 = vld [vmem:[%s1 + $0x658] sm:$0xff]
  %v223 = vld [vmem:[%s1 + $0x660] sm:$0xff]
  %v224 = vld [vmem:[%s1 + $0x668] sm:$0xff]
  %v225 = vld [vmem:[%s1 + $0x670] sm:$0xff]
  %v226 = vld [vmem:[%s1 + $0x678] sm:$0xff]
  %v227 = vld [vmem:[%s1 + $0x680] sm:$0xff]
  %v228 = vld [vmem:[%s1 + $0x688] sm:$0xff]
  %v229 = vld [vmem:[%s1 + $0x690] sm:$0xff]
  %v230 = vld [vmem:[%s1 + $0x698] sm:$0xff]
  %v231 = vld [vmem:[%s1 + $0x6a0] sm:$0xff]
  %v232 = vld [vmem:[%s1 + $0x6a8] sm:$0xff]
  %v233 = vld [vmem:[%s1 + $0x6b0] sm:$0xff]
  %v234 = vld [vmem:[%s1 + $0x6b8] sm:$0xff]
  %v235 = vld [vmem:[%s1 + $0x6c0] sm:$0xff]
  %v236 = vld [vmem:[%s1 + $0x6c8] sm:$0xff]
  %v237 = vld [vmem:[%s1 + $0x6d0] sm:$0xff]
  %v238 = vld [vmem:[%s1 + $0x6d8] sm:$0xff]
  %v239 = vld [vmem:[%s1 + $0x6e0] sm:$0xff]
  %v240 = vld [vmem:[%s1 + $0x6e8] sm:$0xff]
  %v241 = vld [vmem:[%s1 + $0x6f0] sm:$0xff]
  %v242 = vld [vmem:[%s1 + $0x6f8] sm:$0xff]
  %v243 = vld [vmem:[%s1 + $0x700] sm:$0xff]
  %v244 = vld [vmem:[%s1 + $0x708] sm:$0xff]
  %v245 = vld [vmem:[%s1 + $0x710] sm:$0xff]
  %v246 = vld [vmem:[%s1 + $0x718] sm:$0xff]
  %v247 = vld [vmem:[%s1 + $0x720] sm:$0xff]
  %v248 = vld [vmem:[%s1 + $0x728] sm:$0xff]
  %v249 = vld [vmem:[%s1 + $0x730] sm:$0xff]
  %v250 = vld [vmem:[%s1 + $0x738] sm:$0xff]
  %v251 = vld [vmem:[%s1 + $0x740] sm:$0xff]
  %v252 = vld [vmem:[%s1 + $0x748] sm:$0xff]
  %v253 = vld [vmem:[%s1 + $0x750] sm:$0xff]
  %v254 = vld [vmem:[%s1 + $0x758] sm:$0xff]
  %v255 = vld [vmem:[%s1 + $0x760] sm:$0xff]
  %v256 = vld [vmem:[%s1 + $0x768] sm:$0xff]
  %v257 = vld [vmem:[%s1 + $0x770] sm:$0xff]
  %v258 = vld [vmem:[%s1 + $0x778] sm:$0xff]
  %v259 = vld [vmem:[%s1 + $0x780] sm:$0xff]
  %v260 = vld [vmem:[%s1 + $0x788] sm:$0xff]
  %v261 = vld [vmem:[%s1 + $0x790] sm:$0xff]
  %v262 = vld [vmem:[%s1 + $0x798] sm:$0xff]
  %v263 = vld [vmem:[%s1 + $0x7a0] sm:$0xff]
  %v264 = vld [vmem:[%s1 + $0x7a8] sm:$0xff]
  %v265 = vld [vmem:[%s1 + $0x7b0] sm:$0xff]
  %v266 = vld [vmem:[%s1 + $0x7b8] sm:$0xff]
  %v267 = vld [vmem:[%s1 + $0x7c0] sm:$0xff]
  %v268 = vld [vmem:[%s1 + $0x7c8] sm:$0xff]
  %v269 = vld [vmem:[%s1 + $0x7d0] sm:$0xff]
  %v270 = vld [vmem:[%s1 + $0x7d8] sm:$0xff]
  %v271 = vld [vmem:[%s1 + $0x7e0] sm:$0xff]
  %v272 = vld [vmem:[%s1 + $0x7e8] sm:$0xff]
  %v273 = vld [vmem:[%s1 + $0x7f0] sm:$0xff]
  %v274 = vld [vmem:[%s1 + $0x7f8] sm:$0xff]
  %v275 = vld [vmem:[%s1 + $0x800] sm:$0xff]
  %v276 = vld [vmem:[%s1 + $0x808] sm:$0xff]
  %v277 = vld [vmem:[%s1 + $0x810] sm:$0xff]
  %v278 = vld [vmem:[%s1 + $0x818] sm:$0xff]
  %v279 = vld [vmem:[%s1 + $0x820] sm:$0xff]
  %v280 = vld [vmem:[%s1 + $0x828] sm:$0xff]
  %v281 = vld [vmem:[%s1 + $0x830] sm:$0xff]
  %v282 = vld [vmem:[%s1 + $0x838] sm:$0xff]
  %v283 = vld [vmem:[%s1 + $0x840] sm:$0xff]
  %v284 = vld [vmem:[%s1 + $0x848] sm:$0xff]
  %v285 = vld [vmem:[%s1 + $0x850] sm:$0xff]
  %v286 = vld [vmem:[%s1 + $0x858] sm:$0xff]
  %v287 = vld [vmem:[%s1 + $0x860] sm:$0xff]
  %v288 = vld [vmem:[%s1 + $0x868] sm:$0xff]
  %v289 = vld [vmem:[%s1 + $0x870] sm:$0xff]
  %v290 = vld [vmem:[%s1 + $0x878] sm:$0xff]
  %v291 = vld [vmem:[%s1 + $0x880] sm:$0xff]
  %v292 = vld [vmem:[%s1 + $0x888] sm:$0xff]
  %v293 = vld [vmem:[%s1 + $0x890] sm:$0xff]
  %v294 = vld [vmem:[%s1 + $0x898] sm:$0xff]
  %v295 = vld [vmem:[%s1 + $0x8a0] sm:$0xff]
  %v296 = vld [vmem:[%s1 + $0x8a8] sm:$0xff]
  %v297 = vld [vmem:[%s1 + $0x8b0] sm:$0xff]
  %v298 = vld [vmem:[%s1 + $0x8b8] sm:$0xff]
  %v299 = vld [vmem:[%s1 + $0x8c0] sm:$0xff]
  %v300 = vld [vmem:[%s1 + $0x8c8] sm:$0xff]
  %v301 = vld [vmem:[%s1 + $0x8d0] sm:$0xff]
  %v302 = vld [vmem:[%s1 + $0x8d8] sm:$0xff]
  %v303 = vld [vmem:[%s1 + $0x8e0] sm:$0xff]
  %v304 = vld [vmem:[%s1 + $0x8e8] sm:$0xff]
  %v305 = vld [vmem:[%s1 + $0x8f0] sm:$0xff]
  %v306 = vld [vmem:[%s1 + $0x8f8] sm:$0xff]
  %v307 = vld [vmem:[%s1 + $0x900] sm:$0xff]
  %v308 = vld [vmem:[%s1 + $0x908] sm:$0xff]
  %v309 = vld [vmem:[%s1 + $0x910] sm:$0xff]
  %v310 = vld [vmem:[%s1 + $0x918] sm:$0xff]
  %v311 = vld [vmem:[%s1 + $0x920] sm:$0xff]
  %v312 = vld [vmem:[%s1 + $0x928] sm:$0xff]
  %v313 = vld [vmem:[%s1 + $0x930] sm:$0xff]
  %v314 = vld [vmem:[%s1 + $0x938] sm:$0xff]
  %v315 = vld [vmem:[%s1 + $0x940] sm:$0xff]
  %v316 = vld [vmem:[%s1 + $0x948] sm:$0xff]
  %v317 = vld [vmem:[%s1 + $0x950] sm:$0xff]
  %v318 = vld [vmem:[%s1 + $0x958] sm:$0xff]
  %v319 = vld [vmem:[%s1 + $0x960] sm:$0xff]
  %v320 = vld [vmem:[%s1 + $0x968] sm:$0xff]
  %v321 = vld [vmem:[%s1 + $0x970] sm:$0xff]
  %v322 = vld [vmem:[%s1 + $0x978] sm:$0xff]
  %v323 = vld [vmem:[%s1 + $0x980] sm:$0xff]
  %v324 = vld [vmem:[%s1 + $0x988] sm:$0xff]
  %v325 = vld [vmem:[%s1 + $0x990] sm:$0xff]
  %v326 = vld [vmem:[%s1 + $0x998] sm:$0xff]
  %v327 = vld [vmem:[%s1 + $0x9a0] sm:$0xff]
  %v328 = vld [vmem:[%s1 + $0x9a8] sm:$0xff]
  %v329 = vld [vmem:[%s1 + $0x9b0] sm:$0xff]
  %v330 = vld [vmem:[%s1 + $0x9b8] sm:$0xff]
  %v331 = vld [vmem:[%s1 + $0x9c0] sm:$0xff]
  %v332 = vld [vmem:[%s1 + $0x9c8] sm:$0xff]
  %v333 = vld [vmem:[%s1 + $0x9d0] sm:$0xff]
  %v334 = vld [vmem:[%s1 + $0x9d8] sm:$0xff]
  %v335 = vld [vmem:[%s1 + $0x9e0] sm:$0xff]
  %v336 = vld [vmem:[%s1 + $0x9e8] sm:$0xff]
  %v337 = vld [vmem:[%s1 + $0x9f0] sm:$0xff]
  %v338 = vld [vmem:[%s1 + $0x9f8] sm:$0xff]
  %v339 = vld [vmem:[%s1 + $0xa00] sm:$0xff]
  %v340 = vld [vmem:[%s1 + $0xa08] sm:$0xff]
  %v341 = vld [vmem:[%s1 + $0xa10] sm:$0xff]
  %v342 = vld [vmem:[%s1 + $0xa18] sm:$0xff]
  %v343 = vld [vmem:[%s1 + $0xa20] sm:$0xff]
  %v344 = vld [vmem:[%s1 + $0xa28] sm:$0xff]
  %v345 = vld [vmem:[%s1 + $0xa30] sm:$0xff]
  %v346 = vld [vmem:[%s1 + $0xa38] sm:$0xff]
  %v347 = vld [vmem:[%s1 + $0xa40] sm:$0xff]
  %v348 = vld [vmem:[%s1 + $0xa48] sm:$0xff]
  %v349 = vld [vmem:[%s1 + $0xa50] sm:$0xff]
  %v350 = vld [vmem:[%s1 + $0xa58] sm:$0xff]
  %v351 = vld [vmem:[%s1 + $0xa60] sm:$0xff]
  %v352 = vld [vmem:[%s1 + $0xa68] sm:$0xff]
  %v353 = vld [vmem:[%s1 + $0xa70] sm:$0xff]
  %v354 = vld [vmem:[%s1 + $0xa78] sm:$0xff]
  %v355 = vld [vmem:[%s1 + $0xa80] sm:$0xff]
  %v356 = vld [vmem:[%s1 + $0xa88] sm:$0xff]
  %v357 = vld [vmem:[%s1 + $0xa90] sm:$0xff]
  %v358 = vld [vmem:[%s1 + $0xa98] sm:$0xff]
  %v359 = vld [vmem:[%s1 + $0xaa0] sm:$0xff]
  %v360 = vld [vmem:[%s1 + $0xaa8] sm:$0xff]
  %v361 = vld [vmem:[%s1 + $0xab0] sm:$0xff]
  %v362 = vld [vmem:[%s1 + $0xab8] sm:$0xff]
  %v363 = vld [vmem:[%s1 + $0xac0] sm:$0xff]
  %v364 = vld [vmem:[%s1 + $0xac8] sm:$0xff]
  %v365 = vld [vmem:[%s1 + $0xad0] sm:$0xff]
  %v366 = vld [vmem:[%s1 + $0xad8] sm:$0xff]
  %v367 = vld [vmem:[%s1 + $0xae0] sm:$0xff]
  %v368 = vld [vmem:[%s1 + $0xae8] sm:$0xff]
  %v369 = vld [vmem:[%s1 + $0xaf0] sm:$0xff]
  %v370 = vld [vmem:[%s1 + $0xaf8] sm:$0xff]
  %v371 = vld [vmem:[%s1 + $0xb00] sm:$0xff]
  %v372 = vld [vmem:[%s1 + $0xb08] sm:$0xff]
  %v373 = vld [vmem:[%s1 + $0xb10] sm:$0xff]
  %v374 = vld [vmem:[%s1 + $0xb18] sm:$0xff]
  %v375 = vld [vmem:[%s1 + $0xb20] sm:$0xff]
  %v376 = vld [vmem:[%s1 + $0xb28] sm:$0xff]
  %v377 = vld [vmem:[%s1 + $0xb30] sm:$0xff]
  %v378 = vld [vmem:[%s1 + $0xb38] sm:$0xff]
  %v379 = vld [vmem:[%s1 + $0xb40] sm:$0xff]
  %v380 = vld [vmem:[%s1 + $0xb48] sm:$0xff]
  %v381 = vld [vmem:[%s1 + $0xb50] sm:$0xff]
  %v382 = vld [vmem:[%s1 + $0xb58] sm:$0xff]
  %v383 = vld [vmem:[%s1 + $0xb60] sm:$0xff]
  %v384 = vld [vmem:[%s1 + $0xb68] sm:$0xff]
  %v385 = vld [vmem:[%s1 + $0xb70] sm:$0xff]
  %v386 = vld [vmem:[%s1 + $0xb78] sm:$0xff]
  %v387 = vld [vmem:[%s1 + $0xb80] sm:$0xff]
  %v388 = vld [vmem:[%s1 + $0xb88] sm:$0xff]
  %v389 = vld [vmem:[%s1 + $0xb90] sm:$0xff]
  %v390 = vld [vmem:[%s1 + $0xb98] sm:$0xff]
  %v391 = vld [vmem:[%s1 + $0xba0] sm:$0xff]
  %v392 = vld [vmem:[%s1 + $0xba8] sm:$0xff]
  %v393 = vld [vmem:[%s1 + $0xbb0] sm:$0xff]
  %v394 = vld [vmem:[%s1 + $0xbb8] sm:$0xff]
  %v395 = vld [vmem:[%s1 + $0xbc0] sm:$0xff]
  %v396 = vld [vmem:[%s1 + $0xbc8] sm:$0xff]
  %v397 = vld [vmem:[%s1 + $0xbd0] sm:$0xff]
  %v398 = vld [vmem:[%s1 + $0xbd8] sm:$0xff]
  %v399 = vld [vmem:[%s1 + $0xbe0] sm:$0xff]
  %v400 = vld [vmem:[%s1 + $0xbe8] sm:$0xff]
  %v401 = vld [vmem:[%s1 + $0xbf0] sm:$0xff]
  %v402 = vld [vmem:[%s1 + $0xbf8] sm:$0xff]
  %v403 = vld [vmem:[%s1 + $0xc00] sm:$0xff]
  %v404 = vld [vmem:[%s1 + $0xc08] sm:$0xff]
  %v405 = vld [vmem:[%s1 + $0xc10] sm:$0xff]
  %v406 = vld [vmem:[%s1 + $0xc18] sm:$0xff]
  %v407 = vld [vmem:[%s1 + $0xc20] sm:$0xff]
  %v408 = vld [vmem:[%s1 + $0xc28] sm:$0xff]
  %v409 = vld [vmem:[%s1 + $0xc30] sm:$0xff]
  %v410 = vld [vmem:[%s1 + $0xc38] sm:$0xff]
  %v411 = vld [vmem:[%s1 + $0xc40] sm:$0xff]
  %v412 = vld [vmem:[%s1 + $0xc48] sm:$0xff]
  %v413 = vld [vmem:[%s1 + $0xc50] sm:$0xff]
  %v414 = vld [vmem:[%s1 + $0xc58] sm:$0xff]
  %v415 = vld [vmem:[%s1 + $0xc60] sm:$0xff]
  %v416 = vld [vmem:[%s1 + $0xc68] sm:$0xff]
  %v417 = vld [vmem:[%s1 + $0xc70] sm:$0xff]
  %v418 = vld [vmem:[%s1 + $0xc78] sm:$0xff]
  %v419 = vld [vmem:[%s1 + $0xc80] sm:$0xff]
  %v420 = vld [vmem:[%s1 + $0xc88] sm:$0xff]
  %v421 = vld [vmem:[%s1 + $0xc90] sm:$0xff]
  %v422 = vld [vmem:[%s1 + $0xc98] sm:$0xff]
  %v423 = vld [vmem:[%s1 + $0xca0] sm:$0xff]
  %v424 = vld [vmem:[%s1 + $0xca8] sm:$0xff]
  %v425 = vld [vmem:[%s1 + $0xcb0] sm:$0xff]
  %v426 = vld [vmem:[%s1 + $0xcb8] sm:$0xff]
  %v427 = vld [vmem:[%s1 + $0xcc0] sm:$0xff]
  %v428 = vld [vmem:[%s1 + $0xcc8] sm:$0xff]
  %v429 = vld [vmem:[%s1 + $0xcd0] sm:$0xff]
  %v430 = vld [vmem:[%s1 + $0xcd8] sm:$0xff]
  %v431 = vld [vmem:[%s1 + $0xce0] sm:$0xff]
  %v432 = vld [vmem:[%s1 + $0xce8] sm:$0xff]
  %v433 = vld [vmem:[%s1 + $0xcf0] sm:$0xff]
  %v434 = vld [vmem:[%s1 + $0xcf8] sm:$0xff]
  %v435 = vld [vmem:[%s1 + $0xd00] sm:$0xff]
  %v436 = vld [vmem:[%s1 + $0xd08] sm:$0xff]
  %v437 = vld [vmem:[%s1 + $0xd10] sm:$0xff]
  %v438 = vld [vmem:[%s1 + $0xd18] sm:$0xff]
  %v439 = vld [vmem:[%s1 + $0xd20] sm:$0xff]
  %v440 = vld [vmem:[%s1 + $0xd28] sm:$0xff]
  %v441 = vld [vmem:[%s1 + $0xd30] sm:$0xff]
  %v442 = vld [vmem:[%s1 + $0xd38] sm:$0xff]
  %v443 = vld [vmem:[%s1 + $0xd40] sm:$0xff]
  %v444 = vld [vmem:[%s1 + $0xd48] sm:$0xff]
  %v445 = vld [vmem:[%s1 + $0xd50] sm:$0xff]
  %v446 = vld [vmem:[%s1 + $0xd58] sm:$0xff]
  %v447 = vld [vmem:[%s1 + $0xd60] sm:$0xff]
  %v448 = vld [vmem:[%s1 + $0xd68] sm:$0xff]
  %v449 = vld [vmem:[%s1 + $0xd70] sm:$0xff]
  %v450 = vld [vmem:[%s1 + $0xd78] sm:$0xff]
  %v451 = vld [vmem:[%s1 + $0xd80] sm:$0xff]
  %v452 = vld [vmem:[%s1 + $0xd88] sm:$0xff]
  %v453 = vld [vmem:[%s1 + $0xd90] sm:$0xff]
  %v454 = vld [vmem:[%s1 + $0xd98] sm:$0xff]
  %v455 = vld [vmem:[%s1 + $0xda0] sm:$0xff]
  %v456 = vld [vmem:[%s1 + $0xda8] sm:$0xff]
  %v457 = vld [vmem:[%s1 + $0xdb0] sm:$0xff]
  %v458 = vld [vmem:[%s1 + $0xdb8] sm:$0xff]
  %v459 = vld [vmem:[%s1 + $0xdc0] sm:$0xff]
  %v460 = vld [vmem:[%s1 + $0xdc8] sm:$0xff]
  %v461 = vld [vmem:[%s1 + $0xdd0] sm:$0xff]
  %v462 = vld [vmem:[%s1 + $0xdd8] sm:$0xff]
  %v463 = vld [vmem:[%s1 + $0xde0] sm:$0xff]
  %v464 = vld [vmem:[%s1 + $0xde8] sm:$0xff]
  %v465 = vld [vmem:[%s1 + $0xdf0] sm:$0xff]
  %v466 = vld [vmem:[%s1 + $0xdf8] sm:$0xff]
  %v467 = vld [vmem:[%s1 + $0xe00] sm:$0xff]
  %v468 = vld [vmem:[%s1 + $0xe08] sm:$0xff]
  %v469 = vld [vmem:[%s1 + $0xe10] sm:$0xff]
  %v470 = vld [vmem:[%s1 + $0xe18] sm:$0xff]
  %v471 = vld [vmem:[%s1 + $0xe20] sm:$0xff]
  %v472 = vld [vmem:[%s1 + $0xe28] sm:$0xff]
  %v473 = vld [vmem:[%s1 + $0xe30] sm:$0xff]
  %v474 = vld [vmem:[%s1 + $0xe38] sm:$0xff]
  %v475 = vld [vmem:[%s1 + $0xe40] sm:$0xff]
  %v476 = vld [vmem:[%s1 + $0xe48] sm:$0xff]
  %v477 = vld [vmem:[%s1 + $0xe50] sm:$0xff]
  %v478 = vld [vmem:[%s1 + $0xe58] sm:$0xff]
  %v479 = vld [vmem:[%s1 + $0xe60] sm:$0xff]
  %v480 = vld [vmem:[%s1 + $0xe68] sm:$0xff]
  %v481 = vld [vmem:[%s1 + $0xe70] sm:$0xff]
  %v482 = vld [vmem:[%s1 + $0xe78] sm:$0xff]
  %v483 = vld [vmem:[%s1 + $0xe80] sm:$0xff]
  %v484 = vld [vmem:[%s1 + $0xe88] sm:$0xff]
  %v485 = vld [vmem:[%s1 + $0xe90] sm:$0xff]
  %v486 = vld [vmem:[%s1 + $0xe98] sm:$0xff]
  %v487 = vld [vmem:[%s1 + $0xea0] sm:$0xff]
  %v488 = vld [vmem:[%s1 + $0xea8] sm:$0xff]
  %v489 = vld [vmem:[%s1 + $0xeb0] sm:$0xff]
  %v490 = vld [vmem:[%s1 + $0xeb8] sm:$0xff]
  %v491 = vld [vmem:[%s1 + $0xec0] sm:$0xff]
  %v492 = vld [vmem:[%s1 + $0xec8] sm:$0xff]
  %v493 = vld [vmem:[%s1 + $0xed0] sm:$0xff]
  %v494 = vld [vmem:[%s1 + $0xed8] sm:$0xff]
  %v495 = vld [vmem:[%s1 + $0xee0] sm:$0xff]
  %v496 = vld [vmem:[%s1 + $0xee8] sm:$0xff]
  %v497 = vld [vmem:[%s1 + $0xef0] sm:$0xff]
  %v498 = vld [vmem:[%s1 + $0xef8] sm:$0xff]
  %v499 = vld [vmem:[%s1 + $0xf00] sm:$0xff]
  %v500 = vld [vmem:[%s1 + $0xf08] sm:$0xff]
  %v501 = vld [vmem:[%s1 + $0xf10] sm:$0xff]
  %v502 = vld [vmem:[%s1 + $0xf18] sm:$0xff]
  %v503 = vld [vmem:[%s1 + $0xf20] sm:$0xff]
  %v504 = vld [vmem:[%s1 + $0xf28] sm:$0xff]
  %v505 = vld [vmem:[%s1 + $0xf30] sm:$0xff]
  %v506 = vld [vmem:[%s1 + $0xf38] sm:$0xff]
  %v507 = vld [vmem:[%s1 + $0xf40] sm:$0xff]
  %v508 = vld [vmem:[%s1 + $0xf48] sm:$0xff]
  %v509 = vld [vmem:[%s1 + $0xf50] sm:$0xff]
  %v510 = vld [vmem:[%s1 + $0xf58] sm:$0xff]
  %v511 = vld [vmem:[%s1 + $0xf60] sm:$0xff]
  %v512 = vld [vmem:[%s1 + $0xf68] sm:$0xff]
  %v513 = vld [vmem:[%s1 + $0xf70] sm:$0xff]
  %v514 = vld [vmem:[%s1 + $0xf78] sm:$0xff]
  %v515 = vld [vmem:[%s1 + $0xf80] sm:$0xff]
  %v516 = vld [vmem:[%s1 + $0xf88] sm:$0xff]
  %v517 = vld [vmem:[%s1 + $0xf90] sm:$0xff]
  %v518 = vld [vmem:[%s1 + $0xf98] sm:$0xff]
  %v519 = vld [vmem:[%s1 + $0xfa0] sm:$0xff]
  %v520 = vld [vmem:[%s1 + $0xfa8] sm:$0xff]
  %v521 = vld [vmem:[%s1 + $0xfb0] sm:$0xff]
  %v522 = vld [vmem:[%s1 + $0xfb8] sm:$0xff]
  %v523 = vld [vmem:[%s1 + $0xfc0] sm:$0xff]
  %v524 = vld [vmem:[%s1 + $0xfc8] sm:$0xff]
  %v525 = vld [vmem:[%s1 + $0xfd0] sm:$0xff]
  %v526 = vld [vmem:[%s1 + $0xfd8] sm:$0xff]
  %v527 = vld [vmem:[%s1 + $0xfe0] sm:$0xff]
  %v528 = vld [vmem:[%s1 + $0xfe8] sm:$0xff]
  %v529 = vld [vmem:[%s1 + $0xff0] sm:$0xff]
  %v530 = vld [vmem:[%s1 + $0xff8] sm:$0xff]
  %531 = vmatprep.subr.mxu0 %v260
  %532 = vmatpush1.msra.mxu0 %v259
  %533 = vmatprep.subr.mxu0 %v244
  %534 = vmatpush1.msra.mxu0 %v243
  %535 = vmatprep.subr.mxu0 %v228
  %536 = vmatpush1.msra.mxu0 %v227
  %537 = vmatprep.subr.mxu0 %v212
  %538 = vmatpush1.msra.mxu0 %v211
  %539 = vmatprep.subr.mxu0 %v196
  %540 = vmatpush1.msra.mxu0 %v195
  %541 = vmatprep.subr.mxu0 %v180
  %542 = vmatpush1.msra.mxu0 %v179
  %543 = vmatprep.subr.mxu0 %v164
  %544 = vmatpush1.msra.mxu0 %v163
  %545 = vmatprep.subr.mxu0 %v148
  %546 = vmatpush1.msra.mxu0 %v147
  %547 = vmatprep.subr.mxu0 %v132
  %548 = vmatpush1.msra.mxu0 %v131
  %549 = vmatprep.subr.mxu0 %v116
  %550 = vmatpush1.msra.mxu0 %v115
  %551 = vmatprep.subr.mxu0 %v100
  %552 = vmatpush1.msra.mxu0 %v99
  %553 = vmatprep.subr.mxu0 %v84
  %554 = vmatpush1.msra.mxu0 %v83
  %555 = vmatprep.subr.mxu0 %v68
  %556 = vmatpush1.msra.mxu0 %v67
  %557 = vmatprep.subr.mxu0 %v52
  %558 = vmatpush1.msra.mxu0 %v51
  %559 = vmatprep.subr.mxu0 %v36
  %560 = vmatpush1.msra.mxu0 %v35
  %561 = vmatprep.subr.mxu0 %v20
  %562 = vmatpush1.msra.mxu0 %v19
  %563 = vmatprep.subr.mxu0 %v516
  %564 = vmatpush2.msra.mxu0 %v515
  %565 = vmatprep.subr.mxu0 %v500
  %566 = vmatpush2.msra.mxu0 %v499
  %567 = vmatprep.subr.mxu0 %v484
  %568 = vmatpush2.msra.mxu0 %v483
  %569 = vmatprep.subr.mxu0 %v468
  %570 = vmatpush2.msra.mxu0 %v467
  %571 = vmatprep.subr.mxu0 %v452
  %572 = vmatpush2.msra.mxu0 %v451
  %573 = vmatprep.subr.mxu0 %v436
  %574 = vmatpush2.msra.mxu0 %v435
  %575 = vmatprep.subr.mxu0 %v420
  %576 = vmatpush2.msra.mxu0 %v419
  %577 = vmatprep.subr.mxu0 %v404
  %578 = vmatpush2.msra.mxu0 %v403
  %579 = vmatprep.subr.mxu0 %v388
  %580 = vmatpush2.msra.mxu0 %v387
  %581 = vmatprep.subr.mxu0 %v372
  %582 = vmatpush2.msra.mxu0 %v371
  %583 = vmatprep.subr.mxu0 %v356
  %584 = vmatpush2.msra.mxu0 %v355
  %585 = vmatprep.subr.mxu0 %v340
  %586 = vmatpush2.msra.mxu0 %v339
  %587 = vmatprep.subr.mxu0 %v324
  %588 = vmatpush2.msra.mxu0 %v323
  %589 = vmatprep.subr.mxu0 %v308
  %590 = vmatpush2.msra.mxu0 %v307
  %591 = vmatprep.subr.mxu0 %v292
  %592 = vmatpush2.msra.mxu0 %v291
  %593 = vmatprep.subr.mxu0 %v276
  %594 = vmatpush2.msra.mxu0 %v275
  %595 = vmatprep.mubr.f32.mxu0 %v18
  %596 = vmatmul.mubr.f32.gmra.mxu0 %v17
  %v597 = vpop.f32.mrf.mxu0
  %v598 = vadd.f32 0.0, %v597
  %v599 = vpop.f32.mrf.mxu0
  %v600 = vadd.f32 0.0, %v599
  %601 = vdwg.mxu0
  %602 = vmatprep.subr.mxu0 %v262
  %603 = vmatpush1.msra.mxu0 %v261
  %604 = vmatprep.subr.mxu0 %v246
  %605 = vmatpush1.msra.mxu0 %v245
  %606 = vmatprep.subr.mxu0 %v230
  %607 = vmatpush1.msra.mxu0 %v229
  %608 = vmatprep.subr.mxu0 %v214
  %609 = vmatpush1.msra.mxu0 %v213
  %610 = vmatprep.subr.mxu0 %v198
  %611 = vmatpush1.msra.mxu0 %v197
  %612 = vmatprep.subr.mxu0 %v182
  %613 = vmatpush1.msra.mxu0 %v181
  %614 = vmatprep.subr.mxu0 %v166
  %615 = vmatpush1.msra.mxu0 %v165
  %616 = vmatprep.subr.mxu0 %v150
  %617 = vmatpush1.msra.mxu0 %v149
  %618 = vmatprep.subr.mxu0 %v134
  %619 = vmatpush1.msra.mxu0 %v133
  %620 = vmatprep.subr.mxu0 %v118
  %621 = vmatpush1.msra.mxu0 %v117
  %622 = vmatprep.subr.mxu0 %v102
  %623 = vmatpush1.msra.mxu0 %v101
  %624 = vmatprep.subr.mxu0 %v86
  %625 = vmatpush1.msra.mxu0 %v85
  %626 = vmatprep.subr.mxu0 %v70
  %627 = vmatpush1.msra.mxu0 %v69
  %628 = vmatprep.subr.mxu0 %v54
  %629 = vmatpush1.msra.mxu0 %v53
  %630 = vmatprep.subr.mxu0 %v38
  %631 = vmatpush1.msra.mxu0 %v37
  %632 = vmatprep.subr.mxu0 %v22
  %633 = vmatpush1.msra.mxu0 %v21
  %634 = vmatprep.subr.mxu0 %v518
  %635 = vmatpush2.msra.mxu0 %v517
  %636 = vmatprep.subr.mxu0 %v502
  %637 = vmatpush2.msra.mxu0 %v501
  %638 = vmatprep.subr.mxu0 %v486
  %639 = vmatpush2.msra.mxu0 %v485
  %640 = vmatprep.subr.mxu0 %v470
  %641 = vmatpush2.msra.mxu0 %v469
  %642 = vmatprep.subr.mxu0 %v454
  %643 = vmatpush2.msra.mxu0 %v453
  %644 = vmatprep.subr.mxu0 %v438
  %645 = vmatpush2.msra.mxu0 %v437
  %646 = vmatprep.subr.mxu0 %v422
  %647 = vmatpush2.msra.mxu0 %v421
  %648 = vmatprep.subr.mxu0 %v406
  %649 = vmatpush2.msra.mxu0 %v405
  %650 = vmatprep.subr.mxu0 %v390
  %651 = vmatpush2.msra.mxu0 %v389
  %652 = vmatprep.subr.mxu0 %v374
  %653 = vmatpush2.msra.mxu0 %v373
  %654 = vmatprep.subr.mxu0 %v358
  %655 = vmatpush2.msra.mxu0 %v357
  %656 = vmatprep.subr.mxu0 %v342
  %657 = vmatpush2.msra.mxu0 %v341
  %658 = vmatprep.subr.mxu0 %v326
  %659 = vmatpush2.msra.mxu0 %v325
  %660 = vmatprep.subr.mxu0 %v310
  %661 = vmatpush2.msra.mxu0 %v309
  %662 = vmatprep.subr.mxu0 %v294
  %663 = vmatpush2.msra.mxu0 %v293
  %664 = vmatprep.subr.mxu0 %v278
  %665 = vmatpush2.msra.mxu0 %v277
  %666 = vmatprep.mubr.f32.mxu0 %v18
  %667 = vmatmul.mubr.f32.gmra.mxu0 %v17
  %v668 = vpop.f32.mrf.mxu0
  %v669 = vadd.f32 0.0, %v668
  %v670 = vpop.f32.mrf.mxu0
  %v671 = vadd.f32 0.0, %v670
  %672 = vdwg.mxu0
  %673 = vmatprep.subr.mxu0 %v264
  %674 = vmatpush1.msra.mxu0 %v263
  %675 = vmatprep.subr.mxu0 %v248
  %676 = vmatpush1.msra.mxu0 %v247
  %677 = vmatprep.subr.mxu0 %v232
  %678 = vmatpush1.msra.mxu0 %v231
  %679 = vmatprep.subr.mxu0 %v216
  %680 = vmatpush1.msra.mxu0 %v215
  %681 = vmatprep.subr.mxu0 %v200
  %682 = vmatpush1.msra.mxu0 %v199
  %683 = vmatprep.subr.mxu0 %v184
  %684 = vmatpush1.msra.mxu0 %v183
  %685 = vmatprep.subr.mxu0 %v168
  %686 = vmatpush1.msra.mxu0 %v167
  %687 = vmatprep.subr.mxu0 %v152
  %688 = vmatpush1.msra.mxu0 %v151
  %689 = vmatprep.subr.mxu0 %v136
  %690 = vmatpush1.msra.mxu0 %v135
  %691 = vmatprep.subr.mxu0 %v120
  %692 = vmatpush1.msra.mxu0 %v119
  %693 = vmatprep.subr.mxu0 %v104
  %694 = vmatpush1.msra.mxu0 %v103
  %695 = vmatprep.subr.mxu0 %v88
  %696 = vmatpush1.msra.mxu0 %v87
  %697 = vmatprep.subr.mxu0 %v72
  %698 = vmatpush1.msra.mxu0 %v71
  %699 = vmatprep.subr.mxu0 %v56
  %700 = vmatpush1.msra.mxu0 %v55
  %701 = vmatprep.subr.mxu0 %v40
  %702 = vmatpush1.msra.mxu0 %v39
  %703 = vmatprep.subr.mxu0 %v24
  %704 = vmatpush1.msra.mxu0 %v23
  %705 = vmatprep.subr.mxu0 %v520
  %706 = vmatpush2.msra.mxu0 %v519
  %707 = vmatprep.subr.mxu0 %v504
  %708 = vmatpush2.msra.mxu0 %v503
  %709 = vmatprep.subr.mxu0 %v488
  %710 = vmatpush2.msra.mxu0 %v487
  %711 = vmatprep.subr.mxu0 %v472
  %712 = vmatpush2.msra.mxu0 %v471
  %713 = vmatprep.subr.mxu0 %v456
  %714 = vmatpush2.msra.mxu0 %v455
  %715 = vmatprep.subr.mxu0 %v440
  %716 = vmatpush2.msra.mxu0 %v439
  %717 = vmatprep.subr.mxu0 %v424
  %718 = vmatpush2.msra.mxu0 %v423
  %719 = vmatprep.subr.mxu0 %v408
  %720 = vmatpush2.msra.mxu0 %v407
  %721 = vmatprep.subr.mxu0 %v392
  %722 = vmatpush2.msra.mxu0 %v391
  %723 = vmatprep.subr.mxu0 %v376
  %724 = vmatpush2.msra.mxu0 %v375
  %725 = vmatprep.subr.mxu0 %v360
  %726 = vmatpush2.msra.mxu0 %v359
  %727 = vmatprep.subr.mxu0 %v344
  %728 = vmatpush2.msra.mxu0 %v343
  %729 = vmatprep.subr.mxu0 %v328
  %730 = vmatpush2.msra.mxu0 %v327
  %731 = vmatprep.subr.mxu0 %v312
  %732 = vmatpush2.msra.mxu0 %v311
  %733 = vmatprep.subr.mxu0 %v296
  %734 = vmatpush2.msra.mxu0 %v295
  %735 = vmatprep.subr.mxu0 %v280
  %736 = vmatpush2.msra.mxu0 %v279
  %737 = vmatprep.mubr.f32.mxu0 %v18
  %738 = vmatmul.mubr.f32.gmra.mxu0 %v17
  %v739 = vpop.f32.mrf.mxu0
  %v740 = vadd.f32 0.0, %v739
  %v741 = vpop.f32.mrf.mxu0
  %v742 = vadd.f32 0.0, %v741
  %743 = vdwg.mxu0
  %744 = vmatprep.subr.mxu0 %v266
  %745 = vmatpush1.msra.mxu0 %v265
  %746 = vmatprep.subr.mxu0 %v250
  %747 = vmatpush1.msra.mxu0 %v249
  %748 = vmatprep.subr.mxu0 %v234
  %749 = vmatpush1.msra.mxu0 %v233
  %750 = vmatprep.subr.mxu0 %v218
  %751 = vmatpush1.msra.mxu0 %v217
  %752 = vmatprep.subr.mxu0 %v202
  %753 = vmatpush1.msra.mxu0 %v201
  %754 = vmatprep.subr.mxu0 %v186
  %755 = vmatpush1.msra.mxu0 %v185
  %756 = vmatprep.subr.mxu0 %v170
  %757 = vmatpush1.msra.mxu0 %v169
  %758 = vmatprep.subr.mxu0 %v154
  %759 = vmatpush1.msra.mxu0 %v153
  %760 = vmatprep.subr.mxu0 %v138
  %761 = vmatpush1.msra.mxu0 %v137
  %762 = vmatprep.subr.mxu0 %v122
  %763 = vmatpush1.msra.mxu0 %v121
  %764 = vmatprep.subr.mxu0 %v106
  %765 = vmatpush1.msra.mxu0 %v105
  %766 = vmatprep.subr.mxu0 %v90
  %767 = vmatpush1.msra.mxu0 %v89
  %768 = vmatprep.subr.mxu0 %v74
  %769 = vmatpush1.msra.mxu0 %v73
  %770 = vmatprep.subr.mxu0 %v58
  %771 = vmatpush1.msra.mxu0 %v57
  %772 = vmatprep.subr.mxu0 %v42
  %773 = vmatpush1.msra.mxu0 %v41
  %774 = vmatprep.subr.mxu0 %v26
  %775 = vmatpush1.msra.mxu0 %v25
  %776 = vmatprep.subr.mxu0 %v522
  %777 = vmatpush2.msra.mxu0 %v521
  %778 = vmatprep.subr.mxu0 %v506
  %779 = vmatpush2.msra.mxu0 %v505
  %780 = vmatprep.subr.mxu0 %v490
  %781 = vmatpush2.msra.mxu0 %v489
  %782 = vmatprep.subr.mxu0 %v474
  %783 = vmatpush2.msra.mxu0 %v473
  %784 = vmatprep.subr.mxu0 %v458
  %785 = vmatpush2.msra.mxu0 %v457
  %786 = vmatprep.subr.mxu0 %v442
  %787 = vmatpush2.msra.mxu0 %v441
  %788 = vmatprep.subr.mxu0 %v426
  %789 = vmatpush2.msra.mxu0 %v425
  %790 = vmatprep.subr.mxu0 %v410
  %791 = vmatpush2.msra.mxu0 %v409
  %792 = vmatprep.subr.mxu0 %v394
  %793 = vmatpush2.msra.mxu0 %v393
  %794 = vmatprep.subr.mxu0 %v378
  %795 = vmatpush2.msra.mxu0 %v377
  %796 = vmatprep.subr.mxu0 %v362
  %797 = vmatpush2.msra.mxu0 %v361
  %798 = vmatprep.subr.mxu0 %v346
  %799 = vmatpush2.msra.mxu0 %v345
  %800 = vmatprep.subr.mxu0 %v330
  %801 = vmatpush2.msra.mxu0 %v329
  %802 = vmatprep.subr.mxu0 %v314
  %803 = vmatpush2.msra.mxu0 %v313
  %804 = vmatprep.subr.mxu0 %v298
  %805 = vmatpush2.msra.mxu0 %v297
  %806 = vmatprep.subr.mxu0 %v282
  %807 = vmatpush2.msra.mxu0 %v281
  %808 = vmatprep.mubr.f32.mxu0 %v18
  %809 = vmatmul.mubr.f32.gmra.mxu0 %v17
  %v810 = vpop.f32.mrf.mxu0
  %v811 = vadd.f32 0.0, %v810
  %v812 = vpop.f32.mrf.mxu0
  %v813 = vadd.f32 0.0, %v812
  %814 = vdwg.mxu0
  %815 = vmatprep.subr.mxu0 %v268
  %816 = vmatpush1.msra.mxu0 %v267
  %817 = vmatprep.subr.mxu0 %v252
  %818 = vmatpush1.msra.mxu0 %v251
  %819 = vmatprep.subr.mxu0 %v236
  %820 = vmatpush1.msra.mxu0 %v235
  %821 = vmatprep.subr.mxu0 %v220
  %822 = vmatpush1.msra.mxu0 %v219
  %823 = vmatprep.subr.mxu0 %v204
  %824 = vmatpush1.msra.mxu0 %v203
  %825 = vmatprep.subr.mxu0 %v188
  %826 = vmatpush1.msra.mxu0 %v187
  %827 = vmatprep.subr.mxu0 %v172
  %828 = vmatpush1.msra.mxu0 %v171
  %829 = vmatprep.subr.mxu0 %v156
  %830 = vmatpush1.msra.mxu0 %v155
  %831 = vmatprep.subr.mxu0 %v140
  %832 = vmatpush1.msra.mxu0 %v139
  %833 = vmatprep.subr.mxu0 %v124
  %834 = vmatpush1.msra.mxu0 %v123
  %835 = vmatprep.subr.mxu0 %v108
  %836 = vmatpush1.msra.mxu0 %v107
  %837 = vmatprep.subr.mxu0 %v92
  %838 = vmatpush1.msra.mxu0 %v91
  %839 = vmatprep.subr.mxu0 %v76
  %840 = vmatpush1.msra.mxu0 %v75
  %841 = vmatprep.subr.mxu0 %v60
  %842 = vmatpush1.msra.mxu0 %v59
  %843 = vmatprep.subr.mxu0 %v44
  %844 = vmatpush1.msra.mxu0 %v43
  %845 = vmatprep.subr.mxu0 %v28
  %846 = vmatpush1.msra.mxu0 %v27
  %847 = vmatprep.subr.mxu0 %v524
  %848 = vmatpush2.msra.mxu0 %v523
  %849 = vmatprep.subr.mxu0 %v508
  %850 = vmatpush2.msra.mxu0 %v507
  %851 = vmatprep.subr.mxu0 %v492
  %852 = vmatpush2.msra.mxu0 %v491
  %853 = vmatprep.subr.mxu0 %v476
  %854 = vmatpush2.msra.mxu0 %v475
  %855 = vmatprep.subr.mxu0 %v460
  %856 = vmatpush2.msra.mxu0 %v459
  %857 = vmatprep.subr.mxu0 %v444
  %858 = vmatpush2.msra.mxu0 %v443
  %859 = vmatprep.subr.mxu0 %v428
  %860 = vmatpush2.msra.mxu0 %v427
  %861 = vmatprep.subr.mxu0 %v412
  %862 = vmatpush2.msra.mxu0 %v411
  %863 = vmatprep.subr.mxu0 %v396
  %864 = vmatpush2.msra.mxu0 %v395
  %865 = vmatprep.subr.mxu0 %v380
  %866 = vmatpush2.msra.mxu0 %v379
  %867 = vmatprep.subr.mxu0 %v364
  %868 = vmatpush2.msra.mxu0 %v363
  %869 = vmatprep.subr.mxu0 %v348
  %870 = vmatpush2.msra.mxu0 %v347
  %871 = vmatprep.subr.mxu0 %v332
  %872 = vmatpush2.msra.mxu0 %v331
  %873 = vmatprep.subr.mxu0 %v316
  %874 = vmatpush2.msra.mxu0 %v315
  %875 = vmatprep.subr.mxu0 %v300
  %876 = vmatpush2.msra.mxu0 %v299
  %877 = vmatprep.subr.mxu0 %v284
  %878 = vmatpush2.msra.mxu0 %v283
  %879 = vmatprep.mubr.f32.mxu0 %v18
  %880 = vmatmul.mubr.f32.gmra.mxu0 %v17
  %v881 = vpop.f32.mrf.mxu0
  %v882 = vadd.f32 0.0, %v881
  %v883 = vpop.f32.mrf.mxu0
  %v884 = vadd.f32 0.0, %v883
  %885 = vdwg.mxu0
  %886 = vmatprep.subr.mxu0 %v270
  %887 = vmatpush1.msra.mxu0 %v269
  %888 = vmatprep.subr.mxu0 %v254
  %889 = vmatpush1.msra.mxu0 %v253
  %890 = vmatprep.subr.mxu0 %v238
  %891 = vmatpush1.msra.mxu0 %v237
  %892 = vmatprep.subr.mxu0 %v222
  %893 = vmatpush1.msra.mxu0 %v221
  %894 = vmatprep.subr.mxu0 %v206
  %895 = vmatpush1.msra.mxu0 %v205
  %896 = vmatprep.subr.mxu0 %v190
  %897 = vmatpush1.msra.mxu0 %v189
  %898 = vmatprep.subr.mxu0 %v174
  %899 = vmatpush1.msra.mxu0 %v173
  %900 = vmatprep.subr.mxu0 %v158
  %901 = vmatpush1.msra.mxu0 %v157
  %902 = vmatprep.subr.mxu0 %v142
  %903 = vmatpush1.msra.mxu0 %v141
  %904 = vmatprep.subr.mxu0 %v126
  %905 = vmatpush1.msra.mxu0 %v125
  %906 = vmatprep.subr.mxu0 %v110
  %907 = vmatpush1.msra.mxu0 %v109
  %908 = vmatprep.subr.mxu0 %v94
  %909 = vmatpush1.msra.mxu0 %v93
  %910 = vmatprep.subr.mxu0 %v78
  %911 = vmatpush1.msra.mxu0 %v77
  %912 = vmatprep.subr.mxu0 %v62
  %913 = vmatpush1.msra.mxu0 %v61
  %914 = vmatprep.subr.mxu0 %v46
  %915 = vmatpush1.msra.mxu0 %v45
  %916 = vmatprep.subr.mxu0 %v30
  %917 = vmatpush1.msra.mxu0 %v29
  %918 = vmatprep.subr.mxu0 %v526
  %919 = vmatpush2.msra.mxu0 %v525
  %920 = vmatprep.subr.mxu0 %v510
  %921 = vmatpush2.msra.mxu0 %v509
  %922 = vmatprep.subr.mxu0 %v494
  %923 = vmatpush2.msra.mxu0 %v493
  %924 = vmatprep.subr.mxu0 %v478
  %925 = vmatpush2.msra.mxu0 %v477
  %926 = vmatprep.subr.mxu0 %v462
  %927 = vmatpush2.msra.mxu0 %v461
  %928 = vmatprep.subr.mxu0 %v446
  %929 = vmatpush2.msra.mxu0 %v445
  %930 = vmatprep.subr.mxu0 %v430
  %931 = vmatpush2.msra.mxu0 %v429
  %932 = vmatprep.subr.mxu0 %v414
  %933 = vmatpush2.msra.mxu0 %v413
  %934 = vmatprep.subr.mxu0 %v398
  %935 = vmatpush2.msra.mxu0 %v397
  %936 = vmatprep.subr.mxu0 %v382
  %937 = vmatpush2.msra.mxu0 %v381
  %938 = vmatprep.subr.mxu0 %v366
  %939 = vmatpush2.msra.mxu0 %v365
  %940 = vmatprep.subr.mxu0 %v350
  %941 = vmatpush2.msra.mxu0 %v349
  %942 = vmatprep.subr.mxu0 %v334
  %943 = vmatpush2.msra.mxu0 %v333
  %944 = vmatprep.subr.mxu0 %v318
  %945 = vmatpush2.msra.mxu0 %v317
  %946 = vmatprep.subr.mxu0 %v302
  %947 = vmatpush2.msra.mxu0 %v301
  %948 = vmatprep.subr.mxu0 %v286
  %949 = vmatpush2.msra.mxu0 %v285
  %950 = vmatprep.mubr.f32.mxu0 %v18
  %951 = vmatmul.mubr.f32.gmra.mxu0 %v17
  %v952 = vpop.f32.mrf.mxu0
  %v953 = vadd.f32 0.0, %v952
  %v954 = vpop.f32.mrf.mxu0
  %v955 = vadd.f32 0.0, %v954
  %956 = vdwg.mxu0
  %957 = vmatprep.subr.mxu0 %v272
  %958 = vmatpush1.msra.mxu0 %v271
  %959 = vmatprep.subr.mxu0 %v256
  %960 = vmatpush1.msra.mxu0 %v255
  %961 = vmatprep.subr.mxu0 %v240
  %962 = vmatpush1.msra.mxu0 %v239
  %963 = vmatprep.subr.mxu0 %v224
  %964 = vmatpush1.msra.mxu0 %v223
  %965 = vmatprep.subr.mxu0 %v208
  %966 = vmatpush1.msra.mxu0 %v207
  %967 = vmatprep.subr.mxu0 %v192
  %968 = vmatpush1.msra.mxu0 %v191
  %969 = vmatprep.subr.mxu0 %v176
  %970 = vmatpush1.msra.mxu0 %v175
  %971 = vmatprep.subr.mxu0 %v160
  %972 = vmatpush1.msra.mxu0 %v159
  %973 = vmatprep.subr.mxu0 %v144
  %974 = vmatpush1.msra.mxu0 %v143
  %975 = vmatprep.subr.mxu0 %v128
  %976 = vmatpush1.msra.mxu0 %v127
  %977 = vmatprep.subr.mxu0 %v112
  %978 = vmatpush1.msra.mxu0 %v111
  %979 = vmatprep.subr.mxu0 %v96
  %980 = vmatpush1.msra.mxu0 %v95
  %981 = vmatprep.subr.mxu0 %v80
  %982 = vmatpush1.msra.mxu0 %v79
  %983 = vmatprep.subr.mxu0 %v64
  %984 = vmatpush1.msra.mxu0 %v63
  %985 = vmatprep.subr.mxu0 %v48
  %986 = vmatpush1.msra.mxu0 %v47
  %987 = vmatprep.subr.mxu0 %v32
  %988 = vmatpush1.msra.mxu0 %v31
  %989 = vmatprep.subr.mxu0 %v528
  %990 = vmatpush2.msra.mxu0 %v527
  %991 = vmatprep.subr.mxu0 %v512
  %992 = vmatpush2.msra.mxu0 %v511
  %993 = vmatprep.subr.mxu0 %v496
  %994 = vmatpush2.msra.mxu0 %v495
  %995 = vmatprep.subr.mxu0 %v480
  %996 = vmatpush2.msra.mxu0 %v479
  %997 = vmatprep.subr.mxu0 %v464
  %998 = vmatpush2.msra.mxu0 %v463
  %999 = vmatprep.subr.mxu0 %v448
  %1000 = vmatpush2.msra.mxu0 %v447
  %1001 = vmatprep.subr.mxu0 %v432
  %1002 = vmatpush2.msra.mxu0 %v431
  %1003 = vmatprep.subr.mxu0 %v416
  %1004 = vmatpush2.msra.mxu0 %v415
  %1005 = vmatprep.subr.mxu0 %v400
  %1006 = vmatpush2.msra.mxu0 %v399
  %1007 = vmatprep.subr.mxu0 %v384
  %1008 = vmatpush2.msra.mxu0 %v383
  %1009 = vmatprep.subr.mxu0 %v368
  %1010 = vmatpush2.msra.mxu0 %v367
  %1011 = vmatprep.subr.mxu0 %v352
  %1012 = vmatpush2.msra.mxu0 %v351
  %1013 = vmatprep.subr.mxu0 %v336
  %1014 = vmatpush2.msra.mxu0 %v335
  %1015 = vmatprep.subr.mxu0 %v320
  %1016 = vmatpush2.msra.mxu0 %v319
  %1017 = vmatprep.subr.mxu0 %v304
  %1018 = vmatpush2.msra.mxu0 %v303
  %1019 = vmatprep.subr.mxu0 %v288
  %1020 = vmatpush2.msra.mxu0 %v287
  %1021 = vmatprep.mubr.f32.mxu0 %v18
  %1022 = vmatmul.mubr.f32.gmra.mxu0 %v17
  %v1023 = vpop.f32.mrf.mxu0
  %v1024 = vadd.f32 0.0, %v1023
  %v1025 = vpop.f32.mrf.mxu0
  %v1026 = vadd.f32 0.0, %v1025
  %1027 = vdwg.mxu0
  %1028 = vmatprep.subr.mxu0 %v274
  %1029 = vmatpush1.msra.mxu0 %v273
  %1030 = vmatprep.subr.mxu0 %v258
  %1031 = vmatpush1.msra.mxu0 %v257
  %1032 = vmatprep.subr.mxu0 %v242
  %1033 = vmatpush1.msra.mxu0 %v241
  %1034 = vmatprep.subr.mxu0 %v226
  %1035 = vmatpush1.msra.mxu0 %v225
  %1036 = vmatprep.subr.mxu0 %v210
  %1037 = vmatpush1.msra.mxu0 %v209
  %1038 = vmatprep.subr.mxu0 %v194
  %1039 = vmatpush1.msra.mxu0 %v193
  %1040 = vmatprep.subr.mxu0 %v178
  %1041 = vmatpush1.msra.mxu0 %v177
  %1042 = vmatprep.subr.mxu0 %v162
  %1043 = vmatpush1.msra.mxu0 %v161
  %1044 = vmatprep.subr.mxu0 %v146
  %1045 = vmatpush1.msra.mxu0 %v145
  %1046 = vmatprep.subr.mxu0 %v130
  %1047 = vmatpush1.msra.mxu0 %v129
  %1048 = vmatprep.subr.mxu0 %v114
  %1049 = vmatpush1.msra.mxu0 %v113
  %1050 = vmatprep.subr.mxu0 %v98
  %1051 = vmatpush1.msra.mxu0 %v97
  %1052 = vmatprep.subr.mxu0 %v82
  %1053 = vmatpush1.msra.mxu0 %v81
  %1054 = vmatprep.subr.mxu0 %v66
  %1055 = vmatpush1.msra.mxu0 %v65
  %1056 = vmatprep.subr.mxu0 %v50
  %1057 = vmatpush1.msra.mxu0 %v49
  %1058 = vmatprep.subr.mxu0 %v34
  %1059 = vmatpush1.msra.mxu0 %v33
  %1060 = vmatprep.subr.mxu0 %v530
  %1061 = vmatpush2.msra.mxu0 %v529
  %1062 = vmatprep.subr.mxu0 %v514
  %1063 = vmatpush2.msra.mxu0 %v513
  %1064 = vmatprep.subr.mxu0 %v498
  %1065 = vmatpush2.msra.mxu0 %v497
  %1066 = vmatprep.subr.mxu0 %v482
  %1067 = vmatpush2.msra.mxu0 %v481
  %1068 = vmatprep.subr.mxu0 %v466
  %1069 = vmatpush2.msra.mxu0 %v465
  %1070 = vmatprep.subr.mxu0 %v450
  %1071 = vmatpush2.msra.mxu0 %v449
  %1072 = vmatprep.subr.mxu0 %v434
  %1073 = vmatpush2.msra.mxu0 %v433
  %1074 = vmatprep.subr.mxu0 %v418
  %1075 = vmatpush2.msra.mxu0 %v417
  %1076 = vmatprep.subr.mxu0 %v402
  %1077 = vmatpush2.msra.mxu0 %v401
  %1078 = vmatprep.subr.mxu0 %v386
  %1079 = vmatpush2.msra.mxu0 %v385
  %1080 = vmatprep.subr.mxu0 %v370
  %1081 = vmatpush2.msra.mxu0 %v369
  %1082 = vmatprep.subr.mxu0 %v354
  %1083 = vmatpush2.msra.mxu0 %v353
  %1084 = vmatprep.subr.mxu0 %v338
  %1085 = vmatpush2.msra.mxu0 %v337
  %1086 = vmatprep.subr.mxu0 %v322
  %1087 = vmatpush2.msra.mxu0 %v321
  %1088 = vmatprep.subr.mxu0 %v306
  %1089 = vmatpush2.msra.mxu0 %v305
  %1090 = vmatprep.subr.mxu0 %v290
  %1091 = vmatpush2.msra.mxu0 %v289
  %1092 = vmatprep.mubr.f32.mxu0 %v18
  %1093 = vmatmul.mubr.f32.gmra.mxu0 %v17
  %v1094 = vpop.f32.mrf.mxu0
  %v1095 = vadd.f32 0.0, %v1094
  %v1096 = vpop.f32.mrf.mxu0
  %v1097 = vadd.f32 0.0, %v1096
  %1098 = vdwg.mxu0
  %v1099 = vadd.f32 %v598, %v600
  %v1100 = vadd.f32 %v1099, %v669
  %v1101 = vadd.f32 %v1100, %v671
  %v1102 = vadd.f32 %v1101, %v740
  %v1103 = vadd.f32 %v1102, %v742
  %v1104 = vadd.f32 %v1103, %v811
  %v1105 = vadd.f32 %v1104, %v813
  %v1106 = vadd.f32 %v1105, %v882
  %v1107 = vadd.f32 %v1106, %v884
  %v1108 = vadd.f32 %v1107, %v953
  %v1109 = vadd.f32 %v1108, %v955
  %v1110 = vadd.f32 %v1109, %v1024
  %v1111 = vadd.f32 %v1110, %v1026
  %v1112 = vadd.f32 %v1111, %v1095
  %v1113 = vadd.f32 %v1112, %v1097
  %1114 = vadd.xlane.f32.xlu0 %v1113
  %v1115 = vpop.xlane.xlu0 %1114
  %v1116 = vmul.f32 %v1115, 0.00048828125
  %v1117 = vmul.f32 %v598, %v598
  %v1118 = vmul.f32 %v600, %v600
  %v1119 = vmul.f32 %v669, %v669
  %v1120 = vmul.f32 %v671, %v671
  %v1121 = vmul.f32 %v740, %v740
  %v1122 = vmul.f32 %v742, %v742
  %v1123 = vmul.f32 %v811, %v811
  %v1124 = vmul.f32 %v813, %v813
  %v1125 = vmul.f32 %v882, %v882
  %v1126 = vmul.f32 %v884, %v884
  %v1127 = vmul.f32 %v953, %v953
  %v1128 = vmul.f32 %v955, %v955
  %v1129 = vmul.f32 %v1024, %v1024
  %v1130 = vmul.f32 %v1026, %v1026
  %v1131 = vmul.f32 %v1095, %v1095
  %v1132 = vmul.f32 %v1097, %v1097
  %v1133 = vadd.f32 %v1117, %v1118
  %v1134 = vadd.f32 %v1133, %v1119
  %v1135 = vadd.f32 %v1134, %v1120
  %v1136 = vadd.f32 %v1135, %v1121
  %v1137 = vadd.f32 %v1136, %v1122
  %v1138 = vadd.f32 %v1137, %v1123
  %v1139 = vadd.f32 %v1138, %v1124
  %v1140 = vadd.f32 %v1139, %v1125
  %v1141 = vadd.f32 %v1140, %v1126
  %v1142 = vadd.f32 %v1141, %v1127
  %v1143 = vadd.f32 %v1142, %v1128
  %v1144 = vadd.f32 %v1143, %v1129
  %v1145 = vadd.f32 %v1144, %v1130
  %v1146 = vadd.f32 %v1145, %v1131
  %v1147 = vadd.f32 %v1146, %v1132
  %1148 = vadd.xlane.f32.xlu0 %v1147
  %v1149 = vpop.xlane.xlu0 %1148
  %v1150 = vmul.f32 %v1149, 0.00048828125
  %v1151 = vmul.f32 %v1116, %v1116
  %v1152 = vsub.f32 %v1150, %v1151
  %v1153 = vmax.f32 %v1152, 0.0
  %v1154 = vsub.f32 %v598, %v1116
  %v1155 = vsub.f32 %v600, %v1116
  %v1156 = vsub.f32 %v669, %v1116
  %v1157 = vsub.f32 %v671, %v1116
  %v1158 = vsub.f32 %v740, %v1116
  %v1159 = vsub.f32 %v742, %v1116
  %v1160 = vsub.f32 %v811, %v1116
  %v1161 = vsub.f32 %v813, %v1116
  %v1162 = vsub.f32 %v882, %v1116
  %v1163 = vsub.f32 %v884, %v1116
  %v1164 = vsub.f32 %v953, %v1116
  %v1165 = vsub.f32 %v955, %v1116
  %v1166 = vsub.f32 %v1024, %v1116
  %v1167 = vsub.f32 %v1026, %v1116
  %v1168 = vsub.f32 %v1095, %v1116
  %v1169 = vsub.f32 %v1097, %v1116
  %v1170 = vadd.f32 %v1153, 1e-05
  %v1171 = vrsqrt.pop %v1170
  %v1172 = vmul.f32 %v1154, %v1171
  %v1173 = vmul.f32 %v1155, %v1171
  %v1174 = vmul.f32 %v1156, %v1171
  %v1175 = vmul.f32 %v1157, %v1171
  %v1176 = vmul.f32 %v1158, %v1171
  %v1177 = vmul.f32 %v1159, %v1171
  %v1178 = vmul.f32 %v1160, %v1171
  %v1179 = vmul.f32 %v1161, %v1171
  %v1180 = vmul.f32 %v1162, %v1171
  %v1181 = vmul.f32 %v1163, %v1171
  %v1182 = vmul.f32 %v1164, %v1171
  %v1183 = vmul.f32 %v1165, %v1171
  %v1184 = vmul.f32 %v1166, %v1171
  %v1185 = vmul.f32 %v1167, %v1171
  %v1186 = vmul.f32 %v1168, %v1171
  %v1187 = vmul.f32 %v1169, %v1171
  %v1188 = vld [vmem:[%s2] sm:$0xff]
  %1190 = vset.pattern.permute.xlu0 0
  %1191 = vperm.xlu0 %1190, %v1188
  %v1192 = vpop.permute.xlu0 %1191
  %v1194 = vmul.f32 %v1172, %v1192
  %v1195 = vmul.f32 %v1173, %v1192
  %v1196 = vmul.f32 %v1174, %v1192
  %v1197 = vmul.f32 %v1175, %v1192
  %v1198 = vmul.f32 %v1176, %v1192
  %v1199 = vmul.f32 %v1177, %v1192
  %v1200 = vmul.f32 %v1178, %v1192
  %v1201 = vmul.f32 %v1179, %v1192
  %v1202 = vmul.f32 %v1180, %v1192
  %v1203 = vmul.f32 %v1181, %v1192
  %v1204 = vmul.f32 %v1182, %v1192
  %v1205 = vmul.f32 %v1183, %v1192
  %v1206 = vmul.f32 %v1184, %v1192
  %v1207 = vmul.f32 %v1185, %v1192
  %v1208 = vmul.f32 %v1186, %v1192
  %v1209 = vmul.f32 %v1187, %v1192
  %v1210 = vld [vmem:[%s3] sm:$0xff]
  %1212 = vset.pattern.permute.xlu0 0
  %1213 = vperm.xlu0 %1212, %v1210
  %v1214 = vpop.permute.xlu0 %1213
  %v1216 = vadd.f32 %v1194, %v1214
  %v1217 = vadd.f32 %v1195, %v1214
  %v1218 = vadd.f32 %v1196, %v1214
  %v1219 = vadd.f32 %v1197, %v1214
  %v1220 = vadd.f32 %v1198, %v1214
  %v1221 = vadd.f32 %v1199, %v1214
  %v1222 = vadd.f32 %v1200, %v1214
  %v1223 = vadd.f32 %v1201, %v1214
  %v1224 = vadd.f32 %v1202, %v1214
  %v1225 = vadd.f32 %v1203, %v1214
  %v1226 = vadd.f32 %v1204, %v1214
  %v1227 = vadd.f32 %v1205, %v1214
  %v1228 = vadd.f32 %v1206, %v1214
  %v1229 = vadd.f32 %v1207, %v1214
  %v1230 = vadd.f32 %v1208, %v1214
  %v1231 = vadd.f32 %v1209, %v1214
  %v1232 = vmax.f32 %v1216, 0.0
  %v1233 = vmax.f32 %v1217, 0.0
  %v1234 = vmax.f32 %v1218, 0.0
  %v1235 = vmax.f32 %v1219, 0.0
  %v1236 = vmax.f32 %v1220, 0.0
  %v1237 = vmax.f32 %v1221, 0.0
  %v1238 = vmax.f32 %v1222, 0.0
  %v1239 = vmax.f32 %v1223, 0.0
  %v1240 = vmax.f32 %v1224, 0.0
  %v1241 = vmax.f32 %v1225, 0.0
  %v1242 = vmax.f32 %v1226, 0.0
  %v1243 = vmax.f32 %v1227, 0.0
  %v1244 = vmax.f32 %v1228, 0.0
  %v1245 = vmax.f32 %v1229, 0.0
  %v1246 = vmax.f32 %v1230, 0.0
  %v1247 = vmax.f32 %v1231, 0.0
  %1248 = vst [vmem:[%s4] sm:$0xff] %v1232
  %1249 = vst [vmem:[%s4 + $0x8] sm:$0xff] %v1233
  %1250 = vst [vmem:[%s4 + $0x10] sm:$0xff] %v1234
  %1251 = vst [vmem:[%s4 + $0x18] sm:$0xff] %v1235
  %1252 = vst [vmem:[%s4 + $0x20] sm:$0xff] %v1236
  %1253 = vst [vmem:[%s4 + $0x28] sm:$0xff] %v1237
  %1254 = vst [vmem:[%s4 + $0x30] sm:$0xff] %v1238
  %1255 = vst [vmem:[%s4 + $0x38] sm:$0xff] %v1239
  %1256 = vst [vmem:[%s4 + $0x40] sm:$0xff] %v1240
  %1257 = vst [vmem:[%s4 + $0x48] sm:$0xff] %v1241
  %1258 = vst [vmem:[%s4 + $0x50] sm:$0xff] %v1242
  %1259 = vst [vmem:[%s4 + $0x58] sm:$0xff] %v1243
  %1260 = vst [vmem:[%s4 + $0x60] sm:$0xff] %v1244
  %1261 = vst [vmem:[%s4 + $0x68] sm:$0xff] %v1245
  %1262 = vst [vmem:[%s4 + $0x70] sm:$0xff] %v1246
  %1263 = vst [vmem:[%s4 + $0x78] sm:$0xff] %v1247
  // Predicated region
  $region18: #{cat_dog_cnn_forward.5} parent=0 // pred_check
    _
  $region19: #{cat_dog_cnn_forward.5} parent=0 // pred_check_branch
    %1265 = sbr.rel (0) target = $region21
  $region20: #{cat_dog_cnn_forward.5} parent=0 // pred_region
    _
  $region21: #{cat_dog_cnn_forward.5} parent=0 // pred_fallthru
    _
  // Predicated region
  $region22: #{cat_dog_cnn_forward.5} parent=0 // pred_check
    _
  $region23: #{cat_dog_cnn_forward.5} parent=0 // pred_check_branch
    %1267 = sbr.rel (0) target = $region25
  $region24: #{cat_dog_cnn_forward.5} parent=0 // pred_region
    _
  $region25: #{cat_dog_cnn_forward.5} parent=0 // pred_fallthru
    _

// kernel: cat_dog_cnn_forward.6
$region0: #{cat_dog_cnn_forward.6}
  #allocation0 [shape = 'u32[]', space=smem, size = 0x4, offset = 0x4, fixed_abs, tag = 'smem constant byte address 0x4 - core index']
  #allocation1 [shape = 'u32[144,128]{1,0:T(1,128)}', space=vmem, size = 0x12000, scoped, tag = 'internal scratch']
  %s0 = inlined_call_operand.vmem [shape: f32[4,128], index: 0, kind: input, shape index: {}]
  %s1 = inlined_call_operand.vmem [shape: f32[128,512], index: 1, kind: input, shape index: {}]
  %s2 = inlined_call_operand.vmem [shape: f32[4,1], index: 2, kind: input, shape index: {}]
  %s3 = inlined_call_operand.vmem [shape: f32[4,1], index: 3, kind: input, shape index: {}]
  %s4 = inlined_call_operand.vmem [shape: f32[4,512], index: 4, kind: output, shape index: {}]
  %s5 = sld [smem:[#allocation0]]
  $region26: #{cat_dog_cnn_forward.6} parent=0
    _
  %s7 = ssub.s32 1, %s5
  %s8 = scalar_select 0, %s7, %s5
  // Predicated region
  $region2: #{cat_dog_cnn_forward.6} parent=0 // pred_check
    _
  $region3: #{cat_dog_cnn_forward.6} parent=0 // pred_check_branch
    %10 = sbr.rel (0) target = $region5
  $region4: #{cat_dog_cnn_forward.6} parent=0 // pred_region
    _
  $region5: #{cat_dog_cnn_forward.6} parent=0 // pred_fallthru
    _
  // Predicated region
  $region6: #{cat_dog_cnn_forward.6} parent=0 // pred_check
    _
  $region7: #{cat_dog_cnn_forward.6} parent=0 // pred_check_branch
    %12 = sbr.rel (0) target = $region9
  $region8: #{cat_dog_cnn_forward.6} parent=0 // pred_region
    _
  $region9: #{cat_dog_cnn_forward.6} parent=0 // pred_fallthru
    _
  // Predicated region
  $region10: #{cat_dog_cnn_forward.6} parent=0 // pred_check
    _
  $region11: #{cat_dog_cnn_forward.6} parent=0 // pred_check_branch
    %14 = sbr.rel (0) target = $region13
  $region12: #{cat_dog_cnn_forward.6} parent=0 // pred_region
    _
  $region13: #{cat_dog_cnn_forward.6} parent=0 // pred_fallthru
    _
  // Predicated region
  $region14: #{cat_dog_cnn_forward.6} parent=0 // pred_check
    _
  $region15: #{cat_dog_cnn_forward.6} parent=0 // pred_check_branch
    %16 = sbr.rel (0) target = $region17
  $region16: #{cat_dog_cnn_forward.6} parent=0 // pred_region
    _
  $region17: #{cat_dog_cnn_forward.6} parent=0 // pred_fallthru
    _
  %v17 = vld [vmem:[%s0] sm:$0xf]
  %v18 = vld [vmem:[%s1] sm:$0xff]
  %v19 = vld [vmem:[%s1 + $0x8] sm:$0xff]
  %v20 = vld [vmem:[%s1 + $0x10] sm:$0xff]
  %v21 = vld [vmem:[%s1 + $0x18] sm:$0xff]
  %v22 = vld [vmem:[%s1 + $0x20] sm:$0xff]
  %v23 = vld [vmem:[%s1 + $0x28] sm:$0xff]
  %v24 = vld [vmem:[%s1 + $0x30] sm:$0xff]
  %v25 = vld [vmem:[%s1 + $0x38] sm:$0xff]
  %v26 = vld [vmem:[%s1 + $0x40] sm:$0xff]
  %v27 = vld [vmem:[%s1 + $0x48] sm:$0xff]
  %v28 = vld [vmem:[%s1 + $0x50] sm:$0xff]
  %v29 = vld [vmem:[%s1 + $0x58] sm:$0xff]
  %v30 = vld [vmem:[%s1 + $0x60] sm:$0xff]
  %v31 = vld [vmem:[%s1 + $0x68] sm:$0xff]
  %v32 = vld [vmem:[%s1 + $0x70] sm:$0xff]
  %v33 = vld [vmem:[%s1 + $0x78] sm:$0xff]
  %v34 = vld [vmem:[%s1 + $0x80] sm:$0xff]
  %v35 = vld [vmem:[%s1 + $0x88] sm:$0xff]
  %v36 = vld [vmem:[%s1 + $0x90] sm:$0xff]
  %v37 = vld [vmem:[%s1 + $0x98] sm:$0xff]
  %v38 = vld [vmem:[%s1 + $0xa0] sm:$0xff]
  %v39 = vld [vmem:[%s1 + $0xa8] sm:$0xff]
  %v40 = vld [vmem:[%s1 + $0xb0] sm:$0xff]
  %v41 = vld [vmem:[%s1 + $0xb8] sm:$0xff]
  %v42 = vld [vmem:[%s1 + $0xc0] sm:$0xff]
  %v43 = vld [vmem:[%s1 + $0xc8] sm:$0xff]
  %v44 = vld [vmem:[%s1 + $0xd0] sm:$0xff]
  %v45 = vld [vmem:[%s1 + $0xd8] sm:$0xff]
  %v46 = vld [vmem:[%s1 + $0xe0] sm:$0xff]
  %v47 = vld [vmem:[%s1 + $0xe8] sm:$0xff]
  %v48 = vld [vmem:[%s1 + $0xf0] sm:$0xff]
  %v49 = vld [vmem:[%s1 + $0xf8] sm:$0xff]
  %v50 = vld [vmem:[%s1 + $0x100] sm:$0xff]
  %v51 = vld [vmem:[%s1 + $0x108] sm:$0xff]
  %v52 = vld [vmem:[%s1 + $0x110] sm:$0xff]
  %v53 = vld [vmem:[%s1 + $0x118] sm:$0xff]
  %v54 = vld [vmem:[%s1 + $0x120] sm:$0xff]
  %v55 = vld [vmem:[%s1 + $0x128] sm:$0xff]
  %v56 = vld [vmem:[%s1 + $0x130] sm:$0xff]
  %v57 = vld [vmem:[%s1 + $0x138] sm:$0xff]
  %v58 = vld [vmem:[%s1 + $0x140] sm:$0xff]
  %v59 = vld [vmem:[%s1 + $0x148] sm:$0xff]
  %v60 = vld [vmem:[%s1 + $0x150] sm:$0xff]
  %v61 = vld [vmem:[%s1 + $0x158] sm:$0xff]
  %v62 = vld [vmem:[%s1 + $0x160] sm:$0xff]
  %v63 = vld [vmem:[%s1 + $0x168] sm:$0xff]
  %v64 = vld [vmem:[%s1 + $0x170] sm:$0xff]
  %v65 = vld [vmem:[%s1 + $0x178] sm:$0xff]
  %v66 = vld [vmem:[%s1 + $0x180] sm:$0xff]
  %v67 = vld [vmem:[%s1 + $0x188] sm:$0xff]
  %v68 = vld [vmem:[%s1 + $0x190] sm:$0xff]
  %v69 = vld [vmem:[%s1 + $0x198] sm:$0xff]
  %v70 = vld [vmem:[%s1 + $0x1a0] sm:$0xff]
  %v71 = vld [vmem:[%s1 + $0x1a8] sm:$0xff]
  %v72 = vld [vmem:[%s1 + $0x1b0] sm:$0xff]
  %v73 = vld [vmem:[%s1 + $0x1b8] sm:$0xff]
  %v74 = vld [vmem:[%s1 + $0x1c0] sm:$0xff]
  %v75 = vld [vmem:[%s1 + $0x1c8] sm:$0xff]
  %v76 = vld [vmem:[%s1 + $0x1d0] sm:$0xff]
  %v77 = vld [vmem:[%s1 + $0x1d8] sm:$0xff]
  %v78 = vld [vmem:[%s1 + $0x1e0] sm:$0xff]
  %v79 = vld [vmem:[%s1 + $0x1e8] sm:$0xff]
  %v80 = vld [vmem:[%s1 + $0x1f0] sm:$0xff]
  %v81 = vld [vmem:[%s1 + $0x1f8] sm:$0xff]
  %82 = vmatprep.subr.mxu0 %v79
  %83 = vmatpush1.msra.mxu0 %v78
  %84 = vmatprep.subr.mxu0 %v75
  %85 = vmatpush1.msra.mxu0 %v74
  %86 = vmatprep.subr.mxu0 %v71
  %87 = vmatpush1.msra.mxu0 %v70
  %88 = vmatprep.subr.mxu0 %v67
  %89 = vmatpush1.msra.mxu0 %v66
  %90 = vmatprep.subr.mxu0 %v63
  %91 = vmatpush1.msra.mxu0 %v62
  %92 = vmatprep.subr.mxu0 %v59
  %93 = vmatpush1.msra.mxu0 %v58
  %94 = vmatprep.subr.mxu0 %v55
  %95 = vmatpush1.msra.mxu0 %v54
  %96 = vmatprep.subr.mxu0 %v51
  %97 = vmatpush1.msra.mxu0 %v50
  %98 = vmatprep.subr.mxu0 %v47
  %99 = vmatpush1.msra.mxu0 %v46
  %100 = vmatprep.subr.mxu0 %v43
  %101 = vmatpush1.msra.mxu0 %v42
  %102 = vmatprep.subr.mxu0 %v39
  %103 = vmatpush1.msra.mxu0 %v38
  %104 = vmatprep.subr.mxu0 %v35
  %105 = vmatpush1.msra.mxu0 %v34
  %106 = vmatprep.subr.mxu0 %v31
  %107 = vmatpush1.msra.mxu0 %v30
  %108 = vmatprep.subr.mxu0 %v27
  %109 = vmatpush1.msra.mxu0 %v26
  %110 = vmatprep.subr.mxu0 %v23
  %111 = vmatpush1.msra.mxu0 %v22
  %112 = vmatprep.subr.mxu0 %v19
  %113 = vmatpush1.msra.mxu0 %v18
  %114 = vmatprep.subr.mxu0 0.0
  %115 = vmatpush2.msra.mxu0 0.0
  %116 = vmatprep.subr.mxu0 0.0
  %117 = vmatpush2.msra.mxu0 0.0
  %118 = vmatprep.subr.mxu0 0.0
  %119 = vmatpush2.msra.mxu0 0.0
  %120 = vmatprep.subr.mxu0 0.0
  %121 = vmatpush2.msra.mxu0 0.0
  %122 = vmatprep.subr.mxu0 0.0
  %123 = vmatpush2.msra.mxu0 0.0
  %124 = vmatprep.subr.mxu0 0.0
  %125 = vmatpush2.msra.mxu0 0.0
  %126 = vmatprep.subr.mxu0 0.0
  %127 = vmatpush2.msra.mxu0 0.0
  %128 = vmatprep.subr.mxu0 0.0
  %129 = vmatpush2.msra.mxu0 0.0
  %130 = vmatprep.subr.mxu0 0.0
  %131 = vmatpush2.msra.mxu0 0.0
  %132 = vmatprep.subr.mxu0 0.0
  %133 = vmatpush2.msra.mxu0 0.0
  %134 = vmatprep.subr.mxu0 0.0
  %135 = vmatpush2.msra.mxu0 0.0
  %136 = vmatprep.subr.mxu0 0.0
  %137 = vmatpush2.msra.mxu0 0.0
  %138 = vmatprep.subr.mxu0 0.0
  %139 = vmatpush2.msra.mxu0 0.0
  %140 = vmatprep.subr.mxu0 0.0
  %141 = vmatpush2.msra.mxu0 0.0
  %142 = vmatprep.subr.mxu0 0.0
  %143 = vmatpush2.msra.mxu0 0.0
  %144 = vmatprep.subr.mxu0 0.0
  %145 = vmatpush2.msra.mxu0 0.0
  %146 = vmatprep.mubr.f32.mxu0 0.0
  %147 = vmatmul.mubr.f32.gmra.mxu0 %v17
  %v148 = vpop.f32.mrf.mxu0
  %v149 = vadd.f32 0.0, %v148
  %v150 = vpop.f32.mrf.mxu0
  %v151 = vadd.f32 0.0, %v150
  %152 = vdwg.mxu0
  %153 = vmatprep.subr.mxu0 %v81
  %154 = vmatpush1.msra.mxu0 %v80
  %155 = vmatprep.subr.mxu0 %v77
  %156 = vmatpush1.msra.mxu0 %v76
  %157 = vmatprep.subr.mxu0 %v73
  %158 = vmatpush1.msra.mxu0 %v72
  %159 = vmatprep.subr.mxu0 %v69
  %160 = vmatpush1.msra.mxu0 %v68
  %161 = vmatprep.subr.mxu0 %v65
  %162 = vmatpush1.msra.mxu0 %v64
  %163 = vmatprep.subr.mxu0 %v61
  %164 = vmatpush1.msra.mxu0 %v60
  %165 = vmatprep.subr.mxu0 %v57
  %166 = vmatpush1.msra.mxu0 %v56
  %167 = vmatprep.subr.mxu0 %v53
  %168 = vmatpush1.msra.mxu0 %v52
  %169 = vmatprep.subr.mxu0 %v49
  %170 = vmatpush1.msra.mxu0 %v48
  %171 = vmatprep.subr.mxu0 %v45
  %172 = vmatpush1.msra.mxu0 %v44
  %173 = vmatprep.subr.mxu0 %v41
  %174 = vmatpush1.msra.mxu0 %v40
  %175 = vmatprep.subr.mxu0 %v37
  %176 = vmatpush1.msra.mxu0 %v36
  %177 = vmatprep.subr.mxu0 %v33
  %178 = vmatpush1.msra.mxu0 %v32
  %179 = vmatprep.subr.mxu0 %v29
  %180 = vmatpush1.msra.mxu0 %v28
  %181 = vmatprep.subr.mxu0 %v25
  %182 = vmatpush1.msra.mxu0 %v24
  %183 = vmatprep.subr.mxu0 %v21
  %184 = vmatpush1.msra.mxu0 %v20
  %185 = vmatprep.subr.mxu0 0.0
  %186 = vmatpush2.msra.mxu0 0.0
  %187 = vmatprep.subr.mxu0 0.0
  %188 = vmatpush2.msra.mxu0 0.0
  %189 = vmatprep.subr.mxu0 0.0
  %190 = vmatpush2.msra.mxu0 0.0
  %191 = vmatprep.subr.mxu0 0.0
  %192 = vmatpush2.msra.mxu0 0.0
  %193 = vmatprep.subr.mxu0 0.0
  %194 = vmatpush2.msra.mxu0 0.0
  %195 = vmatprep.subr.mxu0 0.0
  %196 = vmatpush2.msra.mxu0 0.0
  %197 = vmatprep.subr.mxu0 0.0
  %198 = vmatpush2.msra.mxu0 0.0
  %199 = vmatprep.subr.mxu0 0.0
  %200 = vmatpush2.msra.mxu0 0.0
  %201 = vmatprep.subr.mxu0 0.0
  %202 = vmatpush2.msra.mxu0 0.0
  %203 = vmatprep.subr.mxu0 0.0
  %204 = vmatpush2.msra.mxu0 0.0
  %205 = vmatprep.subr.mxu0 0.0
  %206 = vmatpush2.msra.mxu0 0.0
  %207 = vmatprep.subr.mxu0 0.0
  %208 = vmatpush2.msra.mxu0 0.0
  %209 = vmatprep.subr.mxu0 0.0
  %210 = vmatpush2.msra.mxu0 0.0
  %211 = vmatprep.subr.mxu0 0.0
  %212 = vmatpush2.msra.mxu0 0.0
  %213 = vmatprep.subr.mxu0 0.0
  %214 = vmatpush2.msra.mxu0 0.0
  %215 = vmatprep.subr.mxu0 0.0
  %216 = vmatpush2.msra.mxu0 0.0
  %217 = vmatprep.mubr.f32.mxu0 0.0
  %218 = vmatmul.mubr.f32.gmra.mxu0 %v17
  %v219 = vpop.f32.mrf.mxu0
  %v220 = vadd.f32 0.0, %v219
  %v221 = vpop.f32.mrf.mxu0
  %v222 = vadd.f32 0.0, %v221
  %223 = vdwg.mxu0
  %vm224 = vcmask 1043456
  %v225 = vsel %vm224, %v149, 0.0
  %v226 = vsel %vm224, %v151, 0.0
  %v227 = vadd.f32 %v225, %v226
  %v228 = vsel %vm224, %v220, 0.0
  %v229 = vadd.f32 %v227, %v228
  %v230 = vsel %vm224, %v222, 0.0
  %v231 = vadd.f32 %v229, %v230
  %232 = vadd.xlane.f32.xlu0 %v231
  %v233 = vpop.xlane.xlu0 %232
  %v234 = vmul.f32 %v233, 0.001953125
  %v235 = vmul.f32 %v149, %v149
  %v236 = vmul.f32 %v151, %v151
  %v237 = vmul.f32 %v220, %v220
  %v238 = vmul.f32 %v222, %v222
  %v239 = vsel %vm224, %v235, 0.0
  %v240 = vsel %vm224, %v236, 0.0
  %v241 = vadd.f32 %v239, %v240
  %v242 = vsel %vm224, %v237, 0.0
  %v243 = vadd.f32 %v241, %v242
  %v244 = vsel %vm224, %v238, 0.0
  %v245 = vadd.f32 %v243, %v244
  %246 = vadd.xlane.f32.xlu0 %v245
  %v247 = vpop.xlane.xlu0 %246
  %v248 = vmul.f32 %v247, 0.001953125
  %v249 = vmul.f32 %v234, %v234
  %v250 = vsub.f32 %v248, %v249
  %v251 = vmax.f32 %v250, 0.0
  %v252 = vsub.f32 %v149, %v234
  %v253 = vsub.f32 %v151, %v234
  %v254 = vsub.f32 %v220, %v234
  %v255 = vsub.f32 %v222, %v234
  %v256 = vadd.f32 %v251, 1e-05
  %v257 = vrsqrt.pop %v256
  %v258 = vmul.f32 %v252, %v257
  %v259 = vmul.f32 %v253, %v257
  %v260 = vmul.f32 %v254, %v257
  %v261 = vmul.f32 %v255, %v257
  %v262 = vld [vmem:[%s2] sm:$0xf]
  %264 = vset.pattern.permute.xlu0 0
  %265 = vperm.xlu0 %264, %v262
  %v266 = vpop.permute.xlu0 %265
  %v268 = vmul.f32 %v258, %v266
  %v269 = vmul.f32 %v259, %v266
  %v270 = vmul.f32 %v260, %v266
  %v271 = vmul.f32 %v261, %v266
  %v272 = vld [vmem:[%s3] sm:$0xf]
  %274 = vset.pattern.permute.xlu0 0
  %275 = vperm.xlu0 %274, %v272
  %v276 = vpop.permute.xlu0 %275
  %v278 = vadd.f32 %v268, %v276
  %v279 = vadd.f32 %v269, %v276
  %v280 = vadd.f32 %v270, %v276
  %v281 = vadd.f32 %v271, %v276
  %v282 = vmax.f32 %v278, 0.0
  %v283 = vmax.f32 %v279, 0.0
  %v284 = vmax.f32 %v280, 0.0
  %v285 = vmax.f32 %v281, 0.0
  %v290 = vcombine.low %v282, %v283
  %v291 = vcombine.low %v284, %v285
  %294 = vst [vmem:[%s4] sm:$0xff] %v290
  %295 = vst [vmem:[%s4 + $0x8] sm:$0xff] %v291
  // Predicated region
  $region18: #{cat_dog_cnn_forward.6} parent=0 // pred_check
    _
  $region19: #{cat_dog_cnn_forward.6} parent=0 // pred_check_branch
    %297 = sbr.rel (0) target = $region21
  $region20: #{cat_dog_cnn_forward.6} parent=0 // pred_region
    _
  $region21: #{cat_dog_cnn_forward.6} parent=0 // pred_fallthru
    _
  // Predicated region
  $region22: #{cat_dog_cnn_forward.6} parent=0 // pred_check
    _
  $region23: #{cat_dog_cnn_forward.6} parent=0 // pred_check_branch
    %299 = sbr.rel (0) target = $region25
  $region24: #{cat_dog_cnn_forward.6} parent=0 // pred_region
    _
  $region25: #{cat_dog_cnn_forward.6} parent=0 // pred_fallthru
    _

// kernel: cat_dog_cnn_forward.7
$region0: #{cat_dog_cnn_forward.7}
  #allocation0 [shape = 'u32[]', space=smem, size = 0x4, offset = 0x4, fixed_abs, tag = 'smem constant byte address 0x4 - core index']
  #allocation1 [shape = 'u32[144,128]{1,0:T(1,128)}', space=vmem, size = 0x12000, scoped, tag = 'internal scratch']
  %s0 = inlined_call_operand.vmem [shape: f32[2,1024], index: 0, kind: input, shape index: {}]
  %s1 = inlined_call_operand.vmem [shape: f32[1024,2], index: 1, kind: input, shape index: {}]
  %s2 = inlined_call_operand.vmem [shape: f32[1,2], index: 2, kind: input, shape index: {}]
  %s3 = inlined_call_operand.hbm [shape: f32[2,2], index: 3, kind: output, shape index: {}]
  %s4 = sld [smem:[#allocation0]]
  $region22: #{cat_dog_cnn_forward.7} parent=0
    _
  %s6 = ssub.s32 1, %s4
  %s7 = scalar_select 0, %s6, %s4
  $region1: #{cat_dog_cnn_forward.7} parent=0
    #allocation2 [shape = 'u8[1024]{0}', space=vmem, size = 0x400, scoped, tag = 'output window, operand 0, single buffered']
    #allocation3 [shape = 's32[1]{0}', space=sflag, size = 0x4, scoped, tag = 'scoped memory for cat_dog_cnn_forward.7']
    %8 = vsyncpa [#allocation3], 0
    // Predicated region
    $region2: #{cat_dog_cnn_forward.7} parent=1 // pred_check
      _
    $region3: #{cat_dog_cnn_forward.7} parent=1 // pred_check_branch
      %10 = sbr.rel (0) target = $region5
    $region4: #{cat_dog_cnn_forward.7} parent=1 // pred_region
      _
    $region5: #{cat_dog_cnn_forward.7} parent=1 // pred_fallthru
      _
    // Predicated region
    $region6: #{cat_dog_cnn_forward.7} parent=1 // pred_check
      _
    $region7: #{cat_dog_cnn_forward.7} parent=1 // pred_check_branch
      %12 = sbr.rel (0) target = $region9
    $region8: #{cat_dog_cnn_forward.7} parent=1 // pred_region
      _
    $region9: #{cat_dog_cnn_forward.7} parent=1 // pred_fallthru
      _
    // Predicated region
    $region10: #{cat_dog_cnn_forward.7} parent=1 // pred_check
      _
    $region11: #{cat_dog_cnn_forward.7} parent=1 // pred_check_branch
      %14 = sbr.rel (0) target = $region13
    $region12: #{cat_dog_cnn_forward.7} parent=1 // pred_region
      _
    $region13: #{cat_dog_cnn_forward.7} parent=1 // pred_fallthru
      _
    %v15 = vld [vmem:[%s0] sm:$0xff]
    %v16 = vld [vmem:[%s0 + $0x8] sm:$0xff]
    %v17 = vld [vmem:[%s1] sm:$0xff]
    %v18 = vld [vmem:[%s1 + $0x8] sm:$0xff]
    %v19 = vld [vmem:[%s1 + $0x10] sm:$0xff]
    %v20 = vld [vmem:[%s1 + $0x18] sm:$0xff]
    %v21 = vld [vmem:[%s1 + $0x20] sm:$0xff]
    %v22 = vld [vmem:[%s1 + $0x28] sm:$0xff]
    %v23 = vld [vmem:[%s1 + $0x30] sm:$0xff]
    %v24 = vld [vmem:[%s1 + $0x38] sm:$0xff]
    %v25 = vld [vmem:[%s1 + $0x40] sm:$0xff]
    %v26 = vld [vmem:[%s1 + $0x48] sm:$0xff]
    %v27 = vld [vmem:[%s1 + $0x50] sm:$0xff]
    %v28 = vld [vmem:[%s1 + $0x58] sm:$0xff]
    %v29 = vld [vmem:[%s1 + $0x60] sm:$0xff]
    %v30 = vld [vmem:[%s1 + $0x68] sm:$0xff]
    %v31 = vld [vmem:[%s1 + $0x70] sm:$0xff]
    %v32 = vld [vmem:[%s1 + $0x78] sm:$0xff]
    %v33 = vld [vmem:[%s1 + $0x80] sm:$0xff]
    %v34 = vld [vmem:[%s1 + $0x88] sm:$0xff]
    %v35 = vld [vmem:[%s1 + $0x90] sm:$0xff]
    %v36 = vld [vmem:[%s1 + $0x98] sm:$0xff]
    %v37 = vld [vmem:[%s1 + $0xa0] sm:$0xff]
    %v38 = vld [vmem:[%s1 + $0xa8] sm:$0xff]
    %v39 = vld [vmem:[%s1 + $0xb0] sm:$0xff]
    %v40 = vld [vmem:[%s1 + $0xb8] sm:$0xff]
    %v41 = vld [vmem:[%s1 + $0xc0] sm:$0xff]
    %v42 = vld [vmem:[%s1 + $0xc8] sm:$0xff]
    %v43 = vld [vmem:[%s1 + $0xd0] sm:$0xff]
    %v44 = vld [vmem:[%s1 + $0xd8] sm:$0xff]
    %v45 = vld [vmem:[%s1 + $0xe0] sm:$0xff]
    %v46 = vld [vmem:[%s1 + $0xe8] sm:$0xff]
    %v47 = vld [vmem:[%s1 + $0xf0] sm:$0xff]
    %v48 = vld [vmem:[%s1 + $0xf8] sm:$0xff]
    %v49 = vld [vmem:[%s1 + $0x100] sm:$0xff]
    %v50 = vld [vmem:[%s1 + $0x108] sm:$0xff]
    %v51 = vld [vmem:[%s1 + $0x110] sm:$0xff]
    %v52 = vld [vmem:[%s1 + $0x118] sm:$0xff]
    %v53 = vld [vmem:[%s1 + $0x120] sm:$0xff]
    %v54 = vld [vmem:[%s1 + $0x128] sm:$0xff]
    %v55 = vld [vmem:[%s1 + $0x130] sm:$0xff]
    %v56 = vld [vmem:[%s1 + $0x138] sm:$0xff]
    %v57 = vld [vmem:[%s1 + $0x140] sm:$0xff]
    %v58 = vld [vmem:[%s1 + $0x148] sm:$0xff]
    %v59 = vld [vmem:[%s1 + $0x150] sm:$0xff]
    %v60 = vld [vmem:[%s1 + $0x158] sm:$0xff]
    %v61 = vld [vmem:[%s1 + $0x160] sm:$0xff]
    %v62 = vld [vmem:[%s1 + $0x168] sm:$0xff]
    %v63 = vld [vmem:[%s1 + $0x170] sm:$0xff]
    %v64 = vld [vmem:[%s1 + $0x178] sm:$0xff]
    %v65 = vld [vmem:[%s1 + $0x180] sm:$0xff]
    %v66 = vld [vmem:[%s1 + $0x188] sm:$0xff]
    %v67 = vld [vmem:[%s1 + $0x190] sm:$0xff]
    %v68 = vld [vmem:[%s1 + $0x198] sm:$0xff]
    %v69 = vld [vmem:[%s1 + $0x1a0] sm:$0xff]
    %v70 = vld [vmem:[%s1 + $0x1a8] sm:$0xff]
    %v71 = vld [vmem:[%s1 + $0x1b0] sm:$0xff]
    %v72 = vld [vmem:[%s1 + $0x1b8] sm:$0xff]
    %v73 = vld [vmem:[%s1 + $0x1c0] sm:$0xff]
    %v74 = vld [vmem:[%s1 + $0x1c8] sm:$0xff]
    %v75 = vld [vmem:[%s1 + $0x1d0] sm:$0xff]
    %v76 = vld [vmem:[%s1 + $0x1d8] sm:$0xff]
    %v77 = vld [vmem:[%s1 + $0x1e0] sm:$0xff]
    %v78 = vld [vmem:[%s1 + $0x1e8] sm:$0xff]
    %v79 = vld [vmem:[%s1 + $0x1f0] sm:$0xff]
    %v80 = vld [vmem:[%s1 + $0x1f8] sm:$0xff]
    %v81 = vld [vmem:[%s1 + $0x200] sm:$0xff]
    %v82 = vld [vmem:[%s1 + $0x208] sm:$0xff]
    %v83 = vld [vmem:[%s1 + $0x210] sm:$0xff]
    %v84 = vld [vmem:[%s1 + $0x218] sm:$0xff]
    %v85 = vld [vmem:[%s1 + $0x220] sm:$0xff]
    %v86 = vld [vmem:[%s1 + $0x228] sm:$0xff]
    %v87 = vld [vmem:[%s1 + $0x230] sm:$0xff]
    %v88 = vld [vmem:[%s1 + $0x238] sm:$0xff]
    %v89 = vld [vmem:[%s1 + $0x240] sm:$0xff]
    %v90 = vld [vmem:[%s1 + $0x248] sm:$0xff]
    %v91 = vld [vmem:[%s1 + $0x250] sm:$0xff]
    %v92 = vld [vmem:[%s1 + $0x258] sm:$0xff]
    %v93 = vld [vmem:[%s1 + $0x260] sm:$0xff]
    %v94 = vld [vmem:[%s1 + $0x268] sm:$0xff]
    %v95 = vld [vmem:[%s1 + $0x270] sm:$0xff]
    %v96 = vld [vmem:[%s1 + $0x278] sm:$0xff]
    %v97 = vld [vmem:[%s1 + $0x280] sm:$0xff]
    %v98 = vld [vmem:[%s1 + $0x288] sm:$0xff]
    %v99 = vld [vmem:[%s1 + $0x290] sm:$0xff]
    %v100 = vld [vmem:[%s1 + $0x298] sm:$0xff]
    %v101 = vld [vmem:[%s1 + $0x2a0] sm:$0xff]
    %v102 = vld [vmem:[%s1 + $0x2a8] sm:$0xff]
    %v103 = vld [vmem:[%s1 + $0x2b0] sm:$0xff]
    %v104 = vld [vmem:[%s1 + $0x2b8] sm:$0xff]
    %v105 = vld [vmem:[%s1 + $0x2c0] sm:$0xff]
    %v106 = vld [vmem:[%s1 + $0x2c8] sm:$0xff]
    %v107 = vld [vmem:[%s1 + $0x2d0] sm:$0xff]
    %v108 = vld [vmem:[%s1 + $0x2d8] sm:$0xff]
    %v109 = vld [vmem:[%s1 + $0x2e0] sm:$0xff]
    %v110 = vld [vmem:[%s1 + $0x2e8] sm:$0xff]
    %v111 = vld [vmem:[%s1 + $0x2f0] sm:$0xff]
    %v112 = vld [vmem:[%s1 + $0x2f8] sm:$0xff]
    %v113 = vld [vmem:[%s1 + $0x300] sm:$0xff]
    %v114 = vld [vmem:[%s1 + $0x308] sm:$0xff]
    %v115 = vld [vmem:[%s1 + $0x310] sm:$0xff]
    %v116 = vld [vmem:[%s1 + $0x318] sm:$0xff]
    %v117 = vld [vmem:[%s1 + $0x320] sm:$0xff]
    %v118 = vld [vmem:[%s1 + $0x328] sm:$0xff]
    %v119 = vld [vmem:[%s1 + $0x330] sm:$0xff]
    %v120 = vld [vmem:[%s1 + $0x338] sm:$0xff]
    %v121 = vld [vmem:[%s1 + $0x340] sm:$0xff]
    %v122 = vld [vmem:[%s1 + $0x348] sm:$0xff]
    %v123 = vld [vmem:[%s1 + $0x350] sm:$0xff]
    %v124 = vld [vmem:[%s1 + $0x358] sm:$0xff]
    %v125 = vld [vmem:[%s1 + $0x360] sm:$0xff]
    %v126 = vld [vmem:[%s1 + $0x368] sm:$0xff]
    %v127 = vld [vmem:[%s1 + $0x370] sm:$0xff]
    %v128 = vld [vmem:[%s1 + $0x378] sm:$0xff]
    %v129 = vld [vmem:[%s1 + $0x380] sm:$0xff]
    %v130 = vld [vmem:[%s1 + $0x388] sm:$0xff]
    %v131 = vld [vmem:[%s1 + $0x390] sm:$0xff]
    %v132 = vld [vmem:[%s1 + $0x398] sm:$0xff]
    %v133 = vld [vmem:[%s1 + $0x3a0] sm:$0xff]
    %v134 = vld [vmem:[%s1 + $0x3a8] sm:$0xff]
    %v135 = vld [vmem:[%s1 + $0x3b0] sm:$0xff]
    %v136 = vld [vmem:[%s1 + $0x3b8] sm:$0xff]
    %v137 = vld [vmem:[%s1 + $0x3c0] sm:$0xff]
    %v138 = vld [vmem:[%s1 + $0x3c8] sm:$0xff]
    %v139 = vld [vmem:[%s1 + $0x3d0] sm:$0xff]
    %v140 = vld [vmem:[%s1 + $0x3d8] sm:$0xff]
    %v141 = vld [vmem:[%s1 + $0x3e0] sm:$0xff]
    %v142 = vld [vmem:[%s1 + $0x3e8] sm:$0xff]
    %v143 = vld [vmem:[%s1 + $0x3f0] sm:$0xff]
    %v144 = vld [vmem:[%s1 + $0x3f8] sm:$0xff]
    %v145 = vld [vmem:[%s2] sm:$0x1]
    %v147 = vlaneseq
    %v148 = vshrl.u32 %v147, 7
    %v149 = vsub.s32 0, %v148
    %v150 = vrot.slane %v145, %v149
    %v154 = vcombine.high %v15, %v15
    %v156 = vunpack.c.l.s4 1983009808
    %v157 = vunpack.c.0.s8 %v156
    %v158 = vlaneseq
    %v159 = vshrl.u32 %v158, 7
    %v160 = vsub.s32 %v157, %v159
    %v161 = vrot.slane %v15, %v160
    %v163 = vunpack.c.l.s4 1983009808
    %v164 = vunpack.c.0.s8 %v163
    %v165 = vlaneseq
    %v166 = vshrl.u32 %v165, 7
    %v167 = vsub.s32 %v164, %v166
    %v168 = vrot.slane %v154, %v167
    %v169 = vcombine.high %v161, %v161
    %v170 = vcombine.high %v168, %v168
    %v171 = vcombine.high %v16, %v16
    %v173 = vunpack.c.l.s4 1983009808
    %v174 = vunpack.c.0.s8 %v173
    %v175 = vlaneseq
    %v176 = vshrl.u32 %v175, 7
    %v177 = vsub.s32 %v174, %v176
    %v178 = vrot.slane %v16, %v177
    %v180 = vunpack.c.l.s4 1983009808
    %v181 = vunpack.c.0.s8 %v180
    %v182 = vlaneseq
    %v183 = vshrl.u32 %v182, 7
    %v184 = vsub.s32 %v181, %v183
    %v185 = vrot.slane %v171, %v184
    %v186 = vcombine.high %v178, %v178
    %v187 = vcombine.high %v185, %v185
    %196 = vmatprep.subr.mxu0 0.0
    %197 = vmatpush1.msra.mxu0 %v32
    %198 = vmatprep.subr.mxu0 0.0
    %199 = vmatpush1.msra.mxu0 %v31
    %200 = vmatprep.subr.mxu0 0.0
    %201 = vmatpush1.msra.mxu0 %v30
    %202 = vmatprep.subr.mxu0 0.0
    %203 = vmatpush1.msra.mxu0 %v29
    %204 = vmatprep.subr.mxu0 0.0
    %205 = vmatpush1.msra.mxu0 %v28
    %206 = vmatprep.subr.mxu0 0.0
    %207 = vmatpush1.msra.mxu0 %v27
    %208 = vmatprep.subr.mxu0 0.0
    %209 = vmatpush1.msra.mxu0 %v26
    %210 = vmatprep.subr.mxu0 0.0
    %211 = vmatpush1.msra.mxu0 %v25
    %212 = vmatprep.subr.mxu0 0.0
    %213 = vmatpush1.msra.mxu0 %v24
    %214 = vmatprep.subr.mxu0 0.0
    %215 = vmatpush1.msra.mxu0 %v23
    %216 = vmatprep.subr.mxu0 0.0
    %217 = vmatpush1.msra.mxu0 %v22
    %218 = vmatprep.subr.mxu0 0.0
    %219 = vmatpush1.msra.mxu0 %v21
    %220 = vmatprep.subr.mxu0 0.0
    %221 = vmatpush1.msra.mxu0 %v20
    %222 = vmatprep.subr.mxu0 0.0
    %223 = vmatpush1.msra.mxu0 %v19
    %224 = vmatprep.subr.mxu0 0.0
    %225 = vmatpush1.msra.mxu0 %v18
    %226 = vmatprep.subr.mxu0 0.0
    %227 = vmatpush1.msra.mxu0 %v17
    %228 = vmatprep.subr.mxu0 0.0
    %229 = vmatpush2.msra.mxu0 %v48
    %230 = vmatprep.subr.mxu0 0.0
    %231 = vmatpush2.msra.mxu0 %v47
    %232 = vmatprep.subr.mxu0 0.0
    %233 = vmatpush2.msra.mxu0 %v46
    %234 = vmatprep.subr.mxu0 0.0
    %235 = vmatpush2.msra.mxu0 %v45
    %236 = vmatprep.subr.mxu0 0.0
    %237 = vmatpush2.msra.mxu0 %v44
    %238 = vmatprep.subr.mxu0 0.0
    %239 = vmatpush2.msra.mxu0 %v43
    %240 = vmatprep.subr.mxu0 0.0
    %241 = vmatpush2.msra.mxu0 %v42
    %242 = vmatprep.subr.mxu0 0.0
    %243 = vmatpush2.msra.mxu0 %v41
    %244 = vmatprep.subr.mxu0 0.0
    %245 = vmatpush2.msra.mxu0 %v40
    %246 = vmatprep.subr.mxu0 0.0
    %247 = vmatpush2.msra.mxu0 %v39
    %248 = vmatprep.subr.mxu0 0.0
    %249 = vmatpush2.msra.mxu0 %v38
    %250 = vmatprep.subr.mxu0 0.0
    %251 = vmatpush2.msra.mxu0 %v37
    %252 = vmatprep.subr.mxu0 0.0
    %253 = vmatpush2.msra.mxu0 %v36
    %254 = vmatprep.subr.mxu0 0.0
    %255 = vmatpush2.msra.mxu0 %v35
    %256 = vmatprep.subr.mxu0 0.0
    %257 = vmatpush2.msra.mxu0 %v34
    %258 = vmatprep.subr.mxu0 0.0
    %259 = vmatpush2.msra.mxu0 %v33
    %260 = vmatprep.mubr.f32.mxu0 %v169
    %261 = vmatmul.mubr.f32.gmra.mxu0 %v161
    %v262 = vpop.f32.mrf.mxu0
    %v263 = vadd.f32 %v150, %v262
    %v264 = vpop.f32.mrf.mxu0
    %265 = vdwg.mxu0
    %266 = vmatprep.subr.mxu0 0.0
    %267 = vmatpush1.msra.mxu0 %v64
    %268 = vmatprep.subr.mxu0 0.0
    %269 = vmatpush1.msra.mxu0 %v63
    %270 = vmatprep.subr.mxu0 0.0
    %271 = vmatpush1.msra.mxu0 %v62
    %272 = vmatprep.subr.mxu0 0.0
    %273 = vmatpush1.msra.mxu0 %v61
    %274 = vmatprep.subr.mxu0 0.0
    %275 = vmatpush1.msra.mxu0 %v60
    %276 = vmatprep.subr.mxu0 0.0
    %277 = vmatpush1.msra.mxu0 %v59
    %278 = vmatprep.subr.mxu0 0.0
    %279 = vmatpush1.msra.mxu0 %v58
    %280 = vmatprep.subr.mxu0 0.0
    %281 = vmatpush1.msra.mxu0 %v57
    %282 = vmatprep.subr.mxu0 0.0
    %283 = vmatpush1.msra.mxu0 %v56
    %284 = vmatprep.subr.mxu0 0.0
    %285 = vmatpush1.msra.mxu0 %v55
    %286 = vmatprep.subr.mxu0 0.0
    %287 = vmatpush1.msra.mxu0 %v54
    %288 = vmatprep.subr.mxu0 0.0
    %289 = vmatpush1.msra.mxu0 %v53
    %290 = vmatprep.subr.mxu0 0.0
    %291 = vmatpush1.msra.mxu0 %v52
    %292 = vmatprep.subr.mxu0 0.0
    %293 = vmatpush1.msra.mxu0 %v51
    %294 = vmatprep.subr.mxu0 0.0
    %295 = vmatpush1.msra.mxu0 %v50
    %296 = vmatprep.subr.mxu0 0.0
    %297 = vmatpush1.msra.mxu0 %v49
    %298 = vmatprep.subr.mxu0 0.0
    %299 = vmatpush2.msra.mxu0 %v80
    %300 = vmatprep.subr.mxu0 0.0
    %301 = vmatpush2.msra.mxu0 %v79
    %302 = vmatprep.subr.mxu0 0.0
    %303 = vmatpush2.msra.mxu0 %v78
    %304 = vmatprep.subr.mxu0 0.0
    %305 = vmatpush2.msra.mxu0 %v77
    %306 = vmatprep.subr.mxu0 0.0
    %307 = vmatpush2.msra.mxu0 %v76
    %308 = vmatprep.subr.mxu0 0.0
    %309 = vmatpush2.msra.mxu0 %v75
    %310 = vmatprep.subr.mxu0 0.0
    %311 = vmatpush2.msra.mxu0 %v74
    %312 = vmatprep.subr.mxu0 0.0
    %313 = vmatpush2.msra.mxu0 %v73
    %314 = vmatprep.subr.mxu0 0.0
    %315 = vmatpush2.msra.mxu0 %v72
    %316 = vmatprep.subr.mxu0 0.0
    %317 = vmatpush2.msra.mxu0 %v71
    %318 = vmatprep.subr.mxu0 0.0
    %319 = vmatpush2.msra.mxu0 %v70
    %320 = vmatprep.subr.mxu0 0.0
    %321 = vmatpush2.msra.mxu0 %v69
    %322 = vmatprep.subr.mxu0 0.0
    %323 = vmatpush2.msra.mxu0 %v68
    %324 = vmatprep.subr.mxu0 0.0
    %325 = vmatpush2.msra.mxu0 %v67
    %326 = vmatprep.subr.mxu0 0.0
    %327 = vmatpush2.msra.mxu0 %v66
    %328 = vmatprep.subr.mxu0 0.0
    %329 = vmatpush2.msra.mxu0 %v65
    %330 = vmatprep.mubr.f32.mxu0 %v170
    %331 = vmatmul.mubr.f32.gmra.mxu0 %v168
    %v332 = vpop.f32.mrf.mxu0
    %v333 = vadd.f32 %v263, %v332
    %v334 = vpop.f32.mrf.mxu0
    %335 = vdwg.mxu0
    %336 = vmatprep.subr.mxu0 0.0
    %337 = vmatpush1.msra.mxu0 %v96
    %338 = vmatprep.subr.mxu0 0.0
    %339 = vmatpush1.msra.mxu0 %v95
    %340 = vmatprep.subr.mxu0 0.0
    %341 = vmatpush1.msra.mxu0 %v94
    %342 = vmatprep.subr.mxu0 0.0
    %343 = vmatpush1.msra.mxu0 %v93
    %344 = vmatprep.subr.mxu0 0.0
    %345 = vmatpush1.msra.mxu0 %v92
    %346 = vmatprep.subr.mxu0 0.0
    %347 = vmatpush1.msra.mxu0 %v91
    %348 = vmatprep.subr.mxu0 0.0
    %349 = vmatpush1.msra.mxu0 %v90
    %350 = vmatprep.subr.mxu0 0.0
    %351 = vmatpush1.msra.mxu0 %v89
    %352 = vmatprep.subr.mxu0 0.0
    %353 = vmatpush1.msra.mxu0 %v88
    %354 = vmatprep.subr.mxu0 0.0
    %355 = vmatpush1.msra.mxu0 %v87
    %356 = vmatprep.subr.mxu0 0.0
    %357 = vmatpush1.msra.mxu0 %v86
    %358 = vmatprep.subr.mxu0 0.0
    %359 = vmatpush1.msra.mxu0 %v85
    %360 = vmatprep.subr.mxu0 0.0
    %361 = vmatpush1.msra.mxu0 %v84
    %362 = vmatprep.subr.mxu0 0.0
    %363 = vmatpush1.msra.mxu0 %v83
    %364 = vmatprep.subr.mxu0 0.0
    %365 = vmatpush1.msra.mxu0 %v82
    %366 = vmatprep.subr.mxu0 0.0
    %367 = vmatpush1.msra.mxu0 %v81
    %368 = vmatprep.subr.mxu0 0.0
    %369 = vmatpush2.msra.mxu0 %v112
    %370 = vmatprep.subr.mxu0 0.0
    %371 = vmatpush2.msra.mxu0 %v111
    %372 = vmatprep.subr.mxu0 0.0
    %373 = vmatpush2.msra.mxu0 %v110
    %374 = vmatprep.subr.mxu0 0.0
    %375 = vmatpush2.msra.mxu0 %v109
    %376 = vmatprep.subr.mxu0 0.0
    %377 = vmatpush2.msra.mxu0 %v108
    %378 = vmatprep.subr.mxu0 0.0
    %379 = vmatpush2.msra.mxu0 %v107
    %380 = vmatprep.subr.mxu0 0.0
    %381 = vmatpush2.msra.mxu0 %v106
    %382 = vmatprep.subr.mxu0 0.0
    %383 = vmatpush2.msra.mxu0 %v105
    %384 = vmatprep.subr.mxu0 0.0
    %385 = vmatpush2.msra.mxu0 %v104
    %386 = vmatprep.subr.mxu0 0.0
    %387 = vmatpush2.msra.mxu0 %v103
    %388 = vmatprep.subr.mxu0 0.0
    %389 = vmatpush2.msra.mxu0 %v102
    %390 = vmatprep.subr.mxu0 0.0
    %391 = vmatpush2.msra.mxu0 %v101
    %392 = vmatprep.subr.mxu0 0.0
    %393 = vmatpush2.msra.mxu0 %v100
    %394 = vmatprep.subr.mxu0 0.0
    %395 = vmatpush2.msra.mxu0 %v99
    %396 = vmatprep.subr.mxu0 0.0
    %397 = vmatpush2.msra.mxu0 %v98
    %398 = vmatprep.subr.mxu0 0.0
    %399 = vmatpush2.msra.mxu0 %v97
    %400 = vmatprep.mubr.f32.mxu0 %v186
    %401 = vmatmul.mubr.f32.gmra.mxu0 %v178
    %v402 = vpop.f32.mrf.mxu0
    %v403 = vadd.f32 %v333, %v402
    %v404 = vpop.f32.mrf.mxu0
    %405 = vdwg.mxu0
    %406 = vmatprep.subr.mxu0 0.0
    %407 = vmatpush1.msra.mxu0 %v128
    %408 = vmatprep.subr.mxu0 0.0
    %409 = vmatpush1.msra.mxu0 %v127
    %410 = vmatprep.subr.mxu0 0.0
    %411 = vmatpush1.msra.mxu0 %v126
    %412 = vmatprep.subr.mxu0 0.0
    %413 = vmatpush1.msra.mxu0 %v125
    %414 = vmatprep.subr.mxu0 0.0
    %415 = vmatpush1.msra.mxu0 %v124
    %416 = vmatprep.subr.mxu0 0.0
    %417 = vmatpush1.msra.mxu0 %v123
    %418 = vmatprep.subr.mxu0 0.0
    %419 = vmatpush1.msra.mxu0 %v122
    %420 = vmatprep.subr.mxu0 0.0
    %421 = vmatpush1.msra.mxu0 %v121
    %422 = vmatprep.subr.mxu0 0.0
    %423 = vmatpush1.msra.mxu0 %v120
    %424 = vmatprep.subr.mxu0 0.0
    %425 = vmatpush1.msra.mxu0 %v119
    %426 = vmatprep.subr.mxu0 0.0
    %427 = vmatpush1.msra.mxu0 %v118
    %428 = vmatprep.subr.mxu0 0.0
    %429 = vmatpush1.msra.mxu0 %v117
    %430 = vmatprep.subr.mxu0 0.0
    %431 = vmatpush1.msra.mxu0 %v116
    %432 = vmatprep.subr.mxu0 0.0
    %433 = vmatpush1.msra.mxu0 %v115
    %434 = vmatprep.subr.mxu0 0.0
    %435 = vmatpush1.msra.mxu0 %v114
    %436 = vmatprep.subr.mxu0 0.0
    %437 = vmatpush1.msra.mxu0 %v113
    %438 = vmatprep.subr.mxu0 0.0
    %439 = vmatpush2.msra.mxu0 %v144
    %440 = vmatprep.subr.mxu0 0.0
    %441 = vmatpush2.msra.mxu0 %v143
    %442 = vmatprep.subr.mxu0 0.0
    %443 = vmatpush2.msra.mxu0 %v142
    %444 = vmatprep.subr.mxu0 0.0
    %445 = vmatpush2.msra.mxu0 %v141
    %446 = vmatprep.subr.mxu0 0.0
    %447 = vmatpush2.msra.mxu0 %v140
    %448 = vmatprep.subr.mxu0 0.0
    %449 = vmatpush2.msra.mxu0 %v139
    %450 = vmatprep.subr.mxu0 0.0
    %451 = vmatpush2.msra.mxu0 %v138
    %452 = vmatprep.subr.mxu0 0.0
    %453 = vmatpush2.msra.mxu0 %v137
    %454 = vmatprep.subr.mxu0 0.0
    %455 = vmatpush2.msra.mxu0 %v136
    %456 = vmatprep.subr.mxu0 0.0
    %457 = vmatpush2.msra.mxu0 %v135
    %458 = vmatprep.subr.mxu0 0.0
    %459 = vmatpush2.msra.mxu0 %v134
    %460 = vmatprep.subr.mxu0 0.0
    %461 = vmatpush2.msra.mxu0 %v133
    %462 = vmatprep.subr.mxu0 0.0
    %463 = vmatpush2.msra.mxu0 %v132
    %464 = vmatprep.subr.mxu0 0.0
    %465 = vmatpush2.msra.mxu0 %v131
    %466 = vmatprep.subr.mxu0 0.0
    %467 = vmatpush2.msra.mxu0 %v130
    %468 = vmatprep.subr.mxu0 0.0
    %469 = vmatpush2.msra.mxu0 %v129
    %470 = vmatprep.mubr.f32.mxu0 %v187
    %471 = vmatmul.mubr.f32.gmra.mxu0 %v185
    %v472 = vpop.f32.mrf.mxu0
    %v473 = vadd.f32 %v403, %v472
    %v474 = vpop.f32.mrf.mxu0
    %475 = vdwg.mxu0
    %vm476 = vcmask 9216
    %v477 = vsel %vm476, %v473, -inf
    %478 = vmax.xlane.f32.xlu0 %v477
    %v479 = vpop.xlane.xlu0 %478
    %v480 = vsub.f32 %v473, %v479
    %v481 = vmul.f32 %v480, 1.442695
    %v482 = vpow.pop %v481
    %v483 = vsel %vm476, %v482, 0.0
    %484 = vadd.xlane.f32.xlu0 %v483
    %v485 = vpop.xlane.xlu0 %484
    %v486 = vrcp.pop %v485
    %v487 = vmul.f32 %v482, %v486
    %488 = vst.msk [vmem:[#allocation2] sm:$0x3] %vm476, %v487
    // Predicated region
    $region14: #{cat_dog_cnn_forward.7} parent=1 // pred_check
      _
    $region15: #{cat_dog_cnn_forward.7} parent=1 // pred_check_branch
      %490 = sbr.rel (0) target = $region17
    $region16: #{cat_dog_cnn_forward.7} parent=1 // pred_region
      %s492 = ssub.s32 32, 32
      %493 = vsyncadd [#allocation3], %s492
      %s495 = sshll.u32 [#allocation2], 4
      %s496 = int_to_ptr.vmem [resolvable:$true] %s495
      %498 = dma.vmem_to_hbm [thread:$0]  %s496, 32, %s3, [#allocation3]
    $region17: #{cat_dog_cnn_forward.7} parent=1 // pred_fallthru
      _
    // Predicated region
    $region18: #{cat_dog_cnn_forward.7} parent=1 // pred_check
      _
    $region19: #{cat_dog_cnn_forward.7} parent=1 // pred_check_branch
      %500 = sbr.rel (0) target = $region21
    $region20: #{cat_dog_cnn_forward.7} parent=1 // pred_region
      %501 = dma.done [#allocation3], 32
    $region21: #{cat_dog_cnn_forward.7} parent=1 // pred_fallthru
      _
    %502 = vsyncpa [#allocation3], 1

</llo_original>
